<compile_context>
chip_gen: v5e
topology: v5e:2x2
jax: 0.10.0
libtpu: 0.0.40
codegen_flags: <defaults>
</compile_context>

<pallas_src>
import functools

import jax
import jax.numpy as jnp
from jax.experimental import pallas as pl
from jax.experimental.pallas import tpu as pltpu

EMBEDDING_LAYER_DIM = 64
GRU_HIDDEN_DIM = 100
SEQ_LENGTH = 10
UPPER_CHARS_NUMBER = 26
VOCAB_SIZE = UPPER_CHARS_NUMBER + 1

H_PAD = 128     # GRU hidden padded to one 128-lane group
V_PAD = 128     # vocab padded so the output store is lane-dense


# ----------------------------- kernel -----------------------------
def seq2seq_kernel(T, B,
                   enc_emb_ref, dec_emb_ref,
                   w_ih_e_ref, w_hh_e_ref, b_ih_e_ref, b_hh_e_ref,
                   w_ih_d_ref, w_dec_ref, b_ih_d_ref, b_hh_dn_ref,
                   w_att_ref, w_lin_ref, b_lin_ref,
                   out_ref,
                   gx_enc_s, gx_dec_s, enc_out_s, dec_out_s):
    G = gx_enc_s.shape[1]                   # 3 * Hp
    Hp = G // 3
    f32, bf16 = jnp.float32, jnp.bfloat16

    # Padding rows of the decoder-hidden scratch must be defined before the
    # final projection reads them.
    dec_out_s[...] = jnp.zeros_like(dec_out_s)

    # ----- hoisted input-side matmuls (flat (T*B, 3Hp), no relayout) -----
    # b_ih folded in; decoder bias also carries b_hh_{r,z}.
    gx_enc_s[...] = jnp.dot(enc_emb_ref[...], w_ih_e_ref[...],
                            preferred_element_type=f32) + b_ih_e_ref[...]
    gx_dec_s[...] = jnp.dot(dec_emb_ref[...], w_ih_d_ref[...],
                            preferred_element_type=f32) + b_ih_d_ref[...]

    # --------------------------- encoder GRU ---------------------------
    b_hh_e = jnp.broadcast_to(b_hh_e_ref[...], (B, G))       # hoisted once

    h = jnp.zeros((B, Hp), f32)
    for t in range(T):                      # static t -> free static slices
        gx = gx_enc_s[pl.ds(t * B, B), :]                     # (B, 3Hp)
        gh = jnp.dot(h.astype(bf16), w_hh_e_ref[...],
                     preferred_element_type=f32) + b_hh_e
        r = jax.nn.sigmoid(gx[:, :Hp] + gh[:, :Hp])
        z = jax.nn.sigmoid(gx[:, Hp:2 * Hp] + gh[:, Hp:2 * Hp])
        n = jnp.tanh(gx[:, 2 * Hp:] + r * gh[:, 2 * Hp:])
        h = (1.0 - z) * n + z * h
        for b in range(B):                  # batch-major rows: b*T + t
            enc_out_s[pl.ds(b * T + t, 1), :] = h[b:b + 1, :]

    # ------------- attention precompute (once, not per step) -------------
    enc_bm = enc_out_s[...]                                   # (B*T, Hp)
    att_bm = jnp.dot(enc_bm.astype(bf16), w_att_ref[...],
                     preferred_element_type=f32)              # (B*T, Hp)
    enc_bt = enc_bm.reshape(B, T, Hp)                         # (B, T, Hp)
    att_bt = att_bm.reshape(B, T, Hp)

    # Decoder loop-invariant, loaded only now (bounded vreg live range).
    b_hh_n = jnp.broadcast_to(b_hh_dn_ref[...], (B, Hp))

    # --------------------- decoder GRU with attention ---------------------
    for t in range(T):
        # attention in (B, T): lane-aligned softmax, EUP reciprocal
        scores = jnp.sum(att_bt * h[:, None, :], axis=-1)     # (B, T)
        e = jnp.exp(scores - jnp.max(scores, axis=-1, keepdims=True))
        w = e * pl.reciprocal(jnp.sum(e, axis=-1, keepdims=True), approx=True)
        ctx = jnp.sum(w[:, :, None] * enc_bt, axis=1)         # (B, Hp)

        # single merged recurrent matmul: [ctx | h] @ w_dec -> (B, 4Hp)
        xh = jnp.concatenate([ctx, h], axis=-1).astype(bf16)  # (B, 2Hp)
        mm = jnp.dot(xh, w_dec_ref[...], preferred_element_type=f32)

        gx = gx_dec_s[pl.ds(t * B, B), :]  # emb-side gates + b_ih + b_hh_{r,z}
        r = jax.nn.sigmoid(gx[:, :Hp] + mm[:, :Hp])
        z = jax.nn.sigmoid(gx[:, Hp:2 * Hp] + mm[:, Hp:2 * Hp])
        n = jnp.tanh(gx[:, 2 * Hp:] + mm[:, 2 * Hp:3 * Hp]
                     + r * (mm[:, 3 * Hp:] + b_hh_n))
        h = (1.0 - z) * n + z * h
        for b in range(B):
            dec_out_s[pl.ds(b * T + t, 1), :] = h[b:b + 1, :]

    # ------------- output projection (lane-dense 128-wide store) -------------
    logits = jnp.dot(dec_out_s[...].astype(bf16), w_lin_ref[...],
                     preferred_element_type=f32) + b_lin_ref[...]
    out_ref[...] = logits                                      # (rows_pad, Vp)


# ----------------------------- parameters -----------------------------
def init_params(key):
    V, E, H = VOCAB_SIZE, EMBEDDING_LAYER_DIM, GRU_HIDDEN_DIM
    ks = jax.random.split(key, 12)
    s = 0.1
    return {
        "embedding": s * jax.random.normal(ks[0], (V, E), jnp.float32),
        # encoder GRU (input-major, gate order r|z|n)
        "w_ih_e": s * jax.random.normal(ks[1], (E, 3 * H), jnp.float32),
        "w_hh_e": s * jax.random.normal(ks[2], (H, 3 * H), jnp.float32),
        "b_ih_e": s * jax.random.normal(ks[3], (1, 3 * H), jnp.float32),
        "b_hh_e": s * jax.random.normal(ks[4], (1, 3 * H), jnp.float32),
        # decoder GRU (input = embedding ++ context)
        "w_ih_d": s * jax.random.normal(ks[5], (E + H, 3 * H), jnp.float32),
        "w_hh_d": s * jax.random.normal(ks[6], (H, 3 * H), jnp.float32),
        "b_ih_d": s * jax.random.normal(ks[7], (1, 3 * H), jnp.float32),
        "b_hh_d": s * jax.random.normal(ks[8], (1, 3 * H), jnp.float32),
        # attention_W.weight.T and linear.weight.T / bias
        "w_att_t": s * jax.random.normal(ks[9], (H, H), jnp.float32),
        "w_lin_t": s * jax.random.normal(ks[10], (H, V), jnp.float32),
        "b_lin": s * jax.random.normal(ks[11], (1, V), jnp.float32),
    }


def _pad_last(x, new):
    return jnp.pad(x, [(0, 0)] * (x.ndim - 1) + [(0, new - x.shape[-1])])


def _pad_gate_cols(w, h, hp):
    # (..., 3h) -> (..., 3hp): zero-pad each of the [r|z|n] gate blocks.
    parts = [w[..., g * h:(g + 1) * h] for g in range(3)]
    return jnp.concatenate([_pad_last(p, hp) for p in parts], axis=-1)


def _pad_rows(w, new_rows):
    return jnp.pad(w, [(0, new_rows - w.shape[0]), (0, 0)])


def prepare_kernel_params(params):
    """Pad H->128 / V->128 with zeros, merge decoder recurrent weights, fold
    biases, cast matmul operands to bf16.  The kernel relies on the padded
    lanes being exactly zero (so padded hidden lanes of h stay 0)."""
    H, Hp, Vp, E = GRU_HIDDEN_DIM, H_PAD, V_PAD, EMBEDDING_LAYER_DIM
    bf16, f32 = jnp.bfloat16, jnp.float32

    w_ih_e = _pad_gate_cols(params["w_ih_e"], H, Hp)                   # (E, 3Hp)
    w_hh_e = _pad_rows(_pad_gate_cols(params["w_hh_e"], H, Hp), Hp)    # (Hp, 3Hp)
    b_ih_e = _pad_gate_cols(params["b_ih_e"], H, Hp)
    b_hh_e = _pad_gate_cols(params["b_hh_e"], H, Hp)

    w_ih_d = params["w_ih_d"]
    w_ih_d_emb = _pad_gate_cols(w_ih_d[:E], H, Hp)                     # (E, 3Hp)
    w_ctx = _pad_rows(_pad_gate_cols(w_ih_d[E:], H, Hp), Hp)           # (Hp, 3Hp)
    w_hh_d = _pad_rows(_pad_gate_cols(params["w_hh_d"], H, Hp), Hp)    # (Hp, 3Hp)

    # Merged decoder recurrent weight (2Hp, 4Hp); column layout documented in
    # the kernel header (keeps the r-gated hidden-side n term separable).
    zblk = jnp.zeros((Hp, Hp), f32)
    w_dec = jnp.concatenate(
        [jnp.concatenate([w_ctx[:, :2 * Hp], w_ctx[:, 2 * Hp:], zblk], axis=1),
         jnp.concatenate([w_hh_d[:, :2 * Hp], zblk, w_hh_d[:, 2 * Hp:]], axis=1)],
        axis=0)

    b_ih_d = _pad_gate_cols(params["b_ih_d"], H, Hp)
    b_hh_d = _pad_gate_cols(params["b_hh_d"], H, Hp)
    # fold b_hh_{r,z} into the hoisted input-side decoder bias; keep b_hh_n.
    b_ih_dec = jnp.concatenate(
        [b_ih_d[:, :2 * Hp] + b_hh_d[:, :2 * Hp], b_ih_d[:, 2 * Hp:]], axis=1)
    b_hh_dn = b_hh_d[:, 2 * Hp:]                                       # (1, Hp)

    w_att = _pad_rows(_pad_last(params["w_att_t"], Hp), Hp)            # (Hp, Hp)
    w_lin = _pad_rows(_pad_last(params["w_lin_t"], Vp), Hp)            # (Hp, Vp)
    b_lin = _pad_last(params["b_lin"], Vp)

    # Zero-padding invariants the kernel depends on (guard future inits).
    def _gate_pads(w):
        return [w[..., g * Hp + H:(g + 1) * Hp] for g in range(3)]

    zero_blocks = (_gate_pads(w_ih_e) + _gate_pads(w_hh_e)
                   + _gate_pads(w_ih_d_emb) + _gate_pads(w_ctx)
                   + _gate_pads(w_hh_d) + _gate_pads(b_ih_e) + _gate_pads(b_hh_e)
                   + [w_hh_e[H:, :], w_ctx[H:, :], w_hh_d[H:, :],
                      w_att[H:, :], w_att[:, H:], w_lin[H:, :],
                      b_lin[:, VOCAB_SIZE:], b_hh_dn[:, H:]])
    for blk in zero_blocks:
        assert float(jnp.max(jnp.abs(blk))) == 0.0, "zero-padding invariant broken"

    return {
        "embedding": params["embedding"].astype(bf16),
        "w_ih_e": w_ih_e.astype(bf16), "w_hh_e": w_hh_e.astype(bf16),
        "b_ih_e": b_ih_e.astype(f32), "b_hh_e": b_hh_e.astype(f32),
        "w_ih_d_emb": w_ih_d_emb.astype(bf16), "w_dec": w_dec.astype(bf16),
        "b_ih_dec": b_ih_dec.astype(f32), "b_hh_dn": b_hh_dn.astype(f32),
        "w_att": w_att.astype(bf16), "w_lin": w_lin.astype(bf16),
        "b_lin": b_lin.astype(f32),
    }


# ----------------------------- forward -----------------------------
@jax.jit
def seq2seq_forward(encoder_X, decoder_X, kp):
    B, T = encoder_X.shape
    E, Hp, Vp, V = EMBEDDING_LAYER_DIM, H_PAD, V_PAD, VOCAB_SIZE
    rows = B * T
    rows_pad = ((rows + 7) // 8) * 8           # full-sublane-tile final store

    # Embedding gather stays in XLA (glue); rows time-major (t*B + b) so each
    # GRU step reads one contiguous (B, E) slab of the hoisted gate scratch.
    emb = kp["embedding"]
    enc_emb = jnp.take(emb, encoder_X, axis=0).transpose(1, 0, 2).reshape(T * B, E)
    dec_emb = jnp.take(emb, decoder_X, axis=0).transpose(1, 0, 2).reshape(T * B, E)

    vmem = pl.BlockSpec(memory_space=pltpu.MemorySpace.VMEM)
    out = pl.pallas_call(
        functools.partial(seq2seq_kernel, T, B),
        out_shape=jax.ShapeDtypeStruct((rows_pad, Vp), jnp.float32),
        in_specs=[vmem] * 13,
        out_specs=vmem,
        scratch_shapes=[
            pltpu.VMEM((T * B, 3 * Hp), jnp.float32),   # encoder input-side gates
            pltpu.VMEM((T * B, 3 * Hp), jnp.float32),   # decoder input-side gates
            pltpu.VMEM((B * T, Hp), jnp.float32),       # encoder hiddens (batch-major)
            pltpu.VMEM((rows_pad, Hp), jnp.float32),    # decoder hiddens (batch-major)
        ],
    )(enc_emb, dec_emb,
      kp["w_ih_e"], kp["w_hh_e"], kp["b_ih_e"], kp["b_hh_e"],
      kp["w_ih_d_emb"], kp["w_dec"], kp["b_ih_dec"], kp["b_hh_dn"],
      kp["w_att"], kp["w_lin"], kp["b_lin"])

    # Rows are batch-major (b*T + t) == PyTorch `.view(-1, vocab_size)` order.
    return out[:rows, :V]


if __name__ == "__main__":
    key = jax.random.PRNGKey(0)
    k_params, k_enc, k_dec = jax.random.split(key, 3)

    params = init_params(k_params)
    kparams = prepare_kernel_params(params)

    B = 2
    encoder_X = jax.random.randint(k_enc, (B, SEQ_LENGTH), 0, VOCAB_SIZE,
                                   dtype=jnp.int32)
    decoder_X = jax.random.randint(k_dec, (B, SEQ_LENGTH), 0, VOCAB_SIZE,
                                   dtype=jnp.int32)

    logits = seq2seq_forward(encoder_X, decoder_X, kparams)
    jax.block_until_ready(logits)

    assert logits.shape == (B * SEQ_LENGTH, VOCAB_SIZE)
    assert bool(jnp.all(jnp.isfinite(logits)))
    print("KERNEL_OK")
</pallas_src>

<mosaic_0001>
module attributes {stable_mosaic.version = 11 : i64} {
  func.func @seq2seq_kernel(%arg0: memref<20x64xbf16, #tpu.memory_space<vmem>>, %arg1: memref<20x64xbf16, #tpu.memory_space<vmem>>, %arg2: memref<64x384xbf16, #tpu.memory_space<vmem>>, %arg3: memref<128x384xbf16, #tpu.memory_space<vmem>>, %arg4: memref<1x384xf32, #tpu.memory_space<vmem>>, %arg5: memref<1x384xf32, #tpu.memory_space<vmem>>, %arg6: memref<64x384xbf16, #tpu.memory_space<vmem>>, %arg7: memref<256x512xbf16, #tpu.memory_space<vmem>>, %arg8: memref<1x384xf32, #tpu.memory_space<vmem>>, %arg9: memref<1x128xf32, #tpu.memory_space<vmem>>, %arg10: memref<128x128xbf16, #tpu.memory_space<vmem>>, %arg11: memref<128x128xbf16, #tpu.memory_space<vmem>>, %arg12: memref<1x128xf32, #tpu.memory_space<vmem>>, %arg13: memref<24x128xf32, #tpu.memory_space<vmem>>, %arg14: memref<20x384xf32, #tpu.memory_space<vmem>>, %arg15: memref<20x384xf32, #tpu.memory_space<vmem>>, %arg16: memref<20x128xf32, #tpu.memory_space<vmem>>, %arg17: memref<24x128xf32, #tpu.memory_space<vmem>>) attributes {dimension_semantics = [], scalar_prefetch = 0 : i64, scratch_operands = 4 : i64, tpu.core_type = #tpu.core_type<tc>} {
    %cst = arith.constant 0.000000e+00 : f32
    %0 = vector.broadcast %cst : f32 to vector<24x128xf32>
    %c0 = arith.constant 0 : index
    %c0_0 = arith.constant 0 : index
    %1 = vector.load %arg17[%c0, %c0_0] : memref<24x128xf32, #tpu.memory_space<vmem>>, vector<24x128xf32>
    tpu.vector_store %arg17[%c0, %c0_0], %0 {strides = array<i32>} : memref<24x128xf32, #tpu.memory_space<vmem>>, vector<24x128xf32>,
    %c0_1 = arith.constant 0 : index
    %c0_2 = arith.constant 0 : index
    %2 = vector.load %arg0[%c0_1, %c0_2] : memref<20x64xbf16, #tpu.memory_space<vmem>>, vector<20x64xbf16>
    %c0_3 = arith.constant 0 : index
    %c0_4 = arith.constant 0 : index
    %3 = vector.load %arg2[%c0_3, %c0_4] : memref<64x384xbf16, #tpu.memory_space<vmem>>, vector<64x384xbf16>
    %cst_5 = arith.constant dense<0.000000e+00> : vector<20x384xf32>
    %4 = tpu.matmul %2, %3, %cst_5 {dimension_numbers = #tpu.dot_dimension_numbers<[1], [0], [0], [1], [0, 0, 1, 1], [], []>} : vector<20x64xbf16>, vector<64x384xbf16>, vector<20x384xf32> -> vector<20x384xf32>
    %c0_6 = arith.constant 0 : index
    %c0_7 = arith.constant 0 : index
    %5 = vector.load %arg4[%c0_6, %c0_7] : memref<1x384xf32, #tpu.memory_space<vmem>>, vector<1x384xf32>
    %6 = vector.broadcast %5 : vector<1x384xf32> to vector<20x384xf32>
    %7 = arith.addf %4, %6 : vector<20x384xf32>
    %c0_8 = arith.constant 0 : index
    %c0_9 = arith.constant 0 : index
    %8 = vector.load %arg14[%c0_8, %c0_9] : memref<20x384xf32, #tpu.memory_space<vmem>>, vector<20x384xf32>
    tpu.vector_store %arg14[%c0_8, %c0_9], %7 {strides = array<i32>} : memref<20x384xf32, #tpu.memory_space<vmem>>, vector<20x384xf32>,
    %c0_10 = arith.constant 0 : index
    %c0_11 = arith.constant 0 : index
    %9 = vector.load %arg1[%c0_10, %c0_11] : memref<20x64xbf16, #tpu.memory_space<vmem>>, vector<20x64xbf16>
    %c0_12 = arith.constant 0 : index
    %c0_13 = arith.constant 0 : index
    %10 = vector.load %arg6[%c0_12, %c0_13] : memref<64x384xbf16, #tpu.memory_space<vmem>>, vector<64x384xbf16>
    %cst_14 = arith.constant dense<0.000000e+00> : vector<20x384xf32>
    %11 = tpu.matmul %9, %10, %cst_14 {dimension_numbers = #tpu.dot_dimension_numbers<[1], [0], [0], [1], [0, 0, 1, 1], [], []>} : vector<20x64xbf16>, vector<64x384xbf16>, vector<20x384xf32> -> vector<20x384xf32>
    %c0_15 = arith.constant 0 : index
    %c0_16 = arith.constant 0 : index
    %12 = vector.load %arg8[%c0_15, %c0_16] : memref<1x384xf32, #tpu.memory_space<vmem>>, vector<1x384xf32>
    %13 = vector.broadcast %12 : vector<1x384xf32> to vector<20x384xf32>
    %14 = arith.addf %11, %13 : vector<20x384xf32>
    %c0_17 = arith.constant 0 : index
    %c0_18 = arith.constant 0 : index
    %15 = vector.load %arg15[%c0_17, %c0_18] : memref<20x384xf32, #tpu.memory_space<vmem>>, vector<20x384xf32>
    tpu.vector_store %arg15[%c0_17, %c0_18], %14 {strides = array<i32>} : memref<20x384xf32, #tpu.memory_space<vmem>>, vector<20x384xf32>,
    %c0_19 = arith.constant 0 : index
    %c0_20 = arith.constant 0 : index
    %16 = vector.load %arg5[%c0_19, %c0_20] : memref<1x384xf32, #tpu.memory_space<vmem>>, vector<1x384xf32>
    %17 = vector.shape_cast %16 : vector<1x384xf32> to vector<1x384xf32>
    %18 = vector.broadcast %17 : vector<1x384xf32> to vector<2x384xf32>
    %cst_21 = arith.constant 0.000000e+00 : f32
    %19 = vector.broadcast %cst_21 : f32 to vector<2x128xf32>
    %c0_22 = arith.constant 0 : index
    %c0_23 = arith.constant 0 : index
    %20 = vector.load %arg14[%c0_22, %c0_23] : memref<20x384xf32, #tpu.memory_space<vmem>>, vector<2x384xf32>
    %21 = arith.truncf %19 : vector<2x128xf32> to vector<2x128xbf16>
    %c0_24 = arith.constant 0 : index
    %c0_25 = arith.constant 0 : index
    %22 = vector.load %arg3[%c0_24, %c0_25] : memref<128x384xbf16, #tpu.memory_space<vmem>>, vector<128x384xbf16>
    %cst_26 = arith.constant dense<0.000000e+00> : vector<2x384xf32>
    %23 = tpu.matmul %21, %22, %cst_26 {dimension_numbers = #tpu.dot_dimension_numbers<[1], [0], [0], [1], [0, 0, 1, 1], [], []>} : vector<2x128xbf16>, vector<128x384xbf16>, vector<2x384xf32> -> vector<2x384xf32>
    %24 = arith.addf %23, %18 : vector<2x384xf32>
    %25 = vector.extract_strided_slice %20 {offsets = [0, 0], sizes = [2, 128], strides = [1, 1]} : vector<2x384xf32> to vector<2x128xf32>
    %26 = vector.extract_strided_slice %24 {offsets = [0, 0], sizes = [2, 128], strides = [1, 1]} : vector<2x384xf32> to vector<2x128xf32>
    %27 = arith.addf %25, %26 : vector<2x128xf32>
    %28 = arith.negf %27 : vector<2x128xf32>
    %29 = math.exp %28 : vector<2x128xf32>
    %cst_27 = arith.constant 1.000000e+00 : f32
    %30 = vector.broadcast %cst_27 : f32 to vector<2x128xf32>
    %31 = arith.addf %30, %29 : vector<2x128xf32>
    %32 = arith.divf %30, %31 : vector<2x128xf32>
    %33 = vector.extract_strided_slice %20 {offsets = [0, 128], sizes = [2, 128], strides = [1, 1]} : vector<2x384xf32> to vector<2x128xf32>
    %34 = vector.extract_strided_slice %24 {offsets = [0, 128], sizes = [2, 128], strides = [1, 1]} : vector<2x384xf32> to vector<2x128xf32>
    %35 = arith.addf %33, %34 : vector<2x128xf32>
    %36 = arith.negf %35 : vector<2x128xf32>
    %37 = math.exp %36 : vector<2x128xf32>
    %cst_28 = arith.constant 1.000000e+00 : f32
    %38 = vector.broadcast %cst_28 : f32 to vector<2x128xf32>
    %39 = arith.addf %38, %37 : vector<2x128xf32>
    %40 = arith.divf %38, %39 : vector<2x128xf32>
    %41 = vector.extract_strided_slice %20 {offsets = [0, 256], sizes = [2, 128], strides = [1, 1]} : vector<2x384xf32> to vector<2x128xf32>
    %42 = vector.extract_strided_slice %24 {offsets = [0, 256], sizes = [2, 128], strides = [1, 1]} : vector<2x384xf32> to vector<2x128xf32>
    %43 = arith.mulf %32, %42 : vector<2x128xf32>
    %44 = arith.addf %41, %43 : vector<2x128xf32>
    %45 = math.tanh %44 : vector<2x128xf32>
    %cst_29 = arith.constant 1.000000e+00 : f32
    %46 = vector.broadcast %cst_29 : f32 to vector<2x128xf32>
    %47 = arith.subf %46, %40 : vector<2x128xf32>
    %48 = arith.mulf %47, %45 : vector<2x128xf32>
    %49 = arith.mulf %40, %19 : vector<2x128xf32>
    %50 = arith.addf %48, %49 : vector<2x128xf32>
    %51 = vector.extract_strided_slice %50 {offsets = [0, 0], sizes = [1, 128], strides = [1, 1]} : vector<2x128xf32> to vector<1x128xf32>
    %c0_30 = arith.constant 0 : index
    %c0_31 = arith.constant 0 : index
    %52 = vector.load %arg16[%c0_30, %c0_31] : memref<20x128xf32, #tpu.memory_space<vmem>>, vector<1x128xf32>
    tpu.vector_store %arg16[%c0_30, %c0_31], %51 {strides = array<i32>} : memref<20x128xf32, #tpu.memory_space<vmem>>, vector<1x128xf32>,
    %53 = vector.extract_strided_slice %50 {offsets = [1, 0], sizes = [1, 128], strides = [1, 1]} : vector<2x128xf32> to vector<1x128xf32>
    %c10 = arith.constant 10 : index
    %c0_32 = arith.constant 0 : index
    %54 = vector.load %arg16[%c10, %c0_32] : memref<20x128xf32, #tpu.memory_space<vmem>>, vector<1x128xf32>
    tpu.vector_store %arg16[%c10, %c0_32], %53 {strides = array<i32>} : memref<20x128xf32, #tpu.memory_space<vmem>>, vector<1x128xf32>,
    %c2 = arith.constant 2 : index
    %c0_33 = arith.constant 0 : index
    %55 = vector.load %arg14[%c2, %c0_33] : memref<20x384xf32, #tpu.memory_space<vmem>>, vector<2x384xf32>
    %56 = arith.truncf %50 : vector<2x128xf32> to vector<2x128xbf16>
    %c0_34 = arith.constant 0 : index
    %c0_35 = arith.constant 0 : index
    %57 = vector.load %arg3[%c0_34, %c0_35] : memref<128x384xbf16, #tpu.memory_space<vmem>>, vector<128x384xbf16>
    %cst_36 = arith.constant dense<0.000000e+00> : vector<2x384xf32>
    %58 = tpu.matmul %56, %57, %cst_36 {dimension_numbers = #tpu.dot_dimension_numbers<[1], [0], [0], [1], [0, 0, 1, 1], [], []>} : vector<2x128xbf16>, vector<128x384xbf16>, vector<2x384xf32> -> vector<2x384xf32>
    %59 = arith.addf %58, %18 : vector<2x384xf32>
    %60 = vector.extract_strided_slice %55 {offsets = [0, 0], sizes = [2, 128], strides = [1, 1]} : vector<2x384xf32> to vector<2x128xf32>
    %61 = vector.extract_strided_slice %59 {offsets = [0, 0], sizes = [2, 128], strides = [1, 1]} : vector<2x384xf32> to vector<2x128xf32>
    %62 = arith.addf %60, %61 : vector<2x128xf32>
    %63 = arith.negf %62 : vector<2x128xf32>
    %64 = math.exp %63 : vector<2x128xf32>
    %cst_37 = arith.constant 1.000000e+00 : f32
    %65 = vector.broadcast %cst_37 : f32 to vector<2x128xf32>
    %66 = arith.addf %65, %64 : vector<2x128xf32>
    %67 = arith.divf %65, %66 : vector<2x128xf32>
    %68 = vector.extract_strided_slice %55 {offsets = [0, 128], sizes = [2, 128], strides = [1, 1]} : vector<2x384xf32> to vector<2x128xf32>
    %69 = vector.extract_strided_slice %59 {offsets = [0, 128], sizes = [2, 128], strides = [1, 1]} : vector<2x384xf32> to vector<2x128xf32>
    %70 = arith.addf %68, %69 : vector<2x128xf32>
    %71 = arith.negf %70 : vector<2x128xf32>
    %72 = math.exp %71 : vector<2x128xf32>
    %cst_38 = arith.constant 1.000000e+00 : f32
    %73 = vector.broadcast %cst_38 : f32 to vector<2x128xf32>
    %74 = arith.addf %73, %72 : vector<2x128xf32>
    %75 = arith.divf %73, %74 : vector<2x128xf32>
    %76 = vector.extract_strided_slice %55 {offsets = [0, 256], sizes = [2, 128], strides = [1, 1]} : vector<2x384xf32> to vector<2x128xf32>
    %77 = vector.extract_strided_slice %59 {offsets = [0, 256], sizes = [2, 128], strides = [1, 1]} : vector<2x384xf32> to vector<2x128xf32>
    %78 = arith.mulf %67, %77 : vector<2x128xf32>
    %79 = arith.addf %76, %78 : vector<2x128xf32>
    %80 = math.tanh %79 : vector<2x128xf32>
    %cst_39 = arith.constant 1.000000e+00 : f32
    %81 = vector.broadcast %cst_39 : f32 to vector<2x128xf32>
    %82 = arith.subf %81, %75 : vector<2x128xf32>
    %83 = arith.mulf %82, %80 : vector<2x128xf32>
    %84 = arith.mulf %75, %50 : vector<2x128xf32>
    %85 = arith.addf %83, %84 : vector<2x128xf32>
    %86 = vector.extract_strided_slice %85 {offsets = [0, 0], sizes = [1, 128], strides = [1, 1]} : vector<2x128xf32> to vector<1x128xf32>
    %c1 = arith.constant 1 : index
    %c0_40 = arith.constant 0 : index
    %87 = vector.load %arg16[%c1, %c0_40] : memref<20x128xf32, #tpu.memory_space<vmem>>, vector<1x128xf32>
    tpu.vector_store %arg16[%c1, %c0_40], %86 {strides = array<i32>} : memref<20x128xf32, #tpu.memory_space<vmem>>, vector<1x128xf32>,
    %88 = vector.extract_strided_slice %85 {offsets = [1, 0], sizes = [1, 128], strides = [1, 1]} : vector<2x128xf32> to vector<1x128xf32>
    %c11 = arith.constant 11 : index
    %c0_41 = arith.constant 0 : index
    %89 = vector.load %arg16[%c11, %c0_41] : memref<20x128xf32, #tpu.memory_space<vmem>>, vector<1x128xf32>
    tpu.vector_store %arg16[%c11, %c0_41], %88 {strides = array<i32>} : memref<20x128xf32, #tpu.memory_space<vmem>>, vector<1x128xf32>,
    %c4 = arith.constant 4 : index
    %c0_42 = arith.constant 0 : index
    %90 = vector.load %arg14[%c4, %c0_42] : memref<20x384xf32, #tpu.memory_space<vmem>>, vector<2x384xf32>
    %91 = arith.truncf %85 : vector<2x128xf32> to vector<2x128xbf16>
    %c0_43 = arith.constant 0 : index
    %c0_44 = arith.constant 0 : index
    %92 = vector.load %arg3[%c0_43, %c0_44] : memref<128x384xbf16, #tpu.memory_space<vmem>>, vector<128x384xbf16>
    %cst_45 = arith.constant dense<0.000000e+00> : vector<2x384xf32>
    %93 = tpu.matmul %91, %92, %cst_45 {dimension_numbers = #tpu.dot_dimension_numbers<[1], [0], [0], [1], [0, 0, 1, 1], [], []>} : vector<2x128xbf16>, vector<128x384xbf16>, vector<2x384xf32> -> vector<2x384xf32>
    %94 = arith.addf %93, %18 : vector<2x384xf32>
    %95 = vector.extract_strided_slice %90 {offsets = [0, 0], sizes = [2, 128], strides = [1, 1]} : vector<2x384xf32> to vector<2x128xf32>
    %96 = vector.extract_strided_slice %94 {offsets = [0, 0], sizes = [2, 128], strides = [1, 1]} : vector<2x384xf32> to vector<2x128xf32>
    %97 = arith.addf %95, %96 : vector<2x128xf32>
    %98 = arith.negf %97 : vector<2x128xf32>
    %99 = math.exp %98 : vector<2x128xf32>
    %cst_46 = arith.constant 1.000000e+00 : f32
    %100 = vector.broadcast %cst_46 : f32 to vector<2x128xf32>
    %101 = arith.addf %100, %99 : vector<2x128xf32>
    %102 = arith.divf %100, %101 : vector<2x128xf32>
    %103 = vector.extract_strided_slice %90 {offsets = [0, 128], sizes = [2, 128], strides = [1, 1]} : vector<2x384xf32> to vector<2x128xf32>
    %104 = vector.extract_strided_slice %94 {offsets = [0, 128], sizes = [2, 128], strides = [1, 1]} : vector<2x384xf32> to vector<2x128xf32>
    %105 = arith.addf %103, %104 : vector<2x128xf32>
    %106 = arith.negf %105 : vector<2x128xf32>
    %107 = math.exp %106 : vector<2x128xf32>
    %cst_47 = arith.constant 1.000000e+00 : f32
    %108 = vector.broadcast %cst_47 : f32 to vector<2x128xf32>
    %109 = arith.addf %108, %107 : vector<2x128xf32>
    %110 = arith.divf %108, %109 : vector<2x128xf32>
    %111 = vector.extract_strided_slice %90 {offsets = [0, 256], sizes = [2, 128], strides = [1, 1]} : vector<2x384xf32> to vector<2x128xf32>
    %112 = vector.extract_strided_slice %94 {offsets = [0, 256], sizes = [2, 128], strides = [1, 1]} : vector<2x384xf32> to vector<2x128xf32>
    %113 = arith.mulf %102, %112 : vector<2x128xf32>
    %114 = arith.addf %111, %113 : vector<2x128xf32>
    %115 = math.tanh %114 : vector<2x128xf32>
    %cst_48 = arith.constant 1.000000e+00 : f32
    %116 = vector.broadcast %cst_48 : f32 to vector<2x128xf32>
    %117 = arith.subf %116, %110 : vector<2x128xf32>
    %118 = arith.mulf %117, %115 : vector<2x128xf32>
    %119 = arith.mulf %110, %85 : vector<2x128xf32>
    %120 = arith.addf %118, %119 : vector<2x128xf32>
    %121 = vector.extract_strided_slice %120 {offsets = [0, 0], sizes = [1, 128], strides = [1, 1]} : vector<2x128xf32> to vector<1x128xf32>
    %c2_49 = arith.constant 2 : index
    %c0_50 = arith.constant 0 : index
    %122 = vector.load %arg16[%c2_49, %c0_50] : memref<20x128xf32, #tpu.memory_space<vmem>>, vector<1x128xf32>
    tpu.vector_store %arg16[%c2_49, %c0_50], %121 {strides = array<i32>} : memref<20x128xf32, #tpu.memory_space<vmem>>, vector<1x128xf32>,
    %123 = vector.extract_strided_slice %120 {offsets = [1, 0], sizes = [1, 128], strides = [1, 1]} : vector<2x128xf32> to vector<1x128xf32>
    %c12 = arith.constant 12 : index
    %c0_51 = arith.constant 0 : index
    %124 = vector.load %arg16[%c12, %c0_51] : memref<20x128xf32, #tpu.memory_space<vmem>>, vector<1x128xf32>
    tpu.vector_store %arg16[%c12, %c0_51], %123 {strides = array<i32>} : memref<20x128xf32, #tpu.memory_space<vmem>>, vector<1x128xf32>,
    %c6 = arith.constant 6 : index
    %c0_52 = arith.constant 0 : index
    %125 = vector.load %arg14[%c6, %c0_52] : memref<20x384xf32, #tpu.memory_space<vmem>>, vector<2x384xf32>
    %126 = arith.truncf %120 : vector<2x128xf32> to vector<2x128xbf16>
    %c0_53 = arith.constant 0 : index
    %c0_54 = arith.constant 0 : index
    %127 = vector.load %arg3[%c0_53, %c0_54] : memref<128x384xbf16, #tpu.memory_space<vmem>>, vector<128x384xbf16>
    %cst_55 = arith.constant dense<0.000000e+00> : vector<2x384xf32>
    %128 = tpu.matmul %126, %127, %cst_55 {dimension_numbers = #tpu.dot_dimension_numbers<[1], [0], [0], [1], [0, 0, 1, 1], [], []>} : vector<2x128xbf16>, vector<128x384xbf16>, vector<2x384xf32> -> vector<2x384xf32>
    %129 = arith.addf %128, %18 : vector<2x384xf32>
    %130 = vector.extract_strided_slice %125 {offsets = [0, 0], sizes = [2, 128], strides = [1, 1]} : vector<2x384xf32> to vector<2x128xf32>
    %131 = vector.extract_strided_slice %129 {offsets = [0, 0], sizes = [2, 128], strides = [1, 1]} : vector<2x384xf32> to vector<2x128xf32>
    %132 = arith.addf %130, %131 : vector<2x128xf32>
    %133 = arith.negf %132 : vector<2x128xf32>
    %134 = math.exp %133 : vector<2x128xf32>
    %cst_56 = arith.constant 1.000000e+00 : f32
    %135 = vector.broadcast %cst_56 : f32 to vector<2x128xf32>
    %136 = arith.addf %135, %134 : vector<2x128xf32>
    %137 = arith.divf %135, %136 : vector<2x128xf32>
    %138 = vector.extract_strided_slice %125 {offsets = [0, 128], sizes = [2, 128], strides = [1, 1]} : vector<2x384xf32> to vector<2x128xf32>
    %139 = vector.extract_strided_slice %129 {offsets = [0, 128], sizes = [2, 128], strides = [1, 1]} : vector<2x384xf32> to vector<2x128xf32>
    %140 = arith.addf %138, %139 : vector<2x128xf32>
    %141 = arith.negf %140 : vector<2x128xf32>
    %142 = math.exp %141 : vector<2x128xf32>
    %cst_57 = arith.constant 1.000000e+00 : f32
    %143 = vector.broadcast %cst_57 : f32 to vector<2x128xf32>
    %144 = arith.addf %143, %142 : vector<2x128xf32>
    %145 = arith.divf %143, %144 : vector<2x128xf32>
    %146 = vector.extract_strided_slice %125 {offsets = [0, 256], sizes = [2, 128], strides = [1, 1]} : vector<2x384xf32> to vector<2x128xf32>
    %147 = vector.extract_strided_slice %129 {offsets = [0, 256], sizes = [2, 128], strides = [1, 1]} : vector<2x384xf32> to vector<2x128xf32>
    %148 = arith.mulf %137, %147 : vector<2x128xf32>
    %149 = arith.addf %146, %148 : vector<2x128xf32>
    %150 = math.tanh %149 : vector<2x128xf32>
    %cst_58 = arith.constant 1.000000e+00 : f32
    %151 = vector.broadcast %cst_58 : f32 to vector<2x128xf32>
    %152 = arith.subf %151, %145 : vector<2x128xf32>
    %153 = arith.mulf %152, %150 : vector<2x128xf32>
    %154 = arith.mulf %145, %120 : vector<2x128xf32>
    %155 = arith.addf %153, %154 : vector<2x128xf32>
    %156 = vector.extract_strided_slice %155 {offsets = [0, 0], sizes = [1, 128], strides = [1, 1]} : vector<2x128xf32> to vector<1x128xf32>
    %c3 = arith.constant 3 : index
    %c0_59 = arith.constant 0 : index
    %157 = vector.load %arg16[%c3, %c0_59] : memref<20x128xf32, #tpu.memory_space<vmem>>, vector<1x128xf32>
    tpu.vector_store %arg16[%c3, %c0_59], %156 {strides = array<i32>} : memref<20x128xf32, #tpu.memory_space<vmem>>, vector<1x128xf32>,
    %158 = vector.extract_strided_slice %155 {offsets = [1, 0], sizes = [1, 128], strides = [1, 1]} : vector<2x128xf32> to vector<1x128xf32>
    %c13 = arith.constant 13 : index
    %c0_60 = arith.constant 0 : index
    %159 = vector.load %arg16[%c13, %c0_60] : memref<20x128xf32, #tpu.memory_space<vmem>>, vector<1x128xf32>
    tpu.vector_store %arg16[%c13, %c0_60], %158 {strides = array<i32>} : memref<20x128xf32, #tpu.memory_space<vmem>>, vector<1x128xf32>,
    %c8 = arith.constant 8 : index
    %c0_61 = arith.constant 0 : index
    %160 = vector.load %arg14[%c8, %c0_61] : memref<20x384xf32, #tpu.memory_space<vmem>>, vector<2x384xf32>
    %161 = arith.truncf %155 : vector<2x128xf32> to vector<2x128xbf16>
    %c0_62 = arith.constant 0 : index
    %c0_63 = arith.constant 0 : index
    %162 = vector.load %arg3[%c0_62, %c0_63] : memref<128x384xbf16, #tpu.memory_space<vmem>>, vector<128x384xbf16>
    %cst_64 = arith.constant dense<0.000000e+00> : vector<2x384xf32>
    %163 = tpu.matmul %161, %162, %cst_64 {dimension_numbers = #tpu.dot_dimension_numbers<[1], [0], [0], [1], [0, 0, 1, 1], [], []>} : vector<2x128xbf16>, vector<128x384xbf16>, vector<2x384xf32> -> vector<2x384xf32>
    %164 = arith.addf %163, %18 : vector<2x384xf32>
    %165 = vector.extract_strided_slice %160 {offsets = [0, 0], sizes = [2, 128], strides = [1, 1]} : vector<2x384xf32> to vector<2x128xf32>
    %166 = vector.extract_strided_slice %164 {offsets = [0, 0], sizes = [2, 128], strides = [1, 1]} : vector<2x384xf32> to vector<2x128xf32>
    %167 = arith.addf %165, %166 : vector<2x128xf32>
    %168 = arith.negf %167 : vector<2x128xf32>
    %169 = math.exp %168 : vector<2x128xf32>
    %cst_65 = arith.constant 1.000000e+00 : f32
    %170 = vector.broadcast %cst_65 : f32 to vector<2x128xf32>
    %171 = arith.addf %170, %169 : vector<2x128xf32>
    %172 = arith.divf %170, %171 : vector<2x128xf32>
    %173 = vector.extract_strided_slice %160 {offsets = [0, 128], sizes = [2, 128], strides = [1, 1]} : vector<2x384xf32> to vector<2x128xf32>
    %174 = vector.extract_strided_slice %164 {offsets = [0, 128], sizes = [2, 128], strides = [1, 1]} : vector<2x384xf32> to vector<2x128xf32>
    %175 = arith.addf %173, %174 : vector<2x128xf32>
    %176 = arith.negf %175 : vector<2x128xf32>
    %177 = math.exp %176 : vector<2x128xf32>
    %cst_66 = arith.constant 1.000000e+00 : f32
    %178 = vector.broadcast %cst_66 : f32 to vector<2x128xf32>
    %179 = arith.addf %178, %177 : vector<2x128xf32>
    %180 = arith.divf %178, %179 : vector<2x128xf32>
    %181 = vector.extract_strided_slice %160 {offsets = [0, 256], sizes = [2, 128], strides = [1, 1]} : vector<2x384xf32> to vector<2x128xf32>
    %182 = vector.extract_strided_slice %164 {offsets = [0, 256], sizes = [2, 128], strides = [1, 1]} : vector<2x384xf32> to vector<2x128xf32>
    %183 = arith.mulf %172, %182 : vector<2x128xf32>
    %184 = arith.addf %181, %183 : vector<2x128xf32>
    %185 = math.tanh %184 : vector<2x128xf32>
    %cst_67 = arith.constant 1.000000e+00 : f32
    %186 = vector.broadcast %cst_67 : f32 to vector<2x128xf32>
    %187 = arith.subf %186, %180 : vector<2x128xf32>
    %188 = arith.mulf %187, %185 : vector<2x128xf32>
    %189 = arith.mulf %180, %155 : vector<2x128xf32>
    %190 = arith.addf %188, %189 : vector<2x128xf32>
    %191 = vector.extract_strided_slice %190 {offsets = [0, 0], sizes = [1, 128], strides = [1, 1]} : vector<2x128xf32> to vector<1x128xf32>
    %c4_68 = arith.constant 4 : index
    %c0_69 = arith.constant 0 : index
    %192 = vector.load %arg16[%c4_68, %c0_69] : memref<20x128xf32, #tpu.memory_space<vmem>>, vector<1x128xf32>
    tpu.vector_store %arg16[%c4_68, %c0_69], %191 {strides = array<i32>} : memref<20x128xf32, #tpu.memory_space<vmem>>, vector<1x128xf32>,
    %193 = vector.extract_strided_slice %190 {offsets = [1, 0], sizes = [1, 128], strides = [1, 1]} : vector<2x128xf32> to vector<1x128xf32>
    %c14 = arith.constant 14 : index
    %c0_70 = arith.constant 0 : index
    %194 = vector.load %arg16[%c14, %c0_70] : memref<20x128xf32, #tpu.memory_space<vmem>>, vector<1x128xf32>
    tpu.vector_store %arg16[%c14, %c0_70], %193 {strides = array<i32>} : memref<20x128xf32, #tpu.memory_space<vmem>>, vector<1x128xf32>,
    %c10_71 = arith.constant 10 : index
    %c0_72 = arith.constant 0 : index
    %195 = vector.load %arg14[%c10_71, %c0_72] : memref<20x384xf32, #tpu.memory_space<vmem>>, vector<2x384xf32>
    %196 = arith.truncf %190 : vector<2x128xf32> to vector<2x128xbf16>
    %c0_73 = arith.constant 0 : index
    %c0_74 = arith.constant 0 : index
    %197 = vector.load %arg3[%c0_73, %c0_74] : memref<128x384xbf16, #tpu.memory_space<vmem>>, vector<128x384xbf16>
    %cst_75 = arith.constant dense<0.000000e+00> : vector<2x384xf32>
    %198 = tpu.matmul %196, %197, %cst_75 {dimension_numbers = #tpu.dot_dimension_numbers<[1], [0], [0], [1], [0, 0, 1, 1], [], []>} : vector<2x128xbf16>, vector<128x384xbf16>, vector<2x384xf32> -> vector<2x384xf32>
    %199 = arith.addf %198, %18 : vector<2x384xf32>
    %200 = vector.extract_strided_slice %195 {offsets = [0, 0], sizes = [2, 128], strides = [1, 1]} : vector<2x384xf32> to vector<2x128xf32>
    %201 = vector.extract_strided_slice %199 {offsets = [0, 0], sizes = [2, 128], strides = [1, 1]} : vector<2x384xf32> to vector<2x128xf32>
    %202 = arith.addf %200, %201 : vector<2x128xf32>
    %203 = arith.negf %202 : vector<2x128xf32>
    %204 = math.exp %203 : vector<2x128xf32>
    %cst_76 = arith.constant 1.000000e+00 : f32
    %205 = vector.broadcast %cst_76 : f32 to vector<2x128xf32>
    %206 = arith.addf %205, %204 : vector<2x128xf32>
    %207 = arith.divf %205, %206 : vector<2x128xf32>
    %208 = vector.extract_strided_slice %195 {offsets = [0, 128], sizes = [2, 128], strides = [1, 1]} : vector<2x384xf32> to vector<2x128xf32>
    %209 = vector.extract_strided_slice %199 {offsets = [0, 128], sizes = [2, 128], strides = [1, 1]} : vector<2x384xf32> to vector<2x128xf32>
    %210 = arith.addf %208, %209 : vector<2x128xf32>
    %211 = arith.negf %210 : vector<2x128xf32>
    %212 = math.exp %211 : vector<2x128xf32>
    %cst_77 = arith.constant 1.000000e+00 : f32
    %213 = vector.broadcast %cst_77 : f32 to vector<2x128xf32>
    %214 = arith.addf %213, %212 : vector<2x128xf32>
    %215 = arith.divf %213, %214 : vector<2x128xf32>
    %216 = vector.extract_strided_slice %195 {offsets = [0, 256], sizes = [2, 128], strides = [1, 1]} : vector<2x384xf32> to vector<2x128xf32>
    %217 = vector.extract_strided_slice %199 {offsets = [0, 256], sizes = [2, 128], strides = [1, 1]} : vector<2x384xf32> to vector<2x128xf32>
    %218 = arith.mulf %207, %217 : vector<2x128xf32>
    %219 = arith.addf %216, %218 : vector<2x128xf32>
    %220 = math.tanh %219 : vector<2x128xf32>
    %cst_78 = arith.constant 1.000000e+00 : f32
    %221 = vector.broadcast %cst_78 : f32 to vector<2x128xf32>
    %222 = arith.subf %221, %215 : vector<2x128xf32>
    %223 = arith.mulf %222, %220 : vector<2x128xf32>
    %224 = arith.mulf %215, %190 : vector<2x128xf32>
    %225 = arith.addf %223, %224 : vector<2x128xf32>
    %226 = vector.extract_strided_slice %225 {offsets = [0, 0], sizes = [1, 128], strides = [1, 1]} : vector<2x128xf32> to vector<1x128xf32>
    %c5 = arith.constant 5 : index
    %c0_79 = arith.constant 0 : index
    %227 = vector.load %arg16[%c5, %c0_79] : memref<20x128xf32, #tpu.memory_space<vmem>>, vector<1x128xf32>
    tpu.vector_store %arg16[%c5, %c0_79], %226 {strides = array<i32>} : memref<20x128xf32, #tpu.memory_space<vmem>>, vector<1x128xf32>,
    %228 = vector.extract_strided_slice %225 {offsets = [1, 0], sizes = [1, 128], strides = [1, 1]} : vector<2x128xf32> to vector<1x128xf32>
    %c15 = arith.constant 15 : index
    %c0_80 = arith.constant 0 : index
    %229 = vector.load %arg16[%c15, %c0_80] : memref<20x128xf32, #tpu.memory_space<vmem>>, vector<1x128xf32>
    tpu.vector_store %arg16[%c15, %c0_80], %228 {strides = array<i32>} : memref<20x128xf32, #tpu.memory_space<vmem>>, vector<1x128xf32>,
    %c12_81 = arith.constant 12 : index
    %c0_82 = arith.constant 0 : index
    %230 = vector.load %arg14[%c12_81, %c0_82] : memref<20x384xf32, #tpu.memory_space<vmem>>, vector<2x384xf32>
    %231 = arith.truncf %225 : vector<2x128xf32> to vector<2x128xbf16>
    %c0_83 = arith.constant 0 : index
    %c0_84 = arith.constant 0 : index
    %232 = vector.load %arg3[%c0_83, %c0_84] : memref<128x384xbf16, #tpu.memory_space<vmem>>, vector<128x384xbf16>
    %cst_85 = arith.constant dense<0.000000e+00> : vector<2x384xf32>
    %233 = tpu.matmul %231, %232, %cst_85 {dimension_numbers = #tpu.dot_dimension_numbers<[1], [0], [0], [1], [0, 0, 1, 1], [], []>} : vector<2x128xbf16>, vector<128x384xbf16>, vector<2x384xf32> -> vector<2x384xf32>
    %234 = arith.addf %233, %18 : vector<2x384xf32>
    %235 = vector.extract_strided_slice %230 {offsets = [0, 0], sizes = [2, 128], strides = [1, 1]} : vector<2x384xf32> to vector<2x128xf32>
    %236 = vector.extract_strided_slice %234 {offsets = [0, 0], sizes = [2, 128], strides = [1, 1]} : vector<2x384xf32> to vector<2x128xf32>
    %237 = arith.addf %235, %236 : vector<2x128xf32>
    %238 = arith.negf %237 : vector<2x128xf32>
    %239 = math.exp %238 : vector<2x128xf32>
    %cst_86 = arith.constant 1.000000e+00 : f32
    %240 = vector.broadcast %cst_86 : f32 to vector<2x128xf32>
    %241 = arith.addf %240, %239 : vector<2x128xf32>
    %242 = arith.divf %240, %241 : vector<2x128xf32>
    %243 = vector.extract_strided_slice %230 {offsets = [0, 128], sizes = [2, 128], strides = [1, 1]} : vector<2x384xf32> to vector<2x128xf32>
    %244 = vector.extract_strided_slice %234 {offsets = [0, 128], sizes = [2, 128], strides = [1, 1]} : vector<2x384xf32> to vector<2x128xf32>
    %245 = arith.addf %243, %244 : vector<2x128xf32>
    %246 = arith.negf %245 : vector<2x128xf32>
    %247 = math.exp %246 : vector<2x128xf32>
    %cst_87 = arith.constant 1.000000e+00 : f32
    %248 = vector.broadcast %cst_87 : f32 to vector<2x128xf32>
    %249 = arith.addf %248, %247 : vector<2x128xf32>
    %250 = arith.divf %248, %249 : vector<2x128xf32>
    %251 = vector.extract_strided_slice %230 {offsets = [0, 256], sizes = [2, 128], strides = [1, 1]} : vector<2x384xf32> to vector<2x128xf32>
    %252 = vector.extract_strided_slice %234 {offsets = [0, 256], sizes = [2, 128], strides = [1, 1]} : vector<2x384xf32> to vector<2x128xf32>
    %253 = arith.mulf %242, %252 : vector<2x128xf32>
    %254 = arith.addf %251, %253 : vector<2x128xf32>
    %255 = math.tanh %254 : vector<2x128xf32>
    %cst_88 = arith.constant 1.000000e+00 : f32
    %256 = vector.broadcast %cst_88 : f32 to vector<2x128xf32>
    %257 = arith.subf %256, %250 : vector<2x128xf32>
    %258 = arith.mulf %257, %255 : vector<2x128xf32>
    %259 = arith.mulf %250, %225 : vector<2x128xf32>
    %260 = arith.addf %258, %259 : vector<2x128xf32>
    %261 = vector.extract_strided_slice %260 {offsets = [0, 0], sizes = [1, 128], strides = [1, 1]} : vector<2x128xf32> to vector<1x128xf32>
    %c6_89 = arith.constant 6 : index
    %c0_90 = arith.constant 0 : index
    %262 = vector.load %arg16[%c6_89, %c0_90] : memref<20x128xf32, #tpu.memory_space<vmem>>, vector<1x128xf32>
    tpu.vector_store %arg16[%c6_89, %c0_90], %261 {strides = array<i32>} : memref<20x128xf32, #tpu.memory_space<vmem>>, vector<1x128xf32>,
    %263 = vector.extract_strided_slice %260 {offsets = [1, 0], sizes = [1, 128], strides = [1, 1]} : vector<2x128xf32> to vector<1x128xf32>
    %c16 = arith.constant 16 : index
    %c0_91 = arith.constant 0 : index
    %264 = vector.load %arg16[%c16, %c0_91] : memref<20x128xf32, #tpu.memory_space<vmem>>, vector<1x128xf32>
    tpu.vector_store %arg16[%c16, %c0_91], %263 {strides = array<i32>} : memref<20x128xf32, #tpu.memory_space<vmem>>, vector<1x128xf32>,
    %c14_92 = arith.constant 14 : index
    %c0_93 = arith.constant 0 : index
    %265 = vector.load %arg14[%c14_92, %c0_93] : memref<20x384xf32, #tpu.memory_space<vmem>>, vector<2x384xf32>
    %266 = arith.truncf %260 : vector<2x128xf32> to vector<2x128xbf16>
    %c0_94 = arith.constant 0 : index
    %c0_95 = arith.constant 0 : index
    %267 = vector.load %arg3[%c0_94, %c0_95] : memref<128x384xbf16, #tpu.memory_space<vmem>>, vector<128x384xbf16>
    %cst_96 = arith.constant dense<0.000000e+00> : vector<2x384xf32>
    %268 = tpu.matmul %266, %267, %cst_96 {dimension_numbers = #tpu.dot_dimension_numbers<[1], [0], [0], [1], [0, 0, 1, 1], [], []>} : vector<2x128xbf16>, vector<128x384xbf16>, vector<2x384xf32> -> vector<2x384xf32>
    %269 = arith.addf %268, %18 : vector<2x384xf32>
    %270 = vector.extract_strided_slice %265 {offsets = [0, 0], sizes = [2, 128], strides = [1, 1]} : vector<2x384xf32> to vector<2x128xf32>
    %271 = vector.extract_strided_slice %269 {offsets = [0, 0], sizes = [2, 128], strides = [1, 1]} : vector<2x384xf32> to vector<2x128xf32>
    %272 = arith.addf %270, %271 : vector<2x128xf32>
    %273 = arith.negf %272 : vector<2x128xf32>
    %274 = math.exp %273 : vector<2x128xf32>
    %cst_97 = arith.constant 1.000000e+00 : f32
    %275 = vector.broadcast %cst_97 : f32 to vector<2x128xf32>
    %276 = arith.addf %275, %274 : vector<2x128xf32>
    %277 = arith.divf %275, %276 : vector<2x128xf32>
    %278 = vector.extract_strided_slice %265 {offsets = [0, 128], sizes = [2, 128], strides = [1, 1]} : vector<2x384xf32> to vector<2x128xf32>
    %279 = vector.extract_strided_slice %269 {offsets = [0, 128], sizes = [2, 128], strides = [1, 1]} : vector<2x384xf32> to vector<2x128xf32>
    %280 = arith.addf %278, %279 : vector<2x128xf32>
    %281 = arith.negf %280 : vector<2x128xf32>
    %282 = math.exp %281 : vector<2x128xf32>
    %cst_98 = arith.constant 1.000000e+00 : f32
    %283 = vector.broadcast %cst_98 : f32 to vector<2x128xf32>
    %284 = arith.addf %283, %282 : vector<2x128xf32>
    %285 = arith.divf %283, %284 : vector<2x128xf32>
    %286 = vector.extract_strided_slice %265 {offsets = [0, 256], sizes = [2, 128], strides = [1, 1]} : vector<2x384xf32> to vector<2x128xf32>
    %287 = vector.extract_strided_slice %269 {offsets = [0, 256], sizes = [2, 128], strides = [1, 1]} : vector<2x384xf32> to vector<2x128xf32>
    %288 = arith.mulf %277, %287 : vector<2x128xf32>
    %289 = arith.addf %286, %288 : vector<2x128xf32>
    %290 = math.tanh %289 : vector<2x128xf32>
    %cst_99 = arith.constant 1.000000e+00 : f32
    %291 = vector.broadcast %cst_99 : f32 to vector<2x128xf32>
    %292 = arith.subf %291, %285 : vector<2x128xf32>
    %293 = arith.mulf %292, %290 : vector<2x128xf32>
    %294 = arith.mulf %285, %260 : vector<2x128xf32>
    %295 = arith.addf %293, %294 : vector<2x128xf32>
    %296 = vector.extract_strided_slice %295 {offsets = [0, 0], sizes = [1, 128], strides = [1, 1]} : vector<2x128xf32> to vector<1x128xf32>
    %c7 = arith.constant 7 : index
    %c0_100 = arith.constant 0 : index
    %297 = vector.load %arg16[%c7, %c0_100] : memref<20x128xf32, #tpu.memory_space<vmem>>, vector<1x128xf32>
    tpu.vector_store %arg16[%c7, %c0_100], %296 {strides = array<i32>} : memref<20x128xf32, #tpu.memory_space<vmem>>, vector<1x128xf32>,
    %298 = vector.extract_strided_slice %295 {offsets = [1, 0], sizes = [1, 128], strides = [1, 1]} : vector<2x128xf32> to vector<1x128xf32>
    %c17 = arith.constant 17 : index
    %c0_101 = arith.constant 0 : index
    %299 = vector.load %arg16[%c17, %c0_101] : memref<20x128xf32, #tpu.memory_space<vmem>>, vector<1x128xf32>
    tpu.vector_store %arg16[%c17, %c0_101], %298 {strides = array<i32>} : memref<20x128xf32, #tpu.memory_space<vmem>>, vector<1x128xf32>,
    %c16_102 = arith.constant 16 : index
    %c0_103 = arith.constant 0 : index
    %300 = vector.load %arg14[%c16_102, %c0_103] : memref<20x384xf32, #tpu.memory_space<vmem>>, vector<2x384xf32>
    %301 = arith.truncf %295 : vector<2x128xf32> to vector<2x128xbf16>
    %c0_104 = arith.constant 0 : index
    %c0_105 = arith.constant 0 : index
    %302 = vector.load %arg3[%c0_104, %c0_105] : memref<128x384xbf16, #tpu.memory_space<vmem>>, vector<128x384xbf16>
    %cst_106 = arith.constant dense<0.000000e+00> : vector<2x384xf32>
    %303 = tpu.matmul %301, %302, %cst_106 {dimension_numbers = #tpu.dot_dimension_numbers<[1], [0], [0], [1], [0, 0, 1, 1], [], []>} : vector<2x128xbf16>, vector<128x384xbf16>, vector<2x384xf32> -> vector<2x384xf32>
    %304 = arith.addf %303, %18 : vector<2x384xf32>
    %305 = vector.extract_strided_slice %300 {offsets = [0, 0], sizes = [2, 128], strides = [1, 1]} : vector<2x384xf32> to vector<2x128xf32>
    %306 = vector.extract_strided_slice %304 {offsets = [0, 0], sizes = [2, 128], strides = [1, 1]} : vector<2x384xf32> to vector<2x128xf32>
    %307 = arith.addf %305, %306 : vector<2x128xf32>
    %308 = arith.negf %307 : vector<2x128xf32>
    %309 = math.exp %308 : vector<2x128xf32>
    %cst_107 = arith.constant 1.000000e+00 : f32
    %310 = vector.broadcast %cst_107 : f32 to vector<2x128xf32>
    %311 = arith.addf %310, %309 : vector<2x128xf32>
    %312 = arith.divf %310, %311 : vector<2x128xf32>
    %313 = vector.extract_strided_slice %300 {offsets = [0, 128], sizes = [2, 128], strides = [1, 1]} : vector<2x384xf32> to vector<2x128xf32>
    %314 = vector.extract_strided_slice %304 {offsets = [0, 128], sizes = [2, 128], strides = [1, 1]} : vector<2x384xf32> to vector<2x128xf32>
    %315 = arith.addf %313, %314 : vector<2x128xf32>
    %316 = arith.negf %315 : vector<2x128xf32>
    %317 = math.exp %316 : vector<2x128xf32>
    %cst_108 = arith.constant 1.000000e+00 : f32
    %318 = vector.broadcast %cst_108 : f32 to vector<2x128xf32>
    %319 = arith.addf %318, %317 : vector<2x128xf32>
    %320 = arith.divf %318, %319 : vector<2x128xf32>
    %321 = vector.extract_strided_slice %300 {offsets = [0, 256], sizes = [2, 128], strides = [1, 1]} : vector<2x384xf32> to vector<2x128xf32>
    %322 = vector.extract_strided_slice %304 {offsets = [0, 256], sizes = [2, 128], strides = [1, 1]} : vector<2x384xf32> to vector<2x128xf32>
    %323 = arith.mulf %312, %322 : vector<2x128xf32>
    %324 = arith.addf %321, %323 : vector<2x128xf32>
    %325 = math.tanh %324 : vector<2x128xf32>
    %cst_109 = arith.constant 1.000000e+00 : f32
    %326 = vector.broadcast %cst_109 : f32 to vector<2x128xf32>
    %327 = arith.subf %326, %320 : vector<2x128xf32>
    %328 = arith.mulf %327, %325 : vector<2x128xf32>
    %329 = arith.mulf %320, %295 : vector<2x128xf32>
    %330 = arith.addf %328, %329 : vector<2x128xf32>
    %331 = vector.extract_strided_slice %330 {offsets = [0, 0], sizes = [1, 128], strides = [1, 1]} : vector<2x128xf32> to vector<1x128xf32>
    %c8_110 = arith.constant 8 : index
    %c0_111 = arith.constant 0 : index
    %332 = vector.load %arg16[%c8_110, %c0_111] : memref<20x128xf32, #tpu.memory_space<vmem>>, vector<1x128xf32>
    tpu.vector_store %arg16[%c8_110, %c0_111], %331 {strides = array<i32>} : memref<20x128xf32, #tpu.memory_space<vmem>>, vector<1x128xf32>,
    %333 = vector.extract_strided_slice %330 {offsets = [1, 0], sizes = [1, 128], strides = [1, 1]} : vector<2x128xf32> to vector<1x128xf32>
    %c18 = arith.constant 18 : index
    %c0_112 = arith.constant 0 : index
    %334 = vector.load %arg16[%c18, %c0_112] : memref<20x128xf32, #tpu.memory_space<vmem>>, vector<1x128xf32>
    tpu.vector_store %arg16[%c18, %c0_112], %333 {strides = array<i32>} : memref<20x128xf32, #tpu.memory_space<vmem>>, vector<1x128xf32>,
    %c18_113 = arith.constant 18 : index
    %c0_114 = arith.constant 0 : index
    %335 = vector.load %arg14[%c18_113, %c0_114] : memref<20x384xf32, #tpu.memory_space<vmem>>, vector<2x384xf32>
    %336 = arith.truncf %330 : vector<2x128xf32> to vector<2x128xbf16>
    %c0_115 = arith.constant 0 : index
    %c0_116 = arith.constant 0 : index
    %337 = vector.load %arg3[%c0_115, %c0_116] : memref<128x384xbf16, #tpu.memory_space<vmem>>, vector<128x384xbf16>
    %cst_117 = arith.constant dense<0.000000e+00> : vector<2x384xf32>
    %338 = tpu.matmul %336, %337, %cst_117 {dimension_numbers = #tpu.dot_dimension_numbers<[1], [0], [0], [1], [0, 0, 1, 1], [], []>} : vector<2x128xbf16>, vector<128x384xbf16>, vector<2x384xf32> -> vector<2x384xf32>
    %339 = arith.addf %338, %18 : vector<2x384xf32>
    %340 = vector.extract_strided_slice %335 {offsets = [0, 0], sizes = [2, 128], strides = [1, 1]} : vector<2x384xf32> to vector<2x128xf32>
    %341 = vector.extract_strided_slice %339 {offsets = [0, 0], sizes = [2, 128], strides = [1, 1]} : vector<2x384xf32> to vector<2x128xf32>
    %342 = arith.addf %340, %341 : vector<2x128xf32>
    %343 = arith.negf %342 : vector<2x128xf32>
    %344 = math.exp %343 : vector<2x128xf32>
    %cst_118 = arith.constant 1.000000e+00 : f32
    %345 = vector.broadcast %cst_118 : f32 to vector<2x128xf32>
    %346 = arith.addf %345, %344 : vector<2x128xf32>
    %347 = arith.divf %345, %346 : vector<2x128xf32>
    %348 = vector.extract_strided_slice %335 {offsets = [0, 128], sizes = [2, 128], strides = [1, 1]} : vector<2x384xf32> to vector<2x128xf32>
    %349 = vector.extract_strided_slice %339 {offsets = [0, 128], sizes = [2, 128], strides = [1, 1]} : vector<2x384xf32> to vector<2x128xf32>
    %350 = arith.addf %348, %349 : vector<2x128xf32>
    %351 = arith.negf %350 : vector<2x128xf32>
    %352 = math.exp %351 : vector<2x128xf32>
    %cst_119 = arith.constant 1.000000e+00 : f32
    %353 = vector.broadcast %cst_119 : f32 to vector<2x128xf32>
    %354 = arith.addf %353, %352 : vector<2x128xf32>
    %355 = arith.divf %353, %354 : vector<2x128xf32>
    %356 = vector.extract_strided_slice %335 {offsets = [0, 256], sizes = [2, 128], strides = [1, 1]} : vector<2x384xf32> to vector<2x128xf32>
    %357 = vector.extract_strided_slice %339 {offsets = [0, 256], sizes = [2, 128], strides = [1, 1]} : vector<2x384xf32> to vector<2x128xf32>
    %358 = arith.mulf %347, %357 : vector<2x128xf32>
    %359 = arith.addf %356, %358 : vector<2x128xf32>
    %360 = math.tanh %359 : vector<2x128xf32>
    %cst_120 = arith.constant 1.000000e+00 : f32
    %361 = vector.broadcast %cst_120 : f32 to vector<2x128xf32>
    %362 = arith.subf %361, %355 : vector<2x128xf32>
    %363 = arith.mulf %362, %360 : vector<2x128xf32>
    %364 = arith.mulf %355, %330 : vector<2x128xf32>
    %365 = arith.addf %363, %364 : vector<2x128xf32>
    %366 = vector.extract_strided_slice %365 {offsets = [0, 0], sizes = [1, 128], strides = [1, 1]} : vector<2x128xf32> to vector<1x128xf32>
    %c9 = arith.constant 9 : index
    %c0_121 = arith.constant 0 : index
    %367 = vector.load %arg16[%c9, %c0_121] : memref<20x128xf32, #tpu.memory_space<vmem>>, vector<1x128xf32>
    tpu.vector_store %arg16[%c9, %c0_121], %366 {strides = array<i32>} : memref<20x128xf32, #tpu.memory_space<vmem>>, vector<1x128xf32>,
    %368 = vector.extract_strided_slice %365 {offsets = [1, 0], sizes = [1, 128], strides = [1, 1]} : vector<2x128xf32> to vector<1x128xf32>
    %c19 = arith.constant 19 : index
    %c0_122 = arith.constant 0 : index
    %369 = vector.load %arg16[%c19, %c0_122] : memref<20x128xf32, #tpu.memory_space<vmem>>, vector<1x128xf32>
    tpu.vector_store %arg16[%c19, %c0_122], %368 {strides = array<i32>} : memref<20x128xf32, #tpu.memory_space<vmem>>, vector<1x128xf32>,
    %c0_123 = arith.constant 0 : index
    %c0_124 = arith.constant 0 : index
    %370 = vector.load %arg16[%c0_123, %c0_124] : memref<20x128xf32, #tpu.memory_space<vmem>>, vector<20x128xf32>
    %371 = arith.truncf %370 : vector<20x128xf32> to vector<20x128xbf16>
    %c0_125 = arith.constant 0 : index
    %c0_126 = arith.constant 0 : index
    %372 = vector.load %arg10[%c0_125, %c0_126] : memref<128x128xbf16, #tpu.memory_space<vmem>>, vector<128x128xbf16>
    %cst_127 = arith.constant dense<0.000000e+00> : vector<20x128xf32>
    %373 = tpu.matmul %371, %372, %cst_127 {dimension_numbers = #tpu.dot_dimension_numbers<[1], [0], [0], [1], [0, 0, 1, 1], [], []>} : vector<20x128xbf16>, vector<128x128xbf16>, vector<20x128xf32> -> vector<20x128xf32>
    %374 = vector.shape_cast %370 : vector<20x128xf32> to vector<2x10x128xf32>
    %375 = vector.shape_cast %373 : vector<20x128xf32> to vector<2x10x128xf32>
    %c0_128 = arith.constant 0 : index
    %c0_129 = arith.constant 0 : index
    %376 = vector.load %arg9[%c0_128, %c0_129] : memref<1x128xf32, #tpu.memory_space<vmem>>, vector<1x128xf32>
    %377 = vector.shape_cast %376 : vector<1x128xf32> to vector<1x128xf32>
    %378 = vector.broadcast %377 : vector<1x128xf32> to vector<2x128xf32>
    %379 = vector.shape_cast %365 : vector<2x128xf32> to vector<2x1x128xf32>
    %380 = vector.broadcast %379 : vector<2x1x128xf32> to vector<2x10x128xf32>
    %381 = arith.mulf %375, %380 : vector<2x10x128xf32>
    %cst_130 = arith.constant dense<0.000000e+00> : vector<2x10xf32>
    %382 = vector.multi_reduction <add>, %381, %cst_130 [2] : vector<2x10x128xf32> to vector<2x10xf32>
    %cst_131 = arith.constant dense<0xFF800000> : vector<2xf32>
    %383 = vector.multi_reduction <maximumf>, %382, %cst_131 [1] : vector<2x10xf32> to vector<2xf32>
    %384 = vector.shape_cast %383 : vector<2xf32> to vector<2x1xf32>
    %385 = vector.broadcast %384 : vector<2x1xf32> to vector<2x10xf32>
    %386 = arith.subf %382, %385 : vector<2x10xf32>
    %387 = math.exp %386 : vector<2x10xf32>
    %cst_132 = arith.constant dense<0.000000e+00> : vector<2xf32>
    %388 = vector.multi_reduction <add>, %387, %cst_132 [1] : vector<2x10xf32> to vector<2xf32>
    %389 = vector.shape_cast %388 : vector<2xf32> to vector<2x1xf32>
    %390 = tpu.reciprocal %389 {approx = true} : vector<2x1xf32> -> vector<2x1xf32>
    %391 = vector.broadcast %390 : vector<2x1xf32> to vector<2x10xf32>
    %392 = arith.mulf %387, %391 : vector<2x10xf32>
    %393 = vector.shape_cast %392 : vector<2x10xf32> to vector<2x10x1xf32>
    %394 = vector.broadcast %393 : vector<2x10x1xf32> to vector<2x10x128xf32>
    %395 = arith.mulf %394, %374 : vector<2x10x128xf32>
    %cst_133 = arith.constant dense<0.000000e+00> : vector<2x128xf32>
    %396 = vector.multi_reduction <add>, %395, %cst_133 [1] : vector<2x10x128xf32> to vector<2x128xf32>
    %397 = tpu.concatenate %396, %365 in 1 : vector<2x128xf32>, vector<2x128xf32> -> vector<2x256xf32>
    %398 = arith.truncf %397 : vector<2x256xf32> to vector<2x256xbf16>
    %c0_134 = arith.constant 0 : index
    %c0_135 = arith.constant 0 : index
    %399 = vector.load %arg7[%c0_134, %c0_135] : memref<256x512xbf16, #tpu.memory_space<vmem>>, vector<256x512xbf16>
    %cst_136 = arith.constant dense<0.000000e+00> : vector<2x512xf32>
    %400 = tpu.matmul %398, %399, %cst_136 {dimension_numbers = #tpu.dot_dimension_numbers<[1], [0], [0], [1], [0, 0, 1, 1], [], []>} : vector<2x256xbf16>, vector<256x512xbf16>, vector<2x512xf32> -> vector<2x512xf32>
    %c0_137 = arith.constant 0 : index
    %c0_138 = arith.constant 0 : index
    %401 = vector.load %arg15[%c0_137, %c0_138] : memref<20x384xf32, #tpu.memory_space<vmem>>, vector<2x384xf32>
    %402 = vector.extract_strided_slice %401 {offsets = [0, 0], sizes = [2, 128], strides = [1, 1]} : vector<2x384xf32> to vector<2x128xf32>
    %403 = vector.extract_strided_slice %400 {offsets = [0, 0], sizes = [2, 128], strides = [1, 1]} : vector<2x512xf32> to vector<2x128xf32>
    %404 = arith.addf %402, %403 : vector<2x128xf32>
    %405 = arith.negf %404 : vector<2x128xf32>
    %406 = math.exp %405 : vector<2x128xf32>
    %cst_139 = arith.constant 1.000000e+00 : f32
    %407 = vector.broadcast %cst_139 : f32 to vector<2x128xf32>
    %408 = arith.addf %407, %406 : vector<2x128xf32>
    %409 = arith.divf %407, %408 : vector<2x128xf32>
    %410 = vector.extract_strided_slice %401 {offsets = [0, 128], sizes = [2, 128], strides = [1, 1]} : vector<2x384xf32> to vector<2x128xf32>
    %411 = vector.extract_strided_slice %400 {offsets = [0, 128], sizes = [2, 128], strides = [1, 1]} : vector<2x512xf32> to vector<2x128xf32>
    %412 = arith.addf %410, %411 : vector<2x128xf32>
    %413 = arith.negf %412 : vector<2x128xf32>
    %414 = math.exp %413 : vector<2x128xf32>
    %cst_140 = arith.constant 1.000000e+00 : f32
    %415 = vector.broadcast %cst_140 : f32 to vector<2x128xf32>
    %416 = arith.addf %415, %414 : vector<2x128xf32>
    %417 = arith.divf %415, %416 : vector<2x128xf32>
    %418 = vector.extract_strided_slice %401 {offsets = [0, 256], sizes = [2, 128], strides = [1, 1]} : vector<2x384xf32> to vector<2x128xf32>
    %419 = vector.extract_strided_slice %400 {offsets = [0, 256], sizes = [2, 128], strides = [1, 1]} : vector<2x512xf32> to vector<2x128xf32>
    %420 = arith.addf %418, %419 : vector<2x128xf32>
    %421 = vector.extract_strided_slice %400 {offsets = [0, 384], sizes = [2, 128], strides = [1, 1]} : vector<2x512xf32> to vector<2x128xf32>
    %422 = arith.addf %421, %378 : vector<2x128xf32>
    %423 = arith.mulf %409, %422 : vector<2x128xf32>
    %424 = arith.addf %420, %423 : vector<2x128xf32>
    %425 = math.tanh %424 : vector<2x128xf32>
    %cst_141 = arith.constant 1.000000e+00 : f32
    %426 = vector.broadcast %cst_141 : f32 to vector<2x128xf32>
    %427 = arith.subf %426, %417 : vector<2x128xf32>
    %428 = arith.mulf %427, %425 : vector<2x128xf32>
    %429 = arith.mulf %417, %365 : vector<2x128xf32>
    %430 = arith.addf %428, %429 : vector<2x128xf32>
    %431 = vector.extract_strided_slice %430 {offsets = [0, 0], sizes = [1, 128], strides = [1, 1]} : vector<2x128xf32> to vector<1x128xf32>
    %c0_142 = arith.constant 0 : index
    %c0_143 = arith.constant 0 : index
    %432 = vector.load %arg17[%c0_142, %c0_143] : memref<24x128xf32, #tpu.memory_space<vmem>>, vector<1x128xf32>
    tpu.vector_store %arg17[%c0_142, %c0_143], %431 {strides = array<i32>} : memref<24x128xf32, #tpu.memory_space<vmem>>, vector<1x128xf32>,
    %433 = vector.extract_strided_slice %430 {offsets = [1, 0], sizes = [1, 128], strides = [1, 1]} : vector<2x128xf32> to vector<1x128xf32>
    %c10_144 = arith.constant 10 : index
    %c0_145 = arith.constant 0 : index
    %434 = vector.load %arg17[%c10_144, %c0_145] : memref<24x128xf32, #tpu.memory_space<vmem>>, vector<1x128xf32>
    tpu.vector_store %arg17[%c10_144, %c0_145], %433 {strides = array<i32>} : memref<24x128xf32, #tpu.memory_space<vmem>>, vector<1x128xf32>,
    %435 = vector.shape_cast %430 : vector<2x128xf32> to vector<2x1x128xf32>
    %436 = vector.broadcast %435 : vector<2x1x128xf32> to vector<2x10x128xf32>
    %437 = arith.mulf %375, %436 : vector<2x10x128xf32>
    %cst_146 = arith.constant dense<0.000000e+00> : vector<2x10xf32>
    %438 = vector.multi_reduction <add>, %437, %cst_146 [2] : vector<2x10x128xf32> to vector<2x10xf32>
    %cst_147 = arith.constant dense<0xFF800000> : vector<2xf32>
    %439 = vector.multi_reduction <maximumf>, %438, %cst_147 [1] : vector<2x10xf32> to vector<2xf32>
    %440 = vector.shape_cast %439 : vector<2xf32> to vector<2x1xf32>
    %441 = vector.broadcast %440 : vector<2x1xf32> to vector<2x10xf32>
    %442 = arith.subf %438, %441 : vector<2x10xf32>
    %443 = math.exp %442 : vector<2x10xf32>
    %cst_148 = arith.constant dense<0.000000e+00> : vector<2xf32>
    %444 = vector.multi_reduction <add>, %443, %cst_148 [1] : vector<2x10xf32> to vector<2xf32>
    %445 = vector.shape_cast %444 : vector<2xf32> to vector<2x1xf32>
    %446 = tpu.reciprocal %445 {approx = true} : vector<2x1xf32> -> vector<2x1xf32>
    %447 = vector.broadcast %446 : vector<2x1xf32> to vector<2x10xf32>
    %448 = arith.mulf %443, %447 : vector<2x10xf32>
    %449 = vector.shape_cast %448 : vector<2x10xf32> to vector<2x10x1xf32>
    %450 = vector.broadcast %449 : vector<2x10x1xf32> to vector<2x10x128xf32>
    %451 = arith.mulf %450, %374 : vector<2x10x128xf32>
    %cst_149 = arith.constant dense<0.000000e+00> : vector<2x128xf32>
    %452 = vector.multi_reduction <add>, %451, %cst_149 [1] : vector<2x10x128xf32> to vector<2x128xf32>
    %453 = tpu.concatenate %452, %430 in 1 : vector<2x128xf32>, vector<2x128xf32> -> vector<2x256xf32>
    %454 = arith.truncf %453 : vector<2x256xf32> to vector<2x256xbf16>
    %c0_150 = arith.constant 0 : index
    %c0_151 = arith.constant 0 : index
    %455 = vector.load %arg7[%c0_150, %c0_151] : memref<256x512xbf16, #tpu.memory_space<vmem>>, vector<256x512xbf16>
    %cst_152 = arith.constant dense<0.000000e+00> : vector<2x512xf32>
    %456 = tpu.matmul %454, %455, %cst_152 {dimension_numbers = #tpu.dot_dimension_numbers<[1], [0], [0], [1], [0, 0, 1, 1], [], []>} : vector<2x256xbf16>, vector<256x512xbf16>, vector<2x512xf32> -> vector<2x512xf32>
    %c2_153 = arith.constant 2 : index
    %c0_154 = arith.constant 0 : index
    %457 = vector.load %arg15[%c2_153, %c0_154] : memref<20x384xf32, #tpu.memory_space<vmem>>, vector<2x384xf32>
    %458 = vector.extract_strided_slice %457 {offsets = [0, 0], sizes = [2, 128], strides = [1, 1]} : vector<2x384xf32> to vector<2x128xf32>
    %459 = vector.extract_strided_slice %456 {offsets = [0, 0], sizes = [2, 128], strides = [1, 1]} : vector<2x512xf32> to vector<2x128xf32>
    %460 = arith.addf %458, %459 : vector<2x128xf32>
    %461 = arith.negf %460 : vector<2x128xf32>
    %462 = math.exp %461 : vector<2x128xf32>
    %cst_155 = arith.constant 1.000000e+00 : f32
    %463 = vector.broadcast %cst_155 : f32 to vector<2x128xf32>
    %464 = arith.addf %463, %462 : vector<2x128xf32>
    %465 = arith.divf %463, %464 : vector<2x128xf32>
    %466 = vector.extract_strided_slice %457 {offsets = [0, 128], sizes = [2, 128], strides = [1, 1]} : vector<2x384xf32> to vector<2x128xf32>
    %467 = vector.extract_strided_slice %456 {offsets = [0, 128], sizes = [2, 128], strides = [1, 1]} : vector<2x512xf32> to vector<2x128xf32>
    %468 = arith.addf %466, %467 : vector<2x128xf32>
    %469 = arith.negf %468 : vector<2x128xf32>
    %470 = math.exp %469 : vector<2x128xf32>
    %cst_156 = arith.constant 1.000000e+00 : f32
    %471 = vector.broadcast %cst_156 : f32 to vector<2x128xf32>
    %472 = arith.addf %471, %470 : vector<2x128xf32>
    %473 = arith.divf %471, %472 : vector<2x128xf32>
    %474 = vector.extract_strided_slice %457 {offsets = [0, 256], sizes = [2, 128], strides = [1, 1]} : vector<2x384xf32> to vector<2x128xf32>
    %475 = vector.extract_strided_slice %456 {offsets = [0, 256], sizes = [2, 128], strides = [1, 1]} : vector<2x512xf32> to vector<2x128xf32>
    %476 = arith.addf %474, %475 : vector<2x128xf32>
    %477 = vector.extract_strided_slice %456 {offsets = [0, 384], sizes = [2, 128], strides = [1, 1]} : vector<2x512xf32> to vector<2x128xf32>
    %478 = arith.addf %477, %378 : vector<2x128xf32>
    %479 = arith.mulf %465, %478 : vector<2x128xf32>
    %480 = arith.addf %476, %479 : vector<2x128xf32>
    %481 = math.tanh %480 : vector<2x128xf32>
    %cst_157 = arith.constant 1.000000e+00 : f32
    %482 = vector.broadcast %cst_157 : f32 to vector<2x128xf32>
    %483 = arith.subf %482, %473 : vector<2x128xf32>
    %484 = arith.mulf %483, %481 : vector<2x128xf32>
    %485 = arith.mulf %473, %430 : vector<2x128xf32>
    %486 = arith.addf %484, %485 : vector<2x128xf32>
    %487 = vector.extract_strided_slice %486 {offsets = [0, 0], sizes = [1, 128], strides = [1, 1]} : vector<2x128xf32> to vector<1x128xf32>
    %c1_158 = arith.constant 1 : index
    %c0_159 = arith.constant 0 : index
    %488 = vector.load %arg17[%c1_158, %c0_159] : memref<24x128xf32, #tpu.memory_space<vmem>>, vector<1x128xf32>
    tpu.vector_store %arg17[%c1_158, %c0_159], %487 {strides = array<i32>} : memref<24x128xf32, #tpu.memory_space<vmem>>, vector<1x128xf32>,
    %489 = vector.extract_strided_slice %486 {offsets = [1, 0], sizes = [1, 128], strides = [1, 1]} : vector<2x128xf32> to vector<1x128xf32>
    %c11_160 = arith.constant 11 : index
    %c0_161 = arith.constant 0 : index
    %490 = vector.load %arg17[%c11_160, %c0_161] : memref<24x128xf32, #tpu.memory_space<vmem>>, vector<1x128xf32>
    tpu.vector_store %arg17[%c11_160, %c0_161], %489 {strides = array<i32>} : memref<24x128xf32, #tpu.memory_space<vmem>>, vector<1x128xf32>,
    %491 = vector.shape_cast %486 : vector<2x128xf32> to vector<2x1x128xf32>
    %492 = vector.broadcast %491 : vector<2x1x128xf32> to vector<2x10x128xf32>
    %493 = arith.mulf %375, %492 : vector<2x10x128xf32>
    %cst_162 = arith.constant dense<0.000000e+00> : vector<2x10xf32>
    %494 = vector.multi_reduction <add>, %493, %cst_162 [2] : vector<2x10x128xf32> to vector<2x10xf32>
    %cst_163 = arith.constant dense<0xFF800000> : vector<2xf32>
    %495 = vector.multi_reduction <maximumf>, %494, %cst_163 [1] : vector<2x10xf32> to vector<2xf32>
    %496 = vector.shape_cast %495 : vector<2xf32> to vector<2x1xf32>
    %497 = vector.broadcast %496 : vector<2x1xf32> to vector<2x10xf32>
    %498 = arith.subf %494, %497 : vector<2x10xf32>
    %499 = math.exp %498 : vector<2x10xf32>
    %cst_164 = arith.constant dense<0.000000e+00> : vector<2xf32>
    %500 = vector.multi_reduction <add>, %499, %cst_164 [1] : vector<2x10xf32> to vector<2xf32>
    %501 = vector.shape_cast %500 : vector<2xf32> to vector<2x1xf32>
    %502 = tpu.reciprocal %501 {approx = true} : vector<2x1xf32> -> vector<2x1xf32>
    %503 = vector.broadcast %502 : vector<2x1xf32> to vector<2x10xf32>
    %504 = arith.mulf %499, %503 : vector<2x10xf32>
    %505 = vector.shape_cast %504 : vector<2x10xf32> to vector<2x10x1xf32>
    %506 = vector.broadcast %505 : vector<2x10x1xf32> to vector<2x10x128xf32>
    %507 = arith.mulf %506, %374 : vector<2x10x128xf32>
    %cst_165 = arith.constant dense<0.000000e+00> : vector<2x128xf32>
    %508 = vector.multi_reduction <add>, %507, %cst_165 [1] : vector<2x10x128xf32> to vector<2x128xf32>
    %509 = tpu.concatenate %508, %486 in 1 : vector<2x128xf32>, vector<2x128xf32> -> vector<2x256xf32>
    %510 = arith.truncf %509 : vector<2x256xf32> to vector<2x256xbf16>
    %c0_166 = arith.constant 0 : index
    %c0_167 = arith.constant 0 : index
    %511 = vector.load %arg7[%c0_166, %c0_167] : memref<256x512xbf16, #tpu.memory_space<vmem>>, vector<256x512xbf16>
    %cst_168 = arith.constant dense<0.000000e+00> : vector<2x512xf32>
    %512 = tpu.matmul %510, %511, %cst_168 {dimension_numbers = #tpu.dot_dimension_numbers<[1], [0], [0], [1], [0, 0, 1, 1], [], []>} : vector<2x256xbf16>, vector<256x512xbf16>, vector<2x512xf32> -> vector<2x512xf32>
    %c4_169 = arith.constant 4 : index
    %c0_170 = arith.constant 0 : index
    %513 = vector.load %arg15[%c4_169, %c0_170] : memref<20x384xf32, #tpu.memory_space<vmem>>, vector<2x384xf32>
    %514 = vector.extract_strided_slice %513 {offsets = [0, 0], sizes = [2, 128], strides = [1, 1]} : vector<2x384xf32> to vector<2x128xf32>
    %515 = vector.extract_strided_slice %512 {offsets = [0, 0], sizes = [2, 128], strides = [1, 1]} : vector<2x512xf32> to vector<2x128xf32>
    %516 = arith.addf %514, %515 : vector<2x128xf32>
    %517 = arith.negf %516 : vector<2x128xf32>
    %518 = math.exp %517 : vector<2x128xf32>
    %cst_171 = arith.constant 1.000000e+00 : f32
    %519 = vector.broadcast %cst_171 : f32 to vector<2x128xf32>
    %520 = arith.addf %519, %518 : vector<2x128xf32>
    %521 = arith.divf %519, %520 : vector<2x128xf32>
    %522 = vector.extract_strided_slice %513 {offsets = [0, 128], sizes = [2, 128], strides = [1, 1]} : vector<2x384xf32> to vector<2x128xf32>
    %523 = vector.extract_strided_slice %512 {offsets = [0, 128], sizes = [2, 128], strides = [1, 1]} : vector<2x512xf32> to vector<2x128xf32>
    %524 = arith.addf %522, %523 : vector<2x128xf32>
    %525 = arith.negf %524 : vector<2x128xf32>
    %526 = math.exp %525 : vector<2x128xf32>
    %cst_172 = arith.constant 1.000000e+00 : f32
    %527 = vector.broadcast %cst_172 : f32 to vector<2x128xf32>
    %528 = arith.addf %527, %526 : vector<2x128xf32>
    %529 = arith.divf %527, %528 : vector<2x128xf32>
    %530 = vector.extract_strided_slice %513 {offsets = [0, 256], sizes = [2, 128], strides = [1, 1]} : vector<2x384xf32> to vector<2x128xf32>
    %531 = vector.extract_strided_slice %512 {offsets = [0, 256], sizes = [2, 128], strides = [1, 1]} : vector<2x512xf32> to vector<2x128xf32>
    %532 = arith.addf %530, %531 : vector<2x128xf32>
    %533 = vector.extract_strided_slice %512 {offsets = [0, 384], sizes = [2, 128], strides = [1, 1]} : vector<2x512xf32> to vector<2x128xf32>
    %534 = arith.addf %533, %378 : vector<2x128xf32>
    %535 = arith.mulf %521, %534 : vector<2x128xf32>
    %536 = arith.addf %532, %535 : vector<2x128xf32>
    %537 = math.tanh %536 : vector<2x128xf32>
    %cst_173 = arith.constant 1.000000e+00 : f32
    %538 = vector.broadcast %cst_173 : f32 to vector<2x128xf32>
    %539 = arith.subf %538, %529 : vector<2x128xf32>
    %540 = arith.mulf %539, %537 : vector<2x128xf32>
    %541 = arith.mulf %529, %486 : vector<2x128xf32>
    %542 = arith.addf %540, %541 : vector<2x128xf32>
    %543 = vector.extract_strided_slice %542 {offsets = [0, 0], sizes = [1, 128], strides = [1, 1]} : vector<2x128xf32> to vector<1x128xf32>
    %c2_174 = arith.constant 2 : index
    %c0_175 = arith.constant 0 : index
    %544 = vector.load %arg17[%c2_174, %c0_175] : memref<24x128xf32, #tpu.memory_space<vmem>>, vector<1x128xf32>
    tpu.vector_store %arg17[%c2_174, %c0_175], %543 {strides = array<i32>} : memref<24x128xf32, #tpu.memory_space<vmem>>, vector<1x128xf32>,
    %545 = vector.extract_strided_slice %542 {offsets = [1, 0], sizes = [1, 128], strides = [1, 1]} : vector<2x128xf32> to vector<1x128xf32>
    %c12_176 = arith.constant 12 : index
    %c0_177 = arith.constant 0 : index
    %546 = vector.load %arg17[%c12_176, %c0_177] : memref<24x128xf32, #tpu.memory_space<vmem>>, vector<1x128xf32>
    tpu.vector_store %arg17[%c12_176, %c0_177], %545 {strides = array<i32>} : memref<24x128xf32, #tpu.memory_space<vmem>>, vector<1x128xf32>,
    %547 = vector.shape_cast %542 : vector<2x128xf32> to vector<2x1x128xf32>
    %548 = vector.broadcast %547 : vector<2x1x128xf32> to vector<2x10x128xf32>
    %549 = arith.mulf %375, %548 : vector<2x10x128xf32>
    %cst_178 = arith.constant dense<0.000000e+00> : vector<2x10xf32>
    %550 = vector.multi_reduction <add>, %549, %cst_178 [2] : vector<2x10x128xf32> to vector<2x10xf32>
    %cst_179 = arith.constant dense<0xFF800000> : vector<2xf32>
    %551 = vector.multi_reduction <maximumf>, %550, %cst_179 [1] : vector<2x10xf32> to vector<2xf32>
    %552 = vector.shape_cast %551 : vector<2xf32> to vector<2x1xf32>
    %553 = vector.broadcast %552 : vector<2x1xf32> to vector<2x10xf32>
    %554 = arith.subf %550, %553 : vector<2x10xf32>
    %555 = math.exp %554 : vector<2x10xf32>
    %cst_180 = arith.constant dense<0.000000e+00> : vector<2xf32>
    %556 = vector.multi_reduction <add>, %555, %cst_180 [1] : vector<2x10xf32> to vector<2xf32>
    %557 = vector.shape_cast %556 : vector<2xf32> to vector<2x1xf32>
    %558 = tpu.reciprocal %557 {approx = true} : vector<2x1xf32> -> vector<2x1xf32>
    %559 = vector.broadcast %558 : vector<2x1xf32> to vector<2x10xf32>
    %560 = arith.mulf %555, %559 : vector<2x10xf32>
    %561 = vector.shape_cast %560 : vector<2x10xf32> to vector<2x10x1xf32>
    %562 = vector.broadcast %561 : vector<2x10x1xf32> to vector<2x10x128xf32>
    %563 = arith.mulf %562, %374 : vector<2x10x128xf32>
    %cst_181 = arith.constant dense<0.000000e+00> : vector<2x128xf32>
    %564 = vector.multi_reduction <add>, %563, %cst_181 [1] : vector<2x10x128xf32> to vector<2x128xf32>
    %565 = tpu.concatenate %564, %542 in 1 : vector<2x128xf32>, vector<2x128xf32> -> vector<2x256xf32>
    %566 = arith.truncf %565 : vector<2x256xf32> to vector<2x256xbf16>
    %c0_182 = arith.constant 0 : index
    %c0_183 = arith.constant 0 : index
    %567 = vector.load %arg7[%c0_182, %c0_183] : memref<256x512xbf16, #tpu.memory_space<vmem>>, vector<256x512xbf16>
    %cst_184 = arith.constant dense<0.000000e+00> : vector<2x512xf32>
    %568 = tpu.matmul %566, %567, %cst_184 {dimension_numbers = #tpu.dot_dimension_numbers<[1], [0], [0], [1], [0, 0, 1, 1], [], []>} : vector<2x256xbf16>, vector<256x512xbf16>, vector<2x512xf32> -> vector<2x512xf32>
    %c6_185 = arith.constant 6 : index
    %c0_186 = arith.constant 0 : index
    %569 = vector.load %arg15[%c6_185, %c0_186] : memref<20x384xf32, #tpu.memory_space<vmem>>, vector<2x384xf32>
    %570 = vector.extract_strided_slice %569 {offsets = [0, 0], sizes = [2, 128], strides = [1, 1]} : vector<2x384xf32> to vector<2x128xf32>
    %571 = vector.extract_strided_slice %568 {offsets = [0, 0], sizes = [2, 128], strides = [1, 1]} : vector<2x512xf32> to vector<2x128xf32>
    %572 = arith.addf %570, %571 : vector<2x128xf32>
    %573 = arith.negf %572 : vector<2x128xf32>
    %574 = math.exp %573 : vector<2x128xf32>
    %cst_187 = arith.constant 1.000000e+00 : f32
    %575 = vector.broadcast %cst_187 : f32 to vector<2x128xf32>
    %576 = arith.addf %575, %574 : vector<2x128xf32>
    %577 = arith.divf %575, %576 : vector<2x128xf32>
    %578 = vector.extract_strided_slice %569 {offsets = [0, 128], sizes = [2, 128], strides = [1, 1]} : vector<2x384xf32> to vector<2x128xf32>
    %579 = vector.extract_strided_slice %568 {offsets = [0, 128], sizes = [2, 128], strides = [1, 1]} : vector<2x512xf32> to vector<2x128xf32>
    %580 = arith.addf %578, %579 : vector<2x128xf32>
    %581 = arith.negf %580 : vector<2x128xf32>
    %582 = math.exp %581 : vector<2x128xf32>
    %cst_188 = arith.constant 1.000000e+00 : f32
    %583 = vector.broadcast %cst_188 : f32 to vector<2x128xf32>
    %584 = arith.addf %583, %582 : vector<2x128xf32>
    %585 = arith.divf %583, %584 : vector<2x128xf32>
    %586 = vector.extract_strided_slice %569 {offsets = [0, 256], sizes = [2, 128], strides = [1, 1]} : vector<2x384xf32> to vector<2x128xf32>
    %587 = vector.extract_strided_slice %568 {offsets = [0, 256], sizes = [2, 128], strides = [1, 1]} : vector<2x512xf32> to vector<2x128xf32>
    %588 = arith.addf %586, %587 : vector<2x128xf32>
    %589 = vector.extract_strided_slice %568 {offsets = [0, 384], sizes = [2, 128], strides = [1, 1]} : vector<2x512xf32> to vector<2x128xf32>
    %590 = arith.addf %589, %378 : vector<2x128xf32>
    %591 = arith.mulf %577, %590 : vector<2x128xf32>
    %592 = arith.addf %588, %591 : vector<2x128xf32>
    %593 = math.tanh %592 : vector<2x128xf32>
    %cst_189 = arith.constant 1.000000e+00 : f32
    %594 = vector.broadcast %cst_189 : f32 to vector<2x128xf32>
    %595 = arith.subf %594, %585 : vector<2x128xf32>
    %596 = arith.mulf %595, %593 : vector<2x128xf32>
    %597 = arith.mulf %585, %542 : vector<2x128xf32>
    %598 = arith.addf %596, %597 : vector<2x128xf32>
    %599 = vector.extract_strided_slice %598 {offsets = [0, 0], sizes = [1, 128], strides = [1, 1]} : vector<2x128xf32> to vector<1x128xf32>
    %c3_190 = arith.constant 3 : index
    %c0_191 = arith.constant 0 : index
    %600 = vector.load %arg17[%c3_190, %c0_191] : memref<24x128xf32, #tpu.memory_space<vmem>>, vector<1x128xf32>
    tpu.vector_store %arg17[%c3_190, %c0_191], %599 {strides = array<i32>} : memref<24x128xf32, #tpu.memory_space<vmem>>, vector<1x128xf32>,
    %601 = vector.extract_strided_slice %598 {offsets = [1, 0], sizes = [1, 128], strides = [1, 1]} : vector<2x128xf32> to vector<1x128xf32>
    %c13_192 = arith.constant 13 : index
    %c0_193 = arith.constant 0 : index
    %602 = vector.load %arg17[%c13_192, %c0_193] : memref<24x128xf32, #tpu.memory_space<vmem>>, vector<1x128xf32>
    tpu.vector_store %arg17[%c13_192, %c0_193], %601 {strides = array<i32>} : memref<24x128xf32, #tpu.memory_space<vmem>>, vector<1x128xf32>,
    %603 = vector.shape_cast %598 : vector<2x128xf32> to vector<2x1x128xf32>
    %604 = vector.broadcast %603 : vector<2x1x128xf32> to vector<2x10x128xf32>
    %605 = arith.mulf %375, %604 : vector<2x10x128xf32>
    %cst_194 = arith.constant dense<0.000000e+00> : vector<2x10xf32>
    %606 = vector.multi_reduction <add>, %605, %cst_194 [2] : vector<2x10x128xf32> to vector<2x10xf32>
    %cst_195 = arith.constant dense<0xFF800000> : vector<2xf32>
    %607 = vector.multi_reduction <maximumf>, %606, %cst_195 [1] : vector<2x10xf32> to vector<2xf32>
    %608 = vector.shape_cast %607 : vector<2xf32> to vector<2x1xf32>
    %609 = vector.broadcast %608 : vector<2x1xf32> to vector<2x10xf32>
    %610 = arith.subf %606, %609 : vector<2x10xf32>
    %611 = math.exp %610 : vector<2x10xf32>
    %cst_196 = arith.constant dense<0.000000e+00> : vector<2xf32>
    %612 = vector.multi_reduction <add>, %611, %cst_196 [1] : vector<2x10xf32> to vector<2xf32>
    %613 = vector.shape_cast %612 : vector<2xf32> to vector<2x1xf32>
    %614 = tpu.reciprocal %613 {approx = true} : vector<2x1xf32> -> vector<2x1xf32>
    %615 = vector.broadcast %614 : vector<2x1xf32> to vector<2x10xf32>
    %616 = arith.mulf %611, %615 : vector<2x10xf32>
    %617 = vector.shape_cast %616 : vector<2x10xf32> to vector<2x10x1xf32>
    %618 = vector.broadcast %617 : vector<2x10x1xf32> to vector<2x10x128xf32>
    %619 = arith.mulf %618, %374 : vector<2x10x128xf32>
    %cst_197 = arith.constant dense<0.000000e+00> : vector<2x128xf32>
    %620 = vector.multi_reduction <add>, %619, %cst_197 [1] : vector<2x10x128xf32> to vector<2x128xf32>
    %621 = tpu.concatenate %620, %598 in 1 : vector<2x128xf32>, vector<2x128xf32> -> vector<2x256xf32>
    %622 = arith.truncf %621 : vector<2x256xf32> to vector<2x256xbf16>
    %c0_198 = arith.constant 0 : index
    %c0_199 = arith.constant 0 : index
    %623 = vector.load %arg7[%c0_198, %c0_199] : memref<256x512xbf16, #tpu.memory_space<vmem>>, vector<256x512xbf16>
    %cst_200 = arith.constant dense<0.000000e+00> : vector<2x512xf32>
    %624 = tpu.matmul %622, %623, %cst_200 {dimension_numbers = #tpu.dot_dimension_numbers<[1], [0], [0], [1], [0, 0, 1, 1], [], []>} : vector<2x256xbf16>, vector<256x512xbf16>, vector<2x512xf32> -> vector<2x512xf32>
    %c8_201 = arith.constant 8 : index
    %c0_202 = arith.constant 0 : index
    %625 = vector.load %arg15[%c8_201, %c0_202] : memref<20x384xf32, #tpu.memory_space<vmem>>, vector<2x384xf32>
    %626 = vector.extract_strided_slice %625 {offsets = [0, 0], sizes = [2, 128], strides = [1, 1]} : vector<2x384xf32> to vector<2x128xf32>
    %627 = vector.extract_strided_slice %624 {offsets = [0, 0], sizes = [2, 128], strides = [1, 1]} : vector<2x512xf32> to vector<2x128xf32>
    %628 = arith.addf %626, %627 : vector<2x128xf32>
    %629 = arith.negf %628 : vector<2x128xf32>
    %630 = math.exp %629 : vector<2x128xf32>
    %cst_203 = arith.constant 1.000000e+00 : f32
    %631 = vector.broadcast %cst_203 : f32 to vector<2x128xf32>
    %632 = arith.addf %631, %630 : vector<2x128xf32>
    %633 = arith.divf %631, %632 : vector<2x128xf32>
    %634 = vector.extract_strided_slice %625 {offsets = [0, 128], sizes = [2, 128], strides = [1, 1]} : vector<2x384xf32> to vector<2x128xf32>
    %635 = vector.extract_strided_slice %624 {offsets = [0, 128], sizes = [2, 128], strides = [1, 1]} : vector<2x512xf32> to vector<2x128xf32>
    %636 = arith.addf %634, %635 : vector<2x128xf32>
    %637 = arith.negf %636 : vector<2x128xf32>
    %638 = math.exp %637 : vector<2x128xf32>
    %cst_204 = arith.constant 1.000000e+00 : f32
    %639 = vector.broadcast %cst_204 : f32 to vector<2x128xf32>
    %640 = arith.addf %639, %638 : vector<2x128xf32>
    %641 = arith.divf %639, %640 : vector<2x128xf32>
    %642 = vector.extract_strided_slice %625 {offsets = [0, 256], sizes = [2, 128], strides = [1, 1]} : vector<2x384xf32> to vector<2x128xf32>
    %643 = vector.extract_strided_slice %624 {offsets = [0, 256], sizes = [2, 128], strides = [1, 1]} : vector<2x512xf32> to vector<2x128xf32>
    %644 = arith.addf %642, %643 : vector<2x128xf32>
    %645 = vector.extract_strided_slice %624 {offsets = [0, 384], sizes = [2, 128], strides = [1, 1]} : vector<2x512xf32> to vector<2x128xf32>
    %646 = arith.addf %645, %378 : vector<2x128xf32>
    %647 = arith.mulf %633, %646 : vector<2x128xf32>
    %648 = arith.addf %644, %647 : vector<2x128xf32>
    %649 = math.tanh %648 : vector<2x128xf32>
    %cst_205 = arith.constant 1.000000e+00 : f32
    %650 = vector.broadcast %cst_205 : f32 to vector<2x128xf32>
    %651 = arith.subf %650, %641 : vector<2x128xf32>
    %652 = arith.mulf %651, %649 : vector<2x128xf32>
    %653 = arith.mulf %641, %598 : vector<2x128xf32>
    %654 = arith.addf %652, %653 : vector<2x128xf32>
    %655 = vector.extract_strided_slice %654 {offsets = [0, 0], sizes = [1, 128], strides = [1, 1]} : vector<2x128xf32> to vector<1x128xf32>
    %c4_206 = arith.constant 4 : index
    %c0_207 = arith.constant 0 : index
    %656 = vector.load %arg17[%c4_206, %c0_207] : memref<24x128xf32, #tpu.memory_space<vmem>>, vector<1x128xf32>
    tpu.vector_store %arg17[%c4_206, %c0_207], %655 {strides = array<i32>} : memref<24x128xf32, #tpu.memory_space<vmem>>, vector<1x128xf32>,
    %657 = vector.extract_strided_slice %654 {offsets = [1, 0], sizes = [1, 128], strides = [1, 1]} : vector<2x128xf32> to vector<1x128xf32>
    %c14_208 = arith.constant 14 : index
    %c0_209 = arith.constant 0 : index
    %658 = vector.load %arg17[%c14_208, %c0_209] : memref<24x128xf32, #tpu.memory_space<vmem>>, vector<1x128xf32>
    tpu.vector_store %arg17[%c14_208, %c0_209], %657 {strides = array<i32>} : memref<24x128xf32, #tpu.memory_space<vmem>>, vector<1x128xf32>,
    %659 = vector.shape_cast %654 : vector<2x128xf32> to vector<2x1x128xf32>
    %660 = vector.broadcast %659 : vector<2x1x128xf32> to vector<2x10x128xf32>
    %661 = arith.mulf %375, %660 : vector<2x10x128xf32>
    %cst_210 = arith.constant dense<0.000000e+00> : vector<2x10xf32>
    %662 = vector.multi_reduction <add>, %661, %cst_210 [2] : vector<2x10x128xf32> to vector<2x10xf32>
    %cst_211 = arith.constant dense<0xFF800000> : vector<2xf32>
    %663 = vector.multi_reduction <maximumf>, %662, %cst_211 [1] : vector<2x10xf32> to vector<2xf32>
    %664 = vector.shape_cast %663 : vector<2xf32> to vector<2x1xf32>
    %665 = vector.broadcast %664 : vector<2x1xf32> to vector<2x10xf32>
    %666 = arith.subf %662, %665 : vector<2x10xf32>
    %667 = math.exp %666 : vector<2x10xf32>
    %cst_212 = arith.constant dense<0.000000e+00> : vector<2xf32>
    %668 = vector.multi_reduction <add>, %667, %cst_212 [1] : vector<2x10xf32> to vector<2xf32>
    %669 = vector.shape_cast %668 : vector<2xf32> to vector<2x1xf32>
    %670 = tpu.reciprocal %669 {approx = true} : vector<2x1xf32> -> vector<2x1xf32>
    %671 = vector.broadcast %670 : vector<2x1xf32> to vector<2x10xf32>
    %672 = arith.mulf %667, %671 : vector<2x10xf32>
    %673 = vector.shape_cast %672 : vector<2x10xf32> to vector<2x10x1xf32>
    %674 = vector.broadcast %673 : vector<2x10x1xf32> to vector<2x10x128xf32>
    %675 = arith.mulf %674, %374 : vector<2x10x128xf32>
    %cst_213 = arith.constant dense<0.000000e+00> : vector<2x128xf32>
    %676 = vector.multi_reduction <add>, %675, %cst_213 [1] : vector<2x10x128xf32> to vector<2x128xf32>
    %677 = tpu.concatenate %676, %654 in 1 : vector<2x128xf32>, vector<2x128xf32> -> vector<2x256xf32>
    %678 = arith.truncf %677 : vector<2x256xf32> to vector<2x256xbf16>
    %c0_214 = arith.constant 0 : index
    %c0_215 = arith.constant 0 : index
    %679 = vector.load %arg7[%c0_214, %c0_215] : memref<256x512xbf16, #tpu.memory_space<vmem>>, vector<256x512xbf16>
    %cst_216 = arith.constant dense<0.000000e+00> : vector<2x512xf32>
    %680 = tpu.matmul %678, %679, %cst_216 {dimension_numbers = #tpu.dot_dimension_numbers<[1], [0], [0], [1], [0, 0, 1, 1], [], []>} : vector<2x256xbf16>, vector<256x512xbf16>, vector<2x512xf32> -> vector<2x512xf32>
    %c10_217 = arith.constant 10 : index
    %c0_218 = arith.constant 0 : index
    %681 = vector.load %arg15[%c10_217, %c0_218] : memref<20x384xf32, #tpu.memory_space<vmem>>, vector<2x384xf32>
    %682 = vector.extract_strided_slice %681 {offsets = [0, 0], sizes = [2, 128], strides = [1, 1]} : vector<2x384xf32> to vector<2x128xf32>
    %683 = vector.extract_strided_slice %680 {offsets = [0, 0], sizes = [2, 128], strides = [1, 1]} : vector<2x512xf32> to vector<2x128xf32>
    %684 = arith.addf %682, %683 : vector<2x128xf32>
    %685 = arith.negf %684 : vector<2x128xf32>
    %686 = math.exp %685 : vector<2x128xf32>
    %cst_219 = arith.constant 1.000000e+00 : f32
    %687 = vector.broadcast %cst_219 : f32 to vector<2x128xf32>
    %688 = arith.addf %687, %686 : vector<2x128xf32>
    %689 = arith.divf %687, %688 : vector<2x128xf32>
    %690 = vector.extract_strided_slice %681 {offsets = [0, 128], sizes = [2, 128], strides = [1, 1]} : vector<2x384xf32> to vector<2x128xf32>
    %691 = vector.extract_strided_slice %680 {offsets = [0, 128], sizes = [2, 128], strides = [1, 1]} : vector<2x512xf32> to vector<2x128xf32>
    %692 = arith.addf %690, %691 : vector<2x128xf32>
    %693 = arith.negf %692 : vector<2x128xf32>
    %694 = math.exp %693 : vector<2x128xf32>
    %cst_220 = arith.constant 1.000000e+00 : f32
    %695 = vector.broadcast %cst_220 : f32 to vector<2x128xf32>
    %696 = arith.addf %695, %694 : vector<2x128xf32>
    %697 = arith.divf %695, %696 : vector<2x128xf32>
    %698 = vector.extract_strided_slice %681 {offsets = [0, 256], sizes = [2, 128], strides = [1, 1]} : vector<2x384xf32> to vector<2x128xf32>
    %699 = vector.extract_strided_slice %680 {offsets = [0, 256], sizes = [2, 128], strides = [1, 1]} : vector<2x512xf32> to vector<2x128xf32>
    %700 = arith.addf %698, %699 : vector<2x128xf32>
    %701 = vector.extract_strided_slice %680 {offsets = [0, 384], sizes = [2, 128], strides = [1, 1]} : vector<2x512xf32> to vector<2x128xf32>
    %702 = arith.addf %701, %378 : vector<2x128xf32>
    %703 = arith.mulf %689, %702 : vector<2x128xf32>
    %704 = arith.addf %700, %703 : vector<2x128xf32>
    %705 = math.tanh %704 : vector<2x128xf32>
    %cst_221 = arith.constant 1.000000e+00 : f32
    %706 = vector.broadcast %cst_221 : f32 to vector<2x128xf32>
    %707 = arith.subf %706, %697 : vector<2x128xf32>
    %708 = arith.mulf %707, %705 : vector<2x128xf32>
    %709 = arith.mulf %697, %654 : vector<2x128xf32>
    %710 = arith.addf %708, %709 : vector<2x128xf32>
    %711 = vector.extract_strided_slice %710 {offsets = [0, 0], sizes = [1, 128], strides = [1, 1]} : vector<2x128xf32> to vector<1x128xf32>
    %c5_222 = arith.constant 5 : index
    %c0_223 = arith.constant 0 : index
    %712 = vector.load %arg17[%c5_222, %c0_223] : memref<24x128xf32, #tpu.memory_space<vmem>>, vector<1x128xf32>
    tpu.vector_store %arg17[%c5_222, %c0_223], %711 {strides = array<i32>} : memref<24x128xf32, #tpu.memory_space<vmem>>, vector<1x128xf32>,
    %713 = vector.extract_strided_slice %710 {offsets = [1, 0], sizes = [1, 128], strides = [1, 1]} : vector<2x128xf32> to vector<1x128xf32>
    %c15_224 = arith.constant 15 : index
    %c0_225 = arith.constant 0 : index
    %714 = vector.load %arg17[%c15_224, %c0_225] : memref<24x128xf32, #tpu.memory_space<vmem>>, vector<1x128xf32>
    tpu.vector_store %arg17[%c15_224, %c0_225], %713 {strides = array<i32>} : memref<24x128xf32, #tpu.memory_space<vmem>>, vector<1x128xf32>,
    %715 = vector.shape_cast %710 : vector<2x128xf32> to vector<2x1x128xf32>
    %716 = vector.broadcast %715 : vector<2x1x128xf32> to vector<2x10x128xf32>
    %717 = arith.mulf %375, %716 : vector<2x10x128xf32>
    %cst_226 = arith.constant dense<0.000000e+00> : vector<2x10xf32>
    %718 = vector.multi_reduction <add>, %717, %cst_226 [2] : vector<2x10x128xf32> to vector<2x10xf32>
    %cst_227 = arith.constant dense<0xFF800000> : vector<2xf32>
    %719 = vector.multi_reduction <maximumf>, %718, %cst_227 [1] : vector<2x10xf32> to vector<2xf32>
    %720 = vector.shape_cast %719 : vector<2xf32> to vector<2x1xf32>
    %721 = vector.broadcast %720 : vector<2x1xf32> to vector<2x10xf32>
    %722 = arith.subf %718, %721 : vector<2x10xf32>
    %723 = math.exp %722 : vector<2x10xf32>
    %cst_228 = arith.constant dense<0.000000e+00> : vector<2xf32>
    %724 = vector.multi_reduction <add>, %723, %cst_228 [1] : vector<2x10xf32> to vector<2xf32>
    %725 = vector.shape_cast %724 : vector<2xf32> to vector<2x1xf32>
    %726 = tpu.reciprocal %725 {approx = true} : vector<2x1xf32> -> vector<2x1xf32>
    %727 = vector.broadcast %726 : vector<2x1xf32> to vector<2x10xf32>
    %728 = arith.mulf %723, %727 : vector<2x10xf32>
    %729 = vector.shape_cast %728 : vector<2x10xf32> to vector<2x10x1xf32>
    %730 = vector.broadcast %729 : vector<2x10x1xf32> to vector<2x10x128xf32>
    %731 = arith.mulf %730, %374 : vector<2x10x128xf32>
    %cst_229 = arith.constant dense<0.000000e+00> : vector<2x128xf32>
    %732 = vector.multi_reduction <add>, %731, %cst_229 [1] : vector<2x10x128xf32> to vector<2x128xf32>
    %733 = tpu.concatenate %732, %710 in 1 : vector<2x128xf32>, vector<2x128xf32> -> vector<2x256xf32>
    %734 = arith.truncf %733 : vector<2x256xf32> to vector<2x256xbf16>
    %c0_230 = arith.constant 0 : index
    %c0_231 = arith.constant 0 : index
    %735 = vector.load %arg7[%c0_230, %c0_231] : memref<256x512xbf16, #tpu.memory_space<vmem>>, vector<256x512xbf16>
    %cst_232 = arith.constant dense<0.000000e+00> : vector<2x512xf32>
    %736 = tpu.matmul %734, %735, %cst_232 {dimension_numbers = #tpu.dot_dimension_numbers<[1], [0], [0], [1], [0, 0, 1, 1], [], []>} : vector<2x256xbf16>, vector<256x512xbf16>, vector<2x512xf32> -> vector<2x512xf32>
    %c12_233 = arith.constant 12 : index
    %c0_234 = arith.constant 0 : index
    %737 = vector.load %arg15[%c12_233, %c0_234] : memref<20x384xf32, #tpu.memory_space<vmem>>, vector<2x384xf32>
    %738 = vector.extract_strided_slice %737 {offsets = [0, 0], sizes = [2, 128], strides = [1, 1]} : vector<2x384xf32> to vector<2x128xf32>
    %739 = vector.extract_strided_slice %736 {offsets = [0, 0], sizes = [2, 128], strides = [1, 1]} : vector<2x512xf32> to vector<2x128xf32>
    %740 = arith.addf %738, %739 : vector<2x128xf32>
    %741 = arith.negf %740 : vector<2x128xf32>
    %742 = math.exp %741 : vector<2x128xf32>
    %cst_235 = arith.constant 1.000000e+00 : f32
    %743 = vector.broadcast %cst_235 : f32 to vector<2x128xf32>
    %744 = arith.addf %743, %742 : vector<2x128xf32>
    %745 = arith.divf %743, %744 : vector<2x128xf32>
    %746 = vector.extract_strided_slice %737 {offsets = [0, 128], sizes = [2, 128], strides = [1, 1]} : vector<2x384xf32> to vector<2x128xf32>
    %747 = vector.extract_strided_slice %736 {offsets = [0, 128], sizes = [2, 128], strides = [1, 1]} : vector<2x512xf32> to vector<2x128xf32>
    %748 = arith.addf %746, %747 : vector<2x128xf32>
    %749 = arith.negf %748 : vector<2x128xf32>
    %750 = math.exp %749 : vector<2x128xf32>
    %cst_236 = arith.constant 1.000000e+00 : f32
    %751 = vector.broadcast %cst_236 : f32 to vector<2x128xf32>
    %752 = arith.addf %751, %750 : vector<2x128xf32>
    %753 = arith.divf %751, %752 : vector<2x128xf32>
    %754 = vector.extract_strided_slice %737 {offsets = [0, 256], sizes = [2, 128], strides = [1, 1]} : vector<2x384xf32> to vector<2x128xf32>
    %755 = vector.extract_strided_slice %736 {offsets = [0, 256], sizes = [2, 128], strides = [1, 1]} : vector<2x512xf32> to vector<2x128xf32>
    %756 = arith.addf %754, %755 : vector<2x128xf32>
    %757 = vector.extract_strided_slice %736 {offsets = [0, 384], sizes = [2, 128], strides = [1, 1]} : vector<2x512xf32> to vector<2x128xf32>
    %758 = arith.addf %757, %378 : vector<2x128xf32>
    %759 = arith.mulf %745, %758 : vector<2x128xf32>
    %760 = arith.addf %756, %759 : vector<2x128xf32>
    %761 = math.tanh %760 : vector<2x128xf32>
    %cst_237 = arith.constant 1.000000e+00 : f32
    %762 = vector.broadcast %cst_237 : f32 to vector<2x128xf32>
    %763 = arith.subf %762, %753 : vector<2x128xf32>
    %764 = arith.mulf %763, %761 : vector<2x128xf32>
    %765 = arith.mulf %753, %710 : vector<2x128xf32>
    %766 = arith.addf %764, %765 : vector<2x128xf32>
    %767 = vector.extract_strided_slice %766 {offsets = [0, 0], sizes = [1, 128], strides = [1, 1]} : vector<2x128xf32> to vector<1x128xf32>
    %c6_238 = arith.constant 6 : index
    %c0_239 = arith.constant 0 : index
    %768 = vector.load %arg17[%c6_238, %c0_239] : memref<24x128xf32, #tpu.memory_space<vmem>>, vector<1x128xf32>
    tpu.vector_store %arg17[%c6_238, %c0_239], %767 {strides = array<i32>} : memref<24x128xf32, #tpu.memory_space<vmem>>, vector<1x128xf32>,
    %769 = vector.extract_strided_slice %766 {offsets = [1, 0], sizes = [1, 128], strides = [1, 1]} : vector<2x128xf32> to vector<1x128xf32>
    %c16_240 = arith.constant 16 : index
    %c0_241 = arith.constant 0 : index
    %770 = vector.load %arg17[%c16_240, %c0_241] : memref<24x128xf32, #tpu.memory_space<vmem>>, vector<1x128xf32>
    tpu.vector_store %arg17[%c16_240, %c0_241], %769 {strides = array<i32>} : memref<24x128xf32, #tpu.memory_space<vmem>>, vector<1x128xf32>,
    %771 = vector.shape_cast %766 : vector<2x128xf32> to vector<2x1x128xf32>
    %772 = vector.broadcast %771 : vector<2x1x128xf32> to vector<2x10x128xf32>
    %773 = arith.mulf %375, %772 : vector<2x10x128xf32>
    %cst_242 = arith.constant dense<0.000000e+00> : vector<2x10xf32>
    %774 = vector.multi_reduction <add>, %773, %cst_242 [2] : vector<2x10x128xf32> to vector<2x10xf32>
    %cst_243 = arith.constant dense<0xFF800000> : vector<2xf32>
    %775 = vector.multi_reduction <maximumf>, %774, %cst_243 [1] : vector<2x10xf32> to vector<2xf32>
    %776 = vector.shape_cast %775 : vector<2xf32> to vector<2x1xf32>
    %777 = vector.broadcast %776 : vector<2x1xf32> to vector<2x10xf32>
    %778 = arith.subf %774, %777 : vector<2x10xf32>
    %779 = math.exp %778 : vector<2x10xf32>
    %cst_244 = arith.constant dense<0.000000e+00> : vector<2xf32>
    %780 = vector.multi_reduction <add>, %779, %cst_244 [1] : vector<2x10xf32> to vector<2xf32>
    %781 = vector.shape_cast %780 : vector<2xf32> to vector<2x1xf32>
    %782 = tpu.reciprocal %781 {approx = true} : vector<2x1xf32> -> vector<2x1xf32>
    %783 = vector.broadcast %782 : vector<2x1xf32> to vector<2x10xf32>
    %784 = arith.mulf %779, %783 : vector<2x10xf32>
    %785 = vector.shape_cast %784 : vector<2x10xf32> to vector<2x10x1xf32>
    %786 = vector.broadcast %785 : vector<2x10x1xf32> to vector<2x10x128xf32>
    %787 = arith.mulf %786, %374 : vector<2x10x128xf32>
    %cst_245 = arith.constant dense<0.000000e+00> : vector<2x128xf32>
    %788 = vector.multi_reduction <add>, %787, %cst_245 [1] : vector<2x10x128xf32> to vector<2x128xf32>
    %789 = tpu.concatenate %788, %766 in 1 : vector<2x128xf32>, vector<2x128xf32> -> vector<2x256xf32>
    %790 = arith.truncf %789 : vector<2x256xf32> to vector<2x256xbf16>
    %c0_246 = arith.constant 0 : index
    %c0_247 = arith.constant 0 : index
    %791 = vector.load %arg7[%c0_246, %c0_247] : memref<256x512xbf16, #tpu.memory_space<vmem>>, vector<256x512xbf16>
    %cst_248 = arith.constant dense<0.000000e+00> : vector<2x512xf32>
    %792 = tpu.matmul %790, %791, %cst_248 {dimension_numbers = #tpu.dot_dimension_numbers<[1], [0], [0], [1], [0, 0, 1, 1], [], []>} : vector<2x256xbf16>, vector<256x512xbf16>, vector<2x512xf32> -> vector<2x512xf32>
    %c14_249 = arith.constant 14 : index
    %c0_250 = arith.constant 0 : index
    %793 = vector.load %arg15[%c14_249, %c0_250] : memref<20x384xf32, #tpu.memory_space<vmem>>, vector<2x384xf32>
    %794 = vector.extract_strided_slice %793 {offsets = [0, 0], sizes = [2, 128], strides = [1, 1]} : vector<2x384xf32> to vector<2x128xf32>
    %795 = vector.extract_strided_slice %792 {offsets = [0, 0], sizes = [2, 128], strides = [1, 1]} : vector<2x512xf32> to vector<2x128xf32>
    %796 = arith.addf %794, %795 : vector<2x128xf32>
    %797 = arith.negf %796 : vector<2x128xf32>
    %798 = math.exp %797 : vector<2x128xf32>
    %cst_251 = arith.constant 1.000000e+00 : f32
    %799 = vector.broadcast %cst_251 : f32 to vector<2x128xf32>
    %800 = arith.addf %799, %798 : vector<2x128xf32>
    %801 = arith.divf %799, %800 : vector<2x128xf32>
    %802 = vector.extract_strided_slice %793 {offsets = [0, 128], sizes = [2, 128], strides = [1, 1]} : vector<2x384xf32> to vector<2x128xf32>
    %803 = vector.extract_strided_slice %792 {offsets = [0, 128], sizes = [2, 128], strides = [1, 1]} : vector<2x512xf32> to vector<2x128xf32>
    %804 = arith.addf %802, %803 : vector<2x128xf32>
    %805 = arith.negf %804 : vector<2x128xf32>
    %806 = math.exp %805 : vector<2x128xf32>
    %cst_252 = arith.constant 1.000000e+00 : f32
    %807 = vector.broadcast %cst_252 : f32 to vector<2x128xf32>
    %808 = arith.addf %807, %806 : vector<2x128xf32>
    %809 = arith.divf %807, %808 : vector<2x128xf32>
    %810 = vector.extract_strided_slice %793 {offsets = [0, 256], sizes = [2, 128], strides = [1, 1]} : vector<2x384xf32> to vector<2x128xf32>
    %811 = vector.extract_strided_slice %792 {offsets = [0, 256], sizes = [2, 128], strides = [1, 1]} : vector<2x512xf32> to vector<2x128xf32>
    %812 = arith.addf %810, %811 : vector<2x128xf32>
    %813 = vector.extract_strided_slice %792 {offsets = [0, 384], sizes = [2, 128], strides = [1, 1]} : vector<2x512xf32> to vector<2x128xf32>
    %814 = arith.addf %813, %378 : vector<2x128xf32>
    %815 = arith.mulf %801, %814 : vector<2x128xf32>
    %816 = arith.addf %812, %815 : vector<2x128xf32>
    %817 = math.tanh %816 : vector<2x128xf32>
    %cst_253 = arith.constant 1.000000e+00 : f32
    %818 = vector.broadcast %cst_253 : f32 to vector<2x128xf32>
    %819 = arith.subf %818, %809 : vector<2x128xf32>
    %820 = arith.mulf %819, %817 : vector<2x128xf32>
    %821 = arith.mulf %809, %766 : vector<2x128xf32>
    %822 = arith.addf %820, %821 : vector<2x128xf32>
    %823 = vector.extract_strided_slice %822 {offsets = [0, 0], sizes = [1, 128], strides = [1, 1]} : vector<2x128xf32> to vector<1x128xf32>
    %c7_254 = arith.constant 7 : index
    %c0_255 = arith.constant 0 : index
    %824 = vector.load %arg17[%c7_254, %c0_255] : memref<24x128xf32, #tpu.memory_space<vmem>>, vector<1x128xf32>
    tpu.vector_store %arg17[%c7_254, %c0_255], %823 {strides = array<i32>} : memref<24x128xf32, #tpu.memory_space<vmem>>, vector<1x128xf32>,
    %825 = vector.extract_strided_slice %822 {offsets = [1, 0], sizes = [1, 128], strides = [1, 1]} : vector<2x128xf32> to vector<1x128xf32>
    %c17_256 = arith.constant 17 : index
    %c0_257 = arith.constant 0 : index
    %826 = vector.load %arg17[%c17_256, %c0_257] : memref<24x128xf32, #tpu.memory_space<vmem>>, vector<1x128xf32>
    tpu.vector_store %arg17[%c17_256, %c0_257], %825 {strides = array<i32>} : memref<24x128xf32, #tpu.memory_space<vmem>>, vector<1x128xf32>,
    %827 = vector.shape_cast %822 : vector<2x128xf32> to vector<2x1x128xf32>
    %828 = vector.broadcast %827 : vector<2x1x128xf32> to vector<2x10x128xf32>
    %829 = arith.mulf %375, %828 : vector<2x10x128xf32>
    %cst_258 = arith.constant dense<0.000000e+00> : vector<2x10xf32>
    %830 = vector.multi_reduction <add>, %829, %cst_258 [2] : vector<2x10x128xf32> to vector<2x10xf32>
    %cst_259 = arith.constant dense<0xFF800000> : vector<2xf32>
    %831 = vector.multi_reduction <maximumf>, %830, %cst_259 [1] : vector<2x10xf32> to vector<2xf32>
    %832 = vector.shape_cast %831 : vector<2xf32> to vector<2x1xf32>
    %833 = vector.broadcast %832 : vector<2x1xf32> to vector<2x10xf32>
    %834 = arith.subf %830, %833 : vector<2x10xf32>
    %835 = math.exp %834 : vector<2x10xf32>
    %cst_260 = arith.constant dense<0.000000e+00> : vector<2xf32>
    %836 = vector.multi_reduction <add>, %835, %cst_260 [1] : vector<2x10xf32> to vector<2xf32>
    %837 = vector.shape_cast %836 : vector<2xf32> to vector<2x1xf32>
    %838 = tpu.reciprocal %837 {approx = true} : vector<2x1xf32> -> vector<2x1xf32>
    %839 = vector.broadcast %838 : vector<2x1xf32> to vector<2x10xf32>
    %840 = arith.mulf %835, %839 : vector<2x10xf32>
    %841 = vector.shape_cast %840 : vector<2x10xf32> to vector<2x10x1xf32>
    %842 = vector.broadcast %841 : vector<2x10x1xf32> to vector<2x10x128xf32>
    %843 = arith.mulf %842, %374 : vector<2x10x128xf32>
    %cst_261 = arith.constant dense<0.000000e+00> : vector<2x128xf32>
    %844 = vector.multi_reduction <add>, %843, %cst_261 [1] : vector<2x10x128xf32> to vector<2x128xf32>
    %845 = tpu.concatenate %844, %822 in 1 : vector<2x128xf32>, vector<2x128xf32> -> vector<2x256xf32>
    %846 = arith.truncf %845 : vector<2x256xf32> to vector<2x256xbf16>
    %c0_262 = arith.constant 0 : index
    %c0_263 = arith.constant 0 : index
    %847 = vector.load %arg7[%c0_262, %c0_263] : memref<256x512xbf16, #tpu.memory_space<vmem>>, vector<256x512xbf16>
    %cst_264 = arith.constant dense<0.000000e+00> : vector<2x512xf32>
    %848 = tpu.matmul %846, %847, %cst_264 {dimension_numbers = #tpu.dot_dimension_numbers<[1], [0], [0], [1], [0, 0, 1, 1], [], []>} : vector<2x256xbf16>, vector<256x512xbf16>, vector<2x512xf32> -> vector<2x512xf32>
    %c16_265 = arith.constant 16 : index
    %c0_266 = arith.constant 0 : index
    %849 = vector.load %arg15[%c16_265, %c0_266] : memref<20x384xf32, #tpu.memory_space<vmem>>, vector<2x384xf32>
    %850 = vector.extract_strided_slice %849 {offsets = [0, 0], sizes = [2, 128], strides = [1, 1]} : vector<2x384xf32> to vector<2x128xf32>
    %851 = vector.extract_strided_slice %848 {offsets = [0, 0], sizes = [2, 128], strides = [1, 1]} : vector<2x512xf32> to vector<2x128xf32>
    %852 = arith.addf %850, %851 : vector<2x128xf32>
    %853 = arith.negf %852 : vector<2x128xf32>
    %854 = math.exp %853 : vector<2x128xf32>
    %cst_267 = arith.constant 1.000000e+00 : f32
    %855 = vector.broadcast %cst_267 : f32 to vector<2x128xf32>
    %856 = arith.addf %855, %854 : vector<2x128xf32>
    %857 = arith.divf %855, %856 : vector<2x128xf32>
    %858 = vector.extract_strided_slice %849 {offsets = [0, 128], sizes = [2, 128], strides = [1, 1]} : vector<2x384xf32> to vector<2x128xf32>
    %859 = vector.extract_strided_slice %848 {offsets = [0, 128], sizes = [2, 128], strides = [1, 1]} : vector<2x512xf32> to vector<2x128xf32>
    %860 = arith.addf %858, %859 : vector<2x128xf32>
    %861 = arith.negf %860 : vector<2x128xf32>
    %862 = math.exp %861 : vector<2x128xf32>
    %cst_268 = arith.constant 1.000000e+00 : f32
    %863 = vector.broadcast %cst_268 : f32 to vector<2x128xf32>
    %864 = arith.addf %863, %862 : vector<2x128xf32>
    %865 = arith.divf %863, %864 : vector<2x128xf32>
    %866 = vector.extract_strided_slice %849 {offsets = [0, 256], sizes = [2, 128], strides = [1, 1]} : vector<2x384xf32> to vector<2x128xf32>
    %867 = vector.extract_strided_slice %848 {offsets = [0, 256], sizes = [2, 128], strides = [1, 1]} : vector<2x512xf32> to vector<2x128xf32>
    %868 = arith.addf %866, %867 : vector<2x128xf32>
    %869 = vector.extract_strided_slice %848 {offsets = [0, 384], sizes = [2, 128], strides = [1, 1]} : vector<2x512xf32> to vector<2x128xf32>
    %870 = arith.addf %869, %378 : vector<2x128xf32>
    %871 = arith.mulf %857, %870 : vector<2x128xf32>
    %872 = arith.addf %868, %871 : vector<2x128xf32>
    %873 = math.tanh %872 : vector<2x128xf32>
    %cst_269 = arith.constant 1.000000e+00 : f32
    %874 = vector.broadcast %cst_269 : f32 to vector<2x128xf32>
    %875 = arith.subf %874, %865 : vector<2x128xf32>
    %876 = arith.mulf %875, %873 : vector<2x128xf32>
    %877 = arith.mulf %865, %822 : vector<2x128xf32>
    %878 = arith.addf %876, %877 : vector<2x128xf32>
    %879 = vector.extract_strided_slice %878 {offsets = [0, 0], sizes = [1, 128], strides = [1, 1]} : vector<2x128xf32> to vector<1x128xf32>
    %c8_270 = arith.constant 8 : index
    %c0_271 = arith.constant 0 : index
    %880 = vector.load %arg17[%c8_270, %c0_271] : memref<24x128xf32, #tpu.memory_space<vmem>>, vector<1x128xf32>
    tpu.vector_store %arg17[%c8_270, %c0_271], %879 {strides = array<i32>} : memref<24x128xf32, #tpu.memory_space<vmem>>, vector<1x128xf32>,
    %881 = vector.extract_strided_slice %878 {offsets = [1, 0], sizes = [1, 128], strides = [1, 1]} : vector<2x128xf32> to vector<1x128xf32>
    %c18_272 = arith.constant 18 : index
    %c0_273 = arith.constant 0 : index
    %882 = vector.load %arg17[%c18_272, %c0_273] : memref<24x128xf32, #tpu.memory_space<vmem>>, vector<1x128xf32>
    tpu.vector_store %arg17[%c18_272, %c0_273], %881 {strides = array<i32>} : memref<24x128xf32, #tpu.memory_space<vmem>>, vector<1x128xf32>,
    %883 = vector.shape_cast %878 : vector<2x128xf32> to vector<2x1x128xf32>
    %884 = vector.broadcast %883 : vector<2x1x128xf32> to vector<2x10x128xf32>
    %885 = arith.mulf %375, %884 : vector<2x10x128xf32>
    %cst_274 = arith.constant dense<0.000000e+00> : vector<2x10xf32>
    %886 = vector.multi_reduction <add>, %885, %cst_274 [2] : vector<2x10x128xf32> to vector<2x10xf32>
    %cst_275 = arith.constant dense<0xFF800000> : vector<2xf32>
    %887 = vector.multi_reduction <maximumf>, %886, %cst_275 [1] : vector<2x10xf32> to vector<2xf32>
    %888 = vector.shape_cast %887 : vector<2xf32> to vector<2x1xf32>
    %889 = vector.broadcast %888 : vector<2x1xf32> to vector<2x10xf32>
    %890 = arith.subf %886, %889 : vector<2x10xf32>
    %891 = math.exp %890 : vector<2x10xf32>
    %cst_276 = arith.constant dense<0.000000e+00> : vector<2xf32>
    %892 = vector.multi_reduction <add>, %891, %cst_276 [1] : vector<2x10xf32> to vector<2xf32>
    %893 = vector.shape_cast %892 : vector<2xf32> to vector<2x1xf32>
    %894 = tpu.reciprocal %893 {approx = true} : vector<2x1xf32> -> vector<2x1xf32>
    %895 = vector.broadcast %894 : vector<2x1xf32> to vector<2x10xf32>
    %896 = arith.mulf %891, %895 : vector<2x10xf32>
    %897 = vector.shape_cast %896 : vector<2x10xf32> to vector<2x10x1xf32>
    %898 = vector.broadcast %897 : vector<2x10x1xf32> to vector<2x10x128xf32>
    %899 = arith.mulf %898, %374 : vector<2x10x128xf32>
    %cst_277 = arith.constant dense<0.000000e+00> : vector<2x128xf32>
    %900 = vector.multi_reduction <add>, %899, %cst_277 [1] : vector<2x10x128xf32> to vector<2x128xf32>
    %901 = tpu.concatenate %900, %878 in 1 : vector<2x128xf32>, vector<2x128xf32> -> vector<2x256xf32>
    %902 = arith.truncf %901 : vector<2x256xf32> to vector<2x256xbf16>
    %c0_278 = arith.constant 0 : index
    %c0_279 = arith.constant 0 : index
    %903 = vector.load %arg7[%c0_278, %c0_279] : memref<256x512xbf16, #tpu.memory_space<vmem>>, vector<256x512xbf16>
    %cst_280 = arith.constant dense<0.000000e+00> : vector<2x512xf32>
    %904 = tpu.matmul %902, %903, %cst_280 {dimension_numbers = #tpu.dot_dimension_numbers<[1], [0], [0], [1], [0, 0, 1, 1], [], []>} : vector<2x256xbf16>, vector<256x512xbf16>, vector<2x512xf32> -> vector<2x512xf32>
    %c18_281 = arith.constant 18 : index
    %c0_282 = arith.constant 0 : index
    %905 = vector.load %arg15[%c18_281, %c0_282] : memref<20x384xf32, #tpu.memory_space<vmem>>, vector<2x384xf32>
    %906 = vector.extract_strided_slice %905 {offsets = [0, 0], sizes = [2, 128], strides = [1, 1]} : vector<2x384xf32> to vector<2x128xf32>
    %907 = vector.extract_strided_slice %904 {offsets = [0, 0], sizes = [2, 128], strides = [1, 1]} : vector<2x512xf32> to vector<2x128xf32>
    %908 = arith.addf %906, %907 : vector<2x128xf32>
    %909 = arith.negf %908 : vector<2x128xf32>
    %910 = math.exp %909 : vector<2x128xf32>
    %cst_283 = arith.constant 1.000000e+00 : f32
    %911 = vector.broadcast %cst_283 : f32 to vector<2x128xf32>
    %912 = arith.addf %911, %910 : vector<2x128xf32>
    %913 = arith.divf %911, %912 : vector<2x128xf32>
    %914 = vector.extract_strided_slice %905 {offsets = [0, 128], sizes = [2, 128], strides = [1, 1]} : vector<2x384xf32> to vector<2x128xf32>
    %915 = vector.extract_strided_slice %904 {offsets = [0, 128], sizes = [2, 128], strides = [1, 1]} : vector<2x512xf32> to vector<2x128xf32>
    %916 = arith.addf %914, %915 : vector<2x128xf32>
    %917 = arith.negf %916 : vector<2x128xf32>
    %918 = math.exp %917 : vector<2x128xf32>
    %cst_284 = arith.constant 1.000000e+00 : f32
    %919 = vector.broadcast %cst_284 : f32 to vector<2x128xf32>
    %920 = arith.addf %919, %918 : vector<2x128xf32>
    %921 = arith.divf %919, %920 : vector<2x128xf32>
    %922 = vector.extract_strided_slice %905 {offsets = [0, 256], sizes = [2, 128], strides = [1, 1]} : vector<2x384xf32> to vector<2x128xf32>
    %923 = vector.extract_strided_slice %904 {offsets = [0, 256], sizes = [2, 128], strides = [1, 1]} : vector<2x512xf32> to vector<2x128xf32>
    %924 = arith.addf %922, %923 : vector<2x128xf32>
    %925 = vector.extract_strided_slice %904 {offsets = [0, 384], sizes = [2, 128], strides = [1, 1]} : vector<2x512xf32> to vector<2x128xf32>
    %926 = arith.addf %925, %378 : vector<2x128xf32>
    %927 = arith.mulf %913, %926 : vector<2x128xf32>
    %928 = arith.addf %924, %927 : vector<2x128xf32>
    %929 = math.tanh %928 : vector<2x128xf32>
    %cst_285 = arith.constant 1.000000e+00 : f32
    %930 = vector.broadcast %cst_285 : f32 to vector<2x128xf32>
    %931 = arith.subf %930, %921 : vector<2x128xf32>
    %932 = arith.mulf %931, %929 : vector<2x128xf32>
    %933 = arith.mulf %921, %878 : vector<2x128xf32>
    %934 = arith.addf %932, %933 : vector<2x128xf32>
    %935 = vector.extract_strided_slice %934 {offsets = [0, 0], sizes = [1, 128], strides = [1, 1]} : vector<2x128xf32> to vector<1x128xf32>
    %c9_286 = arith.constant 9 : index
    %c0_287 = arith.constant 0 : index
    %936 = vector.load %arg17[%c9_286, %c0_287] : memref<24x128xf32, #tpu.memory_space<vmem>>, vector<1x128xf32>
    tpu.vector_store %arg17[%c9_286, %c0_287], %935 {strides = array<i32>} : memref<24x128xf32, #tpu.memory_space<vmem>>, vector<1x128xf32>,
    %937 = vector.extract_strided_slice %934 {offsets = [1, 0], sizes = [1, 128], strides = [1, 1]} : vector<2x128xf32> to vector<1x128xf32>
    %c19_288 = arith.constant 19 : index
    %c0_289 = arith.constant 0 : index
    %938 = vector.load %arg17[%c19_288, %c0_289] : memref<24x128xf32, #tpu.memory_space<vmem>>, vector<1x128xf32>
    tpu.vector_store %arg17[%c19_288, %c0_289], %937 {strides = array<i32>} : memref<24x128xf32, #tpu.memory_space<vmem>>, vector<1x128xf32>,
    %c0_290 = arith.constant 0 : index
    %c0_291 = arith.constant 0 : index
    %939 = vector.load %arg17[%c0_290, %c0_291] : memref<24x128xf32, #tpu.memory_space<vmem>>, vector<24x128xf32>
    %940 = arith.truncf %939 : vector<24x128xf32> to vector<24x128xbf16>
    %c0_292 = arith.constant 0 : index
    %c0_293 = arith.constant 0 : index
    %941 = vector.load %arg11[%c0_292, %c0_293] : memref<128x128xbf16, #tpu.memory_space<vmem>>, vector<128x128xbf16>
    %cst_294 = arith.constant dense<0.000000e+00> : vector<24x128xf32>
    %942 = tpu.matmul %940, %941, %cst_294 {dimension_numbers = #tpu.dot_dimension_numbers<[1], [0], [0], [1], [0, 0, 1, 1], [], []>} : vector<24x128xbf16>, vector<128x128xbf16>, vector<24x128xf32> -> vector<24x128xf32>
    %c0_295 = arith.constant 0 : index
    %c0_296 = arith.constant 0 : index
    %943 = vector.load %arg12[%c0_295, %c0_296] : memref<1x128xf32, #tpu.memory_space<vmem>>, vector<1x128xf32>
    %944 = vector.broadcast %943 : vector<1x128xf32> to vector<24x128xf32>
    %945 = arith.addf %942, %944 : vector<24x128xf32>
    %c0_297 = arith.constant 0 : index
    %c0_298 = arith.constant 0 : index
    %946 = vector.load %arg13[%c0_297, %c0_298] : memref<24x128xf32, #tpu.memory_space<vmem>>, vector<24x128xf32>
    tpu.vector_store %arg13[%c0_297, %c0_298], %945 {strides = array<i32>} : memref<24x128xf32, #tpu.memory_space<vmem>>, vector<24x128xf32>,
    return
  }
}

</mosaic_0001>

<llo_original>
// kernel: seq2seq_forward.1
$region0: #{seq2seq_forward.1}
  #allocation0 [shape = 'u32[]', space=smem, size = 0x4, offset = 0x4, fixed_abs, tag = 'smem constant byte address 0x4 - core index']
  #allocation1 [shape = 'u32[72,128]{1,0:T(1,128)}', space=vmem, size = 0x9000, scoped, tag = 'internal scratch']
  #allocation2 [shape = 'f32[20,384]{1,0:T(8,128)}', space=vmem, size = 0x9000, scoped, tag = 'scratch operand']
  #allocation3 [shape = 'f32[20,384]{1,0:T(8,128)}', space=vmem, size = 0x9000, scoped, tag = 'scratch operand']
  #allocation4 [shape = 'f32[20,128]{1,0:T(8,128)}', space=vmem, size = 0x3000, scoped, tag = 'scratch operand']
  #allocation5 [shape = 'f32[24,128]{1,0:T(8,128)}', space=vmem, size = 0x3000, scoped, tag = 'scratch operand']
  %s0 = inlined_call_operand.vmem [shape: bf16[20,64], index: 0, kind: input, shape index: {}]
  %s1 = inlined_call_operand.vmem [shape: bf16[20,64], index: 1, kind: input, shape index: {}]
  %s2 = inlined_call_operand.hbm [shape: bf16[64,384], index: 2, kind: input, shape index: {}]
  %s3 = inlined_call_operand.hbm [shape: bf16[128,384], index: 3, kind: input, shape index: {}]
  %s4 = inlined_call_operand.vmem [shape: f32[1,384], index: 4, kind: input, shape index: {}]
  %s5 = inlined_call_operand.vmem [shape: f32[1,384], index: 5, kind: input, shape index: {}]
  %s6 = inlined_call_operand.hbm [shape: bf16[64,384], index: 6, kind: input, shape index: {}]
  %s7 = inlined_call_operand.vmem [shape: bf16[256,512], index: 7, kind: input, shape index: {}]
  %s8 = inlined_call_operand.vmem [shape: f32[1,384], index: 8, kind: input, shape index: {}]
  %s9 = inlined_call_operand.vmem [shape: f32[1,128], index: 9, kind: input, shape index: {}]
  %s10 = inlined_call_operand.hbm [shape: bf16[128,128], index: 10, kind: input, shape index: {}]
  %s11 = inlined_call_operand.hbm [shape: bf16[128,128], index: 11, kind: input, shape index: {}]
  %s12 = inlined_call_operand.vmem [shape: f32[1,128], index: 12, kind: input, shape index: {}]
  %s13 = inlined_call_operand.hbm [shape: f32[24,128], index: 13, kind: output, shape index: {}]
  %s14 = sld [smem:[#allocation0]]
  $region82: #{seq2seq_forward.1} parent=0
    _
  %s16 = ssub.s32 1, %s14
  %s17 = scalar_select 0, %s16, %s14
  $region1: #{seq2seq_forward.1} parent=0
    #allocation6 [shape = 'u8[49152]{0}', space=vmem, size = 0xc000, scoped, tag = 'input window, operand 2, single buffered']
    #allocation7 [shape = 's32[1]{0}', space=sflag, size = 0x4, scoped, tag = 'scoped memory for seq2seq_forward.1']
    #allocation8 [shape = 's32[1]{0}', space=sflag, size = 0x4, scoped, tag = 'scoped memory for seq2seq_forward.1']
    #allocation9 [shape = 'u8[98304]{0}', space=vmem, size = 0x18000, scoped, tag = 'input window, operand 3, single buffered']
    #allocation10 [shape = 's32[1]{0}', space=sflag, size = 0x4, scoped, tag = 'scoped memory for seq2seq_forward.1']
    #allocation11 [shape = 'u8[49152]{0}', space=vmem, size = 0xc000, scoped, tag = 'input window, operand 6, single buffered']
    #allocation12 [shape = 'u8[32768]{0}', space=vmem, size = 0x8000, scoped, tag = 'input window, operand 10, single buffered']
    #allocation13 [shape = 's32[1]{0}', space=sflag, size = 0x4, scoped, tag = 'scoped memory for seq2seq_forward.1']
    #allocation14 [shape = 'u8[32768]{0}', space=vmem, size = 0x8000, scoped, tag = 'input window, operand 11, single buffered']
    #allocation15 [shape = 'u8[12288]{0}', space=vmem, size = 0x3000, scoped, tag = 'output window, operand 0, single buffered']
    %18 = vsyncpa [#allocation7], 0
    %19 = vsyncpa [#allocation10], 0
    %20 = vsyncpa [#allocation13], 0
    %21 = vsyncpa [#allocation8], 0
    // Predicated region
    $region2: #{seq2seq_forward.1} parent=1 // pred_check
      _
    $region3: #{seq2seq_forward.1} parent=1 // pred_check_branch
      %23 = sbr.rel (0) target = $region5
    $region4: #{seq2seq_forward.1} parent=1 // pred_region
      _
    $region5: #{seq2seq_forward.1} parent=1 // pred_fallthru
      _
    // Predicated region
    $region6: #{seq2seq_forward.1} parent=1 // pred_check
      _
    $region7: #{seq2seq_forward.1} parent=1 // pred_check_branch
      %25 = sbr.rel (0) target = $region9
    $region8: #{seq2seq_forward.1} parent=1 // pred_region
      _
    $region9: #{seq2seq_forward.1} parent=1 // pred_fallthru
      _
    // Predicated region
    $region10: #{seq2seq_forward.1} parent=1 // pred_check
      _
    $region11: #{seq2seq_forward.1} parent=1 // pred_check_branch
      %27 = sbr.rel (0) target = $region13
    $region12: #{seq2seq_forward.1} parent=1 // pred_region
      %29 = vsyncadd [#allocation7], 0
      %s30 = sshll.u32 %s2, 4
      %s31 = int_to_ptr.hbm [resolvable:$true] %s30
      %s32 = sshll.u32 [#allocation6], 4
      %s33 = int_to_ptr.vmem [resolvable:$true] %s32
      %38 = dma.hbm_to_vmem [thread:$0]  %s31, 1536, %s33, [#allocation7], 192, 192, 12
    $region13: #{seq2seq_forward.1} parent=1 // pred_fallthru
      _
    // Predicated region
    $region14: #{seq2seq_forward.1} parent=1 // pred_check
      _
    $region15: #{seq2seq_forward.1} parent=1 // pred_check_branch
      %40 = sbr.rel (0) target = $region17
    $region16: #{seq2seq_forward.1} parent=1 // pred_region
      %42 = vsyncadd [#allocation10], 0
      %s43 = sshll.u32 %s3, 4
      %s44 = int_to_ptr.hbm [resolvable:$true] %s43
      %s45 = sshll.u32 [#allocation9], 4
      %s46 = int_to_ptr.vmem [resolvable:$true] %s45
      %51 = dma.hbm_to_vmem [thread:$0]  %s44, 3072, %s46, [#allocation10], 192, 192, 12
    $region17: #{seq2seq_forward.1} parent=1 // pred_fallthru
      _
    // Predicated region
    $region18: #{seq2seq_forward.1} parent=1 // pred_check
      _
    $region19: #{seq2seq_forward.1} parent=1 // pred_check_branch
      %53 = sbr.rel (0) target = $region21
    $region20: #{seq2seq_forward.1} parent=1 // pred_region
      _
    $region21: #{seq2seq_forward.1} parent=1 // pred_fallthru
      _
    // Predicated region
    $region22: #{seq2seq_forward.1} parent=1 // pred_check
      _
    $region23: #{seq2seq_forward.1} parent=1 // pred_check_branch
      %55 = sbr.rel (0) target = $region25
    $region24: #{seq2seq_forward.1} parent=1 // pred_region
      _
    $region25: #{seq2seq_forward.1} parent=1 // pred_fallthru
      _
    // Predicated region
    $region26: #{seq2seq_forward.1} parent=1 // pred_check
      _
    $region27: #{seq2seq_forward.1} parent=1 // pred_check_branch
      %57 = sbr.rel (0) target = $region29
    $region28: #{seq2seq_forward.1} parent=1 // pred_region
      %59 = vsyncadd [#allocation10], 0
      %s60 = sshll.u32 %s6, 4
      %s61 = int_to_ptr.hbm [resolvable:$true] %s60
      %s62 = sshll.u32 [#allocation11], 4
      %s63 = int_to_ptr.vmem [resolvable:$true] %s62
      %68 = dma.hbm_to_vmem [thread:$0]  %s61, 1536, %s63, [#allocation10], 192, 192, 12
    $region29: #{seq2seq_forward.1} parent=1 // pred_fallthru
      _
    // Predicated region
    $region30: #{seq2seq_forward.1} parent=1 // pred_check
      _
    $region31: #{seq2seq_forward.1} parent=1 // pred_check_branch
      %70 = sbr.rel (0) target = $region33
    $region32: #{seq2seq_forward.1} parent=1 // pred_region
      _
    $region33: #{seq2seq_forward.1} parent=1 // pred_fallthru
      _
    // Predicated region
    $region34: #{seq2seq_forward.1} parent=1 // pred_check
      _
    $region35: #{seq2seq_forward.1} parent=1 // pred_check_branch
      %72 = sbr.rel (0) target = $region37
    $region36: #{seq2seq_forward.1} parent=1 // pred_region
      _
    $region37: #{seq2seq_forward.1} parent=1 // pred_fallthru
      _
    // Predicated region
    $region38: #{seq2seq_forward.1} parent=1 // pred_check
      _
    $region39: #{seq2seq_forward.1} parent=1 // pred_check_branch
      %74 = sbr.rel (0) target = $region41
    $region40: #{seq2seq_forward.1} parent=1 // pred_region
      _
    $region41: #{seq2seq_forward.1} parent=1 // pred_fallthru
      _
    // Predicated region
    $region42: #{seq2seq_forward.1} parent=1 // pred_check
      _
    $region43: #{seq2seq_forward.1} parent=1 // pred_check_branch
      %76 = sbr.rel (0) target = $region45
    $region44: #{seq2seq_forward.1} parent=1 // pred_region
      %78 = vsyncadd [#allocation13], 0
      %s79 = sshll.u32 %s10, 4
      %s80 = int_to_ptr.hbm [resolvable:$true] %s79
      %s81 = sshll.u32 [#allocation12], 4
      %s82 = int_to_ptr.vmem [resolvable:$true] %s81
      %87 = dma.hbm_to_vmem [thread:$0]  %s80, 1024, %s82, [#allocation13], 64, 64, 4
    $region45: #{seq2seq_forward.1} parent=1 // pred_fallthru
      _
    // Predicated region
    $region46: #{seq2seq_forward.1} parent=1 // pred_check
      _
    $region47: #{seq2seq_forward.1} parent=1 // pred_check_branch
      %89 = sbr.rel (0) target = $region49
    $region48: #{seq2seq_forward.1} parent=1 // pred_region
      %91 = vsyncadd [#allocation13], 0
      %s92 = sshll.u32 %s11, 4
      %s93 = int_to_ptr.hbm [resolvable:$true] %s92
      %s94 = sshll.u32 [#allocation14], 4
      %s95 = int_to_ptr.vmem [resolvable:$true] %s94
      %100 = dma.hbm_to_vmem [thread:$0]  %s93, 1024, %s95, [#allocation13], 64, 64, 4
    $region49: #{seq2seq_forward.1} parent=1 // pred_fallthru
      _
    // Predicated region
    $region50: #{seq2seq_forward.1} parent=1 // pred_check
      _
    $region51: #{seq2seq_forward.1} parent=1 // pred_check_branch
      %102 = sbr.rel (0) target = $region53
    $region52: #{seq2seq_forward.1} parent=1 // pred_region
      _
    $region53: #{seq2seq_forward.1} parent=1 // pred_fallthru
      _
    // Predicated region
    $region54: #{seq2seq_forward.1} parent=1 // pred_check
      _
    $region55: #{seq2seq_forward.1} parent=1 // pred_check_branch
      %104 = sbr.rel (0) target = $region57
    $region56: #{seq2seq_forward.1} parent=1 // pred_region
      %106 = dma.done [#allocation7], 1536
    $region57: #{seq2seq_forward.1} parent=1 // pred_fallthru
      _
    // Predicated region
    $region58: #{seq2seq_forward.1} parent=1 // pred_check
      _
    $region59: #{seq2seq_forward.1} parent=1 // pred_check_branch
      %108 = sbr.rel (0) target = $region61
    $region60: #{seq2seq_forward.1} parent=1 // pred_region
      %110 = dma.done [#allocation10], 3072
    $region61: #{seq2seq_forward.1} parent=1 // pred_fallthru
      _
    // Predicated region
    $region62: #{seq2seq_forward.1} parent=1 // pred_check
      _
    $region63: #{seq2seq_forward.1} parent=1 // pred_check_branch
      %112 = sbr.rel (0) target = $region65
    $region64: #{seq2seq_forward.1} parent=1 // pred_region
      %114 = dma.done [#allocation10], 1536
    $region65: #{seq2seq_forward.1} parent=1 // pred_fallthru
      _
    // Predicated region
    $region66: #{seq2seq_forward.1} parent=1 // pred_check
      _
    $region67: #{seq2seq_forward.1} parent=1 // pred_check_branch
      %116 = sbr.rel (0) target = $region69
    $region68: #{seq2seq_forward.1} parent=1 // pred_region
      %118 = dma.done [#allocation13], 1024
    $region69: #{seq2seq_forward.1} parent=1 // pred_fallthru
      _
    // Predicated region
    $region70: #{seq2seq_forward.1} parent=1 // pred_check
      _
    $region71: #{seq2seq_forward.1} parent=1 // pred_check_branch
      %120 = sbr.rel (0) target = $region73
    $region72: #{seq2seq_forward.1} parent=1 // pred_region
      %122 = dma.done [#allocation13], 1024
    $region73: #{seq2seq_forward.1} parent=1 // pred_fallthru
      _
    %124 = vst [vmem:[#allocation5] sm:$0xff] 0.0
    %125 = vst [vmem:[#allocation5 + $0x8] sm:$0xff] 0.0
    %126 = vst [vmem:[#allocation5 + $0x10] sm:$0xff] 0.0
    %v127 = vld [vmem:[%s0] sm:$0xf]
    %v128 = vld [vmem:[%s0 + $0x4] sm:$0xf]
    %v129 = vld [vmem:[%s0 + $0x8] sm:$0x3]
    %v130 = vld [vmem:[#allocation6] sm:$0xff]
    %v131 = vld [vmem:[#allocation6 + $0x8] sm:$0xf]
    %v132 = vld [vmem:[#allocation6 + $0xc] sm:$0xff]
    %v133 = vld [vmem:[#allocation6 + $0x14] sm:$0xf]
    %v134 = vld [vmem:[#allocation6 + $0x18] sm:$0xff]
    %v135 = vld [vmem:[#allocation6 + $0x20] sm:$0xf]
    %v136 = vld [vmem:[#allocation6 + $0x24] sm:$0xff]
    %v137 = vld [vmem:[#allocation6 + $0x2c] sm:$0xf]
    %v138 = vld [vmem:[#allocation6 + $0x30] sm:$0xff]
    %v139 = vld [vmem:[#allocation6 + $0x38] sm:$0xf]
    %v140 = vld [vmem:[#allocation6 + $0x3c] sm:$0xff]
    %v141 = vld [vmem:[#allocation6 + $0x44] sm:$0xf]
    %v142 = vld [vmem:[#allocation6 + $0x48] sm:$0xff]
    %v143 = vld [vmem:[#allocation6 + $0x50] sm:$0xf]
    %v144 = vld [vmem:[#allocation6 + $0x54] sm:$0xff]
    %v145 = vld [vmem:[#allocation6 + $0x5c] sm:$0xf]
    %v146 = vld [vmem:[%s4] sm:$0x7]
    %v148 = vperm.slane %v146, 0
    %v149 = vperm.slane %v146, 1
    %v150 = vperm.slane %v146, 2
    %v157 = vunpack.c.l.b16 %v127
    %v158 = vunpack.c.l.b16 %v128
    %v159 = vunpack.c.l.b16 %v129
    %v160 = vpack.c.b16 %v158, %v157
    %v161 = vpack.c.b16 %v159, %v159
    %v178 = vunpack.c.l.b16 %v130
    %v179 = vunpack.c.h.b16 %v130
    %v180 = vunpack.c.l.b16 %v131
    %v181 = vunpack.c.l.b16 %v132
    %v182 = vunpack.c.h.b16 %v132
    %v183 = vunpack.c.l.b16 %v133
    %v184 = vunpack.c.l.b16 %v134
    %v185 = vunpack.c.h.b16 %v134
    %v186 = vunpack.c.l.b16 %v135
    %v187 = vunpack.c.l.b16 %v136
    %v188 = vunpack.c.h.b16 %v136
    %v189 = vunpack.c.l.b16 %v137
    %v190 = vunpack.c.l.b16 %v138
    %v191 = vunpack.c.h.b16 %v138
    %v192 = vunpack.c.l.b16 %v139
    %v193 = vunpack.c.l.b16 %v140
    %v194 = vunpack.c.h.b16 %v140
    %v195 = vunpack.c.l.b16 %v141
    %v196 = vunpack.c.l.b16 %v142
    %v197 = vunpack.c.h.b16 %v142
    %v198 = vunpack.c.l.b16 %v143
    %v199 = vunpack.c.l.b16 %v144
    %v200 = vunpack.c.h.b16 %v144
    %v201 = vunpack.c.l.b16 %v145
    %v202 = vpack.c.b16 %v181, %v178
    %v203 = vpack.c.b16 %v182, %v179
    %v204 = vpack.c.b16 %v183, %v180
    %v205 = vpack.c.b16 %v187, %v184
    %v206 = vpack.c.b16 %v188, %v185
    %v207 = vpack.c.b16 %v189, %v186
    %v208 = vpack.c.b16 %v193, %v190
    %v209 = vpack.c.b16 %v194, %v191
    %v210 = vpack.c.b16 %v195, %v192
    %v211 = vpack.c.b16 %v199, %v196
    %v212 = vpack.c.b16 %v200, %v197
    %v213 = vpack.c.b16 %v201, %v198
    %vm226 = vcmask 523264
    %v228 = vsel %vm226, %v160, 0
    %v231 = vsel %vm226, %v161, 0
    %233 = vmatpush.bf16.msra.mxu0 0
    %234 = vmatpush.bf16.msra.mxu0 0
    %235 = vmatpush.bf16.msra.mxu0 0
    %236 = vmatpush.bf16.msra.mxu0 0
    %237 = vmatpush.bf16.msra.mxu0 %v211
    %238 = vmatpush.bf16.msra.mxu0 %v208
    %239 = vmatpush.bf16.msra.mxu0 %v205
    %240 = vmatpush.bf16.msra.mxu0 %v202
    %241 = vmatmul.bf16.gmra.mxu0 %v228
    %v242 = vpop.f32.mrf.mxu0
    %v243 = vadd.f32 %v148, %v242
    %v244 = vpop.f32.mrf.mxu0
    %v245 = vadd.f32 %v148, %v244
    %246 = vmatmul.bf16.gmra.mxu0 %v231
    %v247 = vpop.f32.mrf.mxu0
    %v248 = vadd.f32 %v148, %v247
    %v249 = vpop.f32.mrf.mxu0
    %250 = vdwg.mxu0
    %251 = vmatpush.bf16.msra.mxu0 0
    %252 = vmatpush.bf16.msra.mxu0 0
    %253 = vmatpush.bf16.msra.mxu0 0
    %254 = vmatpush.bf16.msra.mxu0 0
    %255 = vmatpush.bf16.msra.mxu0 %v212
    %256 = vmatpush.bf16.msra.mxu0 %v209
    %257 = vmatpush.bf16.msra.mxu0 %v206
    %258 = vmatpush.bf16.msra.mxu0 %v203
    %259 = vmatmul.bf16.gmra.mxu0 %v228
    %v260 = vpop.f32.mrf.mxu0
    %v261 = vadd.f32 %v149, %v260
    %v262 = vpop.f32.mrf.mxu0
    %v263 = vadd.f32 %v149, %v262
    %264 = vmatmul.bf16.gmra.mxu0 %v231
    %v265 = vpop.f32.mrf.mxu0
    %v266 = vadd.f32 %v149, %v265
    %v267 = vpop.f32.mrf.mxu0
    %268 = vdwg.mxu0
    %269 = vmatpush.bf16.msra.mxu0 0
    %270 = vmatpush.bf16.msra.mxu0 0
    %271 = vmatpush.bf16.msra.mxu0 0
    %272 = vmatpush.bf16.msra.mxu0 0
    %273 = vmatpush.bf16.msra.mxu0 %v213
    %274 = vmatpush.bf16.msra.mxu0 %v210
    %275 = vmatpush.bf16.msra.mxu0 %v207
    %276 = vmatpush.bf16.msra.mxu0 %v204
    %277 = vmatmul.bf16.gmra.mxu0 %v228
    %v278 = vpop.f32.mrf.mxu0
    %v279 = vadd.f32 %v150, %v278
    %v280 = vpop.f32.mrf.mxu0
    %v281 = vadd.f32 %v150, %v280
    %282 = vmatmul.bf16.gmra.mxu0 %v231
    %v283 = vpop.f32.mrf.mxu0
    %v284 = vadd.f32 %v150, %v283
    %v285 = vpop.f32.mrf.mxu0
    %286 = vdwg.mxu0
    %287 = vst [vmem:[#allocation2] sm:$0xff] %v243
    %288 = vst [vmem:[#allocation2 + $0x8] sm:$0xff] %v261
    %289 = vst [vmem:[#allocation2 + $0x10] sm:$0xff] %v279
    %290 = vst [vmem:[#allocation2 + $0x18] sm:$0xff] %v245
    %291 = vst [vmem:[#allocation2 + $0x20] sm:$0xff] %v263
    %292 = vst [vmem:[#allocation2 + $0x28] sm:$0xff] %v281
    %293 = vst [vmem:[#allocation2 + $0x30] sm:$0xf] %v248
    %294 = vst [vmem:[#allocation2 + $0x38] sm:$0xf] %v266
    %295 = vst [vmem:[#allocation2 + $0x40] sm:$0xf] %v284
    %v296 = vld [vmem:[%s1] sm:$0xf]
    %v297 = vld [vmem:[%s1 + $0x4] sm:$0xf]
    %v298 = vld [vmem:[%s1 + $0x8] sm:$0x3]
    %v299 = vld [vmem:[#allocation11] sm:$0xff]
    %v300 = vld [vmem:[#allocation11 + $0x8] sm:$0xf]
    %v301 = vld [vmem:[#allocation11 + $0xc] sm:$0xff]
    %v302 = vld [vmem:[#allocation11 + $0x14] sm:$0xf]
    %v303 = vld [vmem:[#allocation11 + $0x18] sm:$0xff]
    %v304 = vld [vmem:[#allocation11 + $0x20] sm:$0xf]
    %v305 = vld [vmem:[#allocation11 + $0x24] sm:$0xff]
    %v306 = vld [vmem:[#allocation11 + $0x2c] sm:$0xf]
    %v307 = vld [vmem:[#allocation11 + $0x30] sm:$0xff]
    %v308 = vld [vmem:[#allocation11 + $0x38] sm:$0xf]
    %v309 = vld [vmem:[#allocation11 + $0x3c] sm:$0xff]
    %v310 = vld [vmem:[#allocation11 + $0x44] sm:$0xf]
    %v311 = vld [vmem:[#allocation11 + $0x48] sm:$0xff]
    %v312 = vld [vmem:[#allocation11 + $0x50] sm:$0xf]
    %v313 = vld [vmem:[#allocation11 + $0x54] sm:$0xff]
    %v314 = vld [vmem:[#allocation11 + $0x5c] sm:$0xf]
    %v315 = vld [vmem:[%s8] sm:$0x7]
    %v317 = vperm.slane %v315, 0
    %v318 = vperm.slane %v315, 1
    %v319 = vperm.slane %v315, 2
    %v326 = vunpack.c.l.b16 %v296
    %v327 = vunpack.c.l.b16 %v297
    %v328 = vunpack.c.l.b16 %v298
    %v329 = vpack.c.b16 %v327, %v326
    %v330 = vpack.c.b16 %v328, %v328
    %v347 = vunpack.c.l.b16 %v299
    %v348 = vunpack.c.h.b16 %v299
    %v349 = vunpack.c.l.b16 %v300
    %v350 = vunpack.c.l.b16 %v301
    %v351 = vunpack.c.h.b16 %v301
    %v352 = vunpack.c.l.b16 %v302
    %v353 = vunpack.c.l.b16 %v303
    %v354 = vunpack.c.h.b16 %v303
    %v355 = vunpack.c.l.b16 %v304
    %v356 = vunpack.c.l.b16 %v305
    %v357 = vunpack.c.h.b16 %v305
    %v358 = vunpack.c.l.b16 %v306
    %v359 = vunpack.c.l.b16 %v307
    %v360 = vunpack.c.h.b16 %v307
    %v361 = vunpack.c.l.b16 %v308
    %v362 = vunpack.c.l.b16 %v309
    %v363 = vunpack.c.h.b16 %v309
    %v364 = vunpack.c.l.b16 %v310
    %v365 = vunpack.c.l.b16 %v311
    %v366 = vunpack.c.h.b16 %v311
    %v367 = vunpack.c.l.b16 %v312
    %v368 = vunpack.c.l.b16 %v313
    %v369 = vunpack.c.h.b16 %v313
    %v370 = vunpack.c.l.b16 %v314
    %v371 = vpack.c.b16 %v350, %v347
    %v372 = vpack.c.b16 %v351, %v348
    %v373 = vpack.c.b16 %v352, %v349
    %v374 = vpack.c.b16 %v356, %v353
    %v375 = vpack.c.b16 %v357, %v354
    %v376 = vpack.c.b16 %v358, %v355
    %v377 = vpack.c.b16 %v362, %v359
    %v378 = vpack.c.b16 %v363, %v360
    %v379 = vpack.c.b16 %v364, %v361
    %v380 = vpack.c.b16 %v368, %v365
    %v381 = vpack.c.b16 %v369, %v366
    %v382 = vpack.c.b16 %v370, %v367
    %v396 = vsel %vm226, %v329, 0
    %v399 = vsel %vm226, %v330, 0
    %401 = vmatpush.bf16.msra.mxu0 0
    %402 = vmatpush.bf16.msra.mxu0 0
    %403 = vmatpush.bf16.msra.mxu0 0
    %404 = vmatpush.bf16.msra.mxu0 0
    %405 = vmatpush.bf16.msra.mxu0 %v380
    %406 = vmatpush.bf16.msra.mxu0 %v377
    %407 = vmatpush.bf16.msra.mxu0 %v374
    %408 = vmatpush.bf16.msra.mxu0 %v371
    %409 = vmatmul.bf16.gmra.mxu0 %v396
    %v410 = vpop.f32.mrf.mxu0
    %v411 = vadd.f32 %v317, %v410
    %v412 = vpop.f32.mrf.mxu0
    %v413 = vadd.f32 %v317, %v412
    %414 = vmatmul.bf16.gmra.mxu0 %v399
    %v415 = vpop.f32.mrf.mxu0
    %v416 = vadd.f32 %v317, %v415
    %v417 = vpop.f32.mrf.mxu0
    %418 = vdwg.mxu0
    %419 = vmatpush.bf16.msra.mxu0 0
    %420 = vmatpush.bf16.msra.mxu0 0
    %421 = vmatpush.bf16.msra.mxu0 0
    %422 = vmatpush.bf16.msra.mxu0 0
    %423 = vmatpush.bf16.msra.mxu0 %v381
    %424 = vmatpush.bf16.msra.mxu0 %v378
    %425 = vmatpush.bf16.msra.mxu0 %v375
    %426 = vmatpush.bf16.msra.mxu0 %v372
    %427 = vmatmul.bf16.gmra.mxu0 %v396
    %v428 = vpop.f32.mrf.mxu0
    %v429 = vadd.f32 %v318, %v428
    %v430 = vpop.f32.mrf.mxu0
    %v431 = vadd.f32 %v318, %v430
    %432 = vmatmul.bf16.gmra.mxu0 %v399
    %v433 = vpop.f32.mrf.mxu0
    %v434 = vadd.f32 %v318, %v433
    %v435 = vpop.f32.mrf.mxu0
    %436 = vdwg.mxu0
    %437 = vmatpush.bf16.msra.mxu0 0
    %438 = vmatpush.bf16.msra.mxu0 0
    %439 = vmatpush.bf16.msra.mxu0 0
    %440 = vmatpush.bf16.msra.mxu0 0
    %441 = vmatpush.bf16.msra.mxu0 %v382
    %442 = vmatpush.bf16.msra.mxu0 %v379
    %443 = vmatpush.bf16.msra.mxu0 %v376
    %444 = vmatpush.bf16.msra.mxu0 %v373
    %445 = vmatmul.bf16.gmra.mxu0 %v396
    %v446 = vpop.f32.mrf.mxu0
    %v447 = vadd.f32 %v319, %v446
    %v448 = vpop.f32.mrf.mxu0
    %v449 = vadd.f32 %v319, %v448
    %450 = vmatmul.bf16.gmra.mxu0 %v399
    %v451 = vpop.f32.mrf.mxu0
    %v452 = vadd.f32 %v319, %v451
    %v453 = vpop.f32.mrf.mxu0
    %454 = vdwg.mxu0
    %455 = vst [vmem:[#allocation3] sm:$0xff] %v411
    %456 = vst [vmem:[#allocation3 + $0x8] sm:$0xff] %v429
    %457 = vst [vmem:[#allocation3 + $0x10] sm:$0xff] %v447
    %458 = vst [vmem:[#allocation3 + $0x18] sm:$0xff] %v413
    %459 = vst [vmem:[#allocation3 + $0x20] sm:$0xff] %v431
    %460 = vst [vmem:[#allocation3 + $0x28] sm:$0xff] %v449
    %461 = vst [vmem:[#allocation3 + $0x30] sm:$0xf] %v416
    %462 = vst [vmem:[#allocation3 + $0x38] sm:$0xf] %v434
    %463 = vst [vmem:[#allocation3 + $0x40] sm:$0xf] %v452
    %v464 = vld [vmem:[%s5] sm:$0x7]
    %v466 = vperm.slane %v464, 0
    %v467 = vperm.slane %v464, 1
    %v468 = vperm.slane %v464, 2
    %v472 = vld [vmem:[#allocation2] sm:$0x3]
    %v473 = vld [vmem:[#allocation2 + $0x8] sm:$0x3]
    %v474 = vld [vmem:[#allocation2 + $0x10] sm:$0x3]
    %v475 = vld [vmem:[#allocation9] sm:$0xff]
    %v476 = vld [vmem:[#allocation9 + $0x8] sm:$0xf]
    %v477 = vld [vmem:[#allocation9 + $0xc] sm:$0xff]
    %v478 = vld [vmem:[#allocation9 + $0x14] sm:$0xf]
    %v479 = vld [vmem:[#allocation9 + $0x18] sm:$0xff]
    %v480 = vld [vmem:[#allocation9 + $0x20] sm:$0xf]
    %v481 = vld [vmem:[#allocation9 + $0x24] sm:$0xff]
    %v482 = vld [vmem:[#allocation9 + $0x2c] sm:$0xf]
    %v483 = vld [vmem:[#allocation9 + $0x30] sm:$0xff]
    %v484 = vld [vmem:[#allocation9 + $0x38] sm:$0xf]
    %v485 = vld [vmem:[#allocation9 + $0x3c] sm:$0xff]
    %v486 = vld [vmem:[#allocation9 + $0x44] sm:$0xf]
    %v487 = vld [vmem:[#allocation9 + $0x48] sm:$0xff]
    %v488 = vld [vmem:[#allocation9 + $0x50] sm:$0xf]
    %v489 = vld [vmem:[#allocation9 + $0x54] sm:$0xff]
    %v490 = vld [vmem:[#allocation9 + $0x5c] sm:$0xf]
    %v491 = vld [vmem:[#allocation9 + $0x60] sm:$0xff]
    %v492 = vld [vmem:[#allocation9 + $0x68] sm:$0xf]
    %v493 = vld [vmem:[#allocation9 + $0x6c] sm:$0xff]
    %v494 = vld [vmem:[#allocation9 + $0x74] sm:$0xf]
    %v495 = vld [vmem:[#allocation9 + $0x78] sm:$0xff]
    %v496 = vld [vmem:[#allocation9 + $0x80] sm:$0xf]
    %v497 = vld [vmem:[#allocation9 + $0x84] sm:$0xff]
    %v498 = vld [vmem:[#allocation9 + $0x8c] sm:$0xf]
    %v499 = vld [vmem:[#allocation9 + $0x90] sm:$0xff]
    %v500 = vld [vmem:[#allocation9 + $0x98] sm:$0xf]
    %v501 = vld [vmem:[#allocation9 + $0x9c] sm:$0xff]
    %v502 = vld [vmem:[#allocation9 + $0xa4] sm:$0xf]
    %v503 = vld [vmem:[#allocation9 + $0xa8] sm:$0xff]
    %v504 = vld [vmem:[#allocation9 + $0xb0] sm:$0xf]
    %v505 = vld [vmem:[#allocation9 + $0xb4] sm:$0xff]
    %v506 = vld [vmem:[#allocation9 + $0xbc] sm:$0xf]
    %v539 = vunpack.c.l.b16 %v475
    %v540 = vunpack.c.h.b16 %v475
    %v541 = vunpack.c.l.b16 %v476
    %v542 = vunpack.c.l.b16 %v477
    %v543 = vunpack.c.h.b16 %v477
    %v544 = vunpack.c.l.b16 %v478
    %v545 = vunpack.c.l.b16 %v479
    %v546 = vunpack.c.h.b16 %v479
    %v547 = vunpack.c.l.b16 %v480
    %v548 = vunpack.c.l.b16 %v481
    %v549 = vunpack.c.h.b16 %v481
    %v550 = vunpack.c.l.b16 %v482
    %v551 = vunpack.c.l.b16 %v483
    %v552 = vunpack.c.h.b16 %v483
    %v553 = vunpack.c.l.b16 %v484
    %v554 = vunpack.c.l.b16 %v485
    %v555 = vunpack.c.h.b16 %v485
    %v556 = vunpack.c.l.b16 %v486
    %v557 = vunpack.c.l.b16 %v487
    %v558 = vunpack.c.h.b16 %v487
    %v559 = vunpack.c.l.b16 %v488
    %v560 = vunpack.c.l.b16 %v489
    %v561 = vunpack.c.h.b16 %v489
    %v562 = vunpack.c.l.b16 %v490
    %v563 = vunpack.c.l.b16 %v491
    %v564 = vunpack.c.h.b16 %v491
    %v565 = vunpack.c.l.b16 %v492
    %v566 = vunpack.c.l.b16 %v493
    %v567 = vunpack.c.h.b16 %v493
    %v568 = vunpack.c.l.b16 %v494
    %v569 = vunpack.c.l.b16 %v495
    %v570 = vunpack.c.h.b16 %v495
    %v571 = vunpack.c.l.b16 %v496
    %v572 = vunpack.c.l.b16 %v497
    %v573 = vunpack.c.h.b16 %v497
    %v574 = vunpack.c.l.b16 %v498
    %v575 = vunpack.c.l.b16 %v499
    %v576 = vunpack.c.h.b16 %v499
    %v577 = vunpack.c.l.b16 %v500
    %v578 = vunpack.c.l.b16 %v501
    %v579 = vunpack.c.h.b16 %v501
    %v580 = vunpack.c.l.b16 %v502
    %v581 = vunpack.c.l.b16 %v503
    %v582 = vunpack.c.h.b16 %v503
    %v583 = vunpack.c.l.b16 %v504
    %v584 = vunpack.c.l.b16 %v505
    %v585 = vunpack.c.h.b16 %v505
    %v586 = vunpack.c.l.b16 %v506
    %v587 = vpack.c.b16 %v542, %v539
    %v588 = vpack.c.b16 %v543, %v540
    %v589 = vpack.c.b16 %v544, %v541
    %v590 = vpack.c.b16 %v548, %v545
    %v591 = vpack.c.b16 %v549, %v546
    %v592 = vpack.c.b16 %v550, %v547
    %v593 = vpack.c.b16 %v554, %v551
    %v594 = vpack.c.b16 %v555, %v552
    %v595 = vpack.c.b16 %v556, %v553
    %v596 = vpack.c.b16 %v560, %v557
    %v597 = vpack.c.b16 %v561, %v558
    %v598 = vpack.c.b16 %v562, %v559
    %v599 = vpack.c.b16 %v566, %v563
    %v600 = vpack.c.b16 %v567, %v564
    %v601 = vpack.c.b16 %v568, %v565
    %v602 = vpack.c.b16 %v572, %v569
    %v603 = vpack.c.b16 %v573, %v570
    %v604 = vpack.c.b16 %v574, %v571
    %v605 = vpack.c.b16 %v578, %v575
    %v606 = vpack.c.b16 %v579, %v576
    %v607 = vpack.c.b16 %v580, %v577
    %v608 = vpack.c.b16 %v584, %v581
    %v609 = vpack.c.b16 %v585, %v582
    %v610 = vpack.c.b16 %v586, %v583
    %635 = vmatpush.bf16.msra.mxu0 %v608
    %636 = vmatpush.bf16.msra.mxu0 %v605
    %637 = vmatpush.bf16.msra.mxu0 %v602
    %638 = vmatpush.bf16.msra.mxu0 %v599
    %639 = vmatpush.bf16.msra.mxu0 %v596
    %640 = vmatpush.bf16.msra.mxu0 %v593
    %641 = vmatpush.bf16.msra.mxu0 %v590
    %642 = vmatpush.bf16.msra.mxu0 %v587
    %643 = vmatmul.bf16.gmra.mxu0 0
    %v644 = vpop.f32.mrf.mxu0
    %v645 = vadd.f32 %v466, %v644
    %v646 = vpop.f32.mrf.mxu0
    %647 = vdwg.mxu0
    %648 = vmatpush.bf16.msra.mxu0 %v609
    %649 = vmatpush.bf16.msra.mxu0 %v606
    %650 = vmatpush.bf16.msra.mxu0 %v603
    %651 = vmatpush.bf16.msra.mxu0 %v600
    %652 = vmatpush.bf16.msra.mxu0 %v597
    %653 = vmatpush.bf16.msra.mxu0 %v594
    %654 = vmatpush.bf16.msra.mxu0 %v591
    %655 = vmatpush.bf16.msra.mxu0 %v588
    %656 = vmatmul.bf16.gmra.mxu0 0
    %v657 = vpop.f32.mrf.mxu0
    %v658 = vadd.f32 %v467, %v657
    %v659 = vpop.f32.mrf.mxu0
    %660 = vdwg.mxu0
    %661 = vmatpush.bf16.msra.mxu0 %v610
    %662 = vmatpush.bf16.msra.mxu0 %v607
    %663 = vmatpush.bf16.msra.mxu0 %v604
    %664 = vmatpush.bf16.msra.mxu0 %v601
    %665 = vmatpush.bf16.msra.mxu0 %v598
    %666 = vmatpush.bf16.msra.mxu0 %v595
    %667 = vmatpush.bf16.msra.mxu0 %v592
    %668 = vmatpush.bf16.msra.mxu0 %v589
    %669 = vmatmul.bf16.gmra.mxu0 0
    %v670 = vpop.f32.mrf.mxu0
    %v671 = vadd.f32 %v468, %v670
    %v672 = vpop.f32.mrf.mxu0
    %673 = vdwg.mxu0
    %v674 = vadd.f32 %v472, %v645
    %v675 = vxor.u32 %v674, 2147483648
    %v676 = vmul.f32 %v675, 1.442695
    %v677 = vpow.pop %v676
    %v678 = vadd.f32 %v677, 1.0
    %v679 = vrcp.pop %v678
    %v680 = vmul.f32 %v678, %v679
    %v681 = vsub.f32 1.0, %v680
    %v682 = vmul.f32 %v679, %v681
    %v683 = vadd.f32 %v679, %v682
    %vm684 = vweird.f32 %v678
    %vm685 = vweird.f32 %v679
    %vm686 = vmor %vm684, %vm685
    %v687 = vsel %vm686, %v679, %v683
    %v688 = vand.u32 2147483647, %v678
    %vm689 = vcmp.eq.f32.partialorder %v688, 8.507059e+37
    %v690 = vand.u32 %v678, 2147483648
    %v691 = vor.u32 1.1754944e-38, %v690
    %v692 = vsel %vm689, %v691, %v687
    %v693 = vmul.f32 1.0, %v692
    %v694 = vadd.f32 %v473, %v658
    %v695 = vxor.u32 %v694, 2147483648
    %v696 = vmul.f32 %v695, 1.442695
    %v697 = vpow.pop %v696
    %v698 = vadd.f32 %v697, 1.0
    %v699 = vrcp.pop %v698
    %v700 = vmul.f32 %v698, %v699
    %v701 = vsub.f32 1.0, %v700
    %v702 = vmul.f32 %v699, %v701
    %v703 = vadd.f32 %v699, %v702
    %vm704 = vweird.f32 %v698
    %vm705 = vweird.f32 %v699
    %vm706 = vmor %vm704, %vm705
    %v707 = vsel %vm706, %v699, %v703
    %v708 = vand.u32 2147483647, %v698
    %vm709 = vcmp.eq.f32.partialorder %v708, 8.507059e+37
    %v710 = vand.u32 %v698, 2147483648
    %v711 = vor.u32 1.1754944e-38, %v710
    %v712 = vsel %vm709, %v711, %v707
    %v713 = vmul.f32 1.0, %v712
    %v714 = vmul.f32 %v693, %v671
    %v715 = vadd.f32 %v474, %v714
    %v716 = vtanh.pop %v715
    %v717 = vsub.f32 1.0, %v713
    %v718 = vmul.f32 %v717, %v716
    %v719 = vmul.f32 %v713, 0.0
    %v720 = vadd.f32 %v718, %v719
    %721 = vst [vmem:[#allocation4] sm:$0x1] %v720
    %722 = vst [vmem:[#allocation4 + $0x9] sm:$0x2] %v720
    %v723 = vld [vmem:[#allocation2] sm:$0xc]
    %v724 = vld [vmem:[#allocation2 + $0x8] sm:$0xc]
    %v725 = vld [vmem:[#allocation2 + $0x10] sm:$0xc]
    %v726 = vpack.c.bf16 %v720, %v720
    %v727 = vld [vmem:[#allocation9] sm:$0xff]
    %v728 = vld [vmem:[#allocation9 + $0x8] sm:$0xf]
    %v729 = vld [vmem:[#allocation9 + $0xc] sm:$0xff]
    %v730 = vld [vmem:[#allocation9 + $0x14] sm:$0xf]
    %v731 = vld [vmem:[#allocation9 + $0x18] sm:$0xff]
    %v732 = vld [vmem:[#allocation9 + $0x20] sm:$0xf]
    %v733 = vld [vmem:[#allocation9 + $0x24] sm:$0xff]
    %v734 = vld [vmem:[#allocation9 + $0x2c] sm:$0xf]
    %v735 = vld [vmem:[#allocation9 + $0x30] sm:$0xff]
    %v736 = vld [vmem:[#allocation9 + $0x38] sm:$0xf]
    %v737 = vld [vmem:[#allocation9 + $0x3c] sm:$0xff]
    %v738 = vld [vmem:[#allocation9 + $0x44] sm:$0xf]
    %v739 = vld [vmem:[#allocation9 + $0x48] sm:$0xff]
    %v740 = vld [vmem:[#allocation9 + $0x50] sm:$0xf]
    %v741 = vld [vmem:[#allocation9 + $0x54] sm:$0xff]
    %v742 = vld [vmem:[#allocation9 + $0x5c] sm:$0xf]
    %v743 = vld [vmem:[#allocation9 + $0x60] sm:$0xff]
    %v744 = vld [vmem:[#allocation9 + $0x68] sm:$0xf]
    %v745 = vld [vmem:[#allocation9 + $0x6c] sm:$0xff]
    %v746 = vld [vmem:[#allocation9 + $0x74] sm:$0xf]
    %v747 = vld [vmem:[#allocation9 + $0x78] sm:$0xff]
    %v748 = vld [vmem:[#allocation9 + $0x80] sm:$0xf]
    %v749 = vld [vmem:[#allocation9 + $0x84] sm:$0xff]
    %v750 = vld [vmem:[#allocation9 + $0x8c] sm:$0xf]
    %v751 = vld [vmem:[#allocation9 + $0x90] sm:$0xff]
    %v752 = vld [vmem:[#allocation9 + $0x98] sm:$0xf]
    %v753 = vld [vmem:[#allocation9 + $0x9c] sm:$0xff]
    %v754 = vld [vmem:[#allocation9 + $0xa4] sm:$0xf]
    %v755 = vld [vmem:[#allocation9 + $0xa8] sm:$0xff]
    %v756 = vld [vmem:[#allocation9 + $0xb0] sm:$0xf]
    %v757 = vld [vmem:[#allocation9 + $0xb4] sm:$0xff]
    %v758 = vld [vmem:[#allocation9 + $0xbc] sm:$0xf]
    %v791 = vunpack.c.l.b16 %v727
    %v792 = vunpack.c.h.b16 %v727
    %v793 = vunpack.c.l.b16 %v728
    %v794 = vunpack.c.l.b16 %v729
    %v795 = vunpack.c.h.b16 %v729
    %v796 = vunpack.c.l.b16 %v730
    %v797 = vunpack.c.l.b16 %v731
    %v798 = vunpack.c.h.b16 %v731
    %v799 = vunpack.c.l.b16 %v732
    %v800 = vunpack.c.l.b16 %v733
    %v801 = vunpack.c.h.b16 %v733
    %v802 = vunpack.c.l.b16 %v734
    %v803 = vunpack.c.l.b16 %v735
    %v804 = vunpack.c.h.b16 %v735
    %v805 = vunpack.c.l.b16 %v736
    %v806 = vunpack.c.l.b16 %v737
    %v807 = vunpack.c.h.b16 %v737
    %v808 = vunpack.c.l.b16 %v738
    %v809 = vunpack.c.l.b16 %v739
    %v810 = vunpack.c.h.b16 %v739
    %v811 = vunpack.c.l.b16 %v740
    %v812 = vunpack.c.l.b16 %v741
    %v813 = vunpack.c.h.b16 %v741
    %v814 = vunpack.c.l.b16 %v742
    %v815 = vunpack.c.l.b16 %v743
    %v816 = vunpack.c.h.b16 %v743
    %v817 = vunpack.c.l.b16 %v744
    %v818 = vunpack.c.l.b16 %v745
    %v819 = vunpack.c.h.b16 %v745
    %v820 = vunpack.c.l.b16 %v746
    %v821 = vunpack.c.l.b16 %v747
    %v822 = vunpack.c.h.b16 %v747
    %v823 = vunpack.c.l.b16 %v748
    %v824 = vunpack.c.l.b16 %v749
    %v825 = vunpack.c.h.b16 %v749
    %v826 = vunpack.c.l.b16 %v750
    %v827 = vunpack.c.l.b16 %v751
    %v828 = vunpack.c.h.b16 %v751
    %v829 = vunpack.c.l.b16 %v752
    %v830 = vunpack.c.l.b16 %v753
    %v831 = vunpack.c.h.b16 %v753
    %v832 = vunpack.c.l.b16 %v754
    %v833 = vunpack.c.l.b16 %v755
    %v834 = vunpack.c.h.b16 %v755
    %v835 = vunpack.c.l.b16 %v756
    %v836 = vunpack.c.l.b16 %v757
    %v837 = vunpack.c.h.b16 %v757
    %v838 = vunpack.c.l.b16 %v758
    %v839 = vpack.c.b16 %v794, %v791
    %v840 = vpack.c.b16 %v795, %v792
    %v841 = vpack.c.b16 %v796, %v793
    %v842 = vpack.c.b16 %v800, %v797
    %v843 = vpack.c.b16 %v801, %v798
    %v844 = vpack.c.b16 %v802, %v799
    %v845 = vpack.c.b16 %v806, %v803
    %v846 = vpack.c.b16 %v807, %v804
    %v847 = vpack.c.b16 %v808, %v805
    %v848 = vpack.c.b16 %v812, %v809
    %v849 = vpack.c.b16 %v813, %v810
    %v850 = vpack.c.b16 %v814, %v811
    %v851 = vpack.c.b16 %v818, %v815
    %v852 = vpack.c.b16 %v819, %v816
    %v853 = vpack.c.b16 %v820, %v817
    %v854 = vpack.c.b16 %v824, %v821
    %v855 = vpack.c.b16 %v825, %v822
    %v856 = vpack.c.b16 %v826, %v823
    %v857 = vpack.c.b16 %v830, %v827
    %v858 = vpack.c.b16 %v831, %v828
    %v859 = vpack.c.b16 %v832, %v829
    %v860 = vpack.c.b16 %v836, %v833
    %v861 = vpack.c.b16 %v837, %v834
    %v862 = vpack.c.b16 %v838, %v835
    %887 = vmatpush.bf16.msra.mxu0 %v860
    %888 = vmatpush.bf16.msra.mxu0 %v857
    %889 = vmatpush.bf16.msra.mxu0 %v854
    %890 = vmatpush.bf16.msra.mxu0 %v851
    %891 = vmatpush.bf16.msra.mxu0 %v848
    %892 = vmatpush.bf16.msra.mxu0 %v845
    %893 = vmatpush.bf16.msra.mxu0 %v842
    %894 = vmatpush.bf16.msra.mxu0 %v839
    %895 = vmatmul.bf16.gmra.mxu0 %v726
    %v896 = vpop.f32.mrf.mxu0
    %v897 = vadd.f32 %v466, %v896
    %v898 = vpop.f32.mrf.mxu0
    %899 = vdwg.mxu0
    %900 = vmatpush.bf16.msra.mxu0 %v861
    %901 = vmatpush.bf16.msra.mxu0 %v858
    %902 = vmatpush.bf16.msra.mxu0 %v855
    %903 = vmatpush.bf16.msra.mxu0 %v852
    %904 = vmatpush.bf16.msra.mxu0 %v849
    %905 = vmatpush.bf16.msra.mxu0 %v846
    %906 = vmatpush.bf16.msra.mxu0 %v843
    %907 = vmatpush.bf16.msra.mxu0 %v840
    %908 = vmatmul.bf16.gmra.mxu0 %v726
    %v909 = vpop.f32.mrf.mxu0
    %v910 = vadd.f32 %v467, %v909
    %v911 = vpop.f32.mrf.mxu0
    %912 = vdwg.mxu0
    %913 = vmatpush.bf16.msra.mxu0 %v862
    %914 = vmatpush.bf16.msra.mxu0 %v859
    %915 = vmatpush.bf16.msra.mxu0 %v856
    %916 = vmatpush.bf16.msra.mxu0 %v853
    %917 = vmatpush.bf16.msra.mxu0 %v850
    %918 = vmatpush.bf16.msra.mxu0 %v847
    %919 = vmatpush.bf16.msra.mxu0 %v844
    %920 = vmatpush.bf16.msra.mxu0 %v841
    %921 = vmatmul.bf16.gmra.mxu0 %v726
    %v922 = vpop.f32.mrf.mxu0
    %v923 = vadd.f32 %v468, %v922
    %v924 = vpop.f32.mrf.mxu0
    %925 = vdwg.mxu0
    %v927 = vrot.slane %v897, 6
    %v929 = vadd.f32 %v723, %v927
    %v930 = vxor.u32 %v929, 2147483648
    %v931 = vmul.f32 %v930, 1.442695
    %v932 = vpow.pop %v931
    %v933 = vadd.f32 %v932, 1.0
    %v934 = vrcp.pop %v933
    %v935 = vmul.f32 %v933, %v934
    %v936 = vsub.f32 1.0, %v935
    %v937 = vmul.f32 %v934, %v936
    %v938 = vadd.f32 %v934, %v937
    %vm939 = vweird.f32 %v933
    %vm940 = vweird.f32 %v934
    %vm941 = vmor %vm939, %vm940
    %v942 = vsel %vm941, %v934, %v938
    %v943 = vand.u32 2147483647, %v933
    %vm944 = vcmp.eq.f32.partialorder %v943, 8.507059e+37
    %v945 = vand.u32 %v933, 2147483648
    %v946 = vor.u32 1.1754944e-38, %v945
    %v947 = vsel %vm944, %v946, %v942
    %v948 = vmul.f32 1.0, %v947
    %v950 = vrot.slane %v910, 6
    %v952 = vadd.f32 %v724, %v950
    %v953 = vxor.u32 %v952, 2147483648
    %v954 = vmul.f32 %v953, 1.442695
    %v955 = vpow.pop %v954
    %v956 = vadd.f32 %v955, 1.0
    %v957 = vrcp.pop %v956
    %v958 = vmul.f32 %v956, %v957
    %v959 = vsub.f32 1.0, %v958
    %v960 = vmul.f32 %v957, %v959
    %v961 = vadd.f32 %v957, %v960
    %vm962 = vweird.f32 %v956
    %vm963 = vweird.f32 %v957
    %vm964 = vmor %vm962, %vm963
    %v965 = vsel %vm964, %v957, %v961
    %v966 = vand.u32 2147483647, %v956
    %vm967 = vcmp.eq.f32.partialorder %v966, 8.507059e+37
    %v968 = vand.u32 %v956, 2147483648
    %v969 = vor.u32 1.1754944e-38, %v968
    %v970 = vsel %vm967, %v969, %v965
    %v971 = vmul.f32 1.0, %v970
    %v973 = vrot.slane %v923, 6
    %v975 = vmul.f32 %v948, %v973
    %v976 = vadd.f32 %v725, %v975
    %v977 = vtanh.pop %v976
    %v978 = vsub.f32 1.0, %v971
    %v979 = vmul.f32 %v978, %v977
    %v981 = vrot.slane %v720, 6
    %v983 = vmul.f32 %v971, %v981
    %v984 = vadd.f32 %v979, %v983
    %985 = vst [vmem:[#allocation4 - $0x1] sm:$0x4] %v984
    %986 = vst [vmem:[#allocation4 + $0x8] sm:$0x8] %v984
    %v987 = vld [vmem:[#allocation2] sm:$0x30]
    %v988 = vld [vmem:[#allocation2 + $0x8] sm:$0x30]
    %v989 = vld [vmem:[#allocation2 + $0x10] sm:$0x30]
    %v990 = vpack.c.bf16 %v984, %v984
    %v991 = vld [vmem:[#allocation9] sm:$0xff]
    %v992 = vld [vmem:[#allocation9 + $0x8] sm:$0xf]
    %v993 = vld [vmem:[#allocation9 + $0xc] sm:$0xff]
    %v994 = vld [vmem:[#allocation9 + $0x14] sm:$0xf]
    %v995 = vld [vmem:[#allocation9 + $0x18] sm:$0xff]
    %v996 = vld [vmem:[#allocation9 + $0x20] sm:$0xf]
    %v997 = vld [vmem:[#allocation9 + $0x24] sm:$0xff]
    %v998 = vld [vmem:[#allocation9 + $0x2c] sm:$0xf]
    %v999 = vld [vmem:[#allocation9 + $0x30] sm:$0xff]
    %v1000 = vld [vmem:[#allocation9 + $0x38] sm:$0xf]
    %v1001 = vld [vmem:[#allocation9 + $0x3c] sm:$0xff]
    %v1002 = vld [vmem:[#allocation9 + $0x44] sm:$0xf]
    %v1003 = vld [vmem:[#allocation9 + $0x48] sm:$0xff]
    %v1004 = vld [vmem:[#allocation9 + $0x50] sm:$0xf]
    %v1005 = vld [vmem:[#allocation9 + $0x54] sm:$0xff]
    %v1006 = vld [vmem:[#allocation9 + $0x5c] sm:$0xf]
    %v1007 = vld [vmem:[#allocation9 + $0x60] sm:$0xff]
    %v1008 = vld [vmem:[#allocation9 + $0x68] sm:$0xf]
    %v1009 = vld [vmem:[#allocation9 + $0x6c] sm:$0xff]
    %v1010 = vld [vmem:[#allocation9 + $0x74] sm:$0xf]
    %v1011 = vld [vmem:[#allocation9 + $0x78] sm:$0xff]
    %v1012 = vld [vmem:[#allocation9 + $0x80] sm:$0xf]
    %v1013 = vld [vmem:[#allocation9 + $0x84] sm:$0xff]
    %v1014 = vld [vmem:[#allocation9 + $0x8c] sm:$0xf]
    %v1015 = vld [vmem:[#allocation9 + $0x90] sm:$0xff]
    %v1016 = vld [vmem:[#allocation9 + $0x98] sm:$0xf]
    %v1017 = vld [vmem:[#allocation9 + $0x9c] sm:$0xff]
    %v1018 = vld [vmem:[#allocation9 + $0xa4] sm:$0xf]
    %v1019 = vld [vmem:[#allocation9 + $0xa8] sm:$0xff]
    %v1020 = vld [vmem:[#allocation9 + $0xb0] sm:$0xf]
    %v1021 = vld [vmem:[#allocation9 + $0xb4] sm:$0xff]
    %v1022 = vld [vmem:[#allocation9 + $0xbc] sm:$0xf]
    %v1024 = vrot.slane %v990, 1
    %v1058 = vunpack.c.l.b16 %v991
    %v1059 = vunpack.c.h.b16 %v991
    %v1060 = vunpack.c.l.b16 %v992
    %v1061 = vunpack.c.l.b16 %v993
    %v1062 = vunpack.c.h.b16 %v993
    %v1063 = vunpack.c.l.b16 %v994
    %v1064 = vunpack.c.l.b16 %v995
    %v1065 = vunpack.c.h.b16 %v995
    %v1066 = vunpack.c.l.b16 %v996
    %v1067 = vunpack.c.l.b16 %v997
    %v1068 = vunpack.c.h.b16 %v997
    %v1069 = vunpack.c.l.b16 %v998
    %v1070 = vunpack.c.l.b16 %v999
    %v1071 = vunpack.c.h.b16 %v999
    %v1072 = vunpack.c.l.b16 %v1000
    %v1073 = vunpack.c.l.b16 %v1001
    %v1074 = vunpack.c.h.b16 %v1001
    %v1075 = vunpack.c.l.b16 %v1002
    %v1076 = vunpack.c.l.b16 %v1003
    %v1077 = vunpack.c.h.b16 %v1003
    %v1078 = vunpack.c.l.b16 %v1004
    %v1079 = vunpack.c.l.b16 %v1005
    %v1080 = vunpack.c.h.b16 %v1005
    %v1081 = vunpack.c.l.b16 %v1006
    %v1082 = vunpack.c.l.b16 %v1007
    %v1083 = vunpack.c.h.b16 %v1007
    %v1084 = vunpack.c.l.b16 %v1008
    %v1085 = vunpack.c.l.b16 %v1009
    %v1086 = vunpack.c.h.b16 %v1009
    %v1087 = vunpack.c.l.b16 %v1010
    %v1088 = vunpack.c.l.b16 %v1011
    %v1089 = vunpack.c.h.b16 %v1011
    %v1090 = vunpack.c.l.b16 %v1012
    %v1091 = vunpack.c.l.b16 %v1013
    %v1092 = vunpack.c.h.b16 %v1013
    %v1093 = vunpack.c.l.b16 %v1014
    %v1094 = vunpack.c.l.b16 %v1015
    %v1095 = vunpack.c.h.b16 %v1015
    %v1096 = vunpack.c.l.b16 %v1016
    %v1097 = vunpack.c.l.b16 %v1017
    %v1098 = vunpack.c.h.b16 %v1017
    %v1099 = vunpack.c.l.b16 %v1018
    %v1100 = vunpack.c.l.b16 %v1019
    %v1101 = vunpack.c.h.b16 %v1019
    %v1102 = vunpack.c.l.b16 %v1020
    %v1103 = vunpack.c.l.b16 %v1021
    %v1104 = vunpack.c.h.b16 %v1021
    %v1105 = vunpack.c.l.b16 %v1022
    %v1106 = vpack.c.b16 %v1061, %v1058
    %v1107 = vpack.c.b16 %v1062, %v1059
    %v1108 = vpack.c.b16 %v1063, %v1060
    %v1109 = vpack.c.b16 %v1067, %v1064
    %v1110 = vpack.c.b16 %v1068, %v1065
    %v1111 = vpack.c.b16 %v1069, %v1066
    %v1112 = vpack.c.b16 %v1073, %v1070
    %v1113 = vpack.c.b16 %v1074, %v1071
    %v1114 = vpack.c.b16 %v1075, %v1072
    %v1115 = vpack.c.b16 %v1079, %v1076
    %v1116 = vpack.c.b16 %v1080, %v1077
    %v1117 = vpack.c.b16 %v1081, %v1078
    %v1118 = vpack.c.b16 %v1085, %v1082
    %v1119 = vpack.c.b16 %v1086, %v1083
    %v1120 = vpack.c.b16 %v1087, %v1084
    %v1121 = vpack.c.b16 %v1091, %v1088
    %v1122 = vpack.c.b16 %v1092, %v1089
    %v1123 = vpack.c.b16 %v1093, %v1090
    %v1124 = vpack.c.b16 %v1097, %v1094
    %v1125 = vpack.c.b16 %v1098, %v1095
    %v1126 = vpack.c.b16 %v1099, %v1096
    %v1127 = vpack.c.b16 %v1103, %v1100
    %v1128 = vpack.c.b16 %v1104, %v1101
    %v1129 = vpack.c.b16 %v1105, %v1102
    %1154 = vmatpush.bf16.msra.mxu0 %v1127
    %1155 = vmatpush.bf16.msra.mxu0 %v1124
    %1156 = vmatpush.bf16.msra.mxu0 %v1121
    %1157 = vmatpush.bf16.msra.mxu0 %v1118
    %1158 = vmatpush.bf16.msra.mxu0 %v1115
    %1159 = vmatpush.bf16.msra.mxu0 %v1112
    %1160 = vmatpush.bf16.msra.mxu0 %v1109
    %1161 = vmatpush.bf16.msra.mxu0 %v1106
    %1162 = vmatmul.bf16.gmra.mxu0 %v1024
    %v1163 = vpop.f32.mrf.mxu0
    %v1164 = vadd.f32 %v466, %v1163
    %v1165 = vpop.f32.mrf.mxu0
    %1166 = vdwg.mxu0
    %1167 = vmatpush.bf16.msra.mxu0 %v1128
    %1168 = vmatpush.bf16.msra.mxu0 %v1125
    %1169 = vmatpush.bf16.msra.mxu0 %v1122
    %1170 = vmatpush.bf16.msra.mxu0 %v1119
    %1171 = vmatpush.bf16.msra.mxu0 %v1116
    %1172 = vmatpush.bf16.msra.mxu0 %v1113
    %1173 = vmatpush.bf16.msra.mxu0 %v1110
    %1174 = vmatpush.bf16.msra.mxu0 %v1107
    %1175 = vmatmul.bf16.gmra.mxu0 %v1024
    %v1176 = vpop.f32.mrf.mxu0
    %v1177 = vadd.f32 %v467, %v1176
    %v1178 = vpop.f32.mrf.mxu0
    %1179 = vdwg.mxu0
    %1180 = vmatpush.bf16.msra.mxu0 %v1129
    %1181 = vmatpush.bf16.msra.mxu0 %v1126
    %1182 = vmatpush.bf16.msra.mxu0 %v1123
    %1183 = vmatpush.bf16.msra.mxu0 %v1120
    %1184 = vmatpush.bf16.msra.mxu0 %v1117
    %1185 = vmatpush.bf16.msra.mxu0 %v1114
    %1186 = vmatpush.bf16.msra.mxu0 %v1111
    %1187 = vmatpush.bf16.msra.mxu0 %v1108
    %1188 = vmatmul.bf16.gmra.mxu0 %v1024
    %v1189 = vpop.f32.mrf.mxu0
    %v1190 = vadd.f32 %v468, %v1189
    %v1191 = vpop.f32.mrf.mxu0
    %1192 = vdwg.mxu0
    %v1194 = vrot.slane %v1164, 4
    %v1196 = vadd.f32 %v987, %v1194
    %v1197 = vxor.u32 %v1196, 2147483648
    %v1198 = vmul.f32 %v1197, 1.442695
    %v1199 = vpow.pop %v1198
    %v1200 = vadd.f32 %v1199, 1.0
    %v1201 = vrcp.pop %v1200
    %v1202 = vmul.f32 %v1200, %v1201
    %v1203 = vsub.f32 1.0, %v1202
    %v1204 = vmul.f32 %v1201, %v1203
    %v1205 = vadd.f32 %v1201, %v1204
    %vm1206 = vweird.f32 %v1200
    %vm1207 = vweird.f32 %v1201
    %vm1208 = vmor %vm1206, %vm1207
    %v1209 = vsel %vm1208, %v1201, %v1205
    %v1210 = vand.u32 2147483647, %v1200
    %vm1211 = vcmp.eq.f32.partialorder %v1210, 8.507059e+37
    %v1212 = vand.u32 %v1200, 2147483648
    %v1213 = vor.u32 1.1754944e-38, %v1212
    %v1214 = vsel %vm1211, %v1213, %v1209
    %v1215 = vmul.f32 1.0, %v1214
    %v1217 = vrot.slane %v1177, 4
    %v1219 = vadd.f32 %v988, %v1217
    %v1220 = vxor.u32 %v1219, 2147483648
    %v1221 = vmul.f32 %v1220, 1.442695
    %v1222 = vpow.pop %v1221
    %v1223 = vadd.f32 %v1222, 1.0
    %v1224 = vrcp.pop %v1223
    %v1225 = vmul.f32 %v1223, %v1224
    %v1226 = vsub.f32 1.0, %v1225
    %v1227 = vmul.f32 %v1224, %v1226
    %v1228 = vadd.f32 %v1224, %v1227
    %vm1229 = vweird.f32 %v1223
    %vm1230 = vweird.f32 %v1224
    %vm1231 = vmor %vm1229, %vm1230
    %v1232 = vsel %vm1231, %v1224, %v1228
    %v1233 = vand.u32 2147483647, %v1223
    %vm1234 = vcmp.eq.f32.partialorder %v1233, 8.507059e+37
    %v1235 = vand.u32 %v1223, 2147483648
    %v1236 = vor.u32 1.1754944e-38, %v1235
    %v1237 = vsel %vm1234, %v1236, %v1232
    %v1238 = vmul.f32 1.0, %v1237
    %v1240 = vrot.slane %v1190, 4
    %v1242 = vmul.f32 %v1215, %v1240
    %v1243 = vadd.f32 %v989, %v1242
    %v1244 = vtanh.pop %v1243
    %v1245 = vsub.f32 1.0, %v1238
    %v1246 = vmul.f32 %v1245, %v1244
    %v1248 = vrot.slane %v984, 6
    %v1250 = vmul.f32 %v1238, %v1248
    %v1251 = vadd.f32 %v1246, %v1250
    %1252 = vst [vmem:[#allocation4 - $0x2] sm:$0x10] %v1251
    %1253 = vst [vmem:[#allocation4 + $0x7] sm:$0x20] %v1251
    %v1254 = vld [vmem:[#allocation2] sm:$0xc0]
    %v1255 = vld [vmem:[#allocation2 + $0x8] sm:$0xc0]
    %v1256 = vld [vmem:[#allocation2 + $0x10] sm:$0xc0]
    %v1257 = vpack.c.bf16 %v1251, %v1251
    %v1258 = vld [vmem:[#allocation9] sm:$0xff]
    %v1259 = vld [vmem:[#allocation9 + $0x8] sm:$0xf]
    %v1260 = vld [vmem:[#allocation9 + $0xc] sm:$0xff]
    %v1261 = vld [vmem:[#allocation9 + $0x14] sm:$0xf]
    %v1262 = vld [vmem:[#allocation9 + $0x18] sm:$0xff]
    %v1263 = vld [vmem:[#allocation9 + $0x20] sm:$0xf]
    %v1264 = vld [vmem:[#allocation9 + $0x24] sm:$0xff]
    %v1265 = vld [vmem:[#allocation9 + $0x2c] sm:$0xf]
    %v1266 = vld [vmem:[#allocation9 + $0x30] sm:$0xff]
    %v1267 = vld [vmem:[#allocation9 + $0x38] sm:$0xf]
    %v1268 = vld [vmem:[#allocation9 + $0x3c] sm:$0xff]
    %v1269 = vld [vmem:[#allocation9 + $0x44] sm:$0xf]
    %v1270 = vld [vmem:[#allocation9 + $0x48] sm:$0xff]
    %v1271 = vld [vmem:[#allocation9 + $0x50] sm:$0xf]
    %v1272 = vld [vmem:[#allocation9 + $0x54] sm:$0xff]
    %v1273 = vld [vmem:[#allocation9 + $0x5c] sm:$0xf]
    %v1274 = vld [vmem:[#allocation9 + $0x60] sm:$0xff]
    %v1275 = vld [vmem:[#allocation9 + $0x68] sm:$0xf]
    %v1276 = vld [vmem:[#allocation9 + $0x6c] sm:$0xff]
    %v1277 = vld [vmem:[#allocation9 + $0x74] sm:$0xf]
    %v1278 = vld [vmem:[#allocation9 + $0x78] sm:$0xff]
    %v1279 = vld [vmem:[#allocation9 + $0x80] sm:$0xf]
    %v1280 = vld [vmem:[#allocation9 + $0x84] sm:$0xff]
    %v1281 = vld [vmem:[#allocation9 + $0x8c] sm:$0xf]
    %v1282 = vld [vmem:[#allocation9 + $0x90] sm:$0xff]
    %v1283 = vld [vmem:[#allocation9 + $0x98] sm:$0xf]
    %v1284 = vld [vmem:[#allocation9 + $0x9c] sm:$0xff]
    %v1285 = vld [vmem:[#allocation9 + $0xa4] sm:$0xf]
    %v1286 = vld [vmem:[#allocation9 + $0xa8] sm:$0xff]
    %v1287 = vld [vmem:[#allocation9 + $0xb0] sm:$0xf]
    %v1288 = vld [vmem:[#allocation9 + $0xb4] sm:$0xff]
    %v1289 = vld [vmem:[#allocation9 + $0xbc] sm:$0xf]
    %v1291 = vrot.slane %v1257, 2
    %v1325 = vunpack.c.l.b16 %v1258
    %v1326 = vunpack.c.h.b16 %v1258
    %v1327 = vunpack.c.l.b16 %v1259
    %v1328 = vunpack.c.l.b16 %v1260
    %v1329 = vunpack.c.h.b16 %v1260
    %v1330 = vunpack.c.l.b16 %v1261
    %v1331 = vunpack.c.l.b16 %v1262
    %v1332 = vunpack.c.h.b16 %v1262
    %v1333 = vunpack.c.l.b16 %v1263
    %v1334 = vunpack.c.l.b16 %v1264
    %v1335 = vunpack.c.h.b16 %v1264
    %v1336 = vunpack.c.l.b16 %v1265
    %v1337 = vunpack.c.l.b16 %v1266
    %v1338 = vunpack.c.h.b16 %v1266
    %v1339 = vunpack.c.l.b16 %v1267
    %v1340 = vunpack.c.l.b16 %v1268
    %v1341 = vunpack.c.h.b16 %v1268
    %v1342 = vunpack.c.l.b16 %v1269
    %v1343 = vunpack.c.l.b16 %v1270
    %v1344 = vunpack.c.h.b16 %v1270
    %v1345 = vunpack.c.l.b16 %v1271
    %v1346 = vunpack.c.l.b16 %v1272
    %v1347 = vunpack.c.h.b16 %v1272
    %v1348 = vunpack.c.l.b16 %v1273
    %v1349 = vunpack.c.l.b16 %v1274
    %v1350 = vunpack.c.h.b16 %v1274
    %v1351 = vunpack.c.l.b16 %v1275
    %v1352 = vunpack.c.l.b16 %v1276
    %v1353 = vunpack.c.h.b16 %v1276
    %v1354 = vunpack.c.l.b16 %v1277
    %v1355 = vunpack.c.l.b16 %v1278
    %v1356 = vunpack.c.h.b16 %v1278
    %v1357 = vunpack.c.l.b16 %v1279
    %v1358 = vunpack.c.l.b16 %v1280
    %v1359 = vunpack.c.h.b16 %v1280
    %v1360 = vunpack.c.l.b16 %v1281
    %v1361 = vunpack.c.l.b16 %v1282
    %v1362 = vunpack.c.h.b16 %v1282
    %v1363 = vunpack.c.l.b16 %v1283
    %v1364 = vunpack.c.l.b16 %v1284
    %v1365 = vunpack.c.h.b16 %v1284
    %v1366 = vunpack.c.l.b16 %v1285
    %v1367 = vunpack.c.l.b16 %v1286
    %v1368 = vunpack.c.h.b16 %v1286
    %v1369 = vunpack.c.l.b16 %v1287
    %v1370 = vunpack.c.l.b16 %v1288
    %v1371 = vunpack.c.h.b16 %v1288
    %v1372 = vunpack.c.l.b16 %v1289
    %v1373 = vpack.c.b16 %v1328, %v1325
    %v1374 = vpack.c.b16 %v1329, %v1326
    %v1375 = vpack.c.b16 %v1330, %v1327
    %v1376 = vpack.c.b16 %v1334, %v1331
    %v1377 = vpack.c.b16 %v1335, %v1332
    %v1378 = vpack.c.b16 %v1336, %v1333
    %v1379 = vpack.c.b16 %v1340, %v1337
    %v1380 = vpack.c.b16 %v1341, %v1338
    %v1381 = vpack.c.b16 %v1342, %v1339
    %v1382 = vpack.c.b16 %v1346, %v1343
    %v1383 = vpack.c.b16 %v1347, %v1344
    %v1384 = vpack.c.b16 %v1348, %v1345
    %v1385 = vpack.c.b16 %v1352, %v1349
    %v1386 = vpack.c.b16 %v1353, %v1350
    %v1387 = vpack.c.b16 %v1354, %v1351
    %v1388 = vpack.c.b16 %v1358, %v1355
    %v1389 = vpack.c.b16 %v1359, %v1356
    %v1390 = vpack.c.b16 %v1360, %v1357
    %v1391 = vpack.c.b16 %v1364, %v1361
    %v1392 = vpack.c.b16 %v1365, %v1362
    %v1393 = vpack.c.b16 %v1366, %v1363
    %v1394 = vpack.c.b16 %v1370, %v1367
    %v1395 = vpack.c.b16 %v1371, %v1368
    %v1396 = vpack.c.b16 %v1372, %v1369
    %1421 = vmatpush.bf16.msra.mxu0 %v1394
    %1422 = vmatpush.bf16.msra.mxu0 %v1391
    %1423 = vmatpush.bf16.msra.mxu0 %v1388
    %1424 = vmatpush.bf16.msra.mxu0 %v1385
    %1425 = vmatpush.bf16.msra.mxu0 %v1382
    %1426 = vmatpush.bf16.msra.mxu0 %v1379
    %1427 = vmatpush.bf16.msra.mxu0 %v1376
    %1428 = vmatpush.bf16.msra.mxu0 %v1373
    %1429 = vmatmul.bf16.gmra.mxu0 %v1291
    %v1430 = vpop.f32.mrf.mxu0
    %v1431 = vadd.f32 %v466, %v1430
    %v1432 = vpop.f32.mrf.mxu0
    %1433 = vdwg.mxu0
    %1434 = vmatpush.bf16.msra.mxu0 %v1395
    %1435 = vmatpush.bf16.msra.mxu0 %v1392
    %1436 = vmatpush.bf16.msra.mxu0 %v1389
    %1437 = vmatpush.bf16.msra.mxu0 %v1386
    %1438 = vmatpush.bf16.msra.mxu0 %v1383
    %1439 = vmatpush.bf16.msra.mxu0 %v1380
    %1440 = vmatpush.bf16.msra.mxu0 %v1377
    %1441 = vmatpush.bf16.msra.mxu0 %v1374
    %1442 = vmatmul.bf16.gmra.mxu0 %v1291
    %v1443 = vpop.f32.mrf.mxu0
    %v1444 = vadd.f32 %v467, %v1443
    %v1445 = vpop.f32.mrf.mxu0
    %1446 = vdwg.mxu0
    %1447 = vmatpush.bf16.msra.mxu0 %v1396
    %1448 = vmatpush.bf16.msra.mxu0 %v1393
    %1449 = vmatpush.bf16.msra.mxu0 %v1390
    %1450 = vmatpush.bf16.msra.mxu0 %v1387
    %1451 = vmatpush.bf16.msra.mxu0 %v1384
    %1452 = vmatpush.bf16.msra.mxu0 %v1381
    %1453 = vmatpush.bf16.msra.mxu0 %v1378
    %1454 = vmatpush.bf16.msra.mxu0 %v1375
    %1455 = vmatmul.bf16.gmra.mxu0 %v1291
    %v1456 = vpop.f32.mrf.mxu0
    %v1457 = vadd.f32 %v468, %v1456
    %v1458 = vpop.f32.mrf.mxu0
    %1459 = vdwg.mxu0
    %v1461 = vrot.slane %v1431, 2
    %v1463 = vadd.f32 %v1254, %v1461
    %v1464 = vxor.u32 %v1463, 2147483648
    %v1465 = vmul.f32 %v1464, 1.442695
    %v1466 = vpow.pop %v1465
    %v1467 = vadd.f32 %v1466, 1.0
    %v1468 = vrcp.pop %v1467
    %v1469 = vmul.f32 %v1467, %v1468
    %v1470 = vsub.f32 1.0, %v1469
    %v1471 = vmul.f32 %v1468, %v1470
    %v1472 = vadd.f32 %v1468, %v1471
    %vm1473 = vweird.f32 %v1467
    %vm1474 = vweird.f32 %v1468
    %vm1475 = vmor %vm1473, %vm1474
    %v1476 = vsel %vm1475, %v1468, %v1472
    %v1477 = vand.u32 2147483647, %v1467
    %vm1478 = vcmp.eq.f32.partialorder %v1477, 8.507059e+37
    %v1479 = vand.u32 %v1467, 2147483648
    %v1480 = vor.u32 1.1754944e-38, %v1479
    %v1481 = vsel %vm1478, %v1480, %v1476
    %v1482 = vmul.f32 1.0, %v1481
    %v1484 = vrot.slane %v1444, 2
    %v1486 = vadd.f32 %v1255, %v1484
    %v1487 = vxor.u32 %v1486, 2147483648
    %v1488 = vmul.f32 %v1487, 1.442695
    %v1489 = vpow.pop %v1488
    %v1490 = vadd.f32 %v1489, 1.0
    %v1491 = vrcp.pop %v1490
    %v1492 = vmul.f32 %v1490, %v1491
    %v1493 = vsub.f32 1.0, %v1492
    %v1494 = vmul.f32 %v1491, %v1493
    %v1495 = vadd.f32 %v1491, %v1494
    %vm1496 = vweird.f32 %v1490
    %vm1497 = vweird.f32 %v1491
    %vm1498 = vmor %vm1496, %vm1497
    %v1499 = vsel %vm1498, %v1491, %v1495
    %v1500 = vand.u32 2147483647, %v1490
    %vm1501 = vcmp.eq.f32.partialorder %v1500, 8.507059e+37
    %v1502 = vand.u32 %v1490, 2147483648
    %v1503 = vor.u32 1.1754944e-38, %v1502
    %v1504 = vsel %vm1501, %v1503, %v1499
    %v1505 = vmul.f32 1.0, %v1504
    %v1507 = vrot.slane %v1457, 2
    %v1509 = vmul.f32 %v1482, %v1507
    %v1510 = vadd.f32 %v1256, %v1509
    %v1511 = vtanh.pop %v1510
    %v1512 = vsub.f32 1.0, %v1505
    %v1513 = vmul.f32 %v1512, %v1511
    %v1515 = vrot.slane %v1251, 6
    %v1517 = vmul.f32 %v1505, %v1515
    %v1518 = vadd.f32 %v1513, %v1517
    %1519 = vst [vmem:[#allocation4 - $0x3] sm:$0x40] %v1518
    %1520 = vst [vmem:[#allocation4 + $0x6] sm:$0x80] %v1518
    %v1521 = vld [vmem:[#allocation2 + $0x18] sm:$0x3]
    %v1522 = vld [vmem:[#allocation2 + $0x20] sm:$0x3]
    %v1523 = vld [vmem:[#allocation2 + $0x28] sm:$0x3]
    %v1524 = vpack.c.bf16 %v1518, %v1518
    %v1525 = vld [vmem:[#allocation9] sm:$0xff]
    %v1526 = vld [vmem:[#allocation9 + $0x8] sm:$0xf]
    %v1527 = vld [vmem:[#allocation9 + $0xc] sm:$0xff]
    %v1528 = vld [vmem:[#allocation9 + $0x14] sm:$0xf]
    %v1529 = vld [vmem:[#allocation9 + $0x18] sm:$0xff]
    %v1530 = vld [vmem:[#allocation9 + $0x20] sm:$0xf]
    %v1531 = vld [vmem:[#allocation9 + $0x24] sm:$0xff]
    %v1532 = vld [vmem:[#allocation9 + $0x2c] sm:$0xf]
    %v1533 = vld [vmem:[#allocation9 + $0x30] sm:$0xff]
    %v1534 = vld [vmem:[#allocation9 + $0x38] sm:$0xf]
    %v1535 = vld [vmem:[#allocation9 + $0x3c] sm:$0xff]
    %v1536 = vld [vmem:[#allocation9 + $0x44] sm:$0xf]
    %v1537 = vld [vmem:[#allocation9 + $0x48] sm:$0xff]
    %v1538 = vld [vmem:[#allocation9 + $0x50] sm:$0xf]
    %v1539 = vld [vmem:[#allocation9 + $0x54] sm:$0xff]
    %v1540 = vld [vmem:[#allocation9 + $0x5c] sm:$0xf]
    %v1541 = vld [vmem:[#allocation9 + $0x60] sm:$0xff]
    %v1542 = vld [vmem:[#allocation9 + $0x68] sm:$0xf]
    %v1543 = vld [vmem:[#allocation9 + $0x6c] sm:$0xff]
    %v1544 = vld [vmem:[#allocation9 + $0x74] sm:$0xf]
    %v1545 = vld [vmem:[#allocation9 + $0x78] sm:$0xff]
    %v1546 = vld [vmem:[#allocation9 + $0x80] sm:$0xf]
    %v1547 = vld [vmem:[#allocation9 + $0x84] sm:$0xff]
    %v1548 = vld [vmem:[#allocation9 + $0x8c] sm:$0xf]
    %v1549 = vld [vmem:[#allocation9 + $0x90] sm:$0xff]
    %v1550 = vld [vmem:[#allocation9 + $0x98] sm:$0xf]
    %v1551 = vld [vmem:[#allocation9 + $0x9c] sm:$0xff]
    %v1552 = vld [vmem:[#allocation9 + $0xa4] sm:$0xf]
    %v1553 = vld [vmem:[#allocation9 + $0xa8] sm:$0xff]
    %v1554 = vld [vmem:[#allocation9 + $0xb0] sm:$0xf]
    %v1555 = vld [vmem:[#allocation9 + $0xb4] sm:$0xff]
    %v1556 = vld [vmem:[#allocation9 + $0xbc] sm:$0xf]
    %v1558 = vrot.slane %v1524, 3
    %v1592 = vunpack.c.l.b16 %v1525
    %v1593 = vunpack.c.h.b16 %v1525
    %v1594 = vunpack.c.l.b16 %v1526
    %v1595 = vunpack.c.l.b16 %v1527
    %v1596 = vunpack.c.h.b16 %v1527
    %v1597 = vunpack.c.l.b16 %v1528
    %v1598 = vunpack.c.l.b16 %v1529
    %v1599 = vunpack.c.h.b16 %v1529
    %v1600 = vunpack.c.l.b16 %v1530
    %v1601 = vunpack.c.l.b16 %v1531
    %v1602 = vunpack.c.h.b16 %v1531
    %v1603 = vunpack.c.l.b16 %v1532
    %v1604 = vunpack.c.l.b16 %v1533
    %v1605 = vunpack.c.h.b16 %v1533
    %v1606 = vunpack.c.l.b16 %v1534
    %v1607 = vunpack.c.l.b16 %v1535
    %v1608 = vunpack.c.h.b16 %v1535
    %v1609 = vunpack.c.l.b16 %v1536
    %v1610 = vunpack.c.l.b16 %v1537
    %v1611 = vunpack.c.h.b16 %v1537
    %v1612 = vunpack.c.l.b16 %v1538
    %v1613 = vunpack.c.l.b16 %v1539
    %v1614 = vunpack.c.h.b16 %v1539
    %v1615 = vunpack.c.l.b16 %v1540
    %v1616 = vunpack.c.l.b16 %v1541
    %v1617 = vunpack.c.h.b16 %v1541
    %v1618 = vunpack.c.l.b16 %v1542
    %v1619 = vunpack.c.l.b16 %v1543
    %v1620 = vunpack.c.h.b16 %v1543
    %v1621 = vunpack.c.l.b16 %v1544
    %v1622 = vunpack.c.l.b16 %v1545
    %v1623 = vunpack.c.h.b16 %v1545
    %v1624 = vunpack.c.l.b16 %v1546
    %v1625 = vunpack.c.l.b16 %v1547
    %v1626 = vunpack.c.h.b16 %v1547
    %v1627 = vunpack.c.l.b16 %v1548
    %v1628 = vunpack.c.l.b16 %v1549
    %v1629 = vunpack.c.h.b16 %v1549
    %v1630 = vunpack.c.l.b16 %v1550
    %v1631 = vunpack.c.l.b16 %v1551
    %v1632 = vunpack.c.h.b16 %v1551
    %v1633 = vunpack.c.l.b16 %v1552
    %v1634 = vunpack.c.l.b16 %v1553
    %v1635 = vunpack.c.h.b16 %v1553
    %v1636 = vunpack.c.l.b16 %v1554
    %v1637 = vunpack.c.l.b16 %v1555
    %v1638 = vunpack.c.h.b16 %v1555
    %v1639 = vunpack.c.l.b16 %v1556
    %v1640 = vpack.c.b16 %v1595, %v1592
    %v1641 = vpack.c.b16 %v1596, %v1593
    %v1642 = vpack.c.b16 %v1597, %v1594
    %v1643 = vpack.c.b16 %v1601, %v1598
    %v1644 = vpack.c.b16 %v1602, %v1599
    %v1645 = vpack.c.b16 %v1603, %v1600
    %v1646 = vpack.c.b16 %v1607, %v1604
    %v1647 = vpack.c.b16 %v1608, %v1605
    %v1648 = vpack.c.b16 %v1609, %v1606
    %v1649 = vpack.c.b16 %v1613, %v1610
    %v1650 = vpack.c.b16 %v1614, %v1611
    %v1651 = vpack.c.b16 %v1615, %v1612
    %v1652 = vpack.c.b16 %v1619, %v1616
    %v1653 = vpack.c.b16 %v1620, %v1617
    %v1654 = vpack.c.b16 %v1621, %v1618
    %v1655 = vpack.c.b16 %v1625, %v1622
    %v1656 = vpack.c.b16 %v1626, %v1623
    %v1657 = vpack.c.b16 %v1627, %v1624
    %v1658 = vpack.c.b16 %v1631, %v1628
    %v1659 = vpack.c.b16 %v1632, %v1629
    %v1660 = vpack.c.b16 %v1633, %v1630
    %v1661 = vpack.c.b16 %v1637, %v1634
    %v1662 = vpack.c.b16 %v1638, %v1635
    %v1663 = vpack.c.b16 %v1639, %v1636
    %1688 = vmatpush.bf16.msra.mxu0 %v1661
    %1689 = vmatpush.bf16.msra.mxu0 %v1658
    %1690 = vmatpush.bf16.msra.mxu0 %v1655
    %1691 = vmatpush.bf16.msra.mxu0 %v1652
    %1692 = vmatpush.bf16.msra.mxu0 %v1649
    %1693 = vmatpush.bf16.msra.mxu0 %v1646
    %1694 = vmatpush.bf16.msra.mxu0 %v1643
    %1695 = vmatpush.bf16.msra.mxu0 %v1640
    %1696 = vmatmul.bf16.gmra.mxu0 %v1558
    %v1697 = vpop.f32.mrf.mxu0
    %v1698 = vadd.f32 %v466, %v1697
    %v1699 = vpop.f32.mrf.mxu0
    %1700 = vdwg.mxu0
    %1701 = vmatpush.bf16.msra.mxu0 %v1662
    %1702 = vmatpush.bf16.msra.mxu0 %v1659
    %1703 = vmatpush.bf16.msra.mxu0 %v1656
    %1704 = vmatpush.bf16.msra.mxu0 %v1653
    %1705 = vmatpush.bf16.msra.mxu0 %v1650
    %1706 = vmatpush.bf16.msra.mxu0 %v1647
    %1707 = vmatpush.bf16.msra.mxu0 %v1644
    %1708 = vmatpush.bf16.msra.mxu0 %v1641
    %1709 = vmatmul.bf16.gmra.mxu0 %v1558
    %v1710 = vpop.f32.mrf.mxu0
    %v1711 = vadd.f32 %v467, %v1710
    %v1712 = vpop.f32.mrf.mxu0
    %1713 = vdwg.mxu0
    %1714 = vmatpush.bf16.msra.mxu0 %v1663
    %1715 = vmatpush.bf16.msra.mxu0 %v1660
    %1716 = vmatpush.bf16.msra.mxu0 %v1657
    %1717 = vmatpush.bf16.msra.mxu0 %v1654
    %1718 = vmatpush.bf16.msra.mxu0 %v1651
    %1719 = vmatpush.bf16.msra.mxu0 %v1648
    %1720 = vmatpush.bf16.msra.mxu0 %v1645
    %1721 = vmatpush.bf16.msra.mxu0 %v1642
    %1722 = vmatmul.bf16.gmra.mxu0 %v1558
    %v1723 = vpop.f32.mrf.mxu0
    %v1724 = vadd.f32 %v468, %v1723
    %v1725 = vpop.f32.mrf.mxu0
    %1726 = vdwg.mxu0
    %v1727 = vadd.f32 %v1521, %v1698
    %v1728 = vxor.u32 %v1727, 2147483648
    %v1729 = vmul.f32 %v1728, 1.442695
    %v1730 = vpow.pop %v1729
    %v1731 = vadd.f32 %v1730, 1.0
    %v1732 = vrcp.pop %v1731
    %v1733 = vmul.f32 %v1731, %v1732
    %v1734 = vsub.f32 1.0, %v1733
    %v1735 = vmul.f32 %v1732, %v1734
    %v1736 = vadd.f32 %v1732, %v1735
    %vm1737 = vweird.f32 %v1731
    %vm1738 = vweird.f32 %v1732
    %vm1739 = vmor %vm1737, %vm1738
    %v1740 = vsel %vm1739, %v1732, %v1736
    %v1741 = vand.u32 2147483647, %v1731
    %vm1742 = vcmp.eq.f32.partialorder %v1741, 8.507059e+37
    %v1743 = vand.u32 %v1731, 2147483648
    %v1744 = vor.u32 1.1754944e-38, %v1743
    %v1745 = vsel %vm1742, %v1744, %v1740
    %v1746 = vmul.f32 1.0, %v1745
    %v1747 = vadd.f32 %v1522, %v1711
    %v1748 = vxor.u32 %v1747, 2147483648
    %v1749 = vmul.f32 %v1748, 1.442695
    %v1750 = vpow.pop %v1749
    %v1751 = vadd.f32 %v1750, 1.0
    %v1752 = vrcp.pop %v1751
    %v1753 = vmul.f32 %v1751, %v1752
    %v1754 = vsub.f32 1.0, %v1753
    %v1755 = vmul.f32 %v1752, %v1754
    %v1756 = vadd.f32 %v1752, %v1755
    %vm1757 = vweird.f32 %v1751
    %vm1758 = vweird.f32 %v1752
    %vm1759 = vmor %vm1757, %vm1758
    %v1760 = vsel %vm1759, %v1752, %v1756
    %v1761 = vand.u32 2147483647, %v1751
    %vm1762 = vcmp.eq.f32.partialorder %v1761, 8.507059e+37
    %v1763 = vand.u32 %v1751, 2147483648
    %v1764 = vor.u32 1.1754944e-38, %v1763
    %v1765 = vsel %vm1762, %v1764, %v1760
    %v1766 = vmul.f32 1.0, %v1765
    %v1767 = vmul.f32 %v1746, %v1724
    %v1768 = vadd.f32 %v1523, %v1767
    %v1769 = vtanh.pop %v1768
    %v1770 = vsub.f32 1.0, %v1766
    %v1771 = vmul.f32 %v1770, %v1769
    %v1773 = vrot.slane %v1518, 6
    %v1775 = vmul.f32 %v1766, %v1773
    %v1776 = vadd.f32 %v1771, %v1775
    %1777 = vst [vmem:[#allocation4 + $0x4] sm:$0x1] %v1776
    %1778 = vst [vmem:[#allocation4 + $0xd] sm:$0x2] %v1776
    %v1779 = vld [vmem:[#allocation2 + $0x18] sm:$0xc]
    %v1780 = vld [vmem:[#allocation2 + $0x20] sm:$0xc]
    %v1781 = vld [vmem:[#allocation2 + $0x28] sm:$0xc]
    %v1782 = vpack.c.bf16 %v1776, %v1776
    %v1783 = vld [vmem:[#allocation9] sm:$0xff]
    %v1784 = vld [vmem:[#allocation9 + $0x8] sm:$0xf]
    %v1785 = vld [vmem:[#allocation9 + $0xc] sm:$0xff]
    %v1786 = vld [vmem:[#allocation9 + $0x14] sm:$0xf]
    %v1787 = vld [vmem:[#allocation9 + $0x18] sm:$0xff]
    %v1788 = vld [vmem:[#allocation9 + $0x20] sm:$0xf]
    %v1789 = vld [vmem:[#allocation9 + $0x24] sm:$0xff]
    %v1790 = vld [vmem:[#allocation9 + $0x2c] sm:$0xf]
    %v1791 = vld [vmem:[#allocation9 + $0x30] sm:$0xff]
    %v1792 = vld [vmem:[#allocation9 + $0x38] sm:$0xf]
    %v1793 = vld [vmem:[#allocation9 + $0x3c] sm:$0xff]
    %v1794 = vld [vmem:[#allocation9 + $0x44] sm:$0xf]
    %v1795 = vld [vmem:[#allocation9 + $0x48] sm:$0xff]
    %v1796 = vld [vmem:[#allocation9 + $0x50] sm:$0xf]
    %v1797 = vld [vmem:[#allocation9 + $0x54] sm:$0xff]
    %v1798 = vld [vmem:[#allocation9 + $0x5c] sm:$0xf]
    %v1799 = vld [vmem:[#allocation9 + $0x60] sm:$0xff]
    %v1800 = vld [vmem:[#allocation9 + $0x68] sm:$0xf]
    %v1801 = vld [vmem:[#allocation9 + $0x6c] sm:$0xff]
    %v1802 = vld [vmem:[#allocation9 + $0x74] sm:$0xf]
    %v1803 = vld [vmem:[#allocation9 + $0x78] sm:$0xff]
    %v1804 = vld [vmem:[#allocation9 + $0x80] sm:$0xf]
    %v1805 = vld [vmem:[#allocation9 + $0x84] sm:$0xff]
    %v1806 = vld [vmem:[#allocation9 + $0x8c] sm:$0xf]
    %v1807 = vld [vmem:[#allocation9 + $0x90] sm:$0xff]
    %v1808 = vld [vmem:[#allocation9 + $0x98] sm:$0xf]
    %v1809 = vld [vmem:[#allocation9 + $0x9c] sm:$0xff]
    %v1810 = vld [vmem:[#allocation9 + $0xa4] sm:$0xf]
    %v1811 = vld [vmem:[#allocation9 + $0xa8] sm:$0xff]
    %v1812 = vld [vmem:[#allocation9 + $0xb0] sm:$0xf]
    %v1813 = vld [vmem:[#allocation9 + $0xb4] sm:$0xff]
    %v1814 = vld [vmem:[#allocation9 + $0xbc] sm:$0xf]
    %v1847 = vunpack.c.l.b16 %v1783
    %v1848 = vunpack.c.h.b16 %v1783
    %v1849 = vunpack.c.l.b16 %v1784
    %v1850 = vunpack.c.l.b16 %v1785
    %v1851 = vunpack.c.h.b16 %v1785
    %v1852 = vunpack.c.l.b16 %v1786
    %v1853 = vunpack.c.l.b16 %v1787
    %v1854 = vunpack.c.h.b16 %v1787
    %v1855 = vunpack.c.l.b16 %v1788
    %v1856 = vunpack.c.l.b16 %v1789
    %v1857 = vunpack.c.h.b16 %v1789
    %v1858 = vunpack.c.l.b16 %v1790
    %v1859 = vunpack.c.l.b16 %v1791
    %v1860 = vunpack.c.h.b16 %v1791
    %v1861 = vunpack.c.l.b16 %v1792
    %v1862 = vunpack.c.l.b16 %v1793
    %v1863 = vunpack.c.h.b16 %v1793
    %v1864 = vunpack.c.l.b16 %v1794
    %v1865 = vunpack.c.l.b16 %v1795
    %v1866 = vunpack.c.h.b16 %v1795
    %v1867 = vunpack.c.l.b16 %v1796
    %v1868 = vunpack.c.l.b16 %v1797
    %v1869 = vunpack.c.h.b16 %v1797
    %v1870 = vunpack.c.l.b16 %v1798
    %v1871 = vunpack.c.l.b16 %v1799
    %v1872 = vunpack.c.h.b16 %v1799
    %v1873 = vunpack.c.l.b16 %v1800
    %v1874 = vunpack.c.l.b16 %v1801
    %v1875 = vunpack.c.h.b16 %v1801
    %v1876 = vunpack.c.l.b16 %v1802
    %v1877 = vunpack.c.l.b16 %v1803
    %v1878 = vunpack.c.h.b16 %v1803
    %v1879 = vunpack.c.l.b16 %v1804
    %v1880 = vunpack.c.l.b16 %v1805
    %v1881 = vunpack.c.h.b16 %v1805
    %v1882 = vunpack.c.l.b16 %v1806
    %v1883 = vunpack.c.l.b16 %v1807
    %v1884 = vunpack.c.h.b16 %v1807
    %v1885 = vunpack.c.l.b16 %v1808
    %v1886 = vunpack.c.l.b16 %v1809
    %v1887 = vunpack.c.h.b16 %v1809
    %v1888 = vunpack.c.l.b16 %v1810
    %v1889 = vunpack.c.l.b16 %v1811
    %v1890 = vunpack.c.h.b16 %v1811
    %v1891 = vunpack.c.l.b16 %v1812
    %v1892 = vunpack.c.l.b16 %v1813
    %v1893 = vunpack.c.h.b16 %v1813
    %v1894 = vunpack.c.l.b16 %v1814
    %v1895 = vpack.c.b16 %v1850, %v1847
    %v1896 = vpack.c.b16 %v1851, %v1848
    %v1897 = vpack.c.b16 %v1852, %v1849
    %v1898 = vpack.c.b16 %v1856, %v1853
    %v1899 = vpack.c.b16 %v1857, %v1854
    %v1900 = vpack.c.b16 %v1858, %v1855
    %v1901 = vpack.c.b16 %v1862, %v1859
    %v1902 = vpack.c.b16 %v1863, %v1860
    %v1903 = vpack.c.b16 %v1864, %v1861
    %v1904 = vpack.c.b16 %v1868, %v1865
    %v1905 = vpack.c.b16 %v1869, %v1866
    %v1906 = vpack.c.b16 %v1870, %v1867
    %v1907 = vpack.c.b16 %v1874, %v1871
    %v1908 = vpack.c.b16 %v1875, %v1872
    %v1909 = vpack.c.b16 %v1876, %v1873
    %v1910 = vpack.c.b16 %v1880, %v1877
    %v1911 = vpack.c.b16 %v1881, %v1878
    %v1912 = vpack.c.b16 %v1882, %v1879
    %v1913 = vpack.c.b16 %v1886, %v1883
    %v1914 = vpack.c.b16 %v1887, %v1884
    %v1915 = vpack.c.b16 %v1888, %v1885
    %v1916 = vpack.c.b16 %v1892, %v1889
    %v1917 = vpack.c.b16 %v1893, %v1890
    %v1918 = vpack.c.b16 %v1894, %v1891
    %1943 = vmatpush.bf16.msra.mxu0 %v1916
    %1944 = vmatpush.bf16.msra.mxu0 %v1913
    %1945 = vmatpush.bf16.msra.mxu0 %v1910
    %1946 = vmatpush.bf16.msra.mxu0 %v1907
    %1947 = vmatpush.bf16.msra.mxu0 %v1904
    %1948 = vmatpush.bf16.msra.mxu0 %v1901
    %1949 = vmatpush.bf16.msra.mxu0 %v1898
    %1950 = vmatpush.bf16.msra.mxu0 %v1895
    %1951 = vmatmul.bf16.gmra.mxu0 %v1782
    %v1952 = vpop.f32.mrf.mxu0
    %v1953 = vadd.f32 %v466, %v1952
    %v1954 = vpop.f32.mrf.mxu0
    %1955 = vdwg.mxu0
    %1956 = vmatpush.bf16.msra.mxu0 %v1917
    %1957 = vmatpush.bf16.msra.mxu0 %v1914
    %1958 = vmatpush.bf16.msra.mxu0 %v1911
    %1959 = vmatpush.bf16.msra.mxu0 %v1908
    %1960 = vmatpush.bf16.msra.mxu0 %v1905
    %1961 = vmatpush.bf16.msra.mxu0 %v1902
    %1962 = vmatpush.bf16.msra.mxu0 %v1899
    %1963 = vmatpush.bf16.msra.mxu0 %v1896
    %1964 = vmatmul.bf16.gmra.mxu0 %v1782
    %v1965 = vpop.f32.mrf.mxu0
    %v1966 = vadd.f32 %v467, %v1965
    %v1967 = vpop.f32.mrf.mxu0
    %1968 = vdwg.mxu0
    %1969 = vmatpush.bf16.msra.mxu0 %v1918
    %1970 = vmatpush.bf16.msra.mxu0 %v1915
    %1971 = vmatpush.bf16.msra.mxu0 %v1912
    %1972 = vmatpush.bf16.msra.mxu0 %v1909
    %1973 = vmatpush.bf16.msra.mxu0 %v1906
    %1974 = vmatpush.bf16.msra.mxu0 %v1903
    %1975 = vmatpush.bf16.msra.mxu0 %v1900
    %1976 = vmatpush.bf16.msra.mxu0 %v1897
    %1977 = vmatmul.bf16.gmra.mxu0 %v1782
    %v1978 = vpop.f32.mrf.mxu0
    %v1979 = vadd.f32 %v468, %v1978
    %v1980 = vpop.f32.mrf.mxu0
    %1981 = vdwg.mxu0
    %v1983 = vrot.slane %v1953, 6
    %v1985 = vadd.f32 %v1779, %v1983
    %v1986 = vxor.u32 %v1985, 2147483648
    %v1987 = vmul.f32 %v1986, 1.442695
    %v1988 = vpow.pop %v1987
    %v1989 = vadd.f32 %v1988, 1.0
    %v1990 = vrcp.pop %v1989
    %v1991 = vmul.f32 %v1989, %v1990
    %v1992 = vsub.f32 1.0, %v1991
    %v1993 = vmul.f32 %v1990, %v1992
    %v1994 = vadd.f32 %v1990, %v1993
    %vm1995 = vweird.f32 %v1989
    %vm1996 = vweird.f32 %v1990
    %vm1997 = vmor %vm1995, %vm1996
    %v1998 = vsel %vm1997, %v1990, %v1994
    %v1999 = vand.u32 2147483647, %v1989
    %vm2000 = vcmp.eq.f32.partialorder %v1999, 8.507059e+37
    %v2001 = vand.u32 %v1989, 2147483648
    %v2002 = vor.u32 1.1754944e-38, %v2001
    %v2003 = vsel %vm2000, %v2002, %v1998
    %v2004 = vmul.f32 1.0, %v2003
    %v2006 = vrot.slane %v1966, 6
    %v2008 = vadd.f32 %v1780, %v2006
    %v2009 = vxor.u32 %v2008, 2147483648
    %v2010 = vmul.f32 %v2009, 1.442695
    %v2011 = vpow.pop %v2010
    %v2012 = vadd.f32 %v2011, 1.0
    %v2013 = vrcp.pop %v2012
    %v2014 = vmul.f32 %v2012, %v2013
    %v2015 = vsub.f32 1.0, %v2014
    %v2016 = vmul.f32 %v2013, %v2015
    %v2017 = vadd.f32 %v2013, %v2016
    %vm2018 = vweird.f32 %v2012
    %vm2019 = vweird.f32 %v2013
    %vm2020 = vmor %vm2018, %vm2019
    %v2021 = vsel %vm2020, %v2013, %v2017
    %v2022 = vand.u32 2147483647, %v2012
    %vm2023 = vcmp.eq.f32.partialorder %v2022, 8.507059e+37
    %v2024 = vand.u32 %v2012, 2147483648
    %v2025 = vor.u32 1.1754944e-38, %v2024
    %v2026 = vsel %vm2023, %v2025, %v2021
    %v2027 = vmul.f32 1.0, %v2026
    %v2029 = vrot.slane %v1979, 6
    %v2031 = vmul.f32 %v2004, %v2029
    %v2032 = vadd.f32 %v1781, %v2031
    %v2033 = vtanh.pop %v2032
    %v2034 = vsub.f32 1.0, %v2027
    %v2035 = vmul.f32 %v2034, %v2033
    %v2037 = vrot.slane %v1776, 6
    %v2039 = vmul.f32 %v2027, %v2037
    %v2040 = vadd.f32 %v2035, %v2039
    %2041 = vst [vmem:[#allocation4 + $0x3] sm:$0x4] %v2040
    %2042 = vst [vmem:[#allocation4 + $0xc] sm:$0x8] %v2040
    %v2043 = vld [vmem:[#allocation2 + $0x18] sm:$0x30]
    %v2044 = vld [vmem:[#allocation2 + $0x20] sm:$0x30]
    %v2045 = vld [vmem:[#allocation2 + $0x28] sm:$0x30]
    %v2046 = vpack.c.bf16 %v2040, %v2040
    %v2047 = vld [vmem:[#allocation9] sm:$0xff]
    %v2048 = vld [vmem:[#allocation9 + $0x8] sm:$0xf]
    %v2049 = vld [vmem:[#allocation9 + $0xc] sm:$0xff]
    %v2050 = vld [vmem:[#allocation9 + $0x14] sm:$0xf]
    %v2051 = vld [vmem:[#allocation9 + $0x18] sm:$0xff]
    %v2052 = vld [vmem:[#allocation9 + $0x20] sm:$0xf]
    %v2053 = vld [vmem:[#allocation9 + $0x24] sm:$0xff]
    %v2054 = vld [vmem:[#allocation9 + $0x2c] sm:$0xf]
    %v2055 = vld [vmem:[#allocation9 + $0x30] sm:$0xff]
    %v2056 = vld [vmem:[#allocation9 + $0x38] sm:$0xf]
    %v2057 = vld [vmem:[#allocation9 + $0x3c] sm:$0xff]
    %v2058 = vld [vmem:[#allocation9 + $0x44] sm:$0xf]
    %v2059 = vld [vmem:[#allocation9 + $0x48] sm:$0xff]
    %v2060 = vld [vmem:[#allocation9 + $0x50] sm:$0xf]
    %v2061 = vld [vmem:[#allocation9 + $0x54] sm:$0xff]
    %v2062 = vld [vmem:[#allocation9 + $0x5c] sm:$0xf]
    %v2063 = vld [vmem:[#allocation9 + $0x60] sm:$0xff]
    %v2064 = vld [vmem:[#allocation9 + $0x68] sm:$0xf]
    %v2065 = vld [vmem:[#allocation9 + $0x6c] sm:$0xff]
    %v2066 = vld [vmem:[#allocation9 + $0x74] sm:$0xf]
    %v2067 = vld [vmem:[#allocation9 + $0x78] sm:$0xff]
    %v2068 = vld [vmem:[#allocation9 + $0x80] sm:$0xf]
    %v2069 = vld [vmem:[#allocation9 + $0x84] sm:$0xff]
    %v2070 = vld [vmem:[#allocation9 + $0x8c] sm:$0xf]
    %v2071 = vld [vmem:[#allocation9 + $0x90] sm:$0xff]
    %v2072 = vld [vmem:[#allocation9 + $0x98] sm:$0xf]
    %v2073 = vld [vmem:[#allocation9 + $0x9c] sm:$0xff]
    %v2074 = vld [vmem:[#allocation9 + $0xa4] sm:$0xf]
    %v2075 = vld [vmem:[#allocation9 + $0xa8] sm:$0xff]
    %v2076 = vld [vmem:[#allocation9 + $0xb0] sm:$0xf]
    %v2077 = vld [vmem:[#allocation9 + $0xb4] sm:$0xff]
    %v2078 = vld [vmem:[#allocation9 + $0xbc] sm:$0xf]
    %v2080 = vrot.slane %v2046, 1
    %v2114 = vunpack.c.l.b16 %v2047
    %v2115 = vunpack.c.h.b16 %v2047
    %v2116 = vunpack.c.l.b16 %v2048
    %v2117 = vunpack.c.l.b16 %v2049
    %v2118 = vunpack.c.h.b16 %v2049
    %v2119 = vunpack.c.l.b16 %v2050
    %v2120 = vunpack.c.l.b16 %v2051
    %v2121 = vunpack.c.h.b16 %v2051
    %v2122 = vunpack.c.l.b16 %v2052
    %v2123 = vunpack.c.l.b16 %v2053
    %v2124 = vunpack.c.h.b16 %v2053
    %v2125 = vunpack.c.l.b16 %v2054
    %v2126 = vunpack.c.l.b16 %v2055
    %v2127 = vunpack.c.h.b16 %v2055
    %v2128 = vunpack.c.l.b16 %v2056
    %v2129 = vunpack.c.l.b16 %v2057
    %v2130 = vunpack.c.h.b16 %v2057
    %v2131 = vunpack.c.l.b16 %v2058
    %v2132 = vunpack.c.l.b16 %v2059
    %v2133 = vunpack.c.h.b16 %v2059
    %v2134 = vunpack.c.l.b16 %v2060
    %v2135 = vunpack.c.l.b16 %v2061
    %v2136 = vunpack.c.h.b16 %v2061
    %v2137 = vunpack.c.l.b16 %v2062
    %v2138 = vunpack.c.l.b16 %v2063
    %v2139 = vunpack.c.h.b16 %v2063
    %v2140 = vunpack.c.l.b16 %v2064
    %v2141 = vunpack.c.l.b16 %v2065
    %v2142 = vunpack.c.h.b16 %v2065
    %v2143 = vunpack.c.l.b16 %v2066
    %v2144 = vunpack.c.l.b16 %v2067
    %v2145 = vunpack.c.h.b16 %v2067
    %v2146 = vunpack.c.l.b16 %v2068
    %v2147 = vunpack.c.l.b16 %v2069
    %v2148 = vunpack.c.h.b16 %v2069
    %v2149 = vunpack.c.l.b16 %v2070
    %v2150 = vunpack.c.l.b16 %v2071
    %v2151 = vunpack.c.h.b16 %v2071
    %v2152 = vunpack.c.l.b16 %v2072
    %v2153 = vunpack.c.l.b16 %v2073
    %v2154 = vunpack.c.h.b16 %v2073
    %v2155 = vunpack.c.l.b16 %v2074
    %v2156 = vunpack.c.l.b16 %v2075
    %v2157 = vunpack.c.h.b16 %v2075
    %v2158 = vunpack.c.l.b16 %v2076
    %v2159 = vunpack.c.l.b16 %v2077
    %v2160 = vunpack.c.h.b16 %v2077
    %v2161 = vunpack.c.l.b16 %v2078
    %v2162 = vpack.c.b16 %v2117, %v2114
    %v2163 = vpack.c.b16 %v2118, %v2115
    %v2164 = vpack.c.b16 %v2119, %v2116
    %v2165 = vpack.c.b16 %v2123, %v2120
    %v2166 = vpack.c.b16 %v2124, %v2121
    %v2167 = vpack.c.b16 %v2125, %v2122
    %v2168 = vpack.c.b16 %v2129, %v2126
    %v2169 = vpack.c.b16 %v2130, %v2127
    %v2170 = vpack.c.b16 %v2131, %v2128
    %v2171 = vpack.c.b16 %v2135, %v2132
    %v2172 = vpack.c.b16 %v2136, %v2133
    %v2173 = vpack.c.b16 %v2137, %v2134
    %v2174 = vpack.c.b16 %v2141, %v2138
    %v2175 = vpack.c.b16 %v2142, %v2139
    %v2176 = vpack.c.b16 %v2143, %v2140
    %v2177 = vpack.c.b16 %v2147, %v2144
    %v2178 = vpack.c.b16 %v2148, %v2145
    %v2179 = vpack.c.b16 %v2149, %v2146
    %v2180 = vpack.c.b16 %v2153, %v2150
    %v2181 = vpack.c.b16 %v2154, %v2151
    %v2182 = vpack.c.b16 %v2155, %v2152
    %v2183 = vpack.c.b16 %v2159, %v2156
    %v2184 = vpack.c.b16 %v2160, %v2157
    %v2185 = vpack.c.b16 %v2161, %v2158
    %2210 = vmatpush.bf16.msra.mxu0 %v2183
    %2211 = vmatpush.bf16.msra.mxu0 %v2180
    %2212 = vmatpush.bf16.msra.mxu0 %v2177
    %2213 = vmatpush.bf16.msra.mxu0 %v2174
    %2214 = vmatpush.bf16.msra.mxu0 %v2171
    %2215 = vmatpush.bf16.msra.mxu0 %v2168
    %2216 = vmatpush.bf16.msra.mxu0 %v2165
    %2217 = vmatpush.bf16.msra.mxu0 %v2162
    %2218 = vmatmul.bf16.gmra.mxu0 %v2080
    %v2219 = vpop.f32.mrf.mxu0
    %v2220 = vadd.f32 %v466, %v2219
    %v2221 = vpop.f32.mrf.mxu0
    %2222 = vdwg.mxu0
    %2223 = vmatpush.bf16.msra.mxu0 %v2184
    %2224 = vmatpush.bf16.msra.mxu0 %v2181
    %2225 = vmatpush.bf16.msra.mxu0 %v2178
    %2226 = vmatpush.bf16.msra.mxu0 %v2175
    %2227 = vmatpush.bf16.msra.mxu0 %v2172
    %2228 = vmatpush.bf16.msra.mxu0 %v2169
    %2229 = vmatpush.bf16.msra.mxu0 %v2166
    %2230 = vmatpush.bf16.msra.mxu0 %v2163
    %2231 = vmatmul.bf16.gmra.mxu0 %v2080
    %v2232 = vpop.f32.mrf.mxu0
    %v2233 = vadd.f32 %v467, %v2232
    %v2234 = vpop.f32.mrf.mxu0
    %2235 = vdwg.mxu0
    %2236 = vmatpush.bf16.msra.mxu0 %v2185
    %2237 = vmatpush.bf16.msra.mxu0 %v2182
    %2238 = vmatpush.bf16.msra.mxu0 %v2179
    %2239 = vmatpush.bf16.msra.mxu0 %v2176
    %2240 = vmatpush.bf16.msra.mxu0 %v2173
    %2241 = vmatpush.bf16.msra.mxu0 %v2170
    %2242 = vmatpush.bf16.msra.mxu0 %v2167
    %2243 = vmatpush.bf16.msra.mxu0 %v2164
    %2244 = vmatmul.bf16.gmra.mxu0 %v2080
    %v2245 = vpop.f32.mrf.mxu0
    %v2246 = vadd.f32 %v468, %v2245
    %v2247 = vpop.f32.mrf.mxu0
    %2248 = vdwg.mxu0
    %v2250 = vrot.slane %v2220, 4
    %v2252 = vadd.f32 %v2043, %v2250
    %v2253 = vxor.u32 %v2252, 2147483648
    %v2254 = vmul.f32 %v2253, 1.442695
    %v2255 = vpow.pop %v2254
    %v2256 = vadd.f32 %v2255, 1.0
    %v2257 = vrcp.pop %v2256
    %v2258 = vmul.f32 %v2256, %v2257
    %v2259 = vsub.f32 1.0, %v2258
    %v2260 = vmul.f32 %v2257, %v2259
    %v2261 = vadd.f32 %v2257, %v2260
    %vm2262 = vweird.f32 %v2256
    %vm2263 = vweird.f32 %v2257
    %vm2264 = vmor %vm2262, %vm2263
    %v2265 = vsel %vm2264, %v2257, %v2261
    %v2266 = vand.u32 2147483647, %v2256
    %vm2267 = vcmp.eq.f32.partialorder %v2266, 8.507059e+37
    %v2268 = vand.u32 %v2256, 2147483648
    %v2269 = vor.u32 1.1754944e-38, %v2268
    %v2270 = vsel %vm2267, %v2269, %v2265
    %v2271 = vmul.f32 1.0, %v2270
    %v2273 = vrot.slane %v2233, 4
    %v2275 = vadd.f32 %v2044, %v2273
    %v2276 = vxor.u32 %v2275, 2147483648
    %v2277 = vmul.f32 %v2276, 1.442695
    %v2278 = vpow.pop %v2277
    %v2279 = vadd.f32 %v2278, 1.0
    %v2280 = vrcp.pop %v2279
    %v2281 = vmul.f32 %v2279, %v2280
    %v2282 = vsub.f32 1.0, %v2281
    %v2283 = vmul.f32 %v2280, %v2282
    %v2284 = vadd.f32 %v2280, %v2283
    %vm2285 = vweird.f32 %v2279
    %vm2286 = vweird.f32 %v2280
    %vm2287 = vmor %vm2285, %vm2286
    %v2288 = vsel %vm2287, %v2280, %v2284
    %v2289 = vand.u32 2147483647, %v2279
    %vm2290 = vcmp.eq.f32.partialorder %v2289, 8.507059e+37
    %v2291 = vand.u32 %v2279, 2147483648
    %v2292 = vor.u32 1.1754944e-38, %v2291
    %v2293 = vsel %vm2290, %v2292, %v2288
    %v2294 = vmul.f32 1.0, %v2293
    %v2296 = vrot.slane %v2246, 4
    %v2298 = vmul.f32 %v2271, %v2296
    %v2299 = vadd.f32 %v2045, %v2298
    %v2300 = vtanh.pop %v2299
    %v2301 = vsub.f32 1.0, %v2294
    %v2302 = vmul.f32 %v2301, %v2300
    %v2304 = vrot.slane %v2040, 6
    %v2306 = vmul.f32 %v2294, %v2304
    %v2307 = vadd.f32 %v2302, %v2306
    %2308 = vst [vmem:[#allocation4 + $0x2] sm:$0x10] %v2307
    %2309 = vst [vmem:[#allocation4 + $0xb] sm:$0x20] %v2307
    %v2310 = vld [vmem:[#allocation2 + $0x18] sm:$0xc0]
    %v2311 = vld [vmem:[#allocation2 + $0x20] sm:$0xc0]
    %v2312 = vld [vmem:[#allocation2 + $0x28] sm:$0xc0]
    %v2313 = vpack.c.bf16 %v2307, %v2307
    %v2314 = vld [vmem:[#allocation9] sm:$0xff]
    %v2315 = vld [vmem:[#allocation9 + $0x8] sm:$0xf]
    %v2316 = vld [vmem:[#allocation9 + $0xc] sm:$0xff]
    %v2317 = vld [vmem:[#allocation9 + $0x14] sm:$0xf]
    %v2318 = vld [vmem:[#allocation9 + $0x18] sm:$0xff]
    %v2319 = vld [vmem:[#allocation9 + $0x20] sm:$0xf]
    %v2320 = vld [vmem:[#allocation9 + $0x24] sm:$0xff]
    %v2321 = vld [vmem:[#allocation9 + $0x2c] sm:$0xf]
    %v2322 = vld [vmem:[#allocation9 + $0x30] sm:$0xff]
    %v2323 = vld [vmem:[#allocation9 + $0x38] sm:$0xf]
    %v2324 = vld [vmem:[#allocation9 + $0x3c] sm:$0xff]
    %v2325 = vld [vmem:[#allocation9 + $0x44] sm:$0xf]
    %v2326 = vld [vmem:[#allocation9 + $0x48] sm:$0xff]
    %v2327 = vld [vmem:[#allocation9 + $0x50] sm:$0xf]
    %v2328 = vld [vmem:[#allocation9 + $0x54] sm:$0xff]
    %v2329 = vld [vmem:[#allocation9 + $0x5c] sm:$0xf]
    %v2330 = vld [vmem:[#allocation9 + $0x60] sm:$0xff]
    %v2331 = vld [vmem:[#allocation9 + $0x68] sm:$0xf]
    %v2332 = vld [vmem:[#allocation9 + $0x6c] sm:$0xff]
    %v2333 = vld [vmem:[#allocation9 + $0x74] sm:$0xf]
    %v2334 = vld [vmem:[#allocation9 + $0x78] sm:$0xff]
    %v2335 = vld [vmem:[#allocation9 + $0x80] sm:$0xf]
    %v2336 = vld [vmem:[#allocation9 + $0x84] sm:$0xff]
    %v2337 = vld [vmem:[#allocation9 + $0x8c] sm:$0xf]
    %v2338 = vld [vmem:[#allocation9 + $0x90] sm:$0xff]
    %v2339 = vld [vmem:[#allocation9 + $0x98] sm:$0xf]
    %v2340 = vld [vmem:[#allocation9 + $0x9c] sm:$0xff]
    %v2341 = vld [vmem:[#allocation9 + $0xa4] sm:$0xf]
    %v2342 = vld [vmem:[#allocation9 + $0xa8] sm:$0xff]
    %v2343 = vld [vmem:[#allocation9 + $0xb0] sm:$0xf]
    %v2344 = vld [vmem:[#allocation9 + $0xb4] sm:$0xff]
    %v2345 = vld [vmem:[#allocation9 + $0xbc] sm:$0xf]
    %v2347 = vrot.slane %v2313, 2
    %v2381 = vunpack.c.l.b16 %v2314
    %v2382 = vunpack.c.h.b16 %v2314
    %v2383 = vunpack.c.l.b16 %v2315
    %v2384 = vunpack.c.l.b16 %v2316
    %v2385 = vunpack.c.h.b16 %v2316
    %v2386 = vunpack.c.l.b16 %v2317
    %v2387 = vunpack.c.l.b16 %v2318
    %v2388 = vunpack.c.h.b16 %v2318
    %v2389 = vunpack.c.l.b16 %v2319
    %v2390 = vunpack.c.l.b16 %v2320
    %v2391 = vunpack.c.h.b16 %v2320
    %v2392 = vunpack.c.l.b16 %v2321
    %v2393 = vunpack.c.l.b16 %v2322
    %v2394 = vunpack.c.h.b16 %v2322
    %v2395 = vunpack.c.l.b16 %v2323
    %v2396 = vunpack.c.l.b16 %v2324
    %v2397 = vunpack.c.h.b16 %v2324
    %v2398 = vunpack.c.l.b16 %v2325
    %v2399 = vunpack.c.l.b16 %v2326
    %v2400 = vunpack.c.h.b16 %v2326
    %v2401 = vunpack.c.l.b16 %v2327
    %v2402 = vunpack.c.l.b16 %v2328
    %v2403 = vunpack.c.h.b16 %v2328
    %v2404 = vunpack.c.l.b16 %v2329
    %v2405 = vunpack.c.l.b16 %v2330
    %v2406 = vunpack.c.h.b16 %v2330
    %v2407 = vunpack.c.l.b16 %v2331
    %v2408 = vunpack.c.l.b16 %v2332
    %v2409 = vunpack.c.h.b16 %v2332
    %v2410 = vunpack.c.l.b16 %v2333
    %v2411 = vunpack.c.l.b16 %v2334
    %v2412 = vunpack.c.h.b16 %v2334
    %v2413 = vunpack.c.l.b16 %v2335
    %v2414 = vunpack.c.l.b16 %v2336
    %v2415 = vunpack.c.h.b16 %v2336
    %v2416 = vunpack.c.l.b16 %v2337
    %v2417 = vunpack.c.l.b16 %v2338
    %v2418 = vunpack.c.h.b16 %v2338
    %v2419 = vunpack.c.l.b16 %v2339
    %v2420 = vunpack.c.l.b16 %v2340
    %v2421 = vunpack.c.h.b16 %v2340
    %v2422 = vunpack.c.l.b16 %v2341
    %v2423 = vunpack.c.l.b16 %v2342
    %v2424 = vunpack.c.h.b16 %v2342
    %v2425 = vunpack.c.l.b16 %v2343
    %v2426 = vunpack.c.l.b16 %v2344
    %v2427 = vunpack.c.h.b16 %v2344
    %v2428 = vunpack.c.l.b16 %v2345
    %v2429 = vpack.c.b16 %v2384, %v2381
    %v2430 = vpack.c.b16 %v2385, %v2382
    %v2431 = vpack.c.b16 %v2386, %v2383
    %v2432 = vpack.c.b16 %v2390, %v2387
    %v2433 = vpack.c.b16 %v2391, %v2388
    %v2434 = vpack.c.b16 %v2392, %v2389
    %v2435 = vpack.c.b16 %v2396, %v2393
    %v2436 = vpack.c.b16 %v2397, %v2394
    %v2437 = vpack.c.b16 %v2398, %v2395
    %v2438 = vpack.c.b16 %v2402, %v2399
    %v2439 = vpack.c.b16 %v2403, %v2400
    %v2440 = vpack.c.b16 %v2404, %v2401
    %v2441 = vpack.c.b16 %v2408, %v2405
    %v2442 = vpack.c.b16 %v2409, %v2406
    %v2443 = vpack.c.b16 %v2410, %v2407
    %v2444 = vpack.c.b16 %v2414, %v2411
    %v2445 = vpack.c.b16 %v2415, %v2412
    %v2446 = vpack.c.b16 %v2416, %v2413
    %v2447 = vpack.c.b16 %v2420, %v2417
    %v2448 = vpack.c.b16 %v2421, %v2418
    %v2449 = vpack.c.b16 %v2422, %v2419
    %v2450 = vpack.c.b16 %v2426, %v2423
    %v2451 = vpack.c.b16 %v2427, %v2424
    %v2452 = vpack.c.b16 %v2428, %v2425
    %2477 = vmatpush.bf16.msra.mxu0 %v2450
    %2478 = vmatpush.bf16.msra.mxu0 %v2447
    %2479 = vmatpush.bf16.msra.mxu0 %v2444
    %2480 = vmatpush.bf16.msra.mxu0 %v2441
    %2481 = vmatpush.bf16.msra.mxu0 %v2438
    %2482 = vmatpush.bf16.msra.mxu0 %v2435
    %2483 = vmatpush.bf16.msra.mxu0 %v2432
    %2484 = vmatpush.bf16.msra.mxu0 %v2429
    %2485 = vmatmul.bf16.gmra.mxu0 %v2347
    %v2486 = vpop.f32.mrf.mxu0
    %v2487 = vadd.f32 %v466, %v2486
    %v2488 = vpop.f32.mrf.mxu0
    %2489 = vdwg.mxu0
    %2490 = vmatpush.bf16.msra.mxu0 %v2451
    %2491 = vmatpush.bf16.msra.mxu0 %v2448
    %2492 = vmatpush.bf16.msra.mxu0 %v2445
    %2493 = vmatpush.bf16.msra.mxu0 %v2442
    %2494 = vmatpush.bf16.msra.mxu0 %v2439
    %2495 = vmatpush.bf16.msra.mxu0 %v2436
    %2496 = vmatpush.bf16.msra.mxu0 %v2433
    %2497 = vmatpush.bf16.msra.mxu0 %v2430
    %2498 = vmatmul.bf16.gmra.mxu0 %v2347
    %v2499 = vpop.f32.mrf.mxu0
    %v2500 = vadd.f32 %v467, %v2499
    %v2501 = vpop.f32.mrf.mxu0
    %2502 = vdwg.mxu0
    %2503 = vmatpush.bf16.msra.mxu0 %v2452
    %2504 = vmatpush.bf16.msra.mxu0 %v2449
    %2505 = vmatpush.bf16.msra.mxu0 %v2446
    %2506 = vmatpush.bf16.msra.mxu0 %v2443
    %2507 = vmatpush.bf16.msra.mxu0 %v2440
    %2508 = vmatpush.bf16.msra.mxu0 %v2437
    %2509 = vmatpush.bf16.msra.mxu0 %v2434
    %2510 = vmatpush.bf16.msra.mxu0 %v2431
    %2511 = vmatmul.bf16.gmra.mxu0 %v2347
    %v2512 = vpop.f32.mrf.mxu0
    %v2513 = vadd.f32 %v468, %v2512
    %v2514 = vpop.f32.mrf.mxu0
    %2515 = vdwg.mxu0
    %v2517 = vrot.slane %v2487, 2
    %v2519 = vadd.f32 %v2310, %v2517
    %v2520 = vxor.u32 %v2519, 2147483648
    %v2521 = vmul.f32 %v2520, 1.442695
    %v2522 = vpow.pop %v2521
    %v2523 = vadd.f32 %v2522, 1.0
    %v2524 = vrcp.pop %v2523
    %v2525 = vmul.f32 %v2523, %v2524
    %v2526 = vsub.f32 1.0, %v2525
    %v2527 = vmul.f32 %v2524, %v2526
    %v2528 = vadd.f32 %v2524, %v2527
    %vm2529 = vweird.f32 %v2523
    %vm2530 = vweird.f32 %v2524
    %vm2531 = vmor %vm2529, %vm2530
    %v2532 = vsel %vm2531, %v2524, %v2528
    %v2533 = vand.u32 2147483647, %v2523
    %vm2534 = vcmp.eq.f32.partialorder %v2533, 8.507059e+37
    %v2535 = vand.u32 %v2523, 2147483648
    %v2536 = vor.u32 1.1754944e-38, %v2535
    %v2537 = vsel %vm2534, %v2536, %v2532
    %v2538 = vmul.f32 1.0, %v2537
    %v2540 = vrot.slane %v2500, 2
    %v2542 = vadd.f32 %v2311, %v2540
    %v2543 = vxor.u32 %v2542, 2147483648
    %v2544 = vmul.f32 %v2543, 1.442695
    %v2545 = vpow.pop %v2544
    %v2546 = vadd.f32 %v2545, 1.0
    %v2547 = vrcp.pop %v2546
    %v2548 = vmul.f32 %v2546, %v2547
    %v2549 = vsub.f32 1.0, %v2548
    %v2550 = vmul.f32 %v2547, %v2549
    %v2551 = vadd.f32 %v2547, %v2550
    %vm2552 = vweird.f32 %v2546
    %vm2553 = vweird.f32 %v2547
    %vm2554 = vmor %vm2552, %vm2553
    %v2555 = vsel %vm2554, %v2547, %v2551
    %v2556 = vand.u32 2147483647, %v2546
    %vm2557 = vcmp.eq.f32.partialorder %v2556, 8.507059e+37
    %v2558 = vand.u32 %v2546, 2147483648
    %v2559 = vor.u32 1.1754944e-38, %v2558
    %v2560 = vsel %vm2557, %v2559, %v2555
    %v2561 = vmul.f32 1.0, %v2560
    %v2563 = vrot.slane %v2513, 2
    %v2565 = vmul.f32 %v2538, %v2563
    %v2566 = vadd.f32 %v2312, %v2565
    %v2567 = vtanh.pop %v2566
    %v2568 = vsub.f32 1.0, %v2561
    %v2569 = vmul.f32 %v2568, %v2567
    %v2571 = vrot.slane %v2307, 6
    %v2573 = vmul.f32 %v2561, %v2571
    %v2574 = vadd.f32 %v2569, %v2573
    %2575 = vst [vmem:[#allocation4 + $0x1] sm:$0x40] %v2574
    %2576 = vst [vmem:[#allocation4 + $0xa] sm:$0x80] %v2574
    %v2577 = vld [vmem:[#allocation2 + $0x30] sm:$0x3]
    %v2578 = vld [vmem:[#allocation2 + $0x38] sm:$0x3]
    %v2579 = vld [vmem:[#allocation2 + $0x40] sm:$0x3]
    %v2580 = vpack.c.bf16 %v2574, %v2574
    %v2581 = vld [vmem:[#allocation9] sm:$0xff]
    %v2582 = vld [vmem:[#allocation9 + $0x8] sm:$0xf]
    %v2583 = vld [vmem:[#allocation9 + $0xc] sm:$0xff]
    %v2584 = vld [vmem:[#allocation9 + $0x14] sm:$0xf]
    %v2585 = vld [vmem:[#allocation9 + $0x18] sm:$0xff]
    %v2586 = vld [vmem:[#allocation9 + $0x20] sm:$0xf]
    %v2587 = vld [vmem:[#allocation9 + $0x24] sm:$0xff]
    %v2588 = vld [vmem:[#allocation9 + $0x2c] sm:$0xf]
    %v2589 = vld [vmem:[#allocation9 + $0x30] sm:$0xff]
    %v2590 = vld [vmem:[#allocation9 + $0x38] sm:$0xf]
    %v2591 = vld [vmem:[#allocation9 + $0x3c] sm:$0xff]
    %v2592 = vld [vmem:[#allocation9 + $0x44] sm:$0xf]
    %v2593 = vld [vmem:[#allocation9 + $0x48] sm:$0xff]
    %v2594 = vld [vmem:[#allocation9 + $0x50] sm:$0xf]
    %v2595 = vld [vmem:[#allocation9 + $0x54] sm:$0xff]
    %v2596 = vld [vmem:[#allocation9 + $0x5c] sm:$0xf]
    %v2597 = vld [vmem:[#allocation9 + $0x60] sm:$0xff]
    %v2598 = vld [vmem:[#allocation9 + $0x68] sm:$0xf]
    %v2599 = vld [vmem:[#allocation9 + $0x6c] sm:$0xff]
    %v2600 = vld [vmem:[#allocation9 + $0x74] sm:$0xf]
    %v2601 = vld [vmem:[#allocation9 + $0x78] sm:$0xff]
    %v2602 = vld [vmem:[#allocation9 + $0x80] sm:$0xf]
    %v2603 = vld [vmem:[#allocation9 + $0x84] sm:$0xff]
    %v2604 = vld [vmem:[#allocation9 + $0x8c] sm:$0xf]
    %v2605 = vld [vmem:[#allocation9 + $0x90] sm:$0xff]
    %v2606 = vld [vmem:[#allocation9 + $0x98] sm:$0xf]
    %v2607 = vld [vmem:[#allocation9 + $0x9c] sm:$0xff]
    %v2608 = vld [vmem:[#allocation9 + $0xa4] sm:$0xf]
    %v2609 = vld [vmem:[#allocation9 + $0xa8] sm:$0xff]
    %v2610 = vld [vmem:[#allocation9 + $0xb0] sm:$0xf]
    %v2611 = vld [vmem:[#allocation9 + $0xb4] sm:$0xff]
    %v2612 = vld [vmem:[#allocation9 + $0xbc] sm:$0xf]
    %v2614 = vrot.slane %v2580, 3
    %v2648 = vunpack.c.l.b16 %v2581
    %v2649 = vunpack.c.h.b16 %v2581
    %v2650 = vunpack.c.l.b16 %v2582
    %v2651 = vunpack.c.l.b16 %v2583
    %v2652 = vunpack.c.h.b16 %v2583
    %v2653 = vunpack.c.l.b16 %v2584
    %v2654 = vunpack.c.l.b16 %v2585
    %v2655 = vunpack.c.h.b16 %v2585
    %v2656 = vunpack.c.l.b16 %v2586
    %v2657 = vunpack.c.l.b16 %v2587
    %v2658 = vunpack.c.h.b16 %v2587
    %v2659 = vunpack.c.l.b16 %v2588
    %v2660 = vunpack.c.l.b16 %v2589
    %v2661 = vunpack.c.h.b16 %v2589
    %v2662 = vunpack.c.l.b16 %v2590
    %v2663 = vunpack.c.l.b16 %v2591
    %v2664 = vunpack.c.h.b16 %v2591
    %v2665 = vunpack.c.l.b16 %v2592
    %v2666 = vunpack.c.l.b16 %v2593
    %v2667 = vunpack.c.h.b16 %v2593
    %v2668 = vunpack.c.l.b16 %v2594
    %v2669 = vunpack.c.l.b16 %v2595
    %v2670 = vunpack.c.h.b16 %v2595
    %v2671 = vunpack.c.l.b16 %v2596
    %v2672 = vunpack.c.l.b16 %v2597
    %v2673 = vunpack.c.h.b16 %v2597
    %v2674 = vunpack.c.l.b16 %v2598
    %v2675 = vunpack.c.l.b16 %v2599
    %v2676 = vunpack.c.h.b16 %v2599
    %v2677 = vunpack.c.l.b16 %v2600
    %v2678 = vunpack.c.l.b16 %v2601
    %v2679 = vunpack.c.h.b16 %v2601
    %v2680 = vunpack.c.l.b16 %v2602
    %v2681 = vunpack.c.l.b16 %v2603
    %v2682 = vunpack.c.h.b16 %v2603
    %v2683 = vunpack.c.l.b16 %v2604
    %v2684 = vunpack.c.l.b16 %v2605
    %v2685 = vunpack.c.h.b16 %v2605
    %v2686 = vunpack.c.l.b16 %v2606
    %v2687 = vunpack.c.l.b16 %v2607
    %v2688 = vunpack.c.h.b16 %v2607
    %v2689 = vunpack.c.l.b16 %v2608
    %v2690 = vunpack.c.l.b16 %v2609
    %v2691 = vunpack.c.h.b16 %v2609
    %v2692 = vunpack.c.l.b16 %v2610
    %v2693 = vunpack.c.l.b16 %v2611
    %v2694 = vunpack.c.h.b16 %v2611
    %v2695 = vunpack.c.l.b16 %v2612
    %v2696 = vpack.c.b16 %v2651, %v2648
    %v2697 = vpack.c.b16 %v2652, %v2649
    %v2698 = vpack.c.b16 %v2653, %v2650
    %v2699 = vpack.c.b16 %v2657, %v2654
    %v2700 = vpack.c.b16 %v2658, %v2655
    %v2701 = vpack.c.b16 %v2659, %v2656
    %v2702 = vpack.c.b16 %v2663, %v2660
    %v2703 = vpack.c.b16 %v2664, %v2661
    %v2704 = vpack.c.b16 %v2665, %v2662
    %v2705 = vpack.c.b16 %v2669, %v2666
    %v2706 = vpack.c.b16 %v2670, %v2667
    %v2707 = vpack.c.b16 %v2671, %v2668
    %v2708 = vpack.c.b16 %v2675, %v2672
    %v2709 = vpack.c.b16 %v2676, %v2673
    %v2710 = vpack.c.b16 %v2677, %v2674
    %v2711 = vpack.c.b16 %v2681, %v2678
    %v2712 = vpack.c.b16 %v2682, %v2679
    %v2713 = vpack.c.b16 %v2683, %v2680
    %v2714 = vpack.c.b16 %v2687, %v2684
    %v2715 = vpack.c.b16 %v2688, %v2685
    %v2716 = vpack.c.b16 %v2689, %v2686
    %v2717 = vpack.c.b16 %v2693, %v2690
    %v2718 = vpack.c.b16 %v2694, %v2691
    %v2719 = vpack.c.b16 %v2695, %v2692
    %2744 = vmatpush.bf16.msra.mxu0 %v2717
    %2745 = vmatpush.bf16.msra.mxu0 %v2714
    %2746 = vmatpush.bf16.msra.mxu0 %v2711
    %2747 = vmatpush.bf16.msra.mxu0 %v2708
    %2748 = vmatpush.bf16.msra.mxu0 %v2705
    %2749 = vmatpush.bf16.msra.mxu0 %v2702
    %2750 = vmatpush.bf16.msra.mxu0 %v2699
    %2751 = vmatpush.bf16.msra.mxu0 %v2696
    %2752 = vmatmul.bf16.gmra.mxu0 %v2614
    %v2753 = vpop.f32.mrf.mxu0
    %v2754 = vadd.f32 %v466, %v2753
    %v2755 = vpop.f32.mrf.mxu0
    %2756 = vdwg.mxu0
    %2757 = vmatpush.bf16.msra.mxu0 %v2718
    %2758 = vmatpush.bf16.msra.mxu0 %v2715
    %2759 = vmatpush.bf16.msra.mxu0 %v2712
    %2760 = vmatpush.bf16.msra.mxu0 %v2709
    %2761 = vmatpush.bf16.msra.mxu0 %v2706
    %2762 = vmatpush.bf16.msra.mxu0 %v2703
    %2763 = vmatpush.bf16.msra.mxu0 %v2700
    %2764 = vmatpush.bf16.msra.mxu0 %v2697
    %2765 = vmatmul.bf16.gmra.mxu0 %v2614
    %v2766 = vpop.f32.mrf.mxu0
    %v2767 = vadd.f32 %v467, %v2766
    %v2768 = vpop.f32.mrf.mxu0
    %2769 = vdwg.mxu0
    %2770 = vmatpush.bf16.msra.mxu0 %v2719
    %2771 = vmatpush.bf16.msra.mxu0 %v2716
    %2772 = vmatpush.bf16.msra.mxu0 %v2713
    %2773 = vmatpush.bf16.msra.mxu0 %v2710
    %2774 = vmatpush.bf16.msra.mxu0 %v2707
    %2775 = vmatpush.bf16.msra.mxu0 %v2704
    %2776 = vmatpush.bf16.msra.mxu0 %v2701
    %2777 = vmatpush.bf16.msra.mxu0 %v2698
    %2778 = vmatmul.bf16.gmra.mxu0 %v2614
    %v2779 = vpop.f32.mrf.mxu0
    %v2780 = vadd.f32 %v468, %v2779
    %v2781 = vpop.f32.mrf.mxu0
    %2782 = vdwg.mxu0
    %v2783 = vadd.f32 %v2577, %v2754
    %v2784 = vxor.u32 %v2783, 2147483648
    %v2785 = vmul.f32 %v2784, 1.442695
    %v2786 = vpow.pop %v2785
    %v2787 = vadd.f32 %v2786, 1.0
    %v2788 = vrcp.pop %v2787
    %v2789 = vmul.f32 %v2787, %v2788
    %v2790 = vsub.f32 1.0, %v2789
    %v2791 = vmul.f32 %v2788, %v2790
    %v2792 = vadd.f32 %v2788, %v2791
    %vm2793 = vweird.f32 %v2787
    %vm2794 = vweird.f32 %v2788
    %vm2795 = vmor %vm2793, %vm2794
    %v2796 = vsel %vm2795, %v2788, %v2792
    %v2797 = vand.u32 2147483647, %v2787
    %vm2798 = vcmp.eq.f32.partialorder %v2797, 8.507059e+37
    %v2799 = vand.u32 %v2787, 2147483648
    %v2800 = vor.u32 1.1754944e-38, %v2799
    %v2801 = vsel %vm2798, %v2800, %v2796
    %v2802 = vmul.f32 1.0, %v2801
    %v2803 = vadd.f32 %v2578, %v2767
    %v2804 = vxor.u32 %v2803, 2147483648
    %v2805 = vmul.f32 %v2804, 1.442695
    %v2806 = vpow.pop %v2805
    %v2807 = vadd.f32 %v2806, 1.0
    %v2808 = vrcp.pop %v2807
    %v2809 = vmul.f32 %v2807, %v2808
    %v2810 = vsub.f32 1.0, %v2809
    %v2811 = vmul.f32 %v2808, %v2810
    %v2812 = vadd.f32 %v2808, %v2811
    %vm2813 = vweird.f32 %v2807
    %vm2814 = vweird.f32 %v2808
    %vm2815 = vmor %vm2813, %vm2814
    %v2816 = vsel %vm2815, %v2808, %v2812
    %v2817 = vand.u32 2147483647, %v2807
    %vm2818 = vcmp.eq.f32.partialorder %v2817, 8.507059e+37
    %v2819 = vand.u32 %v2807, 2147483648
    %v2820 = vor.u32 1.1754944e-38, %v2819
    %v2821 = vsel %vm2818, %v2820, %v2816
    %v2822 = vmul.f32 1.0, %v2821
    %v2823 = vmul.f32 %v2802, %v2780
    %v2824 = vadd.f32 %v2579, %v2823
    %v2825 = vtanh.pop %v2824
    %v2826 = vsub.f32 1.0, %v2822
    %v2827 = vmul.f32 %v2826, %v2825
    %v2829 = vrot.slane %v2574, 6
    %v2831 = vmul.f32 %v2822, %v2829
    %v2832 = vadd.f32 %v2827, %v2831
    %2833 = vst [vmem:[#allocation4 + $0x8] sm:$0x1] %v2832
    %2834 = vst [vmem:[#allocation4 + $0x11] sm:$0x2] %v2832
    %v2835 = vld [vmem:[#allocation2 + $0x30] sm:$0xc]
    %v2836 = vld [vmem:[#allocation2 + $0x38] sm:$0xc]
    %v2837 = vld [vmem:[#allocation2 + $0x40] sm:$0xc]
    %v2838 = vpack.c.bf16 %v2832, %v2832
    %v2839 = vld [vmem:[#allocation9] sm:$0xff]
    %v2840 = vld [vmem:[#allocation9 + $0x8] sm:$0xf]
    %v2841 = vld [vmem:[#allocation9 + $0xc] sm:$0xff]
    %v2842 = vld [vmem:[#allocation9 + $0x14] sm:$0xf]
    %v2843 = vld [vmem:[#allocation9 + $0x18] sm:$0xff]
    %v2844 = vld [vmem:[#allocation9 + $0x20] sm:$0xf]
    %v2845 = vld [vmem:[#allocation9 + $0x24] sm:$0xff]
    %v2846 = vld [vmem:[#allocation9 + $0x2c] sm:$0xf]
    %v2847 = vld [vmem:[#allocation9 + $0x30] sm:$0xff]
    %v2848 = vld [vmem:[#allocation9 + $0x38] sm:$0xf]
    %v2849 = vld [vmem:[#allocation9 + $0x3c] sm:$0xff]
    %v2850 = vld [vmem:[#allocation9 + $0x44] sm:$0xf]
    %v2851 = vld [vmem:[#allocation9 + $0x48] sm:$0xff]
    %v2852 = vld [vmem:[#allocation9 + $0x50] sm:$0xf]
    %v2853 = vld [vmem:[#allocation9 + $0x54] sm:$0xff]
    %v2854 = vld [vmem:[#allocation9 + $0x5c] sm:$0xf]
    %v2855 = vld [vmem:[#allocation9 + $0x60] sm:$0xff]
    %v2856 = vld [vmem:[#allocation9 + $0x68] sm:$0xf]
    %v2857 = vld [vmem:[#allocation9 + $0x6c] sm:$0xff]
    %v2858 = vld [vmem:[#allocation9 + $0x74] sm:$0xf]
    %v2859 = vld [vmem:[#allocation9 + $0x78] sm:$0xff]
    %v2860 = vld [vmem:[#allocation9 + $0x80] sm:$0xf]
    %v2861 = vld [vmem:[#allocation9 + $0x84] sm:$0xff]
    %v2862 = vld [vmem:[#allocation9 + $0x8c] sm:$0xf]
    %v2863 = vld [vmem:[#allocation9 + $0x90] sm:$0xff]
    %v2864 = vld [vmem:[#allocation9 + $0x98] sm:$0xf]
    %v2865 = vld [vmem:[#allocation9 + $0x9c] sm:$0xff]
    %v2866 = vld [vmem:[#allocation9 + $0xa4] sm:$0xf]
    %v2867 = vld [vmem:[#allocation9 + $0xa8] sm:$0xff]
    %v2868 = vld [vmem:[#allocation9 + $0xb0] sm:$0xf]
    %v2869 = vld [vmem:[#allocation9 + $0xb4] sm:$0xff]
    %v2870 = vld [vmem:[#allocation9 + $0xbc] sm:$0xf]
    %v2903 = vunpack.c.l.b16 %v2839
    %v2904 = vunpack.c.h.b16 %v2839
    %v2905 = vunpack.c.l.b16 %v2840
    %v2906 = vunpack.c.l.b16 %v2841
    %v2907 = vunpack.c.h.b16 %v2841
    %v2908 = vunpack.c.l.b16 %v2842
    %v2909 = vunpack.c.l.b16 %v2843
    %v2910 = vunpack.c.h.b16 %v2843
    %v2911 = vunpack.c.l.b16 %v2844
    %v2912 = vunpack.c.l.b16 %v2845
    %v2913 = vunpack.c.h.b16 %v2845
    %v2914 = vunpack.c.l.b16 %v2846
    %v2915 = vunpack.c.l.b16 %v2847
    %v2916 = vunpack.c.h.b16 %v2847
    %v2917 = vunpack.c.l.b16 %v2848
    %v2918 = vunpack.c.l.b16 %v2849
    %v2919 = vunpack.c.h.b16 %v2849
    %v2920 = vunpack.c.l.b16 %v2850
    %v2921 = vunpack.c.l.b16 %v2851
    %v2922 = vunpack.c.h.b16 %v2851
    %v2923 = vunpack.c.l.b16 %v2852
    %v2924 = vunpack.c.l.b16 %v2853
    %v2925 = vunpack.c.h.b16 %v2853
    %v2926 = vunpack.c.l.b16 %v2854
    %v2927 = vunpack.c.l.b16 %v2855
    %v2928 = vunpack.c.h.b16 %v2855
    %v2929 = vunpack.c.l.b16 %v2856
    %v2930 = vunpack.c.l.b16 %v2857
    %v2931 = vunpack.c.h.b16 %v2857
    %v2932 = vunpack.c.l.b16 %v2858
    %v2933 = vunpack.c.l.b16 %v2859
    %v2934 = vunpack.c.h.b16 %v2859
    %v2935 = vunpack.c.l.b16 %v2860
    %v2936 = vunpack.c.l.b16 %v2861
    %v2937 = vunpack.c.h.b16 %v2861
    %v2938 = vunpack.c.l.b16 %v2862
    %v2939 = vunpack.c.l.b16 %v2863
    %v2940 = vunpack.c.h.b16 %v2863
    %v2941 = vunpack.c.l.b16 %v2864
    %v2942 = vunpack.c.l.b16 %v2865
    %v2943 = vunpack.c.h.b16 %v2865
    %v2944 = vunpack.c.l.b16 %v2866
    %v2945 = vunpack.c.l.b16 %v2867
    %v2946 = vunpack.c.h.b16 %v2867
    %v2947 = vunpack.c.l.b16 %v2868
    %v2948 = vunpack.c.l.b16 %v2869
    %v2949 = vunpack.c.h.b16 %v2869
    %v2950 = vunpack.c.l.b16 %v2870
    %v2951 = vpack.c.b16 %v2906, %v2903
    %v2952 = vpack.c.b16 %v2907, %v2904
    %v2953 = vpack.c.b16 %v2908, %v2905
    %v2954 = vpack.c.b16 %v2912, %v2909
    %v2955 = vpack.c.b16 %v2913, %v2910
    %v2956 = vpack.c.b16 %v2914, %v2911
    %v2957 = vpack.c.b16 %v2918, %v2915
    %v2958 = vpack.c.b16 %v2919, %v2916
    %v2959 = vpack.c.b16 %v2920, %v2917
    %v2960 = vpack.c.b16 %v2924, %v2921
    %v2961 = vpack.c.b16 %v2925, %v2922
    %v2962 = vpack.c.b16 %v2926, %v2923
    %v2963 = vpack.c.b16 %v2930, %v2927
    %v2964 = vpack.c.b16 %v2931, %v2928
    %v2965 = vpack.c.b16 %v2932, %v2929
    %v2966 = vpack.c.b16 %v2936, %v2933
    %v2967 = vpack.c.b16 %v2937, %v2934
    %v2968 = vpack.c.b16 %v2938, %v2935
    %v2969 = vpack.c.b16 %v2942, %v2939
    %v2970 = vpack.c.b16 %v2943, %v2940
    %v2971 = vpack.c.b16 %v2944, %v2941
    %v2972 = vpack.c.b16 %v2948, %v2945
    %v2973 = vpack.c.b16 %v2949, %v2946
    %v2974 = vpack.c.b16 %v2950, %v2947
    %2999 = vmatpush.bf16.msra.mxu0 %v2972
    %3000 = vmatpush.bf16.msra.mxu0 %v2969
    %3001 = vmatpush.bf16.msra.mxu0 %v2966
    %3002 = vmatpush.bf16.msra.mxu0 %v2963
    %3003 = vmatpush.bf16.msra.mxu0 %v2960
    %3004 = vmatpush.bf16.msra.mxu0 %v2957
    %3005 = vmatpush.bf16.msra.mxu0 %v2954
    %3006 = vmatpush.bf16.msra.mxu0 %v2951
    %3007 = vmatmul.bf16.gmra.mxu0 %v2838
    %v3008 = vpop.f32.mrf.mxu0
    %v3009 = vadd.f32 %v466, %v3008
    %v3010 = vpop.f32.mrf.mxu0
    %3011 = vdwg.mxu0
    %3012 = vmatpush.bf16.msra.mxu0 %v2973
    %3013 = vmatpush.bf16.msra.mxu0 %v2970
    %3014 = vmatpush.bf16.msra.mxu0 %v2967
    %3015 = vmatpush.bf16.msra.mxu0 %v2964
    %3016 = vmatpush.bf16.msra.mxu0 %v2961
    %3017 = vmatpush.bf16.msra.mxu0 %v2958
    %3018 = vmatpush.bf16.msra.mxu0 %v2955
    %3019 = vmatpush.bf16.msra.mxu0 %v2952
    %3020 = vmatmul.bf16.gmra.mxu0 %v2838
    %v3021 = vpop.f32.mrf.mxu0
    %v3022 = vadd.f32 %v467, %v3021
    %v3023 = vpop.f32.mrf.mxu0
    %3024 = vdwg.mxu0
    %3025 = vmatpush.bf16.msra.mxu0 %v2974
    %3026 = vmatpush.bf16.msra.mxu0 %v2971
    %3027 = vmatpush.bf16.msra.mxu0 %v2968
    %3028 = vmatpush.bf16.msra.mxu0 %v2965
    %3029 = vmatpush.bf16.msra.mxu0 %v2962
    %3030 = vmatpush.bf16.msra.mxu0 %v2959
    %3031 = vmatpush.bf16.msra.mxu0 %v2956
    %3032 = vmatpush.bf16.msra.mxu0 %v2953
    %3033 = vmatmul.bf16.gmra.mxu0 %v2838
    %v3034 = vpop.f32.mrf.mxu0
    %v3035 = vadd.f32 %v468, %v3034
    %v3036 = vpop.f32.mrf.mxu0
    %3037 = vdwg.mxu0
    %v3039 = vrot.slane %v3009, 6
    %v3041 = vadd.f32 %v2835, %v3039
    %v3042 = vxor.u32 %v3041, 2147483648
    %v3043 = vmul.f32 %v3042, 1.442695
    %v3044 = vpow.pop %v3043
    %v3045 = vadd.f32 %v3044, 1.0
    %v3046 = vrcp.pop %v3045
    %v3047 = vmul.f32 %v3045, %v3046
    %v3048 = vsub.f32 1.0, %v3047
    %v3049 = vmul.f32 %v3046, %v3048
    %v3050 = vadd.f32 %v3046, %v3049
    %vm3051 = vweird.f32 %v3045
    %vm3052 = vweird.f32 %v3046
    %vm3053 = vmor %vm3051, %vm3052
    %v3054 = vsel %vm3053, %v3046, %v3050
    %v3055 = vand.u32 2147483647, %v3045
    %vm3056 = vcmp.eq.f32.partialorder %v3055, 8.507059e+37
    %v3057 = vand.u32 %v3045, 2147483648
    %v3058 = vor.u32 1.1754944e-38, %v3057
    %v3059 = vsel %vm3056, %v3058, %v3054
    %v3060 = vmul.f32 1.0, %v3059
    %v3062 = vrot.slane %v3022, 6
    %v3064 = vadd.f32 %v2836, %v3062
    %v3065 = vxor.u32 %v3064, 2147483648
    %v3066 = vmul.f32 %v3065, 1.442695
    %v3067 = vpow.pop %v3066
    %v3068 = vadd.f32 %v3067, 1.0
    %v3069 = vrcp.pop %v3068
    %v3070 = vmul.f32 %v3068, %v3069
    %v3071 = vsub.f32 1.0, %v3070
    %v3072 = vmul.f32 %v3069, %v3071
    %v3073 = vadd.f32 %v3069, %v3072
    %vm3074 = vweird.f32 %v3068
    %vm3075 = vweird.f32 %v3069
    %vm3076 = vmor %vm3074, %vm3075
    %v3077 = vsel %vm3076, %v3069, %v3073
    %v3078 = vand.u32 2147483647, %v3068
    %vm3079 = vcmp.eq.f32.partialorder %v3078, 8.507059e+37
    %v3080 = vand.u32 %v3068, 2147483648
    %v3081 = vor.u32 1.1754944e-38, %v3080
    %v3082 = vsel %vm3079, %v3081, %v3077
    %v3083 = vmul.f32 1.0, %v3082
    %v3085 = vrot.slane %v3035, 6
    %v3087 = vmul.f32 %v3060, %v3085
    %v3088 = vadd.f32 %v2837, %v3087
    %v3089 = vtanh.pop %v3088
    %v3090 = vsub.f32 1.0, %v3083
    %v3091 = vmul.f32 %v3090, %v3089
    %v3093 = vrot.slane %v2832, 6
    %v3095 = vmul.f32 %v3083, %v3093
    %v3096 = vadd.f32 %v3091, %v3095
    %3097 = vst [vmem:[#allocation4 + $0x7] sm:$0x4] %v3096
    %3098 = vst [vmem:[#allocation4 + $0x10] sm:$0x8] %v3096
    %v3099 = vld [vmem:[#allocation4] sm:$0xff]
    %v3100 = vld [vmem:[#allocation4 + $0x8] sm:$0xff]
    %v3101 = vld [vmem:[#allocation4 + $0x10] sm:$0xf]
    %v3102 = vpack.c.bf16 %v3100, %v3099
    %v3103 = vpack.c.bf16 %v3101, %v3101
    %v3104 = vld [vmem:[#allocation12] sm:$0xf]
    %v3105 = vld [vmem:[#allocation12 + $0x4] sm:$0xf]
    %v3106 = vld [vmem:[#allocation12 + $0x8] sm:$0xf]
    %v3107 = vld [vmem:[#allocation12 + $0xc] sm:$0xf]
    %v3108 = vld [vmem:[#allocation12 + $0x10] sm:$0xf]
    %v3109 = vld [vmem:[#allocation12 + $0x14] sm:$0xf]
    %v3110 = vld [vmem:[#allocation12 + $0x18] sm:$0xf]
    %v3111 = vld [vmem:[#allocation12 + $0x1c] sm:$0xf]
    %v3112 = vld [vmem:[#allocation12 + $0x20] sm:$0xf]
    %v3113 = vld [vmem:[#allocation12 + $0x24] sm:$0xf]
    %v3114 = vld [vmem:[#allocation12 + $0x28] sm:$0xf]
    %v3115 = vld [vmem:[#allocation12 + $0x2c] sm:$0xf]
    %v3116 = vld [vmem:[#allocation12 + $0x30] sm:$0xf]
    %v3117 = vld [vmem:[#allocation12 + $0x34] sm:$0xf]
    %v3118 = vld [vmem:[#allocation12 + $0x38] sm:$0xf]
    %v3119 = vld [vmem:[#allocation12 + $0x3c] sm:$0xf]
    %v3136 = vunpack.c.l.b16 %v3104
    %v3137 = vunpack.c.l.b16 %v3105
    %v3138 = vunpack.c.l.b16 %v3106
    %v3139 = vunpack.c.l.b16 %v3107
    %v3140 = vunpack.c.l.b16 %v3108
    %v3141 = vunpack.c.l.b16 %v3109
    %v3142 = vunpack.c.l.b16 %v3110
    %v3143 = vunpack.c.l.b16 %v3111
    %v3144 = vunpack.c.l.b16 %v3112
    %v3145 = vunpack.c.l.b16 %v3113
    %v3146 = vunpack.c.l.b16 %v3114
    %v3147 = vunpack.c.l.b16 %v3115
    %v3148 = vunpack.c.l.b16 %v3116
    %v3149 = vunpack.c.l.b16 %v3117
    %v3150 = vunpack.c.l.b16 %v3118
    %v3151 = vunpack.c.l.b16 %v3119
    %v3152 = vpack.c.b16 %v3137, %v3136
    %v3153 = vpack.c.b16 %v3139, %v3138
    %v3154 = vpack.c.b16 %v3141, %v3140
    %v3155 = vpack.c.b16 %v3143, %v3142
    %v3156 = vpack.c.b16 %v3145, %v3144
    %v3157 = vpack.c.b16 %v3147, %v3146
    %v3158 = vpack.c.b16 %v3149, %v3148
    %v3159 = vpack.c.b16 %v3151, %v3150
    %3168 = vmatpush.bf16.msra.mxu0 %v3159
    %3169 = vmatpush.bf16.msra.mxu0 %v3158
    %3170 = vmatpush.bf16.msra.mxu0 %v3157
    %3171 = vmatpush.bf16.msra.mxu0 %v3156
    %3172 = vmatpush.bf16.msra.mxu0 %v3155
    %3173 = vmatpush.bf16.msra.mxu0 %v3154
    %3174 = vmatpush.bf16.msra.mxu0 %v3153
    %3175 = vmatpush.bf16.msra.mxu0 %v3152
    %3176 = vmatmul.bf16.gmra.mxu0 %v3102
    %v3177 = vpop.f32.mrf.mxu0
    %v3178 = vadd.f32 0.0, %v3177
    %v3179 = vpop.f32.mrf.mxu0
    %v3180 = vadd.f32 0.0, %v3179
    %3181 = vmatmul.bf16.gmra.mxu0 %v3103
    %v3182 = vpop.f32.mrf.mxu0
    %v3183 = vadd.f32 0.0, %v3182
    %v3184 = vpop.f32.mrf.mxu0
    %3185 = vdwg.mxu0
    %v3189 = vrot.slane %v3099, 2
    %v3190 = vrot.slane %v3099, 4
    %v3191 = vrot.slane %v3099, 6
    %v3192 = vrot.slane %v3100, 2
    %v3193 = vrot.slane %v3100, 4
    %v3194 = vrot.slane %v3100, 6
    %v3195 = vrot.slane %v3101, 2
    %v3199 = vrot.slane %v3178, 2
    %v3200 = vrot.slane %v3178, 4
    %v3201 = vrot.slane %v3178, 6
    %v3202 = vrot.slane %v3180, 2
    %v3203 = vrot.slane %v3180, 4
    %v3204 = vrot.slane %v3180, 6
    %v3205 = vrot.slane %v3183, 2
    %v3213 = vld [vmem:[%s9] sm:$0x1]
    %v3215 = vperm.slane %v3213, 0
    %3218 = vst [vmem:[#allocation1] sm:$0xff] %v3096
    %s3219 = scalar_lea.vmem [#allocation1], 2
    %v3220 = vld [vmem:[%s3219] ss:$9 sm:$0xff]
    %s3221 = scalar_lea.vmem [#allocation1], 3
    %v3222 = vld [vmem:[%s3221] ss:$9 sm:$0xff]
    %v3223 = vperm.slane %v3220, 0
    %v3224 = vperm.slane %v3222, 0
    %v3227 = vrot.slane %v3223, 2
    %v3228 = vrot.slane %v3223, 4
    %v3229 = vrot.slane %v3223, 6
    %v3230 = vrot.slane %v3224, 2
    %v3231 = vrot.slane %v3224, 4
    %v3232 = vrot.slane %v3224, 6
    %v3239 = vmul.f32 %v3178, %v3223
    %v3240 = vmul.f32 %v3199, %v3227
    %v3241 = vmul.f32 %v3200, %v3228
    %v3242 = vmul.f32 %v3201, %v3229
    %v3243 = vmul.f32 %v3180, %v3223
    %v3244 = vmul.f32 %v3202, %v3224
    %v3245 = vmul.f32 %v3203, %v3230
    %v3246 = vmul.f32 %v3204, %v3231
    %v3247 = vmul.f32 %v3183, %v3232
    %v3248 = vmul.f32 %v3205, %v3224
    %3259 = vst [vmem:[#allocation1] ss:$4 sm:$0xff] %v3239
    %s3260 = scalar_lea.vmem [#allocation1], 1
    %3261 = vst [vmem:[%s3260] ss:$4 sm:$0xff] %v3240
    %s3262 = scalar_lea.vmem [#allocation1], 2
    %3263 = vst [vmem:[%s3262] ss:$4 sm:$0xff] %v3241
    %s3264 = scalar_lea.vmem [#allocation1], 3
    %3265 = vst [vmem:[%s3264] ss:$4 sm:$0xff] %v3242
    %s3266 = scalar_lea.vmem [#allocation1], 32
    %3267 = vst [vmem:[%s3266] ss:$4 sm:$0xff] %v3243
    %v3268 = vld.sshfl [vmem:[#allocation1] sm:$0xff pattern:$0x73625140]
    %v3269 = vld.sshfl [vmem:[#allocation1 + $0x20] sm:$0xff pattern:$0x73625140]
    %3270 = vst [vmem:[#allocation1] ss:$4 sm:$0xff] %v3244
    %3271 = vst [vmem:[%s3260] ss:$4 sm:$0xff] %v3245
    %3272 = vst [vmem:[%s3262] ss:$4 sm:$0xff] %v3246
    %3273 = vst [vmem:[%s3264] ss:$4 sm:$0xff] %v3247
    %3274 = vst [vmem:[%s3266] ss:$4 sm:$0xff] %v3248
    %v3275 = vld.sshfl [vmem:[#allocation1] sm:$0xff pattern:$0x73625140]
    %v3276 = vld.sshfl [vmem:[#allocation1 + $0x20] sm:$0xff pattern:$0x73625140]
    %3281 = vadd.xlane.f32.xlu0 %v3268
    %v3282 = vpop.xlane.xlu0 %3281
    %vm3283 = vcmask 1041408
    %v3284 = vsel %vm3283, %v3269, 0.0
    %3285 = vadd.xlane.f32.xlu0 %v3284
    %v3286 = vpop.xlane.xlu0 %3285
    %3287 = vadd.xlane.f32.xlu0 %v3275
    %v3288 = vpop.xlane.xlu0 %3287
    %v3289 = vsel %vm3283, %v3276, 0.0
    %3290 = vadd.xlane.f32.xlu0 %v3289
    %v3291 = vpop.xlane.xlu0 %3290
    %v3296 = vlaneseq
    %v3297 = vand.u32 %v3296, 127
    %v3298 = vperm.slane %v3282, %v3297
    %v3299 = vadd.s32 %v3297, 4294967288
    %v3300 = vperm.slane %v3286, %v3299
    %vm3301 = vcmask 130112
    %v3302 = vsel %vm3301, %v3300, %v3298
    %v3303 = vperm.slane %v3288, %v3297
    %v3304 = vperm.slane %v3291, %v3299
    %v3305 = vsel %vm3301, %v3304, %v3303
    %vm3306 = vcmask 1041409
    %v3307 = vsel %vm3306, %v3305, %v3302
    %vm3309 = vcmask 74752
    %v3310 = vsel %vm3309, %v3307, -inf
    %3311 = vmax.xlane.f32.xlu0 %v3310
    %v3312 = vpop.xlane.xlu0 %3311
    %v3314 = vperm.slane %v3312, 0
    %v3315 = vperm.slane %v3312, 1
    %v3318 = vsub.f32 %v3282, %v3314
    %v3319 = vsub.f32 %v3286, %v3314
    %v3320 = vsub.f32 %v3288, %v3315
    %v3321 = vsub.f32 %v3291, %v3315
    %v3322 = vmul.f32 %v3318, 1.442695
    %v3323 = vpow.pop %v3322
    %v3324 = vmul.f32 %v3319, 1.442695
    %v3325 = vpow.pop %v3324
    %v3326 = vmul.f32 %v3320, 1.442695
    %v3327 = vpow.pop %v3326
    %v3328 = vmul.f32 %v3321, 1.442695
    %v3329 = vpow.pop %v3328
    %3334 = vset.pattern.permute.xlu0 0
    %3335 = vperm.xlu0 %3334, %v3323
    %v3336 = vpop.permute.xlu0 %3335
    %3337 = vset.pattern.permute.xlu0 0
    %3338 = vperm.xlu0 %3337, %v3325
    %v3339 = vpop.permute.xlu0 %3338
    %3340 = vset.pattern.permute.xlu0 0
    %3341 = vperm.xlu0 %3340, %v3327
    %v3342 = vpop.permute.xlu0 %3341
    %3343 = vset.pattern.permute.xlu0 0
    %3344 = vperm.xlu0 %3343, %v3329
    %v3345 = vpop.permute.xlu0 %3344
    %v3346 = vperm.slane %v3336, %v3297
    %v3347 = vperm.slane %v3339, %v3299
    %v3348 = vsel %vm3301, %v3347, %v3346
    %v3349 = vperm.slane %v3342, %v3297
    %v3350 = vperm.slane %v3345, %v3299
    %v3351 = vsel %vm3301, %v3350, %v3349
    %v3352 = vsel %vm3306, %v3351, %v3348
    %v3354 = vsel %vm3309, %v3352, 0.0
    %3355 = vadd.xlane.f32.xlu0 %v3354
    %v3356 = vpop.xlane.xlu0 %3355
    %v3357 = vrcp.pop %v3356
    %v3359 = vperm.slane %v3357, 0
    %v3360 = vperm.slane %v3357, 1
    %v3363 = vmul.f32 %v3323, %v3359
    %v3364 = vmul.f32 %v3325, %v3359
    %v3365 = vmul.f32 %v3327, %v3360
    %v3366 = vmul.f32 %v3329, %v3360
    %3368 = vset.pattern.permute.xlu0 0
    %3369 = vperm.xlu0 %3368, %v3363
    %v3370 = vpop.permute.xlu0 %3369
    %3373 = vset.pattern.permute.xlu0 0
    %3374 = vperm.xlu0 %3373, %v3364
    %v3375 = vpop.permute.xlu0 %3374
    %3378 = vset.pattern.permute.xlu0 0
    %3379 = vperm.xlu0 %3378, %v3365
    %v3380 = vpop.permute.xlu0 %3379
    %3383 = vset.pattern.permute.xlu0 0
    %3384 = vperm.xlu0 %3383, %v3366
    %v3385 = vpop.permute.xlu0 %3384
    %3387 = vst [vmem:[#allocation1] ss:$4 sm:$0xff] %v3099
    %s3388 = scalar_lea.vmem [#allocation1], 1
    %3389 = vst [vmem:[%s3388] ss:$4 sm:$0xff] %v3189
    %s3390 = scalar_lea.vmem [#allocation1], 2
    %3391 = vst [vmem:[%s3390] ss:$4 sm:$0xff] %v3190
    %s3392 = scalar_lea.vmem [#allocation1], 3
    %3393 = vst [vmem:[%s3392] ss:$4 sm:$0xff] %v3191
    %s3394 = scalar_lea.vmem [#allocation1], 32
    %3395 = vst [vmem:[%s3394] ss:$4 sm:$0xff] %v3100
    %v3396 = vld.sshfl [vmem:[#allocation1] sm:$0xff pattern:$0x73625140]
    %v3397 = vld.sshfl [vmem:[#allocation1 + $0x20] sm:$0xff pattern:$0x73625140]
    %3398 = vst [vmem:[#allocation1] ss:$4 sm:$0xff] %v3192
    %3399 = vst [vmem:[%s3388] ss:$4 sm:$0xff] %v3193
    %3400 = vst [vmem:[%s3390] ss:$4 sm:$0xff] %v3194
    %3401 = vst [vmem:[%s3392] ss:$4 sm:$0xff] %v3101
    %3402 = vst [vmem:[%s3394] ss:$4 sm:$0xff] %v3195
    %v3403 = vld.sshfl [vmem:[#allocation1] sm:$0xff pattern:$0x73625140]
    %v3404 = vld.sshfl [vmem:[#allocation1 + $0x20] sm:$0xff pattern:$0x73625140]
    %v3409 = vmul.f32 %v3370, %v3396
    %v3410 = vmul.f32 %v3375, %v3397
    %v3411 = vmul.f32 %v3380, %v3403
    %v3412 = vmul.f32 %v3385, %v3404
    %v3413 = vsel %vm3283, %v3410, 0.0
    %v3414 = vadd.f32 %v3409, %v3413
    %v3415 = vrot.slane %v3414, 4
    %v3416 = vadd.f32 %v3414, %v3415
    %v3417 = vrot.slane %v3416, 2
    %v3418 = vadd.f32 %v3416, %v3417
    %v3419 = vrot.slane %v3418, 1
    %v3420 = vadd.f32 %v3418, %v3419
    %v3421 = vsel %vm3283, %v3412, 0.0
    %v3422 = vadd.f32 %v3411, %v3421
    %v3423 = vrot.slane %v3422, 4
    %v3424 = vadd.f32 %v3422, %v3423
    %v3425 = vrot.slane %v3424, 2
    %v3426 = vadd.f32 %v3424, %v3425
    %v3427 = vrot.slane %v3426, 1
    %v3428 = vadd.f32 %v3426, %v3427
    %v3431 = vsel %vm3306, %v3428, %v3420
    %v3433 = vrot.slane %v3096, 2
    %v3435 = vpack.c.bf16 %v3431, %v3431
    %v3436 = vpack.c.bf16 %v3433, %v3433
    %v3437 = vld [vmem:[%s7] sm:$0xff]
    %v3438 = vld [vmem:[%s7 + $0x8] sm:$0xff]
    %v3439 = vld [vmem:[%s7 + $0x10] sm:$0xff]
    %v3440 = vld [vmem:[%s7 + $0x18] sm:$0xff]
    %v3441 = vld [vmem:[%s7 + $0x20] sm:$0xff]
    %v3442 = vld [vmem:[%s7 + $0x28] sm:$0xff]
    %v3443 = vld [vmem:[%s7 + $0x30] sm:$0xff]
    %v3444 = vld [vmem:[%s7 + $0x38] sm:$0xff]
    %v3445 = vld [vmem:[%s7 + $0x40] sm:$0xff]
    %v3446 = vld [vmem:[%s7 + $0x48] sm:$0xff]
    %v3447 = vld [vmem:[%s7 + $0x50] sm:$0xff]
    %v3448 = vld [vmem:[%s7 + $0x58] sm:$0xff]
    %v3449 = vld [vmem:[%s7 + $0x60] sm:$0xff]
    %v3450 = vld [vmem:[%s7 + $0x68] sm:$0xff]
    %v3451 = vld [vmem:[%s7 + $0x70] sm:$0xff]
    %v3452 = vld [vmem:[%s7 + $0x78] sm:$0xff]
    %v3453 = vld [vmem:[%s7 + $0x80] sm:$0xff]
    %v3454 = vld [vmem:[%s7 + $0x88] sm:$0xff]
    %v3455 = vld [vmem:[%s7 + $0x90] sm:$0xff]
    %v3456 = vld [vmem:[%s7 + $0x98] sm:$0xff]
    %v3457 = vld [vmem:[%s7 + $0xa0] sm:$0xff]
    %v3458 = vld [vmem:[%s7 + $0xa8] sm:$0xff]
    %v3459 = vld [vmem:[%s7 + $0xb0] sm:$0xff]
    %v3460 = vld [vmem:[%s7 + $0xb8] sm:$0xff]
    %v3461 = vld [vmem:[%s7 + $0xc0] sm:$0xff]
    %v3462 = vld [vmem:[%s7 + $0xc8] sm:$0xff]
    %v3463 = vld [vmem:[%s7 + $0xd0] sm:$0xff]
    %v3464 = vld [vmem:[%s7 + $0xd8] sm:$0xff]
    %v3465 = vld [vmem:[%s7 + $0xe0] sm:$0xff]
    %v3466 = vld [vmem:[%s7 + $0xe8] sm:$0xff]
    %v3467 = vld [vmem:[%s7 + $0xf0] sm:$0xff]
    %v3468 = vld [vmem:[%s7 + $0xf8] sm:$0xff]
    %v3469 = vld [vmem:[%s7 + $0x100] sm:$0xff]
    %v3470 = vld [vmem:[%s7 + $0x108] sm:$0xff]
    %v3471 = vld [vmem:[%s7 + $0x110] sm:$0xff]
    %v3472 = vld [vmem:[%s7 + $0x118] sm:$0xff]
    %v3473 = vld [vmem:[%s7 + $0x120] sm:$0xff]
    %v3474 = vld [vmem:[%s7 + $0x128] sm:$0xff]
    %v3475 = vld [vmem:[%s7 + $0x130] sm:$0xff]
    %v3476 = vld [vmem:[%s7 + $0x138] sm:$0xff]
    %v3477 = vld [vmem:[%s7 + $0x140] sm:$0xff]
    %v3478 = vld [vmem:[%s7 + $0x148] sm:$0xff]
    %v3479 = vld [vmem:[%s7 + $0x150] sm:$0xff]
    %v3480 = vld [vmem:[%s7 + $0x158] sm:$0xff]
    %v3481 = vld [vmem:[%s7 + $0x160] sm:$0xff]
    %v3482 = vld [vmem:[%s7 + $0x168] sm:$0xff]
    %v3483 = vld [vmem:[%s7 + $0x170] sm:$0xff]
    %v3484 = vld [vmem:[%s7 + $0x178] sm:$0xff]
    %v3485 = vld [vmem:[%s7 + $0x180] sm:$0xff]
    %v3486 = vld [vmem:[%s7 + $0x188] sm:$0xff]
    %v3487 = vld [vmem:[%s7 + $0x190] sm:$0xff]
    %v3488 = vld [vmem:[%s7 + $0x198] sm:$0xff]
    %v3489 = vld [vmem:[%s7 + $0x1a0] sm:$0xff]
    %v3490 = vld [vmem:[%s7 + $0x1a8] sm:$0xff]
    %v3491 = vld [vmem:[%s7 + $0x1b0] sm:$0xff]
    %v3492 = vld [vmem:[%s7 + $0x1b8] sm:$0xff]
    %v3493 = vld [vmem:[%s7 + $0x1c0] sm:$0xff]
    %v3494 = vld [vmem:[%s7 + $0x1c8] sm:$0xff]
    %v3495 = vld [vmem:[%s7 + $0x1d0] sm:$0xff]
    %v3496 = vld [vmem:[%s7 + $0x1d8] sm:$0xff]
    %v3497 = vld [vmem:[%s7 + $0x1e0] sm:$0xff]
    %v3498 = vld [vmem:[%s7 + $0x1e8] sm:$0xff]
    %v3499 = vld [vmem:[%s7 + $0x1f0] sm:$0xff]
    %v3500 = vld [vmem:[%s7 + $0x1f8] sm:$0xff]
    %v3565 = vunpack.c.l.b16 %v3437
    %v3566 = vunpack.c.h.b16 %v3437
    %v3567 = vunpack.c.l.b16 %v3438
    %v3568 = vunpack.c.h.b16 %v3438
    %v3569 = vunpack.c.l.b16 %v3439
    %v3570 = vunpack.c.h.b16 %v3439
    %v3571 = vunpack.c.l.b16 %v3440
    %v3572 = vunpack.c.h.b16 %v3440
    %v3573 = vunpack.c.l.b16 %v3441
    %v3574 = vunpack.c.h.b16 %v3441
    %v3575 = vunpack.c.l.b16 %v3442
    %v3576 = vunpack.c.h.b16 %v3442
    %v3577 = vunpack.c.l.b16 %v3443
    %v3578 = vunpack.c.h.b16 %v3443
    %v3579 = vunpack.c.l.b16 %v3444
    %v3580 = vunpack.c.h.b16 %v3444
    %v3581 = vunpack.c.l.b16 %v3445
    %v3582 = vunpack.c.h.b16 %v3445
    %v3583 = vunpack.c.l.b16 %v3446
    %v3584 = vunpack.c.h.b16 %v3446
    %v3585 = vunpack.c.l.b16 %v3447
    %v3586 = vunpack.c.h.b16 %v3447
    %v3587 = vunpack.c.l.b16 %v3448
    %v3588 = vunpack.c.h.b16 %v3448
    %v3589 = vunpack.c.l.b16 %v3449
    %v3590 = vunpack.c.h.b16 %v3449
    %v3591 = vunpack.c.l.b16 %v3450
    %v3592 = vunpack.c.h.b16 %v3450
    %v3593 = vunpack.c.l.b16 %v3451
    %v3594 = vunpack.c.h.b16 %v3451
    %v3595 = vunpack.c.l.b16 %v3452
    %v3596 = vunpack.c.h.b16 %v3452
    %v3597 = vunpack.c.l.b16 %v3453
    %v3598 = vunpack.c.h.b16 %v3453
    %v3599 = vunpack.c.l.b16 %v3454
    %v3600 = vunpack.c.h.b16 %v3454
    %v3601 = vunpack.c.l.b16 %v3455
    %v3602 = vunpack.c.h.b16 %v3455
    %v3603 = vunpack.c.l.b16 %v3456
    %v3604 = vunpack.c.h.b16 %v3456
    %v3605 = vunpack.c.l.b16 %v3457
    %v3606 = vunpack.c.h.b16 %v3457
    %v3607 = vunpack.c.l.b16 %v3458
    %v3608 = vunpack.c.h.b16 %v3458
    %v3609 = vunpack.c.l.b16 %v3459
    %v3610 = vunpack.c.h.b16 %v3459
    %v3611 = vunpack.c.l.b16 %v3460
    %v3612 = vunpack.c.h.b16 %v3460
    %v3613 = vunpack.c.l.b16 %v3461
    %v3614 = vunpack.c.h.b16 %v3461
    %v3615 = vunpack.c.l.b16 %v3462
    %v3616 = vunpack.c.h.b16 %v3462
    %v3617 = vunpack.c.l.b16 %v3463
    %v3618 = vunpack.c.h.b16 %v3463
    %v3619 = vunpack.c.l.b16 %v3464
    %v3620 = vunpack.c.h.b16 %v3464
    %v3621 = vunpack.c.l.b16 %v3465
    %v3622 = vunpack.c.h.b16 %v3465
    %v3623 = vunpack.c.l.b16 %v3466
    %v3624 = vunpack.c.h.b16 %v3466
    %v3625 = vunpack.c.l.b16 %v3467
    %v3626 = vunpack.c.h.b16 %v3467
    %v3627 = vunpack.c.l.b16 %v3468
    %v3628 = vunpack.c.h.b16 %v3468
    %v3629 = vunpack.c.l.b16 %v3469
    %v3630 = vunpack.c.h.b16 %v3469
    %v3631 = vunpack.c.l.b16 %v3470
    %v3632 = vunpack.c.h.b16 %v3470
    %v3633 = vunpack.c.l.b16 %v3471
    %v3634 = vunpack.c.h.b16 %v3471
    %v3635 = vunpack.c.l.b16 %v3472
    %v3636 = vunpack.c.h.b16 %v3472
    %v3637 = vunpack.c.l.b16 %v3473
    %v3638 = vunpack.c.h.b16 %v3473
    %v3639 = vunpack.c.l.b16 %v3474
    %v3640 = vunpack.c.h.b16 %v3474
    %v3641 = vunpack.c.l.b16 %v3475
    %v3642 = vunpack.c.h.b16 %v3475
    %v3643 = vunpack.c.l.b16 %v3476
    %v3644 = vunpack.c.h.b16 %v3476
    %v3645 = vunpack.c.l.b16 %v3477
    %v3646 = vunpack.c.h.b16 %v3477
    %v3647 = vunpack.c.l.b16 %v3478
    %v3648 = vunpack.c.h.b16 %v3478
    %v3649 = vunpack.c.l.b16 %v3479
    %v3650 = vunpack.c.h.b16 %v3479
    %v3651 = vunpack.c.l.b16 %v3480
    %v3652 = vunpack.c.h.b16 %v3480
    %v3653 = vunpack.c.l.b16 %v3481
    %v3654 = vunpack.c.h.b16 %v3481
    %v3655 = vunpack.c.l.b16 %v3482
    %v3656 = vunpack.c.h.b16 %v3482
    %v3657 = vunpack.c.l.b16 %v3483
    %v3658 = vunpack.c.h.b16 %v3483
    %v3659 = vunpack.c.l.b16 %v3484
    %v3660 = vunpack.c.h.b16 %v3484
    %v3661 = vunpack.c.l.b16 %v3485
    %v3662 = vunpack.c.h.b16 %v3485
    %v3663 = vunpack.c.l.b16 %v3486
    %v3664 = vunpack.c.h.b16 %v3486
    %v3665 = vunpack.c.l.b16 %v3487
    %v3666 = vunpack.c.h.b16 %v3487
    %v3667 = vunpack.c.l.b16 %v3488
    %v3668 = vunpack.c.h.b16 %v3488
    %v3669 = vunpack.c.l.b16 %v3489
    %v3670 = vunpack.c.h.b16 %v3489
    %v3671 = vunpack.c.l.b16 %v3490
    %v3672 = vunpack.c.h.b16 %v3490
    %v3673 = vunpack.c.l.b16 %v3491
    %v3674 = vunpack.c.h.b16 %v3491
    %v3675 = vunpack.c.l.b16 %v3492
    %v3676 = vunpack.c.h.b16 %v3492
    %v3677 = vunpack.c.l.b16 %v3493
    %v3678 = vunpack.c.h.b16 %v3493
    %v3679 = vunpack.c.l.b16 %v3494
    %v3680 = vunpack.c.h.b16 %v3494
    %v3681 = vunpack.c.l.b16 %v3495
    %v3682 = vunpack.c.h.b16 %v3495
    %v3683 = vunpack.c.l.b16 %v3496
    %v3684 = vunpack.c.h.b16 %v3496
    %v3685 = vunpack.c.l.b16 %v3497
    %v3686 = vunpack.c.h.b16 %v3497
    %v3687 = vunpack.c.l.b16 %v3498
    %v3688 = vunpack.c.h.b16 %v3498
    %v3689 = vunpack.c.l.b16 %v3499
    %v3690 = vunpack.c.h.b16 %v3499
    %v3691 = vunpack.c.l.b16 %v3500
    %v3692 = vunpack.c.h.b16 %v3500
    %v3693 = vpack.c.b16 %v3569, %v3565
    %v3694 = vpack.c.b16 %v3570, %v3566
    %v3695 = vpack.c.b16 %v3571, %v3567
    %v3696 = vpack.c.b16 %v3572, %v3568
    %v3697 = vpack.c.b16 %v3577, %v3573
    %v3698 = vpack.c.b16 %v3578, %v3574
    %v3699 = vpack.c.b16 %v3579, %v3575
    %v3700 = vpack.c.b16 %v3580, %v3576
    %v3701 = vpack.c.b16 %v3585, %v3581
    %v3702 = vpack.c.b16 %v3586, %v3582
    %v3703 = vpack.c.b16 %v3587, %v3583
    %v3704 = vpack.c.b16 %v3588, %v3584
    %v3705 = vpack.c.b16 %v3593, %v3589
    %v3706 = vpack.c.b16 %v3594, %v3590
    %v3707 = vpack.c.b16 %v3595, %v3591
    %v3708 = vpack.c.b16 %v3596, %v3592
    %v3709 = vpack.c.b16 %v3601, %v3597
    %v3710 = vpack.c.b16 %v3602, %v3598
    %v3711 = vpack.c.b16 %v3603, %v3599
    %v3712 = vpack.c.b16 %v3604, %v3600
    %v3713 = vpack.c.b16 %v3609, %v3605
    %v3714 = vpack.c.b16 %v3610, %v3606
    %v3715 = vpack.c.b16 %v3611, %v3607
    %v3716 = vpack.c.b16 %v3612, %v3608
    %v3717 = vpack.c.b16 %v3617, %v3613
    %v3718 = vpack.c.b16 %v3618, %v3614
    %v3719 = vpack.c.b16 %v3619, %v3615
    %v3720 = vpack.c.b16 %v3620, %v3616
    %v3721 = vpack.c.b16 %v3625, %v3621
    %v3722 = vpack.c.b16 %v3626, %v3622
    %v3723 = vpack.c.b16 %v3627, %v3623
    %v3724 = vpack.c.b16 %v3628, %v3624
    %v3725 = vpack.c.b16 %v3633, %v3629
    %v3726 = vpack.c.b16 %v3634, %v3630
    %v3727 = vpack.c.b16 %v3635, %v3631
    %v3728 = vpack.c.b16 %v3636, %v3632
    %v3729 = vpack.c.b16 %v3641, %v3637
    %v3730 = vpack.c.b16 %v3642, %v3638
    %v3731 = vpack.c.b16 %v3643, %v3639
    %v3732 = vpack.c.b16 %v3644, %v3640
    %v3733 = vpack.c.b16 %v3649, %v3645
    %v3734 = vpack.c.b16 %v3650, %v3646
    %v3735 = vpack.c.b16 %v3651, %v3647
    %v3736 = vpack.c.b16 %v3652, %v3648
    %v3737 = vpack.c.b16 %v3657, %v3653
    %v3738 = vpack.c.b16 %v3658, %v3654
    %v3739 = vpack.c.b16 %v3659, %v3655
    %v3740 = vpack.c.b16 %v3660, %v3656
    %v3741 = vpack.c.b16 %v3665, %v3661
    %v3742 = vpack.c.b16 %v3666, %v3662
    %v3743 = vpack.c.b16 %v3667, %v3663
    %v3744 = vpack.c.b16 %v3668, %v3664
    %v3745 = vpack.c.b16 %v3673, %v3669
    %v3746 = vpack.c.b16 %v3674, %v3670
    %v3747 = vpack.c.b16 %v3675, %v3671
    %v3748 = vpack.c.b16 %v3676, %v3672
    %v3749 = vpack.c.b16 %v3681, %v3677
    %v3750 = vpack.c.b16 %v3682, %v3678
    %v3751 = vpack.c.b16 %v3683, %v3679
    %v3752 = vpack.c.b16 %v3684, %v3680
    %v3753 = vpack.c.b16 %v3689, %v3685
    %v3754 = vpack.c.b16 %v3690, %v3686
    %v3755 = vpack.c.b16 %v3691, %v3687
    %v3756 = vpack.c.b16 %v3692, %v3688
    %3821 = vmatpush.bf16.msra.mxu0 %v3721
    %3822 = vmatpush.bf16.msra.mxu0 %v3717
    %3823 = vmatpush.bf16.msra.mxu0 %v3713
    %3824 = vmatpush.bf16.msra.mxu0 %v3709
    %3825 = vmatpush.bf16.msra.mxu0 %v3705
    %3826 = vmatpush.bf16.msra.mxu0 %v3701
    %3827 = vmatpush.bf16.msra.mxu0 %v3697
    %3828 = vmatpush.bf16.msra.mxu0 %v3693
    %3829 = vmatmul.bf16.gmra.mxu0 %v3435
    %v3830 = vpop.f32.mrf.mxu0
    %v3831 = vadd.f32 0.0, %v3830
    %v3832 = vpop.f32.mrf.mxu0
    %3833 = vdwg.mxu0
    %3834 = vmatpush.bf16.msra.mxu0 %v3753
    %3835 = vmatpush.bf16.msra.mxu0 %v3749
    %3836 = vmatpush.bf16.msra.mxu0 %v3745
    %3837 = vmatpush.bf16.msra.mxu0 %v3741
    %3838 = vmatpush.bf16.msra.mxu0 %v3737
    %3839 = vmatpush.bf16.msra.mxu0 %v3733
    %3840 = vmatpush.bf16.msra.mxu0 %v3729
    %3841 = vmatpush.bf16.msra.mxu0 %v3725
    %3842 = vmatmul.bf16.gmra.mxu0 %v3436
    %v3843 = vpop.f32.mrf.mxu0
    %v3844 = vadd.f32 %v3831, %v3843
    %v3845 = vpop.f32.mrf.mxu0
    %3846 = vdwg.mxu0
    %3847 = vmatpush.bf16.msra.mxu0 %v3722
    %3848 = vmatpush.bf16.msra.mxu0 %v3718
    %3849 = vmatpush.bf16.msra.mxu0 %v3714
    %3850 = vmatpush.bf16.msra.mxu0 %v3710
    %3851 = vmatpush.bf16.msra.mxu0 %v3706
    %3852 = vmatpush.bf16.msra.mxu0 %v3702
    %3853 = vmatpush.bf16.msra.mxu0 %v3698
    %3854 = vmatpush.bf16.msra.mxu0 %v3694
    %3855 = vmatmul.bf16.gmra.mxu0 %v3435
    %v3856 = vpop.f32.mrf.mxu0
    %v3857 = vadd.f32 0.0, %v3856
    %v3858 = vpop.f32.mrf.mxu0
    %3859 = vdwg.mxu0
    %3860 = vmatpush.bf16.msra.mxu0 %v3754
    %3861 = vmatpush.bf16.msra.mxu0 %v3750
    %3862 = vmatpush.bf16.msra.mxu0 %v3746
    %3863 = vmatpush.bf16.msra.mxu0 %v3742
    %3864 = vmatpush.bf16.msra.mxu0 %v3738
    %3865 = vmatpush.bf16.msra.mxu0 %v3734
    %3866 = vmatpush.bf16.msra.mxu0 %v3730
    %3867 = vmatpush.bf16.msra.mxu0 %v3726
    %3868 = vmatmul.bf16.gmra.mxu0 %v3436
    %v3869 = vpop.f32.mrf.mxu0
    %v3870 = vadd.f32 %v3857, %v3869
    %v3871 = vpop.f32.mrf.mxu0
    %3872 = vdwg.mxu0
    %3873 = vmatpush.bf16.msra.mxu0 %v3723
    %3874 = vmatpush.bf16.msra.mxu0 %v3719
    %3875 = vmatpush.bf16.msra.mxu0 %v3715
    %3876 = vmatpush.bf16.msra.mxu0 %v3711
    %3877 = vmatpush.bf16.msra.mxu0 %v3707
    %3878 = vmatpush.bf16.msra.mxu0 %v3703
    %3879 = vmatpush.bf16.msra.mxu0 %v3699
    %3880 = vmatpush.bf16.msra.mxu0 %v3695
    %3881 = vmatmul.bf16.gmra.mxu0 %v3435
    %v3882 = vpop.f32.mrf.mxu0
    %v3883 = vadd.f32 0.0, %v3882
    %v3884 = vpop.f32.mrf.mxu0
    %3885 = vdwg.mxu0
    %3886 = vmatpush.bf16.msra.mxu0 %v3755
    %3887 = vmatpush.bf16.msra.mxu0 %v3751
    %3888 = vmatpush.bf16.msra.mxu0 %v3747
    %3889 = vmatpush.bf16.msra.mxu0 %v3743
    %3890 = vmatpush.bf16.msra.mxu0 %v3739
    %3891 = vmatpush.bf16.msra.mxu0 %v3735
    %3892 = vmatpush.bf16.msra.mxu0 %v3731
    %3893 = vmatpush.bf16.msra.mxu0 %v3727
    %3894 = vmatmul.bf16.gmra.mxu0 %v3436
    %v3895 = vpop.f32.mrf.mxu0
    %v3896 = vadd.f32 %v3883, %v3895
    %v3897 = vpop.f32.mrf.mxu0
    %3898 = vdwg.mxu0
    %3899 = vmatpush.bf16.msra.mxu0 %v3724
    %3900 = vmatpush.bf16.msra.mxu0 %v3720
    %3901 = vmatpush.bf16.msra.mxu0 %v3716
    %3902 = vmatpush.bf16.msra.mxu0 %v3712
    %3903 = vmatpush.bf16.msra.mxu0 %v3708
    %3904 = vmatpush.bf16.msra.mxu0 %v3704
    %3905 = vmatpush.bf16.msra.mxu0 %v3700
    %3906 = vmatpush.bf16.msra.mxu0 %v3696
    %3907 = vmatmul.bf16.gmra.mxu0 %v3435
    %v3908 = vpop.f32.mrf.mxu0
    %v3909 = vadd.f32 0.0, %v3908
    %v3910 = vpop.f32.mrf.mxu0
    %3911 = vdwg.mxu0
    %3912 = vmatpush.bf16.msra.mxu0 %v3756
    %3913 = vmatpush.bf16.msra.mxu0 %v3752
    %3914 = vmatpush.bf16.msra.mxu0 %v3748
    %3915 = vmatpush.bf16.msra.mxu0 %v3744
    %3916 = vmatpush.bf16.msra.mxu0 %v3740
    %3917 = vmatpush.bf16.msra.mxu0 %v3736
    %3918 = vmatpush.bf16.msra.mxu0 %v3732
    %3919 = vmatpush.bf16.msra.mxu0 %v3728
    %3920 = vmatmul.bf16.gmra.mxu0 %v3436
    %v3921 = vpop.f32.mrf.mxu0
    %v3922 = vadd.f32 %v3909, %v3921
    %v3923 = vpop.f32.mrf.mxu0
    %3924 = vdwg.mxu0
    %v3925 = vld [vmem:[#allocation3] sm:$0x3]
    %v3926 = vld [vmem:[#allocation3 + $0x8] sm:$0x3]
    %v3927 = vld [vmem:[#allocation3 + $0x10] sm:$0x3]
    %v3928 = vadd.f32 %v3925, %v3844
    %v3929 = vxor.u32 %v3928, 2147483648
    %v3930 = vmul.f32 %v3929, 1.442695
    %v3931 = vpow.pop %v3930
    %v3932 = vadd.f32 %v3931, 1.0
    %v3933 = vrcp.pop %v3932
    %v3934 = vmul.f32 %v3932, %v3933
    %v3935 = vsub.f32 1.0, %v3934
    %v3936 = vmul.f32 %v3933, %v3935
    %v3937 = vadd.f32 %v3933, %v3936
    %vm3938 = vweird.f32 %v3932
    %vm3939 = vweird.f32 %v3933
    %vm3940 = vmor %vm3938, %vm3939
    %v3941 = vsel %vm3940, %v3933, %v3937
    %v3942 = vand.u32 2147483647, %v3932
    %vm3943 = vcmp.eq.f32.partialorder %v3942, 8.507059e+37
    %v3944 = vand.u32 %v3932, 2147483648
    %v3945 = vor.u32 1.1754944e-38, %v3944
    %v3946 = vsel %vm3943, %v3945, %v3941
    %v3947 = vmul.f32 1.0, %v3946
    %v3948 = vadd.f32 %v3926, %v3870
    %v3949 = vxor.u32 %v3948, 2147483648
    %v3950 = vmul.f32 %v3949, 1.442695
    %v3951 = vpow.pop %v3950
    %v3952 = vadd.f32 %v3951, 1.0
    %v3953 = vrcp.pop %v3952
    %v3954 = vmul.f32 %v3952, %v3953
    %v3955 = vsub.f32 1.0, %v3954
    %v3956 = vmul.f32 %v3953, %v3955
    %v3957 = vadd.f32 %v3953, %v3956
    %vm3958 = vweird.f32 %v3952
    %vm3959 = vweird.f32 %v3953
    %vm3960 = vmor %vm3958, %vm3959
    %v3961 = vsel %vm3960, %v3953, %v3957
    %v3962 = vand.u32 2147483647, %v3952
    %vm3963 = vcmp.eq.f32.partialorder %v3962, 8.507059e+37
    %v3964 = vand.u32 %v3952, 2147483648
    %v3965 = vor.u32 1.1754944e-38, %v3964
    %v3966 = vsel %vm3963, %v3965, %v3961
    %v3967 = vmul.f32 1.0, %v3966
    %v3968 = vadd.f32 %v3927, %v3896
    %v3969 = vadd.f32 %v3922, %v3215
    %v3970 = vmul.f32 %v3947, %v3969
    %v3971 = vadd.f32 %v3968, %v3970
    %v3972 = vtanh.pop %v3971
    %v3973 = vsub.f32 1.0, %v3967
    %v3974 = vmul.f32 %v3973, %v3972
    %v3975 = vmul.f32 %v3967, %v3433
    %v3976 = vadd.f32 %v3974, %v3975
    %3977 = vst [vmem:[#allocation5] sm:$0x1] %v3976
    %3978 = vst [vmem:[#allocation5 + $0x9] sm:$0x2] %v3976
    %v3980 = vrot.slane %v3976, 1
    %v3981 = vperm.slane %v3976, 0
    %v3982 = vperm.slane %v3980, 0
    %v3985 = vrot.slane %v3981, 2
    %v3986 = vrot.slane %v3981, 4
    %v3987 = vrot.slane %v3981, 6
    %v3988 = vrot.slane %v3982, 2
    %v3989 = vrot.slane %v3982, 4
    %v3990 = vrot.slane %v3982, 6
    %v3997 = vmul.f32 %v3178, %v3981
    %v3998 = vmul.f32 %v3199, %v3985
    %v3999 = vmul.f32 %v3200, %v3986
    %v4000 = vmul.f32 %v3201, %v3987
    %v4001 = vmul.f32 %v3180, %v3981
    %v4002 = vmul.f32 %v3202, %v3982
    %v4003 = vmul.f32 %v3203, %v3988
    %v4004 = vmul.f32 %v3204, %v3989
    %v4005 = vmul.f32 %v3183, %v3990
    %v4006 = vmul.f32 %v3205, %v3982
    %4017 = vst [vmem:[#allocation1] ss:$4 sm:$0xff] %v3997
    %s4018 = scalar_lea.vmem [#allocation1], 1
    %4019 = vst [vmem:[%s4018] ss:$4 sm:$0xff] %v3998
    %s4020 = scalar_lea.vmem [#allocation1], 2
    %4021 = vst [vmem:[%s4020] ss:$4 sm:$0xff] %v3999
    %s4022 = scalar_lea.vmem [#allocation1], 3
    %4023 = vst [vmem:[%s4022] ss:$4 sm:$0xff] %v4000
    %s4024 = scalar_lea.vmem [#allocation1], 32
    %4025 = vst [vmem:[%s4024] ss:$4 sm:$0xff] %v4001
    %v4026 = vld.sshfl [vmem:[#allocation1] sm:$0xff pattern:$0x73625140]
    %v4027 = vld.sshfl [vmem:[#allocation1 + $0x20] sm:$0xff pattern:$0x73625140]
    %4028 = vst [vmem:[#allocation1] ss:$4 sm:$0xff] %v4002
    %4029 = vst [vmem:[%s4018] ss:$4 sm:$0xff] %v4003
    %4030 = vst [vmem:[%s4020] ss:$4 sm:$0xff] %v4004
    %4031 = vst [vmem:[%s4022] ss:$4 sm:$0xff] %v4005
    %4032 = vst [vmem:[%s4024] ss:$4 sm:$0xff] %v4006
    %v4033 = vld.sshfl [vmem:[#allocation1] sm:$0xff pattern:$0x73625140]
    %v4034 = vld.sshfl [vmem:[#allocation1 + $0x20] sm:$0xff pattern:$0x73625140]
    %4039 = vadd.xlane.f32.xlu0 %v4026
    %v4040 = vpop.xlane.xlu0 %4039
    %v4041 = vsel %vm3283, %v4027, 0.0
    %4042 = vadd.xlane.f32.xlu0 %v4041
    %v4043 = vpop.xlane.xlu0 %4042
    %4044 = vadd.xlane.f32.xlu0 %v4033
    %v4045 = vpop.xlane.xlu0 %4044
    %v4046 = vsel %vm3283, %v4034, 0.0
    %4047 = vadd.xlane.f32.xlu0 %v4046
    %v4048 = vpop.xlane.xlu0 %4047
    %v4053 = vperm.slane %v4040, %v3297
    %v4054 = vperm.slane %v4043, %v3299
    %v4055 = vsel %vm3301, %v4054, %v4053
    %v4056 = vperm.slane %v4045, %v3297
    %v4057 = vperm.slane %v4048, %v3299
    %v4058 = vsel %vm3301, %v4057, %v4056
    %v4059 = vsel %vm3306, %v4058, %v4055
    %v4061 = vsel %vm3309, %v4059, -inf
    %4062 = vmax.xlane.f32.xlu0 %v4061
    %v4063 = vpop.xlane.xlu0 %4062
    %v4065 = vperm.slane %v4063, 0
    %v4066 = vperm.slane %v4063, 1
    %v4069 = vsub.f32 %v4040, %v4065
    %v4070 = vsub.f32 %v4043, %v4065
    %v4071 = vsub.f32 %v4045, %v4066
    %v4072 = vsub.f32 %v4048, %v4066
    %v4073 = vmul.f32 %v4069, 1.442695
    %v4074 = vpow.pop %v4073
    %v4075 = vmul.f32 %v4070, 1.442695
    %v4076 = vpow.pop %v4075
    %v4077 = vmul.f32 %v4071, 1.442695
    %v4078 = vpow.pop %v4077
    %v4079 = vmul.f32 %v4072, 1.442695
    %v4080 = vpow.pop %v4079
    %4085 = vset.pattern.permute.xlu0 0
    %4086 = vperm.xlu0 %4085, %v4074
    %v4087 = vpop.permute.xlu0 %4086
    %4088 = vset.pattern.permute.xlu0 0
    %4089 = vperm.xlu0 %4088, %v4076
    %v4090 = vpop.permute.xlu0 %4089
    %4091 = vset.pattern.permute.xlu0 0
    %4092 = vperm.xlu0 %4091, %v4078
    %v4093 = vpop.permute.xlu0 %4092
    %4094 = vset.pattern.permute.xlu0 0
    %4095 = vperm.xlu0 %4094, %v4080
    %v4096 = vpop.permute.xlu0 %4095
    %v4097 = vperm.slane %v4087, %v3297
    %v4098 = vperm.slane %v4090, %v3299
    %v4099 = vsel %vm3301, %v4098, %v4097
    %v4100 = vperm.slane %v4093, %v3297
    %v4101 = vperm.slane %v4096, %v3299
    %v4102 = vsel %vm3301, %v4101, %v4100
    %v4103 = vsel %vm3306, %v4102, %v4099
    %v4105 = vsel %vm3309, %v4103, 0.0
    %4106 = vadd.xlane.f32.xlu0 %v4105
    %v4107 = vpop.xlane.xlu0 %4106
    %v4108 = vrcp.pop %v4107
    %v4110 = vperm.slane %v4108, 0
    %v4111 = vperm.slane %v4108, 1
    %v4114 = vmul.f32 %v4074, %v4110
    %v4115 = vmul.f32 %v4076, %v4110
    %v4116 = vmul.f32 %v4078, %v4111
    %v4117 = vmul.f32 %v4080, %v4111
    %4119 = vset.pattern.permute.xlu0 0
    %4120 = vperm.xlu0 %4119, %v4114
    %v4121 = vpop.permute.xlu0 %4120
    %4124 = vset.pattern.permute.xlu0 0
    %4125 = vperm.xlu0 %4124, %v4115
    %v4126 = vpop.permute.xlu0 %4125
    %4129 = vset.pattern.permute.xlu0 0
    %4130 = vperm.xlu0 %4129, %v4116
    %v4131 = vpop.permute.xlu0 %4130
    %4134 = vset.pattern.permute.xlu0 0
    %4135 = vperm.xlu0 %4134, %v4117
    %v4136 = vpop.permute.xlu0 %4135
    %4138 = vst [vmem:[#allocation1] ss:$4 sm:$0xff] %v3099
    %s4139 = scalar_lea.vmem [#allocation1], 1
    %4140 = vst [vmem:[%s4139] ss:$4 sm:$0xff] %v3189
    %s4141 = scalar_lea.vmem [#allocation1], 2
    %4142 = vst [vmem:[%s4141] ss:$4 sm:$0xff] %v3190
    %s4143 = scalar_lea.vmem [#allocation1], 3
    %4144 = vst [vmem:[%s4143] ss:$4 sm:$0xff] %v3191
    %s4145 = scalar_lea.vmem [#allocation1], 32
    %4146 = vst [vmem:[%s4145] ss:$4 sm:$0xff] %v3100
    %v4147 = vld.sshfl [vmem:[#allocation1] sm:$0xff pattern:$0x73625140]
    %v4148 = vld.sshfl [vmem:[#allocation1 + $0x20] sm:$0xff pattern:$0x73625140]
    %4149 = vst [vmem:[#allocation1] ss:$4 sm:$0xff] %v3192
    %4150 = vst [vmem:[%s4139] ss:$4 sm:$0xff] %v3193
    %4151 = vst [vmem:[%s4141] ss:$4 sm:$0xff] %v3194
    %4152 = vst [vmem:[%s4143] ss:$4 sm:$0xff] %v3101
    %4153 = vst [vmem:[%s4145] ss:$4 sm:$0xff] %v3195
    %v4154 = vld.sshfl [vmem:[#allocation1] sm:$0xff pattern:$0x73625140]
    %v4155 = vld.sshfl [vmem:[#allocation1 + $0x20] sm:$0xff pattern:$0x73625140]
    %v4160 = vmul.f32 %v4121, %v4147
    %v4161 = vmul.f32 %v4126, %v4148
    %v4162 = vmul.f32 %v4131, %v4154
    %v4163 = vmul.f32 %v4136, %v4155
    %v4164 = vsel %vm3283, %v4161, 0.0
    %v4165 = vadd.f32 %v4160, %v4164
    %v4166 = vrot.slane %v4165, 4
    %v4167 = vadd.f32 %v4165, %v4166
    %v4168 = vrot.slane %v4167, 2
    %v4169 = vadd.f32 %v4167, %v4168
    %v4170 = vrot.slane %v4169, 1
    %v4171 = vadd.f32 %v4169, %v4170
    %v4172 = vsel %vm3283, %v4163, 0.0
    %v4173 = vadd.f32 %v4162, %v4172
    %v4174 = vrot.slane %v4173, 4
    %v4175 = vadd.f32 %v4173, %v4174
    %v4176 = vrot.slane %v4175, 2
    %v4177 = vadd.f32 %v4175, %v4176
    %v4178 = vrot.slane %v4177, 1
    %v4179 = vadd.f32 %v4177, %v4178
    %v4182 = vsel %vm3306, %v4179, %v4171
    %v4184 = vpack.c.bf16 %v4182, %v4182
    %v4185 = vpack.c.bf16 %v3976, %v3976
    %v4186 = vld [vmem:[%s7] sm:$0xff]
    %v4187 = vld [vmem:[%s7 + $0x8] sm:$0xff]
    %v4188 = vld [vmem:[%s7 + $0x10] sm:$0xff]
    %v4189 = vld [vmem:[%s7 + $0x18] sm:$0xff]
    %v4190 = vld [vmem:[%s7 + $0x20] sm:$0xff]
    %v4191 = vld [vmem:[%s7 + $0x28] sm:$0xff]
    %v4192 = vld [vmem:[%s7 + $0x30] sm:$0xff]
    %v4193 = vld [vmem:[%s7 + $0x38] sm:$0xff]
    %v4194 = vld [vmem:[%s7 + $0x40] sm:$0xff]
    %v4195 = vld [vmem:[%s7 + $0x48] sm:$0xff]
    %v4196 = vld [vmem:[%s7 + $0x50] sm:$0xff]
    %v4197 = vld [vmem:[%s7 + $0x58] sm:$0xff]
    %v4198 = vld [vmem:[%s7 + $0x60] sm:$0xff]
    %v4199 = vld [vmem:[%s7 + $0x68] sm:$0xff]
    %v4200 = vld [vmem:[%s7 + $0x70] sm:$0xff]
    %v4201 = vld [vmem:[%s7 + $0x78] sm:$0xff]
    %v4202 = vld [vmem:[%s7 + $0x80] sm:$0xff]
    %v4203 = vld [vmem:[%s7 + $0x88] sm:$0xff]
    %v4204 = vld [vmem:[%s7 + $0x90] sm:$0xff]
    %v4205 = vld [vmem:[%s7 + $0x98] sm:$0xff]
    %v4206 = vld [vmem:[%s7 + $0xa0] sm:$0xff]
    %v4207 = vld [vmem:[%s7 + $0xa8] sm:$0xff]
    %v4208 = vld [vmem:[%s7 + $0xb0] sm:$0xff]
    %v4209 = vld [vmem:[%s7 + $0xb8] sm:$0xff]
    %v4210 = vld [vmem:[%s7 + $0xc0] sm:$0xff]
    %v4211 = vld [vmem:[%s7 + $0xc8] sm:$0xff]
    %v4212 = vld [vmem:[%s7 + $0xd0] sm:$0xff]
    %v4213 = vld [vmem:[%s7 + $0xd8] sm:$0xff]
    %v4214 = vld [vmem:[%s7 + $0xe0] sm:$0xff]
    %v4215 = vld [vmem:[%s7 + $0xe8] sm:$0xff]
    %v4216 = vld [vmem:[%s7 + $0xf0] sm:$0xff]
    %v4217 = vld [vmem:[%s7 + $0xf8] sm:$0xff]
    %v4218 = vld [vmem:[%s7 + $0x100] sm:$0xff]
    %v4219 = vld [vmem:[%s7 + $0x108] sm:$0xff]
    %v4220 = vld [vmem:[%s7 + $0x110] sm:$0xff]
    %v4221 = vld [vmem:[%s7 + $0x118] sm:$0xff]
    %v4222 = vld [vmem:[%s7 + $0x120] sm:$0xff]
    %v4223 = vld [vmem:[%s7 + $0x128] sm:$0xff]
    %v4224 = vld [vmem:[%s7 + $0x130] sm:$0xff]
    %v4225 = vld [vmem:[%s7 + $0x138] sm:$0xff]
    %v4226 = vld [vmem:[%s7 + $0x140] sm:$0xff]
    %v4227 = vld [vmem:[%s7 + $0x148] sm:$0xff]
    %v4228 = vld [vmem:[%s7 + $0x150] sm:$0xff]
    %v4229 = vld [vmem:[%s7 + $0x158] sm:$0xff]
    %v4230 = vld [vmem:[%s7 + $0x160] sm:$0xff]
    %v4231 = vld [vmem:[%s7 + $0x168] sm:$0xff]
    %v4232 = vld [vmem:[%s7 + $0x170] sm:$0xff]
    %v4233 = vld [vmem:[%s7 + $0x178] sm:$0xff]
    %v4234 = vld [vmem:[%s7 + $0x180] sm:$0xff]
    %v4235 = vld [vmem:[%s7 + $0x188] sm:$0xff]
    %v4236 = vld [vmem:[%s7 + $0x190] sm:$0xff]
    %v4237 = vld [vmem:[%s7 + $0x198] sm:$0xff]
    %v4238 = vld [vmem:[%s7 + $0x1a0] sm:$0xff]
    %v4239 = vld [vmem:[%s7 + $0x1a8] sm:$0xff]
    %v4240 = vld [vmem:[%s7 + $0x1b0] sm:$0xff]
    %v4241 = vld [vmem:[%s7 + $0x1b8] sm:$0xff]
    %v4242 = vld [vmem:[%s7 + $0x1c0] sm:$0xff]
    %v4243 = vld [vmem:[%s7 + $0x1c8] sm:$0xff]
    %v4244 = vld [vmem:[%s7 + $0x1d0] sm:$0xff]
    %v4245 = vld [vmem:[%s7 + $0x1d8] sm:$0xff]
    %v4246 = vld [vmem:[%s7 + $0x1e0] sm:$0xff]
    %v4247 = vld [vmem:[%s7 + $0x1e8] sm:$0xff]
    %v4248 = vld [vmem:[%s7 + $0x1f0] sm:$0xff]
    %v4249 = vld [vmem:[%s7 + $0x1f8] sm:$0xff]
    %v4314 = vunpack.c.l.b16 %v4186
    %v4315 = vunpack.c.h.b16 %v4186
    %v4316 = vunpack.c.l.b16 %v4187
    %v4317 = vunpack.c.h.b16 %v4187
    %v4318 = vunpack.c.l.b16 %v4188
    %v4319 = vunpack.c.h.b16 %v4188
    %v4320 = vunpack.c.l.b16 %v4189
    %v4321 = vunpack.c.h.b16 %v4189
    %v4322 = vunpack.c.l.b16 %v4190
    %v4323 = vunpack.c.h.b16 %v4190
    %v4324 = vunpack.c.l.b16 %v4191
    %v4325 = vunpack.c.h.b16 %v4191
    %v4326 = vunpack.c.l.b16 %v4192
    %v4327 = vunpack.c.h.b16 %v4192
    %v4328 = vunpack.c.l.b16 %v4193
    %v4329 = vunpack.c.h.b16 %v4193
    %v4330 = vunpack.c.l.b16 %v4194
    %v4331 = vunpack.c.h.b16 %v4194
    %v4332 = vunpack.c.l.b16 %v4195
    %v4333 = vunpack.c.h.b16 %v4195
    %v4334 = vunpack.c.l.b16 %v4196
    %v4335 = vunpack.c.h.b16 %v4196
    %v4336 = vunpack.c.l.b16 %v4197
    %v4337 = vunpack.c.h.b16 %v4197
    %v4338 = vunpack.c.l.b16 %v4198
    %v4339 = vunpack.c.h.b16 %v4198
    %v4340 = vunpack.c.l.b16 %v4199
    %v4341 = vunpack.c.h.b16 %v4199
    %v4342 = vunpack.c.l.b16 %v4200
    %v4343 = vunpack.c.h.b16 %v4200
    %v4344 = vunpack.c.l.b16 %v4201
    %v4345 = vunpack.c.h.b16 %v4201
    %v4346 = vunpack.c.l.b16 %v4202
    %v4347 = vunpack.c.h.b16 %v4202
    %v4348 = vunpack.c.l.b16 %v4203
    %v4349 = vunpack.c.h.b16 %v4203
    %v4350 = vunpack.c.l.b16 %v4204
    %v4351 = vunpack.c.h.b16 %v4204
    %v4352 = vunpack.c.l.b16 %v4205
    %v4353 = vunpack.c.h.b16 %v4205
    %v4354 = vunpack.c.l.b16 %v4206
    %v4355 = vunpack.c.h.b16 %v4206
    %v4356 = vunpack.c.l.b16 %v4207
    %v4357 = vunpack.c.h.b16 %v4207
    %v4358 = vunpack.c.l.b16 %v4208
    %v4359 = vunpack.c.h.b16 %v4208
    %v4360 = vunpack.c.l.b16 %v4209
    %v4361 = vunpack.c.h.b16 %v4209
    %v4362 = vunpack.c.l.b16 %v4210
    %v4363 = vunpack.c.h.b16 %v4210
    %v4364 = vunpack.c.l.b16 %v4211
    %v4365 = vunpack.c.h.b16 %v4211
    %v4366 = vunpack.c.l.b16 %v4212
    %v4367 = vunpack.c.h.b16 %v4212
    %v4368 = vunpack.c.l.b16 %v4213
    %v4369 = vunpack.c.h.b16 %v4213
    %v4370 = vunpack.c.l.b16 %v4214
    %v4371 = vunpack.c.h.b16 %v4214
    %v4372 = vunpack.c.l.b16 %v4215
    %v4373 = vunpack.c.h.b16 %v4215
    %v4374 = vunpack.c.l.b16 %v4216
    %v4375 = vunpack.c.h.b16 %v4216
    %v4376 = vunpack.c.l.b16 %v4217
    %v4377 = vunpack.c.h.b16 %v4217
    %v4378 = vunpack.c.l.b16 %v4218
    %v4379 = vunpack.c.h.b16 %v4218
    %v4380 = vunpack.c.l.b16 %v4219
    %v4381 = vunpack.c.h.b16 %v4219
    %v4382 = vunpack.c.l.b16 %v4220
    %v4383 = vunpack.c.h.b16 %v4220
    %v4384 = vunpack.c.l.b16 %v4221
    %v4385 = vunpack.c.h.b16 %v4221
    %v4386 = vunpack.c.l.b16 %v4222
    %v4387 = vunpack.c.h.b16 %v4222
    %v4388 = vunpack.c.l.b16 %v4223
    %v4389 = vunpack.c.h.b16 %v4223
    %v4390 = vunpack.c.l.b16 %v4224
    %v4391 = vunpack.c.h.b16 %v4224
    %v4392 = vunpack.c.l.b16 %v4225
    %v4393 = vunpack.c.h.b16 %v4225
    %v4394 = vunpack.c.l.b16 %v4226
    %v4395 = vunpack.c.h.b16 %v4226
    %v4396 = vunpack.c.l.b16 %v4227
    %v4397 = vunpack.c.h.b16 %v4227
    %v4398 = vunpack.c.l.b16 %v4228
    %v4399 = vunpack.c.h.b16 %v4228
    %v4400 = vunpack.c.l.b16 %v4229
    %v4401 = vunpack.c.h.b16 %v4229
    %v4402 = vunpack.c.l.b16 %v4230
    %v4403 = vunpack.c.h.b16 %v4230
    %v4404 = vunpack.c.l.b16 %v4231
    %v4405 = vunpack.c.h.b16 %v4231
    %v4406 = vunpack.c.l.b16 %v4232
    %v4407 = vunpack.c.h.b16 %v4232
    %v4408 = vunpack.c.l.b16 %v4233
    %v4409 = vunpack.c.h.b16 %v4233
    %v4410 = vunpack.c.l.b16 %v4234
    %v4411 = vunpack.c.h.b16 %v4234
    %v4412 = vunpack.c.l.b16 %v4235
    %v4413 = vunpack.c.h.b16 %v4235
    %v4414 = vunpack.c.l.b16 %v4236
    %v4415 = vunpack.c.h.b16 %v4236
    %v4416 = vunpack.c.l.b16 %v4237
    %v4417 = vunpack.c.h.b16 %v4237
    %v4418 = vunpack.c.l.b16 %v4238
    %v4419 = vunpack.c.h.b16 %v4238
    %v4420 = vunpack.c.l.b16 %v4239
    %v4421 = vunpack.c.h.b16 %v4239
    %v4422 = vunpack.c.l.b16 %v4240
    %v4423 = vunpack.c.h.b16 %v4240
    %v4424 = vunpack.c.l.b16 %v4241
    %v4425 = vunpack.c.h.b16 %v4241
    %v4426 = vunpack.c.l.b16 %v4242
    %v4427 = vunpack.c.h.b16 %v4242
    %v4428 = vunpack.c.l.b16 %v4243
    %v4429 = vunpack.c.h.b16 %v4243
    %v4430 = vunpack.c.l.b16 %v4244
    %v4431 = vunpack.c.h.b16 %v4244
    %v4432 = vunpack.c.l.b16 %v4245
    %v4433 = vunpack.c.h.b16 %v4245
    %v4434 = vunpack.c.l.b16 %v4246
    %v4435 = vunpack.c.h.b16 %v4246
    %v4436 = vunpack.c.l.b16 %v4247
    %v4437 = vunpack.c.h.b16 %v4247
    %v4438 = vunpack.c.l.b16 %v4248
    %v4439 = vunpack.c.h.b16 %v4248
    %v4440 = vunpack.c.l.b16 %v4249
    %v4441 = vunpack.c.h.b16 %v4249
    %v4442 = vpack.c.b16 %v4318, %v4314
    %v4443 = vpack.c.b16 %v4319, %v4315
    %v4444 = vpack.c.b16 %v4320, %v4316
    %v4445 = vpack.c.b16 %v4321, %v4317
    %v4446 = vpack.c.b16 %v4326, %v4322
    %v4447 = vpack.c.b16 %v4327, %v4323
    %v4448 = vpack.c.b16 %v4328, %v4324
    %v4449 = vpack.c.b16 %v4329, %v4325
    %v4450 = vpack.c.b16 %v4334, %v4330
    %v4451 = vpack.c.b16 %v4335, %v4331
    %v4452 = vpack.c.b16 %v4336, %v4332
    %v4453 = vpack.c.b16 %v4337, %v4333
    %v4454 = vpack.c.b16 %v4342, %v4338
    %v4455 = vpack.c.b16 %v4343, %v4339
    %v4456 = vpack.c.b16 %v4344, %v4340
    %v4457 = vpack.c.b16 %v4345, %v4341
    %v4458 = vpack.c.b16 %v4350, %v4346
    %v4459 = vpack.c.b16 %v4351, %v4347
    %v4460 = vpack.c.b16 %v4352, %v4348
    %v4461 = vpack.c.b16 %v4353, %v4349
    %v4462 = vpack.c.b16 %v4358, %v4354
    %v4463 = vpack.c.b16 %v4359, %v4355
    %v4464 = vpack.c.b16 %v4360, %v4356
    %v4465 = vpack.c.b16 %v4361, %v4357
    %v4466 = vpack.c.b16 %v4366, %v4362
    %v4467 = vpack.c.b16 %v4367, %v4363
    %v4468 = vpack.c.b16 %v4368, %v4364
    %v4469 = vpack.c.b16 %v4369, %v4365
    %v4470 = vpack.c.b16 %v4374, %v4370
    %v4471 = vpack.c.b16 %v4375, %v4371
    %v4472 = vpack.c.b16 %v4376, %v4372
    %v4473 = vpack.c.b16 %v4377, %v4373
    %v4474 = vpack.c.b16 %v4382, %v4378
    %v4475 = vpack.c.b16 %v4383, %v4379
    %v4476 = vpack.c.b16 %v4384, %v4380
    %v4477 = vpack.c.b16 %v4385, %v4381
    %v4478 = vpack.c.b16 %v4390, %v4386
    %v4479 = vpack.c.b16 %v4391, %v4387
    %v4480 = vpack.c.b16 %v4392, %v4388
    %v4481 = vpack.c.b16 %v4393, %v4389
    %v4482 = vpack.c.b16 %v4398, %v4394
    %v4483 = vpack.c.b16 %v4399, %v4395
    %v4484 = vpack.c.b16 %v4400, %v4396
    %v4485 = vpack.c.b16 %v4401, %v4397
    %v4486 = vpack.c.b16 %v4406, %v4402
    %v4487 = vpack.c.b16 %v4407, %v4403
    %v4488 = vpack.c.b16 %v4408, %v4404
    %v4489 = vpack.c.b16 %v4409, %v4405
    %v4490 = vpack.c.b16 %v4414, %v4410
    %v4491 = vpack.c.b16 %v4415, %v4411
    %v4492 = vpack.c.b16 %v4416, %v4412
    %v4493 = vpack.c.b16 %v4417, %v4413
    %v4494 = vpack.c.b16 %v4422, %v4418
    %v4495 = vpack.c.b16 %v4423, %v4419
    %v4496 = vpack.c.b16 %v4424, %v4420
    %v4497 = vpack.c.b16 %v4425, %v4421
    %v4498 = vpack.c.b16 %v4430, %v4426
    %v4499 = vpack.c.b16 %v4431, %v4427
    %v4500 = vpack.c.b16 %v4432, %v4428
    %v4501 = vpack.c.b16 %v4433, %v4429
    %v4502 = vpack.c.b16 %v4438, %v4434
    %v4503 = vpack.c.b16 %v4439, %v4435
    %v4504 = vpack.c.b16 %v4440, %v4436
    %v4505 = vpack.c.b16 %v4441, %v4437
    %4570 = vmatpush.bf16.msra.mxu0 %v4470
    %4571 = vmatpush.bf16.msra.mxu0 %v4466
    %4572 = vmatpush.bf16.msra.mxu0 %v4462
    %4573 = vmatpush.bf16.msra.mxu0 %v4458
    %4574 = vmatpush.bf16.msra.mxu0 %v4454
    %4575 = vmatpush.bf16.msra.mxu0 %v4450
    %4576 = vmatpush.bf16.msra.mxu0 %v4446
    %4577 = vmatpush.bf16.msra.mxu0 %v4442
    %4578 = vmatmul.bf16.gmra.mxu0 %v4184
    %v4579 = vpop.f32.mrf.mxu0
    %v4580 = vadd.f32 0.0, %v4579
    %v4581 = vpop.f32.mrf.mxu0
    %4582 = vdwg.mxu0
    %4583 = vmatpush.bf16.msra.mxu0 %v4502
    %4584 = vmatpush.bf16.msra.mxu0 %v4498
    %4585 = vmatpush.bf16.msra.mxu0 %v4494
    %4586 = vmatpush.bf16.msra.mxu0 %v4490
    %4587 = vmatpush.bf16.msra.mxu0 %v4486
    %4588 = vmatpush.bf16.msra.mxu0 %v4482
    %4589 = vmatpush.bf16.msra.mxu0 %v4478
    %4590 = vmatpush.bf16.msra.mxu0 %v4474
    %4591 = vmatmul.bf16.gmra.mxu0 %v4185
    %v4592 = vpop.f32.mrf.mxu0
    %v4593 = vadd.f32 %v4580, %v4592
    %v4594 = vpop.f32.mrf.mxu0
    %4595 = vdwg.mxu0
    %4596 = vmatpush.bf16.msra.mxu0 %v4471
    %4597 = vmatpush.bf16.msra.mxu0 %v4467
    %4598 = vmatpush.bf16.msra.mxu0 %v4463
    %4599 = vmatpush.bf16.msra.mxu0 %v4459
    %4600 = vmatpush.bf16.msra.mxu0 %v4455
    %4601 = vmatpush.bf16.msra.mxu0 %v4451
    %4602 = vmatpush.bf16.msra.mxu0 %v4447
    %4603 = vmatpush.bf16.msra.mxu0 %v4443
    %4604 = vmatmul.bf16.gmra.mxu0 %v4184
    %v4605 = vpop.f32.mrf.mxu0
    %v4606 = vadd.f32 0.0, %v4605
    %v4607 = vpop.f32.mrf.mxu0
    %4608 = vdwg.mxu0
    %4609 = vmatpush.bf16.msra.mxu0 %v4503
    %4610 = vmatpush.bf16.msra.mxu0 %v4499
    %4611 = vmatpush.bf16.msra.mxu0 %v4495
    %4612 = vmatpush.bf16.msra.mxu0 %v4491
    %4613 = vmatpush.bf16.msra.mxu0 %v4487
    %4614 = vmatpush.bf16.msra.mxu0 %v4483
    %4615 = vmatpush.bf16.msra.mxu0 %v4479
    %4616 = vmatpush.bf16.msra.mxu0 %v4475
    %4617 = vmatmul.bf16.gmra.mxu0 %v4185
    %v4618 = vpop.f32.mrf.mxu0
    %v4619 = vadd.f32 %v4606, %v4618
    %v4620 = vpop.f32.mrf.mxu0
    %4621 = vdwg.mxu0
    %4622 = vmatpush.bf16.msra.mxu0 %v4472
    %4623 = vmatpush.bf16.msra.mxu0 %v4468
    %4624 = vmatpush.bf16.msra.mxu0 %v4464
    %4625 = vmatpush.bf16.msra.mxu0 %v4460
    %4626 = vmatpush.bf16.msra.mxu0 %v4456
    %4627 = vmatpush.bf16.msra.mxu0 %v4452
    %4628 = vmatpush.bf16.msra.mxu0 %v4448
    %4629 = vmatpush.bf16.msra.mxu0 %v4444
    %4630 = vmatmul.bf16.gmra.mxu0 %v4184
    %v4631 = vpop.f32.mrf.mxu0
    %v4632 = vadd.f32 0.0, %v4631
    %v4633 = vpop.f32.mrf.mxu0
    %4634 = vdwg.mxu0
    %4635 = vmatpush.bf16.msra.mxu0 %v4504
    %4636 = vmatpush.bf16.msra.mxu0 %v4500
    %4637 = vmatpush.bf16.msra.mxu0 %v4496
    %4638 = vmatpush.bf16.msra.mxu0 %v4492
    %4639 = vmatpush.bf16.msra.mxu0 %v4488
    %4640 = vmatpush.bf16.msra.mxu0 %v4484
    %4641 = vmatpush.bf16.msra.mxu0 %v4480
    %4642 = vmatpush.bf16.msra.mxu0 %v4476
    %4643 = vmatmul.bf16.gmra.mxu0 %v4185
    %v4644 = vpop.f32.mrf.mxu0
    %v4645 = vadd.f32 %v4632, %v4644
    %v4646 = vpop.f32.mrf.mxu0
    %4647 = vdwg.mxu0
    %4648 = vmatpush.bf16.msra.mxu0 %v4473
    %4649 = vmatpush.bf16.msra.mxu0 %v4469
    %4650 = vmatpush.bf16.msra.mxu0 %v4465
    %4651 = vmatpush.bf16.msra.mxu0 %v4461
    %4652 = vmatpush.bf16.msra.mxu0 %v4457
    %4653 = vmatpush.bf16.msra.mxu0 %v4453
    %4654 = vmatpush.bf16.msra.mxu0 %v4449
    %4655 = vmatpush.bf16.msra.mxu0 %v4445
    %4656 = vmatmul.bf16.gmra.mxu0 %v4184
    %v4657 = vpop.f32.mrf.mxu0
    %v4658 = vadd.f32 0.0, %v4657
    %v4659 = vpop.f32.mrf.mxu0
    %4660 = vdwg.mxu0
    %4661 = vmatpush.bf16.msra.mxu0 %v4505
    %4662 = vmatpush.bf16.msra.mxu0 %v4501
    %4663 = vmatpush.bf16.msra.mxu0 %v4497
    %4664 = vmatpush.bf16.msra.mxu0 %v4493
    %4665 = vmatpush.bf16.msra.mxu0 %v4489
    %4666 = vmatpush.bf16.msra.mxu0 %v4485
    %4667 = vmatpush.bf16.msra.mxu0 %v4481
    %4668 = vmatpush.bf16.msra.mxu0 %v4477
    %4669 = vmatmul.bf16.gmra.mxu0 %v4185
    %v4670 = vpop.f32.mrf.mxu0
    %v4671 = vadd.f32 %v4658, %v4670
    %v4672 = vpop.f32.mrf.mxu0
    %4673 = vdwg.mxu0
    %v4674 = vld [vmem:[#allocation3] sm:$0xc]
    %v4675 = vld [vmem:[#allocation3 + $0x8] sm:$0xc]
    %v4676 = vld [vmem:[#allocation3 + $0x10] sm:$0xc]
    %v4678 = vrot.slane %v4593, 6
    %v4680 = vadd.f32 %v4674, %v4678
    %v4681 = vxor.u32 %v4680, 2147483648
    %v4682 = vmul.f32 %v4681, 1.442695
    %v4683 = vpow.pop %v4682
    %v4684 = vadd.f32 %v4683, 1.0
    %v4685 = vrcp.pop %v4684
    %v4686 = vmul.f32 %v4684, %v4685
    %v4687 = vsub.f32 1.0, %v4686
    %v4688 = vmul.f32 %v4685, %v4687
    %v4689 = vadd.f32 %v4685, %v4688
    %vm4690 = vweird.f32 %v4684
    %vm4691 = vweird.f32 %v4685
    %vm4692 = vmor %vm4690, %vm4691
    %v4693 = vsel %vm4692, %v4685, %v4689
    %v4694 = vand.u32 2147483647, %v4684
    %vm4695 = vcmp.eq.f32.partialorder %v4694, 8.507059e+37
    %v4696 = vand.u32 %v4684, 2147483648
    %v4697 = vor.u32 1.1754944e-38, %v4696
    %v4698 = vsel %vm4695, %v4697, %v4693
    %v4699 = vmul.f32 1.0, %v4698
    %v4701 = vrot.slane %v4619, 6
    %v4703 = vadd.f32 %v4675, %v4701
    %v4704 = vxor.u32 %v4703, 2147483648
    %v4705 = vmul.f32 %v4704, 1.442695
    %v4706 = vpow.pop %v4705
    %v4707 = vadd.f32 %v4706, 1.0
    %v4708 = vrcp.pop %v4707
    %v4709 = vmul.f32 %v4707, %v4708
    %v4710 = vsub.f32 1.0, %v4709
    %v4711 = vmul.f32 %v4708, %v4710
    %v4712 = vadd.f32 %v4708, %v4711
    %vm4713 = vweird.f32 %v4707
    %vm4714 = vweird.f32 %v4708
    %vm4715 = vmor %vm4713, %vm4714
    %v4716 = vsel %vm4715, %v4708, %v4712
    %v4717 = vand.u32 2147483647, %v4707
    %vm4718 = vcmp.eq.f32.partialorder %v4717, 8.507059e+37
    %v4719 = vand.u32 %v4707, 2147483648
    %v4720 = vor.u32 1.1754944e-38, %v4719
    %v4721 = vsel %vm4718, %v4720, %v4716
    %v4722 = vmul.f32 1.0, %v4721
    %v4724 = vrot.slane %v4645, 6
    %v4726 = vadd.f32 %v4676, %v4724
    %v4727 = vadd.f32 %v4671, %v3215
    %v4729 = vrot.slane %v4727, 6
    %v4731 = vmul.f32 %v4699, %v4729
    %v4732 = vadd.f32 %v4726, %v4731
    %v4733 = vtanh.pop %v4732
    %v4734 = vsub.f32 1.0, %v4722
    %v4735 = vmul.f32 %v4734, %v4733
    %v4736 = vrot.slane %v3976, 6
    %v4738 = vmul.f32 %v4722, %v4736
    %v4739 = vadd.f32 %v4735, %v4738
    %4740 = vst [vmem:[#allocation5 - $0x1] sm:$0x4] %v4739
    %4741 = vst [vmem:[#allocation5 + $0x8] sm:$0x8] %v4739
    %4743 = vst [vmem:[#allocation1] sm:$0xff] %v4739
    %s4744 = scalar_lea.vmem [#allocation1], 2
    %v4745 = vld [vmem:[%s4744] ss:$9 sm:$0xff]
    %s4746 = scalar_lea.vmem [#allocation1], 3
    %v4747 = vld [vmem:[%s4746] ss:$9 sm:$0xff]
    %v4748 = vperm.slane %v4745, 0
    %v4749 = vperm.slane %v4747, 0
    %v4752 = vrot.slane %v4748, 2
    %v4753 = vrot.slane %v4748, 4
    %v4754 = vrot.slane %v4748, 6
    %v4755 = vrot.slane %v4749, 2
    %v4756 = vrot.slane %v4749, 4
    %v4757 = vrot.slane %v4749, 6
    %v4764 = vmul.f32 %v3178, %v4748
    %v4765 = vmul.f32 %v3199, %v4752
    %v4766 = vmul.f32 %v3200, %v4753
    %v4767 = vmul.f32 %v3201, %v4754
    %v4768 = vmul.f32 %v3180, %v4748
    %v4769 = vmul.f32 %v3202, %v4749
    %v4770 = vmul.f32 %v3203, %v4755
    %v4771 = vmul.f32 %v3204, %v4756
    %v4772 = vmul.f32 %v3183, %v4757
    %v4773 = vmul.f32 %v3205, %v4749
    %4784 = vst [vmem:[#allocation1] ss:$4 sm:$0xff] %v4764
    %s4785 = scalar_lea.vmem [#allocation1], 1
    %4786 = vst [vmem:[%s4785] ss:$4 sm:$0xff] %v4765
    %s4787 = scalar_lea.vmem [#allocation1], 2
    %4788 = vst [vmem:[%s4787] ss:$4 sm:$0xff] %v4766
    %s4789 = scalar_lea.vmem [#allocation1], 3
    %4790 = vst [vmem:[%s4789] ss:$4 sm:$0xff] %v4767
    %s4791 = scalar_lea.vmem [#allocation1], 32
    %4792 = vst [vmem:[%s4791] ss:$4 sm:$0xff] %v4768
    %v4793 = vld.sshfl [vmem:[#allocation1] sm:$0xff pattern:$0x73625140]
    %v4794 = vld.sshfl [vmem:[#allocation1 + $0x20] sm:$0xff pattern:$0x73625140]
    %4795 = vst [vmem:[#allocation1] ss:$4 sm:$0xff] %v4769
    %4796 = vst [vmem:[%s4785] ss:$4 sm:$0xff] %v4770
    %4797 = vst [vmem:[%s4787] ss:$4 sm:$0xff] %v4771
    %4798 = vst [vmem:[%s4789] ss:$4 sm:$0xff] %v4772
    %4799 = vst [vmem:[%s4791] ss:$4 sm:$0xff] %v4773
    %v4800 = vld.sshfl [vmem:[#allocation1] sm:$0xff pattern:$0x73625140]
    %v4801 = vld.sshfl [vmem:[#allocation1 + $0x20] sm:$0xff pattern:$0x73625140]
    %4806 = vadd.xlane.f32.xlu0 %v4793
    %v4807 = vpop.xlane.xlu0 %4806
    %v4808 = vsel %vm3283, %v4794, 0.0
    %4809 = vadd.xlane.f32.xlu0 %v4808
    %v4810 = vpop.xlane.xlu0 %4809
    %4811 = vadd.xlane.f32.xlu0 %v4800
    %v4812 = vpop.xlane.xlu0 %4811
    %v4813 = vsel %vm3283, %v4801, 0.0
    %4814 = vadd.xlane.f32.xlu0 %v4813
    %v4815 = vpop.xlane.xlu0 %4814
    %v4820 = vperm.slane %v4807, %v3297
    %v4821 = vperm.slane %v4810, %v3299
    %v4822 = vsel %vm3301, %v4821, %v4820
    %v4823 = vperm.slane %v4812, %v3297
    %v4824 = vperm.slane %v4815, %v3299
    %v4825 = vsel %vm3301, %v4824, %v4823
    %v4826 = vsel %vm3306, %v4825, %v4822
    %v4828 = vsel %vm3309, %v4826, -inf
    %4829 = vmax.xlane.f32.xlu0 %v4828
    %v4830 = vpop.xlane.xlu0 %4829
    %v4832 = vperm.slane %v4830, 0
    %v4833 = vperm.slane %v4830, 1
    %v4836 = vsub.f32 %v4807, %v4832
    %v4837 = vsub.f32 %v4810, %v4832
    %v4838 = vsub.f32 %v4812, %v4833
    %v4839 = vsub.f32 %v4815, %v4833
    %v4840 = vmul.f32 %v4836, 1.442695
    %v4841 = vpow.pop %v4840
    %v4842 = vmul.f32 %v4837, 1.442695
    %v4843 = vpow.pop %v4842
    %v4844 = vmul.f32 %v4838, 1.442695
    %v4845 = vpow.pop %v4844
    %v4846 = vmul.f32 %v4839, 1.442695
    %v4847 = vpow.pop %v4846
    %4852 = vset.pattern.permute.xlu0 0
    %4853 = vperm.xlu0 %4852, %v4841
    %v4854 = vpop.permute.xlu0 %4853
    %4855 = vset.pattern.permute.xlu0 0
    %4856 = vperm.xlu0 %4855, %v4843
    %v4857 = vpop.permute.xlu0 %4856
    %4858 = vset.pattern.permute.xlu0 0
    %4859 = vperm.xlu0 %4858, %v4845
    %v4860 = vpop.permute.xlu0 %4859
    %4861 = vset.pattern.permute.xlu0 0
    %4862 = vperm.xlu0 %4861, %v4847
    %v4863 = vpop.permute.xlu0 %4862
    %v4864 = vperm.slane %v4854, %v3297
    %v4865 = vperm.slane %v4857, %v3299
    %v4866 = vsel %vm3301, %v4865, %v4864
    %v4867 = vperm.slane %v4860, %v3297
    %v4868 = vperm.slane %v4863, %v3299
    %v4869 = vsel %vm3301, %v4868, %v4867
    %v4870 = vsel %vm3306, %v4869, %v4866
    %v4872 = vsel %vm3309, %v4870, 0.0
    %4873 = vadd.xlane.f32.xlu0 %v4872
    %v4874 = vpop.xlane.xlu0 %4873
    %v4875 = vrcp.pop %v4874
    %v4877 = vperm.slane %v4875, 0
    %v4878 = vperm.slane %v4875, 1
    %v4881 = vmul.f32 %v4841, %v4877
    %v4882 = vmul.f32 %v4843, %v4877
    %v4883 = vmul.f32 %v4845, %v4878
    %v4884 = vmul.f32 %v4847, %v4878
    %4886 = vset.pattern.permute.xlu0 0
    %4887 = vperm.xlu0 %4886, %v4881
    %v4888 = vpop.permute.xlu0 %4887
    %4891 = vset.pattern.permute.xlu0 0
    %4892 = vperm.xlu0 %4891, %v4882
    %v4893 = vpop.permute.xlu0 %4892
    %4896 = vset.pattern.permute.xlu0 0
    %4897 = vperm.xlu0 %4896, %v4883
    %v4898 = vpop.permute.xlu0 %4897
    %4901 = vset.pattern.permute.xlu0 0
    %4902 = vperm.xlu0 %4901, %v4884
    %v4903 = vpop.permute.xlu0 %4902
    %4905 = vst [vmem:[#allocation1] ss:$4 sm:$0xff] %v3099
    %s4906 = scalar_lea.vmem [#allocation1], 1
    %4907 = vst [vmem:[%s4906] ss:$4 sm:$0xff] %v3189
    %s4908 = scalar_lea.vmem [#allocation1], 2
    %4909 = vst [vmem:[%s4908] ss:$4 sm:$0xff] %v3190
    %s4910 = scalar_lea.vmem [#allocation1], 3
    %4911 = vst [vmem:[%s4910] ss:$4 sm:$0xff] %v3191
    %s4912 = scalar_lea.vmem [#allocation1], 32
    %4913 = vst [vmem:[%s4912] ss:$4 sm:$0xff] %v3100
    %v4914 = vld.sshfl [vmem:[#allocation1] sm:$0xff pattern:$0x73625140]
    %v4915 = vld.sshfl [vmem:[#allocation1 + $0x20] sm:$0xff pattern:$0x73625140]
    %4916 = vst [vmem:[#allocation1] ss:$4 sm:$0xff] %v3192
    %4917 = vst [vmem:[%s4906] ss:$4 sm:$0xff] %v3193
    %4918 = vst [vmem:[%s4908] ss:$4 sm:$0xff] %v3194
    %4919 = vst [vmem:[%s4910] ss:$4 sm:$0xff] %v3101
    %4920 = vst [vmem:[%s4912] ss:$4 sm:$0xff] %v3195
    %v4921 = vld.sshfl [vmem:[#allocation1] sm:$0xff pattern:$0x73625140]
    %v4922 = vld.sshfl [vmem:[#allocation1 + $0x20] sm:$0xff pattern:$0x73625140]
    %v4927 = vmul.f32 %v4888, %v4914
    %v4928 = vmul.f32 %v4893, %v4915
    %v4929 = vmul.f32 %v4898, %v4921
    %v4930 = vmul.f32 %v4903, %v4922
    %v4931 = vsel %vm3283, %v4928, 0.0
    %v4932 = vadd.f32 %v4927, %v4931
    %v4933 = vrot.slane %v4932, 4
    %v4934 = vadd.f32 %v4932, %v4933
    %v4935 = vrot.slane %v4934, 2
    %v4936 = vadd.f32 %v4934, %v4935
    %v4937 = vrot.slane %v4936, 1
    %v4938 = vadd.f32 %v4936, %v4937
    %v4939 = vsel %vm3283, %v4930, 0.0
    %v4940 = vadd.f32 %v4929, %v4939
    %v4941 = vrot.slane %v4940, 4
    %v4942 = vadd.f32 %v4940, %v4941
    %v4943 = vrot.slane %v4942, 2
    %v4944 = vadd.f32 %v4942, %v4943
    %v4945 = vrot.slane %v4944, 1
    %v4946 = vadd.f32 %v4944, %v4945
    %v4949 = vsel %vm3306, %v4946, %v4938
    %v4951 = vrot.slane %v4739, 2
    %v4953 = vpack.c.bf16 %v4949, %v4949
    %v4954 = vpack.c.bf16 %v4951, %v4951
    %v4955 = vld [vmem:[%s7] sm:$0xff]
    %v4956 = vld [vmem:[%s7 + $0x8] sm:$0xff]
    %v4957 = vld [vmem:[%s7 + $0x10] sm:$0xff]
    %v4958 = vld [vmem:[%s7 + $0x18] sm:$0xff]
    %v4959 = vld [vmem:[%s7 + $0x20] sm:$0xff]
    %v4960 = vld [vmem:[%s7 + $0x28] sm:$0xff]
    %v4961 = vld [vmem:[%s7 + $0x30] sm:$0xff]
    %v4962 = vld [vmem:[%s7 + $0x38] sm:$0xff]
    %v4963 = vld [vmem:[%s7 + $0x40] sm:$0xff]
    %v4964 = vld [vmem:[%s7 + $0x48] sm:$0xff]
    %v4965 = vld [vmem:[%s7 + $0x50] sm:$0xff]
    %v4966 = vld [vmem:[%s7 + $0x58] sm:$0xff]
    %v4967 = vld [vmem:[%s7 + $0x60] sm:$0xff]
    %v4968 = vld [vmem:[%s7 + $0x68] sm:$0xff]
    %v4969 = vld [vmem:[%s7 + $0x70] sm:$0xff]
    %v4970 = vld [vmem:[%s7 + $0x78] sm:$0xff]
    %v4971 = vld [vmem:[%s7 + $0x80] sm:$0xff]
    %v4972 = vld [vmem:[%s7 + $0x88] sm:$0xff]
    %v4973 = vld [vmem:[%s7 + $0x90] sm:$0xff]
    %v4974 = vld [vmem:[%s7 + $0x98] sm:$0xff]
    %v4975 = vld [vmem:[%s7 + $0xa0] sm:$0xff]
    %v4976 = vld [vmem:[%s7 + $0xa8] sm:$0xff]
    %v4977 = vld [vmem:[%s7 + $0xb0] sm:$0xff]
    %v4978 = vld [vmem:[%s7 + $0xb8] sm:$0xff]
    %v4979 = vld [vmem:[%s7 + $0xc0] sm:$0xff]
    %v4980 = vld [vmem:[%s7 + $0xc8] sm:$0xff]
    %v4981 = vld [vmem:[%s7 + $0xd0] sm:$0xff]
    %v4982 = vld [vmem:[%s7 + $0xd8] sm:$0xff]
    %v4983 = vld [vmem:[%s7 + $0xe0] sm:$0xff]
    %v4984 = vld [vmem:[%s7 + $0xe8] sm:$0xff]
    %v4985 = vld [vmem:[%s7 + $0xf0] sm:$0xff]
    %v4986 = vld [vmem:[%s7 + $0xf8] sm:$0xff]
    %v4987 = vld [vmem:[%s7 + $0x100] sm:$0xff]
    %v4988 = vld [vmem:[%s7 + $0x108] sm:$0xff]
    %v4989 = vld [vmem:[%s7 + $0x110] sm:$0xff]
    %v4990 = vld [vmem:[%s7 + $0x118] sm:$0xff]
    %v4991 = vld [vmem:[%s7 + $0x120] sm:$0xff]
    %v4992 = vld [vmem:[%s7 + $0x128] sm:$0xff]
    %v4993 = vld [vmem:[%s7 + $0x130] sm:$0xff]
    %v4994 = vld [vmem:[%s7 + $0x138] sm:$0xff]
    %v4995 = vld [vmem:[%s7 + $0x140] sm:$0xff]
    %v4996 = vld [vmem:[%s7 + $0x148] sm:$0xff]
    %v4997 = vld [vmem:[%s7 + $0x150] sm:$0xff]
    %v4998 = vld [vmem:[%s7 + $0x158] sm:$0xff]
    %v4999 = vld [vmem:[%s7 + $0x160] sm:$0xff]
    %v5000 = vld [vmem:[%s7 + $0x168] sm:$0xff]
    %v5001 = vld [vmem:[%s7 + $0x170] sm:$0xff]
    %v5002 = vld [vmem:[%s7 + $0x178] sm:$0xff]
    %v5003 = vld [vmem:[%s7 + $0x180] sm:$0xff]
    %v5004 = vld [vmem:[%s7 + $0x188] sm:$0xff]
    %v5005 = vld [vmem:[%s7 + $0x190] sm:$0xff]
    %v5006 = vld [vmem:[%s7 + $0x198] sm:$0xff]
    %v5007 = vld [vmem:[%s7 + $0x1a0] sm:$0xff]
    %v5008 = vld [vmem:[%s7 + $0x1a8] sm:$0xff]
    %v5009 = vld [vmem:[%s7 + $0x1b0] sm:$0xff]
    %v5010 = vld [vmem:[%s7 + $0x1b8] sm:$0xff]
    %v5011 = vld [vmem:[%s7 + $0x1c0] sm:$0xff]
    %v5012 = vld [vmem:[%s7 + $0x1c8] sm:$0xff]
    %v5013 = vld [vmem:[%s7 + $0x1d0] sm:$0xff]
    %v5014 = vld [vmem:[%s7 + $0x1d8] sm:$0xff]
    %v5015 = vld [vmem:[%s7 + $0x1e0] sm:$0xff]
    %v5016 = vld [vmem:[%s7 + $0x1e8] sm:$0xff]
    %v5017 = vld [vmem:[%s7 + $0x1f0] sm:$0xff]
    %v5018 = vld [vmem:[%s7 + $0x1f8] sm:$0xff]
    %v5083 = vunpack.c.l.b16 %v4955
    %v5084 = vunpack.c.h.b16 %v4955
    %v5085 = vunpack.c.l.b16 %v4956
    %v5086 = vunpack.c.h.b16 %v4956
    %v5087 = vunpack.c.l.b16 %v4957
    %v5088 = vunpack.c.h.b16 %v4957
    %v5089 = vunpack.c.l.b16 %v4958
    %v5090 = vunpack.c.h.b16 %v4958
    %v5091 = vunpack.c.l.b16 %v4959
    %v5092 = vunpack.c.h.b16 %v4959
    %v5093 = vunpack.c.l.b16 %v4960
    %v5094 = vunpack.c.h.b16 %v4960
    %v5095 = vunpack.c.l.b16 %v4961
    %v5096 = vunpack.c.h.b16 %v4961
    %v5097 = vunpack.c.l.b16 %v4962
    %v5098 = vunpack.c.h.b16 %v4962
    %v5099 = vunpack.c.l.b16 %v4963
    %v5100 = vunpack.c.h.b16 %v4963
    %v5101 = vunpack.c.l.b16 %v4964
    %v5102 = vunpack.c.h.b16 %v4964
    %v5103 = vunpack.c.l.b16 %v4965
    %v5104 = vunpack.c.h.b16 %v4965
    %v5105 = vunpack.c.l.b16 %v4966
    %v5106 = vunpack.c.h.b16 %v4966
    %v5107 = vunpack.c.l.b16 %v4967
    %v5108 = vunpack.c.h.b16 %v4967
    %v5109 = vunpack.c.l.b16 %v4968
    %v5110 = vunpack.c.h.b16 %v4968
    %v5111 = vunpack.c.l.b16 %v4969
    %v5112 = vunpack.c.h.b16 %v4969
    %v5113 = vunpack.c.l.b16 %v4970
    %v5114 = vunpack.c.h.b16 %v4970
    %v5115 = vunpack.c.l.b16 %v4971
    %v5116 = vunpack.c.h.b16 %v4971
    %v5117 = vunpack.c.l.b16 %v4972
    %v5118 = vunpack.c.h.b16 %v4972
    %v5119 = vunpack.c.l.b16 %v4973
    %v5120 = vunpack.c.h.b16 %v4973
    %v5121 = vunpack.c.l.b16 %v4974
    %v5122 = vunpack.c.h.b16 %v4974
    %v5123 = vunpack.c.l.b16 %v4975
    %v5124 = vunpack.c.h.b16 %v4975
    %v5125 = vunpack.c.l.b16 %v4976
    %v5126 = vunpack.c.h.b16 %v4976
    %v5127 = vunpack.c.l.b16 %v4977
    %v5128 = vunpack.c.h.b16 %v4977
    %v5129 = vunpack.c.l.b16 %v4978
    %v5130 = vunpack.c.h.b16 %v4978
    %v5131 = vunpack.c.l.b16 %v4979
    %v5132 = vunpack.c.h.b16 %v4979
    %v5133 = vunpack.c.l.b16 %v4980
    %v5134 = vunpack.c.h.b16 %v4980
    %v5135 = vunpack.c.l.b16 %v4981
    %v5136 = vunpack.c.h.b16 %v4981
    %v5137 = vunpack.c.l.b16 %v4982
    %v5138 = vunpack.c.h.b16 %v4982
    %v5139 = vunpack.c.l.b16 %v4983
    %v5140 = vunpack.c.h.b16 %v4983
    %v5141 = vunpack.c.l.b16 %v4984
    %v5142 = vunpack.c.h.b16 %v4984
    %v5143 = vunpack.c.l.b16 %v4985
    %v5144 = vunpack.c.h.b16 %v4985
    %v5145 = vunpack.c.l.b16 %v4986
    %v5146 = vunpack.c.h.b16 %v4986
    %v5147 = vunpack.c.l.b16 %v4987
    %v5148 = vunpack.c.h.b16 %v4987
    %v5149 = vunpack.c.l.b16 %v4988
    %v5150 = vunpack.c.h.b16 %v4988
    %v5151 = vunpack.c.l.b16 %v4989
    %v5152 = vunpack.c.h.b16 %v4989
    %v5153 = vunpack.c.l.b16 %v4990
    %v5154 = vunpack.c.h.b16 %v4990
    %v5155 = vunpack.c.l.b16 %v4991
    %v5156 = vunpack.c.h.b16 %v4991
    %v5157 = vunpack.c.l.b16 %v4992
    %v5158 = vunpack.c.h.b16 %v4992
    %v5159 = vunpack.c.l.b16 %v4993
    %v5160 = vunpack.c.h.b16 %v4993
    %v5161 = vunpack.c.l.b16 %v4994
    %v5162 = vunpack.c.h.b16 %v4994
    %v5163 = vunpack.c.l.b16 %v4995
    %v5164 = vunpack.c.h.b16 %v4995
    %v5165 = vunpack.c.l.b16 %v4996
    %v5166 = vunpack.c.h.b16 %v4996
    %v5167 = vunpack.c.l.b16 %v4997
    %v5168 = vunpack.c.h.b16 %v4997
    %v5169 = vunpack.c.l.b16 %v4998
    %v5170 = vunpack.c.h.b16 %v4998
    %v5171 = vunpack.c.l.b16 %v4999
    %v5172 = vunpack.c.h.b16 %v4999
    %v5173 = vunpack.c.l.b16 %v5000
    %v5174 = vunpack.c.h.b16 %v5000
    %v5175 = vunpack.c.l.b16 %v5001
    %v5176 = vunpack.c.h.b16 %v5001
    %v5177 = vunpack.c.l.b16 %v5002
    %v5178 = vunpack.c.h.b16 %v5002
    %v5179 = vunpack.c.l.b16 %v5003
    %v5180 = vunpack.c.h.b16 %v5003
    %v5181 = vunpack.c.l.b16 %v5004
    %v5182 = vunpack.c.h.b16 %v5004
    %v5183 = vunpack.c.l.b16 %v5005
    %v5184 = vunpack.c.h.b16 %v5005
    %v5185 = vunpack.c.l.b16 %v5006
    %v5186 = vunpack.c.h.b16 %v5006
    %v5187 = vunpack.c.l.b16 %v5007
    %v5188 = vunpack.c.h.b16 %v5007
    %v5189 = vunpack.c.l.b16 %v5008
    %v5190 = vunpack.c.h.b16 %v5008
    %v5191 = vunpack.c.l.b16 %v5009
    %v5192 = vunpack.c.h.b16 %v5009
    %v5193 = vunpack.c.l.b16 %v5010
    %v5194 = vunpack.c.h.b16 %v5010
    %v5195 = vunpack.c.l.b16 %v5011
    %v5196 = vunpack.c.h.b16 %v5011
    %v5197 = vunpack.c.l.b16 %v5012
    %v5198 = vunpack.c.h.b16 %v5012
    %v5199 = vunpack.c.l.b16 %v5013
    %v5200 = vunpack.c.h.b16 %v5013
    %v5201 = vunpack.c.l.b16 %v5014
    %v5202 = vunpack.c.h.b16 %v5014
    %v5203 = vunpack.c.l.b16 %v5015
    %v5204 = vunpack.c.h.b16 %v5015
    %v5205 = vunpack.c.l.b16 %v5016
    %v5206 = vunpack.c.h.b16 %v5016
    %v5207 = vunpack.c.l.b16 %v5017
    %v5208 = vunpack.c.h.b16 %v5017
    %v5209 = vunpack.c.l.b16 %v5018
    %v5210 = vunpack.c.h.b16 %v5018
    %v5211 = vpack.c.b16 %v5087, %v5083
    %v5212 = vpack.c.b16 %v5088, %v5084
    %v5213 = vpack.c.b16 %v5089, %v5085
    %v5214 = vpack.c.b16 %v5090, %v5086
    %v5215 = vpack.c.b16 %v5095, %v5091
    %v5216 = vpack.c.b16 %v5096, %v5092
    %v5217 = vpack.c.b16 %v5097, %v5093
    %v5218 = vpack.c.b16 %v5098, %v5094
    %v5219 = vpack.c.b16 %v5103, %v5099
    %v5220 = vpack.c.b16 %v5104, %v5100
    %v5221 = vpack.c.b16 %v5105, %v5101
    %v5222 = vpack.c.b16 %v5106, %v5102
    %v5223 = vpack.c.b16 %v5111, %v5107
    %v5224 = vpack.c.b16 %v5112, %v5108
    %v5225 = vpack.c.b16 %v5113, %v5109
    %v5226 = vpack.c.b16 %v5114, %v5110
    %v5227 = vpack.c.b16 %v5119, %v5115
    %v5228 = vpack.c.b16 %v5120, %v5116
    %v5229 = vpack.c.b16 %v5121, %v5117
    %v5230 = vpack.c.b16 %v5122, %v5118
    %v5231 = vpack.c.b16 %v5127, %v5123
    %v5232 = vpack.c.b16 %v5128, %v5124
    %v5233 = vpack.c.b16 %v5129, %v5125
    %v5234 = vpack.c.b16 %v5130, %v5126
    %v5235 = vpack.c.b16 %v5135, %v5131
    %v5236 = vpack.c.b16 %v5136, %v5132
    %v5237 = vpack.c.b16 %v5137, %v5133
    %v5238 = vpack.c.b16 %v5138, %v5134
    %v5239 = vpack.c.b16 %v5143, %v5139
    %v5240 = vpack.c.b16 %v5144, %v5140
    %v5241 = vpack.c.b16 %v5145, %v5141
    %v5242 = vpack.c.b16 %v5146, %v5142
    %v5243 = vpack.c.b16 %v5151, %v5147
    %v5244 = vpack.c.b16 %v5152, %v5148
    %v5245 = vpack.c.b16 %v5153, %v5149
    %v5246 = vpack.c.b16 %v5154, %v5150
    %v5247 = vpack.c.b16 %v5159, %v5155
    %v5248 = vpack.c.b16 %v5160, %v5156
    %v5249 = vpack.c.b16 %v5161, %v5157
    %v5250 = vpack.c.b16 %v5162, %v5158
    %v5251 = vpack.c.b16 %v5167, %v5163
    %v5252 = vpack.c.b16 %v5168, %v5164
    %v5253 = vpack.c.b16 %v5169, %v5165
    %v5254 = vpack.c.b16 %v5170, %v5166
    %v5255 = vpack.c.b16 %v5175, %v5171
    %v5256 = vpack.c.b16 %v5176, %v5172
    %v5257 = vpack.c.b16 %v5177, %v5173
    %v5258 = vpack.c.b16 %v5178, %v5174
    %v5259 = vpack.c.b16 %v5183, %v5179
    %v5260 = vpack.c.b16 %v5184, %v5180
    %v5261 = vpack.c.b16 %v5185, %v5181
    %v5262 = vpack.c.b16 %v5186, %v5182
    %v5263 = vpack.c.b16 %v5191, %v5187
    %v5264 = vpack.c.b16 %v5192, %v5188
    %v5265 = vpack.c.b16 %v5193, %v5189
    %v5266 = vpack.c.b16 %v5194, %v5190
    %v5267 = vpack.c.b16 %v5199, %v5195
    %v5268 = vpack.c.b16 %v5200, %v5196
    %v5269 = vpack.c.b16 %v5201, %v5197
    %v5270 = vpack.c.b16 %v5202, %v5198
    %v5271 = vpack.c.b16 %v5207, %v5203
    %v5272 = vpack.c.b16 %v5208, %v5204
    %v5273 = vpack.c.b16 %v5209, %v5205
    %v5274 = vpack.c.b16 %v5210, %v5206
    %5339 = vmatpush.bf16.msra.mxu0 %v5239
    %5340 = vmatpush.bf16.msra.mxu0 %v5235
    %5341 = vmatpush.bf16.msra.mxu0 %v5231
    %5342 = vmatpush.bf16.msra.mxu0 %v5227
    %5343 = vmatpush.bf16.msra.mxu0 %v5223
    %5344 = vmatpush.bf16.msra.mxu0 %v5219
    %5345 = vmatpush.bf16.msra.mxu0 %v5215
    %5346 = vmatpush.bf16.msra.mxu0 %v5211
    %5347 = vmatmul.bf16.gmra.mxu0 %v4953
    %v5348 = vpop.f32.mrf.mxu0
    %v5349 = vadd.f32 0.0, %v5348
    %v5350 = vpop.f32.mrf.mxu0
    %5351 = vdwg.mxu0
    %5352 = vmatpush.bf16.msra.mxu0 %v5271
    %5353 = vmatpush.bf16.msra.mxu0 %v5267
    %5354 = vmatpush.bf16.msra.mxu0 %v5263
    %5355 = vmatpush.bf16.msra.mxu0 %v5259
    %5356 = vmatpush.bf16.msra.mxu0 %v5255
    %5357 = vmatpush.bf16.msra.mxu0 %v5251
    %5358 = vmatpush.bf16.msra.mxu0 %v5247
    %5359 = vmatpush.bf16.msra.mxu0 %v5243
    %5360 = vmatmul.bf16.gmra.mxu0 %v4954
    %v5361 = vpop.f32.mrf.mxu0
    %v5362 = vadd.f32 %v5349, %v5361
    %v5363 = vpop.f32.mrf.mxu0
    %5364 = vdwg.mxu0
    %5365 = vmatpush.bf16.msra.mxu0 %v5240
    %5366 = vmatpush.bf16.msra.mxu0 %v5236
    %5367 = vmatpush.bf16.msra.mxu0 %v5232
    %5368 = vmatpush.bf16.msra.mxu0 %v5228
    %5369 = vmatpush.bf16.msra.mxu0 %v5224
    %5370 = vmatpush.bf16.msra.mxu0 %v5220
    %5371 = vmatpush.bf16.msra.mxu0 %v5216
    %5372 = vmatpush.bf16.msra.mxu0 %v5212
    %5373 = vmatmul.bf16.gmra.mxu0 %v4953
    %v5374 = vpop.f32.mrf.mxu0
    %v5375 = vadd.f32 0.0, %v5374
    %v5376 = vpop.f32.mrf.mxu0
    %5377 = vdwg.mxu0
    %5378 = vmatpush.bf16.msra.mxu0 %v5272
    %5379 = vmatpush.bf16.msra.mxu0 %v5268
    %5380 = vmatpush.bf16.msra.mxu0 %v5264
    %5381 = vmatpush.bf16.msra.mxu0 %v5260
    %5382 = vmatpush.bf16.msra.mxu0 %v5256
    %5383 = vmatpush.bf16.msra.mxu0 %v5252
    %5384 = vmatpush.bf16.msra.mxu0 %v5248
    %5385 = vmatpush.bf16.msra.mxu0 %v5244
    %5386 = vmatmul.bf16.gmra.mxu0 %v4954
    %v5387 = vpop.f32.mrf.mxu0
    %v5388 = vadd.f32 %v5375, %v5387
    %v5389 = vpop.f32.mrf.mxu0
    %5390 = vdwg.mxu0
    %5391 = vmatpush.bf16.msra.mxu0 %v5241
    %5392 = vmatpush.bf16.msra.mxu0 %v5237
    %5393 = vmatpush.bf16.msra.mxu0 %v5233
    %5394 = vmatpush.bf16.msra.mxu0 %v5229
    %5395 = vmatpush.bf16.msra.mxu0 %v5225
    %5396 = vmatpush.bf16.msra.mxu0 %v5221
    %5397 = vmatpush.bf16.msra.mxu0 %v5217
    %5398 = vmatpush.bf16.msra.mxu0 %v5213
    %5399 = vmatmul.bf16.gmra.mxu0 %v4953
    %v5400 = vpop.f32.mrf.mxu0
    %v5401 = vadd.f32 0.0, %v5400
    %v5402 = vpop.f32.mrf.mxu0
    %5403 = vdwg.mxu0
    %5404 = vmatpush.bf16.msra.mxu0 %v5273
    %5405 = vmatpush.bf16.msra.mxu0 %v5269
    %5406 = vmatpush.bf16.msra.mxu0 %v5265
    %5407 = vmatpush.bf16.msra.mxu0 %v5261
    %5408 = vmatpush.bf16.msra.mxu0 %v5257
    %5409 = vmatpush.bf16.msra.mxu0 %v5253
    %5410 = vmatpush.bf16.msra.mxu0 %v5249
    %5411 = vmatpush.bf16.msra.mxu0 %v5245
    %5412 = vmatmul.bf16.gmra.mxu0 %v4954
    %v5413 = vpop.f32.mrf.mxu0
    %v5414 = vadd.f32 %v5401, %v5413
    %v5415 = vpop.f32.mrf.mxu0
    %5416 = vdwg.mxu0
    %5417 = vmatpush.bf16.msra.mxu0 %v5242
    %5418 = vmatpush.bf16.msra.mxu0 %v5238
    %5419 = vmatpush.bf16.msra.mxu0 %v5234
    %5420 = vmatpush.bf16.msra.mxu0 %v5230
    %5421 = vmatpush.bf16.msra.mxu0 %v5226
    %5422 = vmatpush.bf16.msra.mxu0 %v5222
    %5423 = vmatpush.bf16.msra.mxu0 %v5218
    %5424 = vmatpush.bf16.msra.mxu0 %v5214
    %5425 = vmatmul.bf16.gmra.mxu0 %v4953
    %v5426 = vpop.f32.mrf.mxu0
    %v5427 = vadd.f32 0.0, %v5426
    %v5428 = vpop.f32.mrf.mxu0
    %5429 = vdwg.mxu0
    %5430 = vmatpush.bf16.msra.mxu0 %v5274
    %5431 = vmatpush.bf16.msra.mxu0 %v5270
    %5432 = vmatpush.bf16.msra.mxu0 %v5266
    %5433 = vmatpush.bf16.msra.mxu0 %v5262
    %5434 = vmatpush.bf16.msra.mxu0 %v5258
    %5435 = vmatpush.bf16.msra.mxu0 %v5254
    %5436 = vmatpush.bf16.msra.mxu0 %v5250
    %5437 = vmatpush.bf16.msra.mxu0 %v5246
    %5438 = vmatmul.bf16.gmra.mxu0 %v4954
    %v5439 = vpop.f32.mrf.mxu0
    %v5440 = vadd.f32 %v5427, %v5439
    %v5441 = vpop.f32.mrf.mxu0
    %5442 = vdwg.mxu0
    %v5443 = vld [vmem:[#allocation3] sm:$0x30]
    %v5444 = vld [vmem:[#allocation3 + $0x8] sm:$0x30]
    %v5445 = vld [vmem:[#allocation3 + $0x10] sm:$0x30]
    %v5447 = vrot.slane %v5362, 4
    %v5449 = vadd.f32 %v5443, %v5447
    %v5450 = vxor.u32 %v5449, 2147483648
    %v5451 = vmul.f32 %v5450, 1.442695
    %v5452 = vpow.pop %v5451
    %v5453 = vadd.f32 %v5452, 1.0
    %v5454 = vrcp.pop %v5453
    %v5455 = vmul.f32 %v5453, %v5454
    %v5456 = vsub.f32 1.0, %v5455
    %v5457 = vmul.f32 %v5454, %v5456
    %v5458 = vadd.f32 %v5454, %v5457
    %vm5459 = vweird.f32 %v5453
    %vm5460 = vweird.f32 %v5454
    %vm5461 = vmor %vm5459, %vm5460
    %v5462 = vsel %vm5461, %v5454, %v5458
    %v5463 = vand.u32 2147483647, %v5453
    %vm5464 = vcmp.eq.f32.partialorder %v5463, 8.507059e+37
    %v5465 = vand.u32 %v5453, 2147483648
    %v5466 = vor.u32 1.1754944e-38, %v5465
    %v5467 = vsel %vm5464, %v5466, %v5462
    %v5468 = vmul.f32 1.0, %v5467
    %v5470 = vrot.slane %v5388, 4
    %v5472 = vadd.f32 %v5444, %v5470
    %v5473 = vxor.u32 %v5472, 2147483648
    %v5474 = vmul.f32 %v5473, 1.442695
    %v5475 = vpow.pop %v5474
    %v5476 = vadd.f32 %v5475, 1.0
    %v5477 = vrcp.pop %v5476
    %v5478 = vmul.f32 %v5476, %v5477
    %v5479 = vsub.f32 1.0, %v5478
    %v5480 = vmul.f32 %v5477, %v5479
    %v5481 = vadd.f32 %v5477, %v5480
    %vm5482 = vweird.f32 %v5476
    %vm5483 = vweird.f32 %v5477
    %vm5484 = vmor %vm5482, %vm5483
    %v5485 = vsel %vm5484, %v5477, %v5481
    %v5486 = vand.u32 2147483647, %v5476
    %vm5487 = vcmp.eq.f32.partialorder %v5486, 8.507059e+37
    %v5488 = vand.u32 %v5476, 2147483648
    %v5489 = vor.u32 1.1754944e-38, %v5488
    %v5490 = vsel %vm5487, %v5489, %v5485
    %v5491 = vmul.f32 1.0, %v5490
    %v5493 = vrot.slane %v5414, 4
    %v5495 = vadd.f32 %v5445, %v5493
    %v5496 = vadd.f32 %v5440, %v3215
    %v5498 = vrot.slane %v5496, 4
    %v5500 = vmul.f32 %v5468, %v5498
    %v5501 = vadd.f32 %v5495, %v5500
    %v5502 = vtanh.pop %v5501
    %v5503 = vsub.f32 1.0, %v5491
    %v5504 = vmul.f32 %v5503, %v5502
    %v5505 = vrot.slane %v4739, 6
    %v5507 = vmul.f32 %v5491, %v5505
    %v5508 = vadd.f32 %v5504, %v5507
    %5509 = vst [vmem:[#allocation5 - $0x2] sm:$0x10] %v5508
    %5510 = vst [vmem:[#allocation5 + $0x7] sm:$0x20] %v5508
    %5512 = vst [vmem:[#allocation1] sm:$0xff] %v5508
    %s5513 = scalar_lea.vmem [#allocation1], 4
    %v5514 = vld [vmem:[%s5513] ss:$9 sm:$0xff]
    %s5515 = scalar_lea.vmem [#allocation1], 5
    %v5516 = vld [vmem:[%s5515] ss:$9 sm:$0xff]
    %v5517 = vperm.slane %v5514, 0
    %v5518 = vperm.slane %v5516, 0
    %v5521 = vrot.slane %v5517, 2
    %v5522 = vrot.slane %v5517, 4
    %v5523 = vrot.slane %v5517, 6
    %v5524 = vrot.slane %v5518, 2
    %v5525 = vrot.slane %v5518, 4
    %v5526 = vrot.slane %v5518, 6
    %v5533 = vmul.f32 %v3178, %v5517
    %v5534 = vmul.f32 %v3199, %v5521
    %v5535 = vmul.f32 %v3200, %v5522
    %v5536 = vmul.f32 %v3201, %v5523
    %v5537 = vmul.f32 %v3180, %v5517
    %v5538 = vmul.f32 %v3202, %v5518
    %v5539 = vmul.f32 %v3203, %v5524
    %v5540 = vmul.f32 %v3204, %v5525
    %v5541 = vmul.f32 %v3183, %v5526
    %v5542 = vmul.f32 %v3205, %v5518
    %5553 = vst [vmem:[#allocation1] ss:$4 sm:$0xff] %v5533
    %s5554 = scalar_lea.vmem [#allocation1], 1
    %5555 = vst [vmem:[%s5554] ss:$4 sm:$0xff] %v5534
    %s5556 = scalar_lea.vmem [#allocation1], 2
    %5557 = vst [vmem:[%s5556] ss:$4 sm:$0xff] %v5535
    %s5558 = scalar_lea.vmem [#allocation1], 3
    %5559 = vst [vmem:[%s5558] ss:$4 sm:$0xff] %v5536
    %s5560 = scalar_lea.vmem [#allocation1], 32
    %5561 = vst [vmem:[%s5560] ss:$4 sm:$0xff] %v5537
    %v5562 = vld.sshfl [vmem:[#allocation1] sm:$0xff pattern:$0x73625140]
    %v5563 = vld.sshfl [vmem:[#allocation1 + $0x20] sm:$0xff pattern:$0x73625140]
    %5564 = vst [vmem:[#allocation1] ss:$4 sm:$0xff] %v5538
    %5565 = vst [vmem:[%s5554] ss:$4 sm:$0xff] %v5539
    %5566 = vst [vmem:[%s5556] ss:$4 sm:$0xff] %v5540
    %5567 = vst [vmem:[%s5558] ss:$4 sm:$0xff] %v5541
    %5568 = vst [vmem:[%s5560] ss:$4 sm:$0xff] %v5542
    %v5569 = vld.sshfl [vmem:[#allocation1] sm:$0xff pattern:$0x73625140]
    %v5570 = vld.sshfl [vmem:[#allocation1 + $0x20] sm:$0xff pattern:$0x73625140]
    %5575 = vadd.xlane.f32.xlu0 %v5562
    %v5576 = vpop.xlane.xlu0 %5575
    %v5577 = vsel %vm3283, %v5563, 0.0
    %5578 = vadd.xlane.f32.xlu0 %v5577
    %v5579 = vpop.xlane.xlu0 %5578
    %5580 = vadd.xlane.f32.xlu0 %v5569
    %v5581 = vpop.xlane.xlu0 %5580
    %v5582 = vsel %vm3283, %v5570, 0.0
    %5583 = vadd.xlane.f32.xlu0 %v5582
    %v5584 = vpop.xlane.xlu0 %5583
    %v5589 = vperm.slane %v5576, %v3297
    %v5590 = vperm.slane %v5579, %v3299
    %v5591 = vsel %vm3301, %v5590, %v5589
    %v5592 = vperm.slane %v5581, %v3297
    %v5593 = vperm.slane %v5584, %v3299
    %v5594 = vsel %vm3301, %v5593, %v5592
    %v5595 = vsel %vm3306, %v5594, %v5591
    %v5597 = vsel %vm3309, %v5595, -inf
    %5598 = vmax.xlane.f32.xlu0 %v5597
    %v5599 = vpop.xlane.xlu0 %5598
    %v5601 = vperm.slane %v5599, 0
    %v5602 = vperm.slane %v5599, 1
    %v5605 = vsub.f32 %v5576, %v5601
    %v5606 = vsub.f32 %v5579, %v5601
    %v5607 = vsub.f32 %v5581, %v5602
    %v5608 = vsub.f32 %v5584, %v5602
    %v5609 = vmul.f32 %v5605, 1.442695
    %v5610 = vpow.pop %v5609
    %v5611 = vmul.f32 %v5606, 1.442695
    %v5612 = vpow.pop %v5611
    %v5613 = vmul.f32 %v5607, 1.442695
    %v5614 = vpow.pop %v5613
    %v5615 = vmul.f32 %v5608, 1.442695
    %v5616 = vpow.pop %v5615
    %5621 = vset.pattern.permute.xlu0 0
    %5622 = vperm.xlu0 %5621, %v5610
    %v5623 = vpop.permute.xlu0 %5622
    %5624 = vset.pattern.permute.xlu0 0
    %5625 = vperm.xlu0 %5624, %v5612
    %v5626 = vpop.permute.xlu0 %5625
    %5627 = vset.pattern.permute.xlu0 0
    %5628 = vperm.xlu0 %5627, %v5614
    %v5629 = vpop.permute.xlu0 %5628
    %5630 = vset.pattern.permute.xlu0 0
    %5631 = vperm.xlu0 %5630, %v5616
    %v5632 = vpop.permute.xlu0 %5631
    %v5633 = vperm.slane %v5623, %v3297
    %v5634 = vperm.slane %v5626, %v3299
    %v5635 = vsel %vm3301, %v5634, %v5633
    %v5636 = vperm.slane %v5629, %v3297
    %v5637 = vperm.slane %v5632, %v3299
    %v5638 = vsel %vm3301, %v5637, %v5636
    %v5639 = vsel %vm3306, %v5638, %v5635
    %v5641 = vsel %vm3309, %v5639, 0.0
    %5642 = vadd.xlane.f32.xlu0 %v5641
    %v5643 = vpop.xlane.xlu0 %5642
    %v5644 = vrcp.pop %v5643
    %v5646 = vperm.slane %v5644, 0
    %v5647 = vperm.slane %v5644, 1
    %v5650 = vmul.f32 %v5610, %v5646
    %v5651 = vmul.f32 %v5612, %v5646
    %v5652 = vmul.f32 %v5614, %v5647
    %v5653 = vmul.f32 %v5616, %v5647
    %5655 = vset.pattern.permute.xlu0 0
    %5656 = vperm.xlu0 %5655, %v5650
    %v5657 = vpop.permute.xlu0 %5656
    %5660 = vset.pattern.permute.xlu0 0
    %5661 = vperm.xlu0 %5660, %v5651
    %v5662 = vpop.permute.xlu0 %5661
    %5665 = vset.pattern.permute.xlu0 0
    %5666 = vperm.xlu0 %5665, %v5652
    %v5667 = vpop.permute.xlu0 %5666
    %5670 = vset.pattern.permute.xlu0 0
    %5671 = vperm.xlu0 %5670, %v5653
    %v5672 = vpop.permute.xlu0 %5671
    %5674 = vst [vmem:[#allocation1] ss:$4 sm:$0xff] %v3099
    %s5675 = scalar_lea.vmem [#allocation1], 1
    %5676 = vst [vmem:[%s5675] ss:$4 sm:$0xff] %v3189
    %s5677 = scalar_lea.vmem [#allocation1], 2
    %5678 = vst [vmem:[%s5677] ss:$4 sm:$0xff] %v3190
    %s5679 = scalar_lea.vmem [#allocation1], 3
    %5680 = vst [vmem:[%s5679] ss:$4 sm:$0xff] %v3191
    %s5681 = scalar_lea.vmem [#allocation1], 32
    %5682 = vst [vmem:[%s5681] ss:$4 sm:$0xff] %v3100
    %v5683 = vld.sshfl [vmem:[#allocation1] sm:$0xff pattern:$0x73625140]
    %v5684 = vld.sshfl [vmem:[#allocation1 + $0x20] sm:$0xff pattern:$0x73625140]
    %5685 = vst [vmem:[#allocation1] ss:$4 sm:$0xff] %v3192
    %5686 = vst [vmem:[%s5675] ss:$4 sm:$0xff] %v3193
    %5687 = vst [vmem:[%s5677] ss:$4 sm:$0xff] %v3194
    %5688 = vst [vmem:[%s5679] ss:$4 sm:$0xff] %v3101
    %5689 = vst [vmem:[%s5681] ss:$4 sm:$0xff] %v3195
    %v5690 = vld.sshfl [vmem:[#allocation1] sm:$0xff pattern:$0x73625140]
    %v5691 = vld.sshfl [vmem:[#allocation1 + $0x20] sm:$0xff pattern:$0x73625140]
    %v5696 = vmul.f32 %v5657, %v5683
    %v5697 = vmul.f32 %v5662, %v5684
    %v5698 = vmul.f32 %v5667, %v5690
    %v5699 = vmul.f32 %v5672, %v5691
    %v5700 = vsel %vm3283, %v5697, 0.0
    %v5701 = vadd.f32 %v5696, %v5700
    %v5702 = vrot.slane %v5701, 4
    %v5703 = vadd.f32 %v5701, %v5702
    %v5704 = vrot.slane %v5703, 2
    %v5705 = vadd.f32 %v5703, %v5704
    %v5706 = vrot.slane %v5705, 1
    %v5707 = vadd.f32 %v5705, %v5706
    %v5708 = vsel %vm3283, %v5699, 0.0
    %v5709 = vadd.f32 %v5698, %v5708
    %v5710 = vrot.slane %v5709, 4
    %v5711 = vadd.f32 %v5709, %v5710
    %v5712 = vrot.slane %v5711, 2
    %v5713 = vadd.f32 %v5711, %v5712
    %v5714 = vrot.slane %v5713, 1
    %v5715 = vadd.f32 %v5713, %v5714
    %v5718 = vsel %vm3306, %v5715, %v5707
    %v5720 = vrot.slane %v5508, 4
    %v5722 = vpack.c.bf16 %v5718, %v5718
    %v5723 = vpack.c.bf16 %v5720, %v5720
    %v5724 = vld [vmem:[%s7] sm:$0xff]
    %v5725 = vld [vmem:[%s7 + $0x8] sm:$0xff]
    %v5726 = vld [vmem:[%s7 + $0x10] sm:$0xff]
    %v5727 = vld [vmem:[%s7 + $0x18] sm:$0xff]
    %v5728 = vld [vmem:[%s7 + $0x20] sm:$0xff]
    %v5729 = vld [vmem:[%s7 + $0x28] sm:$0xff]
    %v5730 = vld [vmem:[%s7 + $0x30] sm:$0xff]
    %v5731 = vld [vmem:[%s7 + $0x38] sm:$0xff]
    %v5732 = vld [vmem:[%s7 + $0x40] sm:$0xff]
    %v5733 = vld [vmem:[%s7 + $0x48] sm:$0xff]
    %v5734 = vld [vmem:[%s7 + $0x50] sm:$0xff]
    %v5735 = vld [vmem:[%s7 + $0x58] sm:$0xff]
    %v5736 = vld [vmem:[%s7 + $0x60] sm:$0xff]
    %v5737 = vld [vmem:[%s7 + $0x68] sm:$0xff]
    %v5738 = vld [vmem:[%s7 + $0x70] sm:$0xff]
    %v5739 = vld [vmem:[%s7 + $0x78] sm:$0xff]
    %v5740 = vld [vmem:[%s7 + $0x80] sm:$0xff]
    %v5741 = vld [vmem:[%s7 + $0x88] sm:$0xff]
    %v5742 = vld [vmem:[%s7 + $0x90] sm:$0xff]
    %v5743 = vld [vmem:[%s7 + $0x98] sm:$0xff]
    %v5744 = vld [vmem:[%s7 + $0xa0] sm:$0xff]
    %v5745 = vld [vmem:[%s7 + $0xa8] sm:$0xff]
    %v5746 = vld [vmem:[%s7 + $0xb0] sm:$0xff]
    %v5747 = vld [vmem:[%s7 + $0xb8] sm:$0xff]
    %v5748 = vld [vmem:[%s7 + $0xc0] sm:$0xff]
    %v5749 = vld [vmem:[%s7 + $0xc8] sm:$0xff]
    %v5750 = vld [vmem:[%s7 + $0xd0] sm:$0xff]
    %v5751 = vld [vmem:[%s7 + $0xd8] sm:$0xff]
    %v5752 = vld [vmem:[%s7 + $0xe0] sm:$0xff]
    %v5753 = vld [vmem:[%s7 + $0xe8] sm:$0xff]
    %v5754 = vld [vmem:[%s7 + $0xf0] sm:$0xff]
    %v5755 = vld [vmem:[%s7 + $0xf8] sm:$0xff]
    %v5756 = vld [vmem:[%s7 + $0x100] sm:$0xff]
    %v5757 = vld [vmem:[%s7 + $0x108] sm:$0xff]
    %v5758 = vld [vmem:[%s7 + $0x110] sm:$0xff]
    %v5759 = vld [vmem:[%s7 + $0x118] sm:$0xff]
    %v5760 = vld [vmem:[%s7 + $0x120] sm:$0xff]
    %v5761 = vld [vmem:[%s7 + $0x128] sm:$0xff]
    %v5762 = vld [vmem:[%s7 + $0x130] sm:$0xff]
    %v5763 = vld [vmem:[%s7 + $0x138] sm:$0xff]
    %v5764 = vld [vmem:[%s7 + $0x140] sm:$0xff]
    %v5765 = vld [vmem:[%s7 + $0x148] sm:$0xff]
    %v5766 = vld [vmem:[%s7 + $0x150] sm:$0xff]
    %v5767 = vld [vmem:[%s7 + $0x158] sm:$0xff]
    %v5768 = vld [vmem:[%s7 + $0x160] sm:$0xff]
    %v5769 = vld [vmem:[%s7 + $0x168] sm:$0xff]
    %v5770 = vld [vmem:[%s7 + $0x170] sm:$0xff]
    %v5771 = vld [vmem:[%s7 + $0x178] sm:$0xff]
    %v5772 = vld [vmem:[%s7 + $0x180] sm:$0xff]
    %v5773 = vld [vmem:[%s7 + $0x188] sm:$0xff]
    %v5774 = vld [vmem:[%s7 + $0x190] sm:$0xff]
    %v5775 = vld [vmem:[%s7 + $0x198] sm:$0xff]
    %v5776 = vld [vmem:[%s7 + $0x1a0] sm:$0xff]
    %v5777 = vld [vmem:[%s7 + $0x1a8] sm:$0xff]
    %v5778 = vld [vmem:[%s7 + $0x1b0] sm:$0xff]
    %v5779 = vld [vmem:[%s7 + $0x1b8] sm:$0xff]
    %v5780 = vld [vmem:[%s7 + $0x1c0] sm:$0xff]
    %v5781 = vld [vmem:[%s7 + $0x1c8] sm:$0xff]
    %v5782 = vld [vmem:[%s7 + $0x1d0] sm:$0xff]
    %v5783 = vld [vmem:[%s7 + $0x1d8] sm:$0xff]
    %v5784 = vld [vmem:[%s7 + $0x1e0] sm:$0xff]
    %v5785 = vld [vmem:[%s7 + $0x1e8] sm:$0xff]
    %v5786 = vld [vmem:[%s7 + $0x1f0] sm:$0xff]
    %v5787 = vld [vmem:[%s7 + $0x1f8] sm:$0xff]
    %v5852 = vunpack.c.l.b16 %v5724
    %v5853 = vunpack.c.h.b16 %v5724
    %v5854 = vunpack.c.l.b16 %v5725
    %v5855 = vunpack.c.h.b16 %v5725
    %v5856 = vunpack.c.l.b16 %v5726
    %v5857 = vunpack.c.h.b16 %v5726
    %v5858 = vunpack.c.l.b16 %v5727
    %v5859 = vunpack.c.h.b16 %v5727
    %v5860 = vunpack.c.l.b16 %v5728
    %v5861 = vunpack.c.h.b16 %v5728
    %v5862 = vunpack.c.l.b16 %v5729
    %v5863 = vunpack.c.h.b16 %v5729
    %v5864 = vunpack.c.l.b16 %v5730
    %v5865 = vunpack.c.h.b16 %v5730
    %v5866 = vunpack.c.l.b16 %v5731
    %v5867 = vunpack.c.h.b16 %v5731
    %v5868 = vunpack.c.l.b16 %v5732
    %v5869 = vunpack.c.h.b16 %v5732
    %v5870 = vunpack.c.l.b16 %v5733
    %v5871 = vunpack.c.h.b16 %v5733
    %v5872 = vunpack.c.l.b16 %v5734
    %v5873 = vunpack.c.h.b16 %v5734
    %v5874 = vunpack.c.l.b16 %v5735
    %v5875 = vunpack.c.h.b16 %v5735
    %v5876 = vunpack.c.l.b16 %v5736
    %v5877 = vunpack.c.h.b16 %v5736
    %v5878 = vunpack.c.l.b16 %v5737
    %v5879 = vunpack.c.h.b16 %v5737
    %v5880 = vunpack.c.l.b16 %v5738
    %v5881 = vunpack.c.h.b16 %v5738
    %v5882 = vunpack.c.l.b16 %v5739
    %v5883 = vunpack.c.h.b16 %v5739
    %v5884 = vunpack.c.l.b16 %v5740
    %v5885 = vunpack.c.h.b16 %v5740
    %v5886 = vunpack.c.l.b16 %v5741
    %v5887 = vunpack.c.h.b16 %v5741
    %v5888 = vunpack.c.l.b16 %v5742
    %v5889 = vunpack.c.h.b16 %v5742
    %v5890 = vunpack.c.l.b16 %v5743
    %v5891 = vunpack.c.h.b16 %v5743
    %v5892 = vunpack.c.l.b16 %v5744
    %v5893 = vunpack.c.h.b16 %v5744
    %v5894 = vunpack.c.l.b16 %v5745
    %v5895 = vunpack.c.h.b16 %v5745
    %v5896 = vunpack.c.l.b16 %v5746
    %v5897 = vunpack.c.h.b16 %v5746
    %v5898 = vunpack.c.l.b16 %v5747
    %v5899 = vunpack.c.h.b16 %v5747
    %v5900 = vunpack.c.l.b16 %v5748
    %v5901 = vunpack.c.h.b16 %v5748
    %v5902 = vunpack.c.l.b16 %v5749
    %v5903 = vunpack.c.h.b16 %v5749
    %v5904 = vunpack.c.l.b16 %v5750
    %v5905 = vunpack.c.h.b16 %v5750
    %v5906 = vunpack.c.l.b16 %v5751
    %v5907 = vunpack.c.h.b16 %v5751
    %v5908 = vunpack.c.l.b16 %v5752
    %v5909 = vunpack.c.h.b16 %v5752
    %v5910 = vunpack.c.l.b16 %v5753
    %v5911 = vunpack.c.h.b16 %v5753
    %v5912 = vunpack.c.l.b16 %v5754
    %v5913 = vunpack.c.h.b16 %v5754
    %v5914 = vunpack.c.l.b16 %v5755
    %v5915 = vunpack.c.h.b16 %v5755
    %v5916 = vunpack.c.l.b16 %v5756
    %v5917 = vunpack.c.h.b16 %v5756
    %v5918 = vunpack.c.l.b16 %v5757
    %v5919 = vunpack.c.h.b16 %v5757
    %v5920 = vunpack.c.l.b16 %v5758
    %v5921 = vunpack.c.h.b16 %v5758
    %v5922 = vunpack.c.l.b16 %v5759
    %v5923 = vunpack.c.h.b16 %v5759
    %v5924 = vunpack.c.l.b16 %v5760
    %v5925 = vunpack.c.h.b16 %v5760
    %v5926 = vunpack.c.l.b16 %v5761
    %v5927 = vunpack.c.h.b16 %v5761
    %v5928 = vunpack.c.l.b16 %v5762
    %v5929 = vunpack.c.h.b16 %v5762
    %v5930 = vunpack.c.l.b16 %v5763
    %v5931 = vunpack.c.h.b16 %v5763
    %v5932 = vunpack.c.l.b16 %v5764
    %v5933 = vunpack.c.h.b16 %v5764
    %v5934 = vunpack.c.l.b16 %v5765
    %v5935 = vunpack.c.h.b16 %v5765
    %v5936 = vunpack.c.l.b16 %v5766
    %v5937 = vunpack.c.h.b16 %v5766
    %v5938 = vunpack.c.l.b16 %v5767
    %v5939 = vunpack.c.h.b16 %v5767
    %v5940 = vunpack.c.l.b16 %v5768
    %v5941 = vunpack.c.h.b16 %v5768
    %v5942 = vunpack.c.l.b16 %v5769
    %v5943 = vunpack.c.h.b16 %v5769
    %v5944 = vunpack.c.l.b16 %v5770
    %v5945 = vunpack.c.h.b16 %v5770
    %v5946 = vunpack.c.l.b16 %v5771
    %v5947 = vunpack.c.h.b16 %v5771
    %v5948 = vunpack.c.l.b16 %v5772
    %v5949 = vunpack.c.h.b16 %v5772
    %v5950 = vunpack.c.l.b16 %v5773
    %v5951 = vunpack.c.h.b16 %v5773
    %v5952 = vunpack.c.l.b16 %v5774
    %v5953 = vunpack.c.h.b16 %v5774
    %v5954 = vunpack.c.l.b16 %v5775
    %v5955 = vunpack.c.h.b16 %v5775
    %v5956 = vunpack.c.l.b16 %v5776
    %v5957 = vunpack.c.h.b16 %v5776
    %v5958 = vunpack.c.l.b16 %v5777
    %v5959 = vunpack.c.h.b16 %v5777
    %v5960 = vunpack.c.l.b16 %v5778
    %v5961 = vunpack.c.h.b16 %v5778
    %v5962 = vunpack.c.l.b16 %v5779
    %v5963 = vunpack.c.h.b16 %v5779
    %v5964 = vunpack.c.l.b16 %v5780
    %v5965 = vunpack.c.h.b16 %v5780
    %v5966 = vunpack.c.l.b16 %v5781
    %v5967 = vunpack.c.h.b16 %v5781
    %v5968 = vunpack.c.l.b16 %v5782
    %v5969 = vunpack.c.h.b16 %v5782
    %v5970 = vunpack.c.l.b16 %v5783
    %v5971 = vunpack.c.h.b16 %v5783
    %v5972 = vunpack.c.l.b16 %v5784
    %v5973 = vunpack.c.h.b16 %v5784
    %v5974 = vunpack.c.l.b16 %v5785
    %v5975 = vunpack.c.h.b16 %v5785
    %v5976 = vunpack.c.l.b16 %v5786
    %v5977 = vunpack.c.h.b16 %v5786
    %v5978 = vunpack.c.l.b16 %v5787
    %v5979 = vunpack.c.h.b16 %v5787
    %v5980 = vpack.c.b16 %v5856, %v5852
    %v5981 = vpack.c.b16 %v5857, %v5853
    %v5982 = vpack.c.b16 %v5858, %v5854
    %v5983 = vpack.c.b16 %v5859, %v5855
    %v5984 = vpack.c.b16 %v5864, %v5860
    %v5985 = vpack.c.b16 %v5865, %v5861
    %v5986 = vpack.c.b16 %v5866, %v5862
    %v5987 = vpack.c.b16 %v5867, %v5863
    %v5988 = vpack.c.b16 %v5872, %v5868
    %v5989 = vpack.c.b16 %v5873, %v5869
    %v5990 = vpack.c.b16 %v5874, %v5870
    %v5991 = vpack.c.b16 %v5875, %v5871
    %v5992 = vpack.c.b16 %v5880, %v5876
    %v5993 = vpack.c.b16 %v5881, %v5877
    %v5994 = vpack.c.b16 %v5882, %v5878
    %v5995 = vpack.c.b16 %v5883, %v5879
    %v5996 = vpack.c.b16 %v5888, %v5884
    %v5997 = vpack.c.b16 %v5889, %v5885
    %v5998 = vpack.c.b16 %v5890, %v5886
    %v5999 = vpack.c.b16 %v5891, %v5887
    %v6000 = vpack.c.b16 %v5896, %v5892
    %v6001 = vpack.c.b16 %v5897, %v5893
    %v6002 = vpack.c.b16 %v5898, %v5894
    %v6003 = vpack.c.b16 %v5899, %v5895
    %v6004 = vpack.c.b16 %v5904, %v5900
    %v6005 = vpack.c.b16 %v5905, %v5901
    %v6006 = vpack.c.b16 %v5906, %v5902
    %v6007 = vpack.c.b16 %v5907, %v5903
    %v6008 = vpack.c.b16 %v5912, %v5908
    %v6009 = vpack.c.b16 %v5913, %v5909
    %v6010 = vpack.c.b16 %v5914, %v5910
    %v6011 = vpack.c.b16 %v5915, %v5911
    %v6012 = vpack.c.b16 %v5920, %v5916
    %v6013 = vpack.c.b16 %v5921, %v5917
    %v6014 = vpack.c.b16 %v5922, %v5918
    %v6015 = vpack.c.b16 %v5923, %v5919
    %v6016 = vpack.c.b16 %v5928, %v5924
    %v6017 = vpack.c.b16 %v5929, %v5925
    %v6018 = vpack.c.b16 %v5930, %v5926
    %v6019 = vpack.c.b16 %v5931, %v5927
    %v6020 = vpack.c.b16 %v5936, %v5932
    %v6021 = vpack.c.b16 %v5937, %v5933
    %v6022 = vpack.c.b16 %v5938, %v5934
    %v6023 = vpack.c.b16 %v5939, %v5935
    %v6024 = vpack.c.b16 %v5944, %v5940
    %v6025 = vpack.c.b16 %v5945, %v5941
    %v6026 = vpack.c.b16 %v5946, %v5942
    %v6027 = vpack.c.b16 %v5947, %v5943
    %v6028 = vpack.c.b16 %v5952, %v5948
    %v6029 = vpack.c.b16 %v5953, %v5949
    %v6030 = vpack.c.b16 %v5954, %v5950
    %v6031 = vpack.c.b16 %v5955, %v5951
    %v6032 = vpack.c.b16 %v5960, %v5956
    %v6033 = vpack.c.b16 %v5961, %v5957
    %v6034 = vpack.c.b16 %v5962, %v5958
    %v6035 = vpack.c.b16 %v5963, %v5959
    %v6036 = vpack.c.b16 %v5968, %v5964
    %v6037 = vpack.c.b16 %v5969, %v5965
    %v6038 = vpack.c.b16 %v5970, %v5966
    %v6039 = vpack.c.b16 %v5971, %v5967
    %v6040 = vpack.c.b16 %v5976, %v5972
    %v6041 = vpack.c.b16 %v5977, %v5973
    %v6042 = vpack.c.b16 %v5978, %v5974
    %v6043 = vpack.c.b16 %v5979, %v5975
    %6108 = vmatpush.bf16.msra.mxu0 %v6008
    %6109 = vmatpush.bf16.msra.mxu0 %v6004
    %6110 = vmatpush.bf16.msra.mxu0 %v6000
    %6111 = vmatpush.bf16.msra.mxu0 %v5996
    %6112 = vmatpush.bf16.msra.mxu0 %v5992
    %6113 = vmatpush.bf16.msra.mxu0 %v5988
    %6114 = vmatpush.bf16.msra.mxu0 %v5984
    %6115 = vmatpush.bf16.msra.mxu0 %v5980
    %6116 = vmatmul.bf16.gmra.mxu0 %v5722
    %v6117 = vpop.f32.mrf.mxu0
    %v6118 = vadd.f32 0.0, %v6117
    %v6119 = vpop.f32.mrf.mxu0
    %6120 = vdwg.mxu0
    %6121 = vmatpush.bf16.msra.mxu0 %v6040
    %6122 = vmatpush.bf16.msra.mxu0 %v6036
    %6123 = vmatpush.bf16.msra.mxu0 %v6032
    %6124 = vmatpush.bf16.msra.mxu0 %v6028
    %6125 = vmatpush.bf16.msra.mxu0 %v6024
    %6126 = vmatpush.bf16.msra.mxu0 %v6020
    %6127 = vmatpush.bf16.msra.mxu0 %v6016
    %6128 = vmatpush.bf16.msra.mxu0 %v6012
    %6129 = vmatmul.bf16.gmra.mxu0 %v5723
    %v6130 = vpop.f32.mrf.mxu0
    %v6131 = vadd.f32 %v6118, %v6130
    %v6132 = vpop.f32.mrf.mxu0
    %6133 = vdwg.mxu0
    %6134 = vmatpush.bf16.msra.mxu0 %v6009
    %6135 = vmatpush.bf16.msra.mxu0 %v6005
    %6136 = vmatpush.bf16.msra.mxu0 %v6001
    %6137 = vmatpush.bf16.msra.mxu0 %v5997
    %6138 = vmatpush.bf16.msra.mxu0 %v5993
    %6139 = vmatpush.bf16.msra.mxu0 %v5989
    %6140 = vmatpush.bf16.msra.mxu0 %v5985
    %6141 = vmatpush.bf16.msra.mxu0 %v5981
    %6142 = vmatmul.bf16.gmra.mxu0 %v5722
    %v6143 = vpop.f32.mrf.mxu0
    %v6144 = vadd.f32 0.0, %v6143
    %v6145 = vpop.f32.mrf.mxu0
    %6146 = vdwg.mxu0
    %6147 = vmatpush.bf16.msra.mxu0 %v6041
    %6148 = vmatpush.bf16.msra.mxu0 %v6037
    %6149 = vmatpush.bf16.msra.mxu0 %v6033
    %6150 = vmatpush.bf16.msra.mxu0 %v6029
    %6151 = vmatpush.bf16.msra.mxu0 %v6025
    %6152 = vmatpush.bf16.msra.mxu0 %v6021
    %6153 = vmatpush.bf16.msra.mxu0 %v6017
    %6154 = vmatpush.bf16.msra.mxu0 %v6013
    %6155 = vmatmul.bf16.gmra.mxu0 %v5723
    %v6156 = vpop.f32.mrf.mxu0
    %v6157 = vadd.f32 %v6144, %v6156
    %v6158 = vpop.f32.mrf.mxu0
    %6159 = vdwg.mxu0
    %6160 = vmatpush.bf16.msra.mxu0 %v6010
    %6161 = vmatpush.bf16.msra.mxu0 %v6006
    %6162 = vmatpush.bf16.msra.mxu0 %v6002
    %6163 = vmatpush.bf16.msra.mxu0 %v5998
    %6164 = vmatpush.bf16.msra.mxu0 %v5994
    %6165 = vmatpush.bf16.msra.mxu0 %v5990
    %6166 = vmatpush.bf16.msra.mxu0 %v5986
    %6167 = vmatpush.bf16.msra.mxu0 %v5982
    %6168 = vmatmul.bf16.gmra.mxu0 %v5722
    %v6169 = vpop.f32.mrf.mxu0
    %v6170 = vadd.f32 0.0, %v6169
    %v6171 = vpop.f32.mrf.mxu0
    %6172 = vdwg.mxu0
    %6173 = vmatpush.bf16.msra.mxu0 %v6042
    %6174 = vmatpush.bf16.msra.mxu0 %v6038
    %6175 = vmatpush.bf16.msra.mxu0 %v6034
    %6176 = vmatpush.bf16.msra.mxu0 %v6030
    %6177 = vmatpush.bf16.msra.mxu0 %v6026
    %6178 = vmatpush.bf16.msra.mxu0 %v6022
    %6179 = vmatpush.bf16.msra.mxu0 %v6018
    %6180 = vmatpush.bf16.msra.mxu0 %v6014
    %6181 = vmatmul.bf16.gmra.mxu0 %v5723
    %v6182 = vpop.f32.mrf.mxu0
    %v6183 = vadd.f32 %v6170, %v6182
    %v6184 = vpop.f32.mrf.mxu0
    %6185 = vdwg.mxu0
    %6186 = vmatpush.bf16.msra.mxu0 %v6011
    %6187 = vmatpush.bf16.msra.mxu0 %v6007
    %6188 = vmatpush.bf16.msra.mxu0 %v6003
    %6189 = vmatpush.bf16.msra.mxu0 %v5999
    %6190 = vmatpush.bf16.msra.mxu0 %v5995
    %6191 = vmatpush.bf16.msra.mxu0 %v5991
    %6192 = vmatpush.bf16.msra.mxu0 %v5987
    %6193 = vmatpush.bf16.msra.mxu0 %v5983
    %6194 = vmatmul.bf16.gmra.mxu0 %v5722
    %v6195 = vpop.f32.mrf.mxu0
    %v6196 = vadd.f32 0.0, %v6195
    %v6197 = vpop.f32.mrf.mxu0
    %6198 = vdwg.mxu0
    %6199 = vmatpush.bf16.msra.mxu0 %v6043
    %6200 = vmatpush.bf16.msra.mxu0 %v6039
    %6201 = vmatpush.bf16.msra.mxu0 %v6035
    %6202 = vmatpush.bf16.msra.mxu0 %v6031
    %6203 = vmatpush.bf16.msra.mxu0 %v6027
    %6204 = vmatpush.bf16.msra.mxu0 %v6023
    %6205 = vmatpush.bf16.msra.mxu0 %v6019
    %6206 = vmatpush.bf16.msra.mxu0 %v6015
    %6207 = vmatmul.bf16.gmra.mxu0 %v5723
    %v6208 = vpop.f32.mrf.mxu0
    %v6209 = vadd.f32 %v6196, %v6208
    %v6210 = vpop.f32.mrf.mxu0
    %6211 = vdwg.mxu0
    %v6212 = vld [vmem:[#allocation3] sm:$0xc0]
    %v6213 = vld [vmem:[#allocation3 + $0x8] sm:$0xc0]
    %v6214 = vld [vmem:[#allocation3 + $0x10] sm:$0xc0]
    %v6216 = vrot.slane %v6131, 2
    %v6218 = vadd.f32 %v6212, %v6216
    %v6219 = vxor.u32 %v6218, 2147483648
    %v6220 = vmul.f32 %v6219, 1.442695
    %v6221 = vpow.pop %v6220
    %v6222 = vadd.f32 %v6221, 1.0
    %v6223 = vrcp.pop %v6222
    %v6224 = vmul.f32 %v6222, %v6223
    %v6225 = vsub.f32 1.0, %v6224
    %v6226 = vmul.f32 %v6223, %v6225
    %v6227 = vadd.f32 %v6223, %v6226
    %vm6228 = vweird.f32 %v6222
    %vm6229 = vweird.f32 %v6223
    %vm6230 = vmor %vm6228, %vm6229
    %v6231 = vsel %vm6230, %v6223, %v6227
    %v6232 = vand.u32 2147483647, %v6222
    %vm6233 = vcmp.eq.f32.partialorder %v6232, 8.507059e+37
    %v6234 = vand.u32 %v6222, 2147483648
    %v6235 = vor.u32 1.1754944e-38, %v6234
    %v6236 = vsel %vm6233, %v6235, %v6231
    %v6237 = vmul.f32 1.0, %v6236
    %v6239 = vrot.slane %v6157, 2
    %v6241 = vadd.f32 %v6213, %v6239
    %v6242 = vxor.u32 %v6241, 2147483648
    %v6243 = vmul.f32 %v6242, 1.442695
    %v6244 = vpow.pop %v6243
    %v6245 = vadd.f32 %v6244, 1.0
    %v6246 = vrcp.pop %v6245
    %v6247 = vmul.f32 %v6245, %v6246
    %v6248 = vsub.f32 1.0, %v6247
    %v6249 = vmul.f32 %v6246, %v6248
    %v6250 = vadd.f32 %v6246, %v6249
    %vm6251 = vweird.f32 %v6245
    %vm6252 = vweird.f32 %v6246
    %vm6253 = vmor %vm6251, %vm6252
    %v6254 = vsel %vm6253, %v6246, %v6250
    %v6255 = vand.u32 2147483647, %v6245
    %vm6256 = vcmp.eq.f32.partialorder %v6255, 8.507059e+37
    %v6257 = vand.u32 %v6245, 2147483648
    %v6258 = vor.u32 1.1754944e-38, %v6257
    %v6259 = vsel %vm6256, %v6258, %v6254
    %v6260 = vmul.f32 1.0, %v6259
    %v6262 = vrot.slane %v6183, 2
    %v6264 = vadd.f32 %v6214, %v6262
    %v6265 = vadd.f32 %v6209, %v3215
    %v6267 = vrot.slane %v6265, 2
    %v6269 = vmul.f32 %v6237, %v6267
    %v6270 = vadd.f32 %v6264, %v6269
    %v6271 = vtanh.pop %v6270
    %v6272 = vsub.f32 1.0, %v6260
    %v6273 = vmul.f32 %v6272, %v6271
    %v6274 = vrot.slane %v5508, 6
    %v6276 = vmul.f32 %v6260, %v6274
    %v6277 = vadd.f32 %v6273, %v6276
    %6278 = vst [vmem:[#allocation5 - $0x3] sm:$0x40] %v6277
    %6279 = vst [vmem:[#allocation5 + $0x6] sm:$0x80] %v6277
    %6281 = vst [vmem:[#allocation1] sm:$0xff] %v6277
    %s6282 = scalar_lea.vmem [#allocation1], 6
    %v6283 = vld [vmem:[%s6282] ss:$9 sm:$0xff]
    %s6284 = scalar_lea.vmem [#allocation1], 7
    %v6285 = vld [vmem:[%s6284] ss:$9 sm:$0xff]
    %v6286 = vperm.slane %v6283, 0
    %v6287 = vperm.slane %v6285, 0
    %v6290 = vrot.slane %v6286, 2
    %v6291 = vrot.slane %v6286, 4
    %v6292 = vrot.slane %v6286, 6
    %v6293 = vrot.slane %v6287, 2
    %v6294 = vrot.slane %v6287, 4
    %v6295 = vrot.slane %v6287, 6
    %v6302 = vmul.f32 %v3178, %v6286
    %v6303 = vmul.f32 %v3199, %v6290
    %v6304 = vmul.f32 %v3200, %v6291
    %v6305 = vmul.f32 %v3201, %v6292
    %v6306 = vmul.f32 %v3180, %v6286
    %v6307 = vmul.f32 %v3202, %v6287
    %v6308 = vmul.f32 %v3203, %v6293
    %v6309 = vmul.f32 %v3204, %v6294
    %v6310 = vmul.f32 %v3183, %v6295
    %v6311 = vmul.f32 %v3205, %v6287
    %6322 = vst [vmem:[#allocation1] ss:$4 sm:$0xff] %v6302
    %s6323 = scalar_lea.vmem [#allocation1], 1
    %6324 = vst [vmem:[%s6323] ss:$4 sm:$0xff] %v6303
    %s6325 = scalar_lea.vmem [#allocation1], 2
    %6326 = vst [vmem:[%s6325] ss:$4 sm:$0xff] %v6304
    %s6327 = scalar_lea.vmem [#allocation1], 3
    %6328 = vst [vmem:[%s6327] ss:$4 sm:$0xff] %v6305
    %s6329 = scalar_lea.vmem [#allocation1], 32
    %6330 = vst [vmem:[%s6329] ss:$4 sm:$0xff] %v6306
    %v6331 = vld.sshfl [vmem:[#allocation1] sm:$0xff pattern:$0x73625140]
    %v6332 = vld.sshfl [vmem:[#allocation1 + $0x20] sm:$0xff pattern:$0x73625140]
    %6333 = vst [vmem:[#allocation1] ss:$4 sm:$0xff] %v6307
    %6334 = vst [vmem:[%s6323] ss:$4 sm:$0xff] %v6308
    %6335 = vst [vmem:[%s6325] ss:$4 sm:$0xff] %v6309
    %6336 = vst [vmem:[%s6327] ss:$4 sm:$0xff] %v6310
    %6337 = vst [vmem:[%s6329] ss:$4 sm:$0xff] %v6311
    %v6338 = vld.sshfl [vmem:[#allocation1] sm:$0xff pattern:$0x73625140]
    %v6339 = vld.sshfl [vmem:[#allocation1 + $0x20] sm:$0xff pattern:$0x73625140]
    %6344 = vadd.xlane.f32.xlu0 %v6331
    %v6345 = vpop.xlane.xlu0 %6344
    %v6346 = vsel %vm3283, %v6332, 0.0
    %6347 = vadd.xlane.f32.xlu0 %v6346
    %v6348 = vpop.xlane.xlu0 %6347
    %6349 = vadd.xlane.f32.xlu0 %v6338
    %v6350 = vpop.xlane.xlu0 %6349
    %v6351 = vsel %vm3283, %v6339, 0.0
    %6352 = vadd.xlane.f32.xlu0 %v6351
    %v6353 = vpop.xlane.xlu0 %6352
    %v6358 = vperm.slane %v6345, %v3297
    %v6359 = vperm.slane %v6348, %v3299
    %v6360 = vsel %vm3301, %v6359, %v6358
    %v6361 = vperm.slane %v6350, %v3297
    %v6362 = vperm.slane %v6353, %v3299
    %v6363 = vsel %vm3301, %v6362, %v6361
    %v6364 = vsel %vm3306, %v6363, %v6360
    %v6366 = vsel %vm3309, %v6364, -inf
    %6367 = vmax.xlane.f32.xlu0 %v6366
    %v6368 = vpop.xlane.xlu0 %6367
    %v6370 = vperm.slane %v6368, 0
    %v6371 = vperm.slane %v6368, 1
    %v6374 = vsub.f32 %v6345, %v6370
    %v6375 = vsub.f32 %v6348, %v6370
    %v6376 = vsub.f32 %v6350, %v6371
    %v6377 = vsub.f32 %v6353, %v6371
    %v6378 = vmul.f32 %v6374, 1.442695
    %v6379 = vpow.pop %v6378
    %v6380 = vmul.f32 %v6375, 1.442695
    %v6381 = vpow.pop %v6380
    %v6382 = vmul.f32 %v6376, 1.442695
    %v6383 = vpow.pop %v6382
    %v6384 = vmul.f32 %v6377, 1.442695
    %v6385 = vpow.pop %v6384
    %6390 = vset.pattern.permute.xlu0 0
    %6391 = vperm.xlu0 %6390, %v6379
    %v6392 = vpop.permute.xlu0 %6391
    %6393 = vset.pattern.permute.xlu0 0
    %6394 = vperm.xlu0 %6393, %v6381
    %v6395 = vpop.permute.xlu0 %6394
    %6396 = vset.pattern.permute.xlu0 0
    %6397 = vperm.xlu0 %6396, %v6383
    %v6398 = vpop.permute.xlu0 %6397
    %6399 = vset.pattern.permute.xlu0 0
    %6400 = vperm.xlu0 %6399, %v6385
    %v6401 = vpop.permute.xlu0 %6400
    %v6402 = vperm.slane %v6392, %v3297
    %v6403 = vperm.slane %v6395, %v3299
    %v6404 = vsel %vm3301, %v6403, %v6402
    %v6405 = vperm.slane %v6398, %v3297
    %v6406 = vperm.slane %v6401, %v3299
    %v6407 = vsel %vm3301, %v6406, %v6405
    %v6408 = vsel %vm3306, %v6407, %v6404
    %v6410 = vsel %vm3309, %v6408, 0.0
    %6411 = vadd.xlane.f32.xlu0 %v6410
    %v6412 = vpop.xlane.xlu0 %6411
    %v6413 = vrcp.pop %v6412
    %v6415 = vperm.slane %v6413, 0
    %v6416 = vperm.slane %v6413, 1
    %v6419 = vmul.f32 %v6379, %v6415
    %v6420 = vmul.f32 %v6381, %v6415
    %v6421 = vmul.f32 %v6383, %v6416
    %v6422 = vmul.f32 %v6385, %v6416
    %6424 = vset.pattern.permute.xlu0 0
    %6425 = vperm.xlu0 %6424, %v6419
    %v6426 = vpop.permute.xlu0 %6425
    %6429 = vset.pattern.permute.xlu0 0
    %6430 = vperm.xlu0 %6429, %v6420
    %v6431 = vpop.permute.xlu0 %6430
    %6434 = vset.pattern.permute.xlu0 0
    %6435 = vperm.xlu0 %6434, %v6421
    %v6436 = vpop.permute.xlu0 %6435
    %6439 = vset.pattern.permute.xlu0 0
    %6440 = vperm.xlu0 %6439, %v6422
    %v6441 = vpop.permute.xlu0 %6440
    %6443 = vst [vmem:[#allocation1] ss:$4 sm:$0xff] %v3099
    %s6444 = scalar_lea.vmem [#allocation1], 1
    %6445 = vst [vmem:[%s6444] ss:$4 sm:$0xff] %v3189
    %s6446 = scalar_lea.vmem [#allocation1], 2
    %6447 = vst [vmem:[%s6446] ss:$4 sm:$0xff] %v3190
    %s6448 = scalar_lea.vmem [#allocation1], 3
    %6449 = vst [vmem:[%s6448] ss:$4 sm:$0xff] %v3191
    %s6450 = scalar_lea.vmem [#allocation1], 32
    %6451 = vst [vmem:[%s6450] ss:$4 sm:$0xff] %v3100
    %v6452 = vld.sshfl [vmem:[#allocation1] sm:$0xff pattern:$0x73625140]
    %v6453 = vld.sshfl [vmem:[#allocation1 + $0x20] sm:$0xff pattern:$0x73625140]
    %6454 = vst [vmem:[#allocation1] ss:$4 sm:$0xff] %v3192
    %6455 = vst [vmem:[%s6444] ss:$4 sm:$0xff] %v3193
    %6456 = vst [vmem:[%s6446] ss:$4 sm:$0xff] %v3194
    %6457 = vst [vmem:[%s6448] ss:$4 sm:$0xff] %v3101
    %6458 = vst [vmem:[%s6450] ss:$4 sm:$0xff] %v3195
    %v6459 = vld.sshfl [vmem:[#allocation1] sm:$0xff pattern:$0x73625140]
    %v6460 = vld.sshfl [vmem:[#allocation1 + $0x20] sm:$0xff pattern:$0x73625140]
    %v6465 = vmul.f32 %v6426, %v6452
    %v6466 = vmul.f32 %v6431, %v6453
    %v6467 = vmul.f32 %v6436, %v6459
    %v6468 = vmul.f32 %v6441, %v6460
    %v6469 = vsel %vm3283, %v6466, 0.0
    %v6470 = vadd.f32 %v6465, %v6469
    %v6471 = vrot.slane %v6470, 4
    %v6472 = vadd.f32 %v6470, %v6471
    %v6473 = vrot.slane %v6472, 2
    %v6474 = vadd.f32 %v6472, %v6473
    %v6475 = vrot.slane %v6474, 1
    %v6476 = vadd.f32 %v6474, %v6475
    %v6477 = vsel %vm3283, %v6468, 0.0
    %v6478 = vadd.f32 %v6467, %v6477
    %v6479 = vrot.slane %v6478, 4
    %v6480 = vadd.f32 %v6478, %v6479
    %v6481 = vrot.slane %v6480, 2
    %v6482 = vadd.f32 %v6480, %v6481
    %v6483 = vrot.slane %v6482, 1
    %v6484 = vadd.f32 %v6482, %v6483
    %v6487 = vsel %vm3306, %v6484, %v6476
    %v6489 = vrot.slane %v6277, 6
    %v6491 = vpack.c.bf16 %v6487, %v6487
    %v6492 = vpack.c.bf16 %v6489, %v6489
    %v6493 = vld [vmem:[%s7] sm:$0xff]
    %v6494 = vld [vmem:[%s7 + $0x8] sm:$0xff]
    %v6495 = vld [vmem:[%s7 + $0x10] sm:$0xff]
    %v6496 = vld [vmem:[%s7 + $0x18] sm:$0xff]
    %v6497 = vld [vmem:[%s7 + $0x20] sm:$0xff]
    %v6498 = vld [vmem:[%s7 + $0x28] sm:$0xff]
    %v6499 = vld [vmem:[%s7 + $0x30] sm:$0xff]
    %v6500 = vld [vmem:[%s7 + $0x38] sm:$0xff]
    %v6501 = vld [vmem:[%s7 + $0x40] sm:$0xff]
    %v6502 = vld [vmem:[%s7 + $0x48] sm:$0xff]
    %v6503 = vld [vmem:[%s7 + $0x50] sm:$0xff]
    %v6504 = vld [vmem:[%s7 + $0x58] sm:$0xff]
    %v6505 = vld [vmem:[%s7 + $0x60] sm:$0xff]
    %v6506 = vld [vmem:[%s7 + $0x68] sm:$0xff]
    %v6507 = vld [vmem:[%s7 + $0x70] sm:$0xff]
    %v6508 = vld [vmem:[%s7 + $0x78] sm:$0xff]
    %v6509 = vld [vmem:[%s7 + $0x80] sm:$0xff]
    %v6510 = vld [vmem:[%s7 + $0x88] sm:$0xff]
    %v6511 = vld [vmem:[%s7 + $0x90] sm:$0xff]
    %v6512 = vld [vmem:[%s7 + $0x98] sm:$0xff]
    %v6513 = vld [vmem:[%s7 + $0xa0] sm:$0xff]
    %v6514 = vld [vmem:[%s7 + $0xa8] sm:$0xff]
    %v6515 = vld [vmem:[%s7 + $0xb0] sm:$0xff]
    %v6516 = vld [vmem:[%s7 + $0xb8] sm:$0xff]
    %v6517 = vld [vmem:[%s7 + $0xc0] sm:$0xff]
    %v6518 = vld [vmem:[%s7 + $0xc8] sm:$0xff]
    %v6519 = vld [vmem:[%s7 + $0xd0] sm:$0xff]
    %v6520 = vld [vmem:[%s7 + $0xd8] sm:$0xff]
    %v6521 = vld [vmem:[%s7 + $0xe0] sm:$0xff]
    %v6522 = vld [vmem:[%s7 + $0xe8] sm:$0xff]
    %v6523 = vld [vmem:[%s7 + $0xf0] sm:$0xff]
    %v6524 = vld [vmem:[%s7 + $0xf8] sm:$0xff]
    %v6525 = vld [vmem:[%s7 + $0x100] sm:$0xff]
    %v6526 = vld [vmem:[%s7 + $0x108] sm:$0xff]
    %v6527 = vld [vmem:[%s7 + $0x110] sm:$0xff]
    %v6528 = vld [vmem:[%s7 + $0x118] sm:$0xff]
    %v6529 = vld [vmem:[%s7 + $0x120] sm:$0xff]
    %v6530 = vld [vmem:[%s7 + $0x128] sm:$0xff]
    %v6531 = vld [vmem:[%s7 + $0x130] sm:$0xff]
    %v6532 = vld [vmem:[%s7 + $0x138] sm:$0xff]
    %v6533 = vld [vmem:[%s7 + $0x140] sm:$0xff]
    %v6534 = vld [vmem:[%s7 + $0x148] sm:$0xff]
    %v6535 = vld [vmem:[%s7 + $0x150] sm:$0xff]
    %v6536 = vld [vmem:[%s7 + $0x158] sm:$0xff]
    %v6537 = vld [vmem:[%s7 + $0x160] sm:$0xff]
    %v6538 = vld [vmem:[%s7 + $0x168] sm:$0xff]
    %v6539 = vld [vmem:[%s7 + $0x170] sm:$0xff]
    %v6540 = vld [vmem:[%s7 + $0x178] sm:$0xff]
    %v6541 = vld [vmem:[%s7 + $0x180] sm:$0xff]
    %v6542 = vld [vmem:[%s7 + $0x188] sm:$0xff]
    %v6543 = vld [vmem:[%s7 + $0x190] sm:$0xff]
    %v6544 = vld [vmem:[%s7 + $0x198] sm:$0xff]
    %v6545 = vld [vmem:[%s7 + $0x1a0] sm:$0xff]
    %v6546 = vld [vmem:[%s7 + $0x1a8] sm:$0xff]
    %v6547 = vld [vmem:[%s7 + $0x1b0] sm:$0xff]
    %v6548 = vld [vmem:[%s7 + $0x1b8] sm:$0xff]
    %v6549 = vld [vmem:[%s7 + $0x1c0] sm:$0xff]
    %v6550 = vld [vmem:[%s7 + $0x1c8] sm:$0xff]
    %v6551 = vld [vmem:[%s7 + $0x1d0] sm:$0xff]
    %v6552 = vld [vmem:[%s7 + $0x1d8] sm:$0xff]
    %v6553 = vld [vmem:[%s7 + $0x1e0] sm:$0xff]
    %v6554 = vld [vmem:[%s7 + $0x1e8] sm:$0xff]
    %v6555 = vld [vmem:[%s7 + $0x1f0] sm:$0xff]
    %v6556 = vld [vmem:[%s7 + $0x1f8] sm:$0xff]
    %v6621 = vunpack.c.l.b16 %v6493
    %v6622 = vunpack.c.h.b16 %v6493
    %v6623 = vunpack.c.l.b16 %v6494
    %v6624 = vunpack.c.h.b16 %v6494
    %v6625 = vunpack.c.l.b16 %v6495
    %v6626 = vunpack.c.h.b16 %v6495
    %v6627 = vunpack.c.l.b16 %v6496
    %v6628 = vunpack.c.h.b16 %v6496
    %v6629 = vunpack.c.l.b16 %v6497
    %v6630 = vunpack.c.h.b16 %v6497
    %v6631 = vunpack.c.l.b16 %v6498
    %v6632 = vunpack.c.h.b16 %v6498
    %v6633 = vunpack.c.l.b16 %v6499
    %v6634 = vunpack.c.h.b16 %v6499
    %v6635 = vunpack.c.l.b16 %v6500
    %v6636 = vunpack.c.h.b16 %v6500
    %v6637 = vunpack.c.l.b16 %v6501
    %v6638 = vunpack.c.h.b16 %v6501
    %v6639 = vunpack.c.l.b16 %v6502
    %v6640 = vunpack.c.h.b16 %v6502
    %v6641 = vunpack.c.l.b16 %v6503
    %v6642 = vunpack.c.h.b16 %v6503
    %v6643 = vunpack.c.l.b16 %v6504
    %v6644 = vunpack.c.h.b16 %v6504
    %v6645 = vunpack.c.l.b16 %v6505
    %v6646 = vunpack.c.h.b16 %v6505
    %v6647 = vunpack.c.l.b16 %v6506
    %v6648 = vunpack.c.h.b16 %v6506
    %v6649 = vunpack.c.l.b16 %v6507
    %v6650 = vunpack.c.h.b16 %v6507
    %v6651 = vunpack.c.l.b16 %v6508
    %v6652 = vunpack.c.h.b16 %v6508
    %v6653 = vunpack.c.l.b16 %v6509
    %v6654 = vunpack.c.h.b16 %v6509
    %v6655 = vunpack.c.l.b16 %v6510
    %v6656 = vunpack.c.h.b16 %v6510
    %v6657 = vunpack.c.l.b16 %v6511
    %v6658 = vunpack.c.h.b16 %v6511
    %v6659 = vunpack.c.l.b16 %v6512
    %v6660 = vunpack.c.h.b16 %v6512
    %v6661 = vunpack.c.l.b16 %v6513
    %v6662 = vunpack.c.h.b16 %v6513
    %v6663 = vunpack.c.l.b16 %v6514
    %v6664 = vunpack.c.h.b16 %v6514
    %v6665 = vunpack.c.l.b16 %v6515
    %v6666 = vunpack.c.h.b16 %v6515
    %v6667 = vunpack.c.l.b16 %v6516
    %v6668 = vunpack.c.h.b16 %v6516
    %v6669 = vunpack.c.l.b16 %v6517
    %v6670 = vunpack.c.h.b16 %v6517
    %v6671 = vunpack.c.l.b16 %v6518
    %v6672 = vunpack.c.h.b16 %v6518
    %v6673 = vunpack.c.l.b16 %v6519
    %v6674 = vunpack.c.h.b16 %v6519
    %v6675 = vunpack.c.l.b16 %v6520
    %v6676 = vunpack.c.h.b16 %v6520
    %v6677 = vunpack.c.l.b16 %v6521
    %v6678 = vunpack.c.h.b16 %v6521
    %v6679 = vunpack.c.l.b16 %v6522
    %v6680 = vunpack.c.h.b16 %v6522
    %v6681 = vunpack.c.l.b16 %v6523
    %v6682 = vunpack.c.h.b16 %v6523
    %v6683 = vunpack.c.l.b16 %v6524
    %v6684 = vunpack.c.h.b16 %v6524
    %v6685 = vunpack.c.l.b16 %v6525
    %v6686 = vunpack.c.h.b16 %v6525
    %v6687 = vunpack.c.l.b16 %v6526
    %v6688 = vunpack.c.h.b16 %v6526
    %v6689 = vunpack.c.l.b16 %v6527
    %v6690 = vunpack.c.h.b16 %v6527
    %v6691 = vunpack.c.l.b16 %v6528
    %v6692 = vunpack.c.h.b16 %v6528
    %v6693 = vunpack.c.l.b16 %v6529
    %v6694 = vunpack.c.h.b16 %v6529
    %v6695 = vunpack.c.l.b16 %v6530
    %v6696 = vunpack.c.h.b16 %v6530
    %v6697 = vunpack.c.l.b16 %v6531
    %v6698 = vunpack.c.h.b16 %v6531
    %v6699 = vunpack.c.l.b16 %v6532
    %v6700 = vunpack.c.h.b16 %v6532
    %v6701 = vunpack.c.l.b16 %v6533
    %v6702 = vunpack.c.h.b16 %v6533
    %v6703 = vunpack.c.l.b16 %v6534
    %v6704 = vunpack.c.h.b16 %v6534
    %v6705 = vunpack.c.l.b16 %v6535
    %v6706 = vunpack.c.h.b16 %v6535
    %v6707 = vunpack.c.l.b16 %v6536
    %v6708 = vunpack.c.h.b16 %v6536
    %v6709 = vunpack.c.l.b16 %v6537
    %v6710 = vunpack.c.h.b16 %v6537
    %v6711 = vunpack.c.l.b16 %v6538
    %v6712 = vunpack.c.h.b16 %v6538
    %v6713 = vunpack.c.l.b16 %v6539
    %v6714 = vunpack.c.h.b16 %v6539
    %v6715 = vunpack.c.l.b16 %v6540
    %v6716 = vunpack.c.h.b16 %v6540
    %v6717 = vunpack.c.l.b16 %v6541
    %v6718 = vunpack.c.h.b16 %v6541
    %v6719 = vunpack.c.l.b16 %v6542
    %v6720 = vunpack.c.h.b16 %v6542
    %v6721 = vunpack.c.l.b16 %v6543
    %v6722 = vunpack.c.h.b16 %v6543
    %v6723 = vunpack.c.l.b16 %v6544
    %v6724 = vunpack.c.h.b16 %v6544
    %v6725 = vunpack.c.l.b16 %v6545
    %v6726 = vunpack.c.h.b16 %v6545
    %v6727 = vunpack.c.l.b16 %v6546
    %v6728 = vunpack.c.h.b16 %v6546
    %v6729 = vunpack.c.l.b16 %v6547
    %v6730 = vunpack.c.h.b16 %v6547
    %v6731 = vunpack.c.l.b16 %v6548
    %v6732 = vunpack.c.h.b16 %v6548
    %v6733 = vunpack.c.l.b16 %v6549
    %v6734 = vunpack.c.h.b16 %v6549
    %v6735 = vunpack.c.l.b16 %v6550
    %v6736 = vunpack.c.h.b16 %v6550
    %v6737 = vunpack.c.l.b16 %v6551
    %v6738 = vunpack.c.h.b16 %v6551
    %v6739 = vunpack.c.l.b16 %v6552
    %v6740 = vunpack.c.h.b16 %v6552
    %v6741 = vunpack.c.l.b16 %v6553
    %v6742 = vunpack.c.h.b16 %v6553
    %v6743 = vunpack.c.l.b16 %v6554
    %v6744 = vunpack.c.h.b16 %v6554
    %v6745 = vunpack.c.l.b16 %v6555
    %v6746 = vunpack.c.h.b16 %v6555
    %v6747 = vunpack.c.l.b16 %v6556
    %v6748 = vunpack.c.h.b16 %v6556
    %v6749 = vpack.c.b16 %v6625, %v6621
    %v6750 = vpack.c.b16 %v6626, %v6622
    %v6751 = vpack.c.b16 %v6627, %v6623
    %v6752 = vpack.c.b16 %v6628, %v6624
    %v6753 = vpack.c.b16 %v6633, %v6629
    %v6754 = vpack.c.b16 %v6634, %v6630
    %v6755 = vpack.c.b16 %v6635, %v6631
    %v6756 = vpack.c.b16 %v6636, %v6632
    %v6757 = vpack.c.b16 %v6641, %v6637
    %v6758 = vpack.c.b16 %v6642, %v6638
    %v6759 = vpack.c.b16 %v6643, %v6639
    %v6760 = vpack.c.b16 %v6644, %v6640
    %v6761 = vpack.c.b16 %v6649, %v6645
    %v6762 = vpack.c.b16 %v6650, %v6646
    %v6763 = vpack.c.b16 %v6651, %v6647
    %v6764 = vpack.c.b16 %v6652, %v6648
    %v6765 = vpack.c.b16 %v6657, %v6653
    %v6766 = vpack.c.b16 %v6658, %v6654
    %v6767 = vpack.c.b16 %v6659, %v6655
    %v6768 = vpack.c.b16 %v6660, %v6656
    %v6769 = vpack.c.b16 %v6665, %v6661
    %v6770 = vpack.c.b16 %v6666, %v6662
    %v6771 = vpack.c.b16 %v6667, %v6663
    %v6772 = vpack.c.b16 %v6668, %v6664
    %v6773 = vpack.c.b16 %v6673, %v6669
    %v6774 = vpack.c.b16 %v6674, %v6670
    %v6775 = vpack.c.b16 %v6675, %v6671
    %v6776 = vpack.c.b16 %v6676, %v6672
    %v6777 = vpack.c.b16 %v6681, %v6677
    %v6778 = vpack.c.b16 %v6682, %v6678
    %v6779 = vpack.c.b16 %v6683, %v6679
    %v6780 = vpack.c.b16 %v6684, %v6680
    %v6781 = vpack.c.b16 %v6689, %v6685
    %v6782 = vpack.c.b16 %v6690, %v6686
    %v6783 = vpack.c.b16 %v6691, %v6687
    %v6784 = vpack.c.b16 %v6692, %v6688
    %v6785 = vpack.c.b16 %v6697, %v6693
    %v6786 = vpack.c.b16 %v6698, %v6694
    %v6787 = vpack.c.b16 %v6699, %v6695
    %v6788 = vpack.c.b16 %v6700, %v6696
    %v6789 = vpack.c.b16 %v6705, %v6701
    %v6790 = vpack.c.b16 %v6706, %v6702
    %v6791 = vpack.c.b16 %v6707, %v6703
    %v6792 = vpack.c.b16 %v6708, %v6704
    %v6793 = vpack.c.b16 %v6713, %v6709
    %v6794 = vpack.c.b16 %v6714, %v6710
    %v6795 = vpack.c.b16 %v6715, %v6711
    %v6796 = vpack.c.b16 %v6716, %v6712
    %v6797 = vpack.c.b16 %v6721, %v6717
    %v6798 = vpack.c.b16 %v6722, %v6718
    %v6799 = vpack.c.b16 %v6723, %v6719
    %v6800 = vpack.c.b16 %v6724, %v6720
    %v6801 = vpack.c.b16 %v6729, %v6725
    %v6802 = vpack.c.b16 %v6730, %v6726
    %v6803 = vpack.c.b16 %v6731, %v6727
    %v6804 = vpack.c.b16 %v6732, %v6728
    %v6805 = vpack.c.b16 %v6737, %v6733
    %v6806 = vpack.c.b16 %v6738, %v6734
    %v6807 = vpack.c.b16 %v6739, %v6735
    %v6808 = vpack.c.b16 %v6740, %v6736
    %v6809 = vpack.c.b16 %v6745, %v6741
    %v6810 = vpack.c.b16 %v6746, %v6742
    %v6811 = vpack.c.b16 %v6747, %v6743
    %v6812 = vpack.c.b16 %v6748, %v6744
    %6877 = vmatpush.bf16.msra.mxu0 %v6777
    %6878 = vmatpush.bf16.msra.mxu0 %v6773
    %6879 = vmatpush.bf16.msra.mxu0 %v6769
    %6880 = vmatpush.bf16.msra.mxu0 %v6765
    %6881 = vmatpush.bf16.msra.mxu0 %v6761
    %6882 = vmatpush.bf16.msra.mxu0 %v6757
    %6883 = vmatpush.bf16.msra.mxu0 %v6753
    %6884 = vmatpush.bf16.msra.mxu0 %v6749
    %6885 = vmatmul.bf16.gmra.mxu0 %v6491
    %v6886 = vpop.f32.mrf.mxu0
    %v6887 = vadd.f32 0.0, %v6886
    %v6888 = vpop.f32.mrf.mxu0
    %6889 = vdwg.mxu0
    %6890 = vmatpush.bf16.msra.mxu0 %v6809
    %6891 = vmatpush.bf16.msra.mxu0 %v6805
    %6892 = vmatpush.bf16.msra.mxu0 %v6801
    %6893 = vmatpush.bf16.msra.mxu0 %v6797
    %6894 = vmatpush.bf16.msra.mxu0 %v6793
    %6895 = vmatpush.bf16.msra.mxu0 %v6789
    %6896 = vmatpush.bf16.msra.mxu0 %v6785
    %6897 = vmatpush.bf16.msra.mxu0 %v6781
    %6898 = vmatmul.bf16.gmra.mxu0 %v6492
    %v6899 = vpop.f32.mrf.mxu0
    %v6900 = vadd.f32 %v6887, %v6899
    %v6901 = vpop.f32.mrf.mxu0
    %6902 = vdwg.mxu0
    %6903 = vmatpush.bf16.msra.mxu0 %v6778
    %6904 = vmatpush.bf16.msra.mxu0 %v6774
    %6905 = vmatpush.bf16.msra.mxu0 %v6770
    %6906 = vmatpush.bf16.msra.mxu0 %v6766
    %6907 = vmatpush.bf16.msra.mxu0 %v6762
    %6908 = vmatpush.bf16.msra.mxu0 %v6758
    %6909 = vmatpush.bf16.msra.mxu0 %v6754
    %6910 = vmatpush.bf16.msra.mxu0 %v6750
    %6911 = vmatmul.bf16.gmra.mxu0 %v6491
    %v6912 = vpop.f32.mrf.mxu0
    %v6913 = vadd.f32 0.0, %v6912
    %v6914 = vpop.f32.mrf.mxu0
    %6915 = vdwg.mxu0
    %6916 = vmatpush.bf16.msra.mxu0 %v6810
    %6917 = vmatpush.bf16.msra.mxu0 %v6806
    %6918 = vmatpush.bf16.msra.mxu0 %v6802
    %6919 = vmatpush.bf16.msra.mxu0 %v6798
    %6920 = vmatpush.bf16.msra.mxu0 %v6794
    %6921 = vmatpush.bf16.msra.mxu0 %v6790
    %6922 = vmatpush.bf16.msra.mxu0 %v6786
    %6923 = vmatpush.bf16.msra.mxu0 %v6782
    %6924 = vmatmul.bf16.gmra.mxu0 %v6492
    %v6925 = vpop.f32.mrf.mxu0
    %v6926 = vadd.f32 %v6913, %v6925
    %v6927 = vpop.f32.mrf.mxu0
    %6928 = vdwg.mxu0
    %6929 = vmatpush.bf16.msra.mxu0 %v6779
    %6930 = vmatpush.bf16.msra.mxu0 %v6775
    %6931 = vmatpush.bf16.msra.mxu0 %v6771
    %6932 = vmatpush.bf16.msra.mxu0 %v6767
    %6933 = vmatpush.bf16.msra.mxu0 %v6763
    %6934 = vmatpush.bf16.msra.mxu0 %v6759
    %6935 = vmatpush.bf16.msra.mxu0 %v6755
    %6936 = vmatpush.bf16.msra.mxu0 %v6751
    %6937 = vmatmul.bf16.gmra.mxu0 %v6491
    %v6938 = vpop.f32.mrf.mxu0
    %v6939 = vadd.f32 0.0, %v6938
    %v6940 = vpop.f32.mrf.mxu0
    %6941 = vdwg.mxu0
    %6942 = vmatpush.bf16.msra.mxu0 %v6811
    %6943 = vmatpush.bf16.msra.mxu0 %v6807
    %6944 = vmatpush.bf16.msra.mxu0 %v6803
    %6945 = vmatpush.bf16.msra.mxu0 %v6799
    %6946 = vmatpush.bf16.msra.mxu0 %v6795
    %6947 = vmatpush.bf16.msra.mxu0 %v6791
    %6948 = vmatpush.bf16.msra.mxu0 %v6787
    %6949 = vmatpush.bf16.msra.mxu0 %v6783
    %6950 = vmatmul.bf16.gmra.mxu0 %v6492
    %v6951 = vpop.f32.mrf.mxu0
    %v6952 = vadd.f32 %v6939, %v6951
    %v6953 = vpop.f32.mrf.mxu0
    %6954 = vdwg.mxu0
    %6955 = vmatpush.bf16.msra.mxu0 %v6780
    %6956 = vmatpush.bf16.msra.mxu0 %v6776
    %6957 = vmatpush.bf16.msra.mxu0 %v6772
    %6958 = vmatpush.bf16.msra.mxu0 %v6768
    %6959 = vmatpush.bf16.msra.mxu0 %v6764
    %6960 = vmatpush.bf16.msra.mxu0 %v6760
    %6961 = vmatpush.bf16.msra.mxu0 %v6756
    %6962 = vmatpush.bf16.msra.mxu0 %v6752
    %6963 = vmatmul.bf16.gmra.mxu0 %v6491
    %v6964 = vpop.f32.mrf.mxu0
    %v6965 = vadd.f32 0.0, %v6964
    %v6966 = vpop.f32.mrf.mxu0
    %6967 = vdwg.mxu0
    %6968 = vmatpush.bf16.msra.mxu0 %v6812
    %6969 = vmatpush.bf16.msra.mxu0 %v6808
    %6970 = vmatpush.bf16.msra.mxu0 %v6804
    %6971 = vmatpush.bf16.msra.mxu0 %v6800
    %6972 = vmatpush.bf16.msra.mxu0 %v6796
    %6973 = vmatpush.bf16.msra.mxu0 %v6792
    %6974 = vmatpush.bf16.msra.mxu0 %v6788
    %6975 = vmatpush.bf16.msra.mxu0 %v6784
    %6976 = vmatmul.bf16.gmra.mxu0 %v6492
    %v6977 = vpop.f32.mrf.mxu0
    %v6978 = vadd.f32 %v6965, %v6977
    %v6979 = vpop.f32.mrf.mxu0
    %6980 = vdwg.mxu0
    %v6981 = vld [vmem:[#allocation3 + $0x18] sm:$0x3]
    %v6982 = vld [vmem:[#allocation3 + $0x20] sm:$0x3]
    %v6983 = vld [vmem:[#allocation3 + $0x28] sm:$0x3]
    %v6984 = vadd.f32 %v6981, %v6900
    %v6985 = vxor.u32 %v6984, 2147483648
    %v6986 = vmul.f32 %v6985, 1.442695
    %v6987 = vpow.pop %v6986
    %v6988 = vadd.f32 %v6987, 1.0
    %v6989 = vrcp.pop %v6988
    %v6990 = vmul.f32 %v6988, %v6989
    %v6991 = vsub.f32 1.0, %v6990
    %v6992 = vmul.f32 %v6989, %v6991
    %v6993 = vadd.f32 %v6989, %v6992
    %vm6994 = vweird.f32 %v6988
    %vm6995 = vweird.f32 %v6989
    %vm6996 = vmor %vm6994, %vm6995
    %v6997 = vsel %vm6996, %v6989, %v6993
    %v6998 = vand.u32 2147483647, %v6988
    %vm6999 = vcmp.eq.f32.partialorder %v6998, 8.507059e+37
    %v7000 = vand.u32 %v6988, 2147483648
    %v7001 = vor.u32 1.1754944e-38, %v7000
    %v7002 = vsel %vm6999, %v7001, %v6997
    %v7003 = vmul.f32 1.0, %v7002
    %v7004 = vadd.f32 %v6982, %v6926
    %v7005 = vxor.u32 %v7004, 2147483648
    %v7006 = vmul.f32 %v7005, 1.442695
    %v7007 = vpow.pop %v7006
    %v7008 = vadd.f32 %v7007, 1.0
    %v7009 = vrcp.pop %v7008
    %v7010 = vmul.f32 %v7008, %v7009
    %v7011 = vsub.f32 1.0, %v7010
    %v7012 = vmul.f32 %v7009, %v7011
    %v7013 = vadd.f32 %v7009, %v7012
    %vm7014 = vweird.f32 %v7008
    %vm7015 = vweird.f32 %v7009
    %vm7016 = vmor %vm7014, %vm7015
    %v7017 = vsel %vm7016, %v7009, %v7013
    %v7018 = vand.u32 2147483647, %v7008
    %vm7019 = vcmp.eq.f32.partialorder %v7018, 8.507059e+37
    %v7020 = vand.u32 %v7008, 2147483648
    %v7021 = vor.u32 1.1754944e-38, %v7020
    %v7022 = vsel %vm7019, %v7021, %v7017
    %v7023 = vmul.f32 1.0, %v7022
    %v7024 = vadd.f32 %v6983, %v6952
    %v7025 = vadd.f32 %v6978, %v3215
    %v7026 = vmul.f32 %v7003, %v7025
    %v7027 = vadd.f32 %v7024, %v7026
    %v7028 = vtanh.pop %v7027
    %v7029 = vsub.f32 1.0, %v7023
    %v7030 = vmul.f32 %v7029, %v7028
    %v7031 = vmul.f32 %v7023, %v6489
    %v7032 = vadd.f32 %v7030, %v7031
    %7033 = vst [vmem:[#allocation5 + $0x4] sm:$0x1] %v7032
    %7034 = vst [vmem:[#allocation5 + $0xd] sm:$0x2] %v7032
    %v7036 = vrot.slane %v7032, 1
    %v7037 = vperm.slane %v7032, 0
    %v7038 = vperm.slane %v7036, 0
    %v7041 = vrot.slane %v7037, 2
    %v7042 = vrot.slane %v7037, 4
    %v7043 = vrot.slane %v7037, 6
    %v7044 = vrot.slane %v7038, 2
    %v7045 = vrot.slane %v7038, 4
    %v7046 = vrot.slane %v7038, 6
    %v7053 = vmul.f32 %v3178, %v7037
    %v7054 = vmul.f32 %v3199, %v7041
    %v7055 = vmul.f32 %v3200, %v7042
    %v7056 = vmul.f32 %v3201, %v7043
    %v7057 = vmul.f32 %v3180, %v7037
    %v7058 = vmul.f32 %v3202, %v7038
    %v7059 = vmul.f32 %v3203, %v7044
    %v7060 = vmul.f32 %v3204, %v7045
    %v7061 = vmul.f32 %v3183, %v7046
    %v7062 = vmul.f32 %v3205, %v7038
    %7073 = vst [vmem:[#allocation1] ss:$4 sm:$0xff] %v7053
    %s7074 = scalar_lea.vmem [#allocation1], 1
    %7075 = vst [vmem:[%s7074] ss:$4 sm:$0xff] %v7054
    %s7076 = scalar_lea.vmem [#allocation1], 2
    %7077 = vst [vmem:[%s7076] ss:$4 sm:$0xff] %v7055
    %s7078 = scalar_lea.vmem [#allocation1], 3
    %7079 = vst [vmem:[%s7078] ss:$4 sm:$0xff] %v7056
    %s7080 = scalar_lea.vmem [#allocation1], 32
    %7081 = vst [vmem:[%s7080] ss:$4 sm:$0xff] %v7057
    %v7082 = vld.sshfl [vmem:[#allocation1] sm:$0xff pattern:$0x73625140]
    %v7083 = vld.sshfl [vmem:[#allocation1 + $0x20] sm:$0xff pattern:$0x73625140]
    %7084 = vst [vmem:[#allocation1] ss:$4 sm:$0xff] %v7058
    %7085 = vst [vmem:[%s7074] ss:$4 sm:$0xff] %v7059
    %7086 = vst [vmem:[%s7076] ss:$4 sm:$0xff] %v7060
    %7087 = vst [vmem:[%s7078] ss:$4 sm:$0xff] %v7061
    %7088 = vst [vmem:[%s7080] ss:$4 sm:$0xff] %v7062
    %v7089 = vld.sshfl [vmem:[#allocation1] sm:$0xff pattern:$0x73625140]
    %v7090 = vld.sshfl [vmem:[#allocation1 + $0x20] sm:$0xff pattern:$0x73625140]
    %7095 = vadd.xlane.f32.xlu0 %v7082
    %v7096 = vpop.xlane.xlu0 %7095
    %v7097 = vsel %vm3283, %v7083, 0.0
    %7098 = vadd.xlane.f32.xlu0 %v7097
    %v7099 = vpop.xlane.xlu0 %7098
    %7100 = vadd.xlane.f32.xlu0 %v7089
    %v7101 = vpop.xlane.xlu0 %7100
    %v7102 = vsel %vm3283, %v7090, 0.0
    %7103 = vadd.xlane.f32.xlu0 %v7102
    %v7104 = vpop.xlane.xlu0 %7103
    %v7109 = vperm.slane %v7096, %v3297
    %v7110 = vperm.slane %v7099, %v3299
    %v7111 = vsel %vm3301, %v7110, %v7109
    %v7112 = vperm.slane %v7101, %v3297
    %v7113 = vperm.slane %v7104, %v3299
    %v7114 = vsel %vm3301, %v7113, %v7112
    %v7115 = vsel %vm3306, %v7114, %v7111
    %v7117 = vsel %vm3309, %v7115, -inf
    %7118 = vmax.xlane.f32.xlu0 %v7117
    %v7119 = vpop.xlane.xlu0 %7118
    %v7121 = vperm.slane %v7119, 0
    %v7122 = vperm.slane %v7119, 1
    %v7125 = vsub.f32 %v7096, %v7121
    %v7126 = vsub.f32 %v7099, %v7121
    %v7127 = vsub.f32 %v7101, %v7122
    %v7128 = vsub.f32 %v7104, %v7122
    %v7129 = vmul.f32 %v7125, 1.442695
    %v7130 = vpow.pop %v7129
    %v7131 = vmul.f32 %v7126, 1.442695
    %v7132 = vpow.pop %v7131
    %v7133 = vmul.f32 %v7127, 1.442695
    %v7134 = vpow.pop %v7133
    %v7135 = vmul.f32 %v7128, 1.442695
    %v7136 = vpow.pop %v7135
    %7141 = vset.pattern.permute.xlu0 0
    %7142 = vperm.xlu0 %7141, %v7130
    %v7143 = vpop.permute.xlu0 %7142
    %7144 = vset.pattern.permute.xlu0 0
    %7145 = vperm.xlu0 %7144, %v7132
    %v7146 = vpop.permute.xlu0 %7145
    %7147 = vset.pattern.permute.xlu0 0
    %7148 = vperm.xlu0 %7147, %v7134
    %v7149 = vpop.permute.xlu0 %7148
    %7150 = vset.pattern.permute.xlu0 0
    %7151 = vperm.xlu0 %7150, %v7136
    %v7152 = vpop.permute.xlu0 %7151
    %v7153 = vperm.slane %v7143, %v3297
    %v7154 = vperm.slane %v7146, %v3299
    %v7155 = vsel %vm3301, %v7154, %v7153
    %v7156 = vperm.slane %v7149, %v3297
    %v7157 = vperm.slane %v7152, %v3299
    %v7158 = vsel %vm3301, %v7157, %v7156
    %v7159 = vsel %vm3306, %v7158, %v7155
    %v7161 = vsel %vm3309, %v7159, 0.0
    %7162 = vadd.xlane.f32.xlu0 %v7161
    %v7163 = vpop.xlane.xlu0 %7162
    %v7164 = vrcp.pop %v7163
    %v7166 = vperm.slane %v7164, 0
    %v7167 = vperm.slane %v7164, 1
    %v7170 = vmul.f32 %v7130, %v7166
    %v7171 = vmul.f32 %v7132, %v7166
    %v7172 = vmul.f32 %v7134, %v7167
    %v7173 = vmul.f32 %v7136, %v7167
    %7175 = vset.pattern.permute.xlu0 0
    %7176 = vperm.xlu0 %7175, %v7170
    %v7177 = vpop.permute.xlu0 %7176
    %7180 = vset.pattern.permute.xlu0 0
    %7181 = vperm.xlu0 %7180, %v7171
    %v7182 = vpop.permute.xlu0 %7181
    %7185 = vset.pattern.permute.xlu0 0
    %7186 = vperm.xlu0 %7185, %v7172
    %v7187 = vpop.permute.xlu0 %7186
    %7190 = vset.pattern.permute.xlu0 0
    %7191 = vperm.xlu0 %7190, %v7173
    %v7192 = vpop.permute.xlu0 %7191
    %7194 = vst [vmem:[#allocation1] ss:$4 sm:$0xff] %v3099
    %s7195 = scalar_lea.vmem [#allocation1], 1
    %7196 = vst [vmem:[%s7195] ss:$4 sm:$0xff] %v3189
    %s7197 = scalar_lea.vmem [#allocation1], 2
    %7198 = vst [vmem:[%s7197] ss:$4 sm:$0xff] %v3190
    %s7199 = scalar_lea.vmem [#allocation1], 3
    %7200 = vst [vmem:[%s7199] ss:$4 sm:$0xff] %v3191
    %s7201 = scalar_lea.vmem [#allocation1], 32
    %7202 = vst [vmem:[%s7201] ss:$4 sm:$0xff] %v3100
    %v7203 = vld.sshfl [vmem:[#allocation1] sm:$0xff pattern:$0x73625140]
    %v7204 = vld.sshfl [vmem:[#allocation1 + $0x20] sm:$0xff pattern:$0x73625140]
    %7205 = vst [vmem:[#allocation1] ss:$4 sm:$0xff] %v3192
    %7206 = vst [vmem:[%s7195] ss:$4 sm:$0xff] %v3193
    %7207 = vst [vmem:[%s7197] ss:$4 sm:$0xff] %v3194
    %7208 = vst [vmem:[%s7199] ss:$4 sm:$0xff] %v3101
    %7209 = vst [vmem:[%s7201] ss:$4 sm:$0xff] %v3195
    %v7210 = vld.sshfl [vmem:[#allocation1] sm:$0xff pattern:$0x73625140]
    %v7211 = vld.sshfl [vmem:[#allocation1 + $0x20] sm:$0xff pattern:$0x73625140]
    %v7216 = vmul.f32 %v7177, %v7203
    %v7217 = vmul.f32 %v7182, %v7204
    %v7218 = vmul.f32 %v7187, %v7210
    %v7219 = vmul.f32 %v7192, %v7211
    %v7220 = vsel %vm3283, %v7217, 0.0
    %v7221 = vadd.f32 %v7216, %v7220
    %v7222 = vrot.slane %v7221, 4
    %v7223 = vadd.f32 %v7221, %v7222
    %v7224 = vrot.slane %v7223, 2
    %v7225 = vadd.f32 %v7223, %v7224
    %v7226 = vrot.slane %v7225, 1
    %v7227 = vadd.f32 %v7225, %v7226
    %v7228 = vsel %vm3283, %v7219, 0.0
    %v7229 = vadd.f32 %v7218, %v7228
    %v7230 = vrot.slane %v7229, 4
    %v7231 = vadd.f32 %v7229, %v7230
    %v7232 = vrot.slane %v7231, 2
    %v7233 = vadd.f32 %v7231, %v7232
    %v7234 = vrot.slane %v7233, 1
    %v7235 = vadd.f32 %v7233, %v7234
    %v7238 = vsel %vm3306, %v7235, %v7227
    %v7240 = vpack.c.bf16 %v7238, %v7238
    %v7241 = vpack.c.bf16 %v7032, %v7032
    %v7242 = vld [vmem:[%s7] sm:$0xff]
    %v7243 = vld [vmem:[%s7 + $0x8] sm:$0xff]
    %v7244 = vld [vmem:[%s7 + $0x10] sm:$0xff]
    %v7245 = vld [vmem:[%s7 + $0x18] sm:$0xff]
    %v7246 = vld [vmem:[%s7 + $0x20] sm:$0xff]
    %v7247 = vld [vmem:[%s7 + $0x28] sm:$0xff]
    %v7248 = vld [vmem:[%s7 + $0x30] sm:$0xff]
    %v7249 = vld [vmem:[%s7 + $0x38] sm:$0xff]
    %v7250 = vld [vmem:[%s7 + $0x40] sm:$0xff]
    %v7251 = vld [vmem:[%s7 + $0x48] sm:$0xff]
    %v7252 = vld [vmem:[%s7 + $0x50] sm:$0xff]
    %v7253 = vld [vmem:[%s7 + $0x58] sm:$0xff]
    %v7254 = vld [vmem:[%s7 + $0x60] sm:$0xff]
    %v7255 = vld [vmem:[%s7 + $0x68] sm:$0xff]
    %v7256 = vld [vmem:[%s7 + $0x70] sm:$0xff]
    %v7257 = vld [vmem:[%s7 + $0x78] sm:$0xff]
    %v7258 = vld [vmem:[%s7 + $0x80] sm:$0xff]
    %v7259 = vld [vmem:[%s7 + $0x88] sm:$0xff]
    %v7260 = vld [vmem:[%s7 + $0x90] sm:$0xff]
    %v7261 = vld [vmem:[%s7 + $0x98] sm:$0xff]
    %v7262 = vld [vmem:[%s7 + $0xa0] sm:$0xff]
    %v7263 = vld [vmem:[%s7 + $0xa8] sm:$0xff]
    %v7264 = vld [vmem:[%s7 + $0xb0] sm:$0xff]
    %v7265 = vld [vmem:[%s7 + $0xb8] sm:$0xff]
    %v7266 = vld [vmem:[%s7 + $0xc0] sm:$0xff]
    %v7267 = vld [vmem:[%s7 + $0xc8] sm:$0xff]
    %v7268 = vld [vmem:[%s7 + $0xd0] sm:$0xff]
    %v7269 = vld [vmem:[%s7 + $0xd8] sm:$0xff]
    %v7270 = vld [vmem:[%s7 + $0xe0] sm:$0xff]
    %v7271 = vld [vmem:[%s7 + $0xe8] sm:$0xff]
    %v7272 = vld [vmem:[%s7 + $0xf0] sm:$0xff]
    %v7273 = vld [vmem:[%s7 + $0xf8] sm:$0xff]
    %v7274 = vld [vmem:[%s7 + $0x100] sm:$0xff]
    %v7275 = vld [vmem:[%s7 + $0x108] sm:$0xff]
    %v7276 = vld [vmem:[%s7 + $0x110] sm:$0xff]
    %v7277 = vld [vmem:[%s7 + $0x118] sm:$0xff]
    %v7278 = vld [vmem:[%s7 + $0x120] sm:$0xff]
    %v7279 = vld [vmem:[%s7 + $0x128] sm:$0xff]
    %v7280 = vld [vmem:[%s7 + $0x130] sm:$0xff]
    %v7281 = vld [vmem:[%s7 + $0x138] sm:$0xff]
    %v7282 = vld [vmem:[%s7 + $0x140] sm:$0xff]
    %v7283 = vld [vmem:[%s7 + $0x148] sm:$0xff]
    %v7284 = vld [vmem:[%s7 + $0x150] sm:$0xff]
    %v7285 = vld [vmem:[%s7 + $0x158] sm:$0xff]
    %v7286 = vld [vmem:[%s7 + $0x160] sm:$0xff]
    %v7287 = vld [vmem:[%s7 + $0x168] sm:$0xff]
    %v7288 = vld [vmem:[%s7 + $0x170] sm:$0xff]
    %v7289 = vld [vmem:[%s7 + $0x178] sm:$0xff]
    %v7290 = vld [vmem:[%s7 + $0x180] sm:$0xff]
    %v7291 = vld [vmem:[%s7 + $0x188] sm:$0xff]
    %v7292 = vld [vmem:[%s7 + $0x190] sm:$0xff]
    %v7293 = vld [vmem:[%s7 + $0x198] sm:$0xff]
    %v7294 = vld [vmem:[%s7 + $0x1a0] sm:$0xff]
    %v7295 = vld [vmem:[%s7 + $0x1a8] sm:$0xff]
    %v7296 = vld [vmem:[%s7 + $0x1b0] sm:$0xff]
    %v7297 = vld [vmem:[%s7 + $0x1b8] sm:$0xff]
    %v7298 = vld [vmem:[%s7 + $0x1c0] sm:$0xff]
    %v7299 = vld [vmem:[%s7 + $0x1c8] sm:$0xff]
    %v7300 = vld [vmem:[%s7 + $0x1d0] sm:$0xff]
    %v7301 = vld [vmem:[%s7 + $0x1d8] sm:$0xff]
    %v7302 = vld [vmem:[%s7 + $0x1e0] sm:$0xff]
    %v7303 = vld [vmem:[%s7 + $0x1e8] sm:$0xff]
    %v7304 = vld [vmem:[%s7 + $0x1f0] sm:$0xff]
    %v7305 = vld [vmem:[%s7 + $0x1f8] sm:$0xff]
    %v7370 = vunpack.c.l.b16 %v7242
    %v7371 = vunpack.c.h.b16 %v7242
    %v7372 = vunpack.c.l.b16 %v7243
    %v7373 = vunpack.c.h.b16 %v7243
    %v7374 = vunpack.c.l.b16 %v7244
    %v7375 = vunpack.c.h.b16 %v7244
    %v7376 = vunpack.c.l.b16 %v7245
    %v7377 = vunpack.c.h.b16 %v7245
    %v7378 = vunpack.c.l.b16 %v7246
    %v7379 = vunpack.c.h.b16 %v7246
    %v7380 = vunpack.c.l.b16 %v7247
    %v7381 = vunpack.c.h.b16 %v7247
    %v7382 = vunpack.c.l.b16 %v7248
    %v7383 = vunpack.c.h.b16 %v7248
    %v7384 = vunpack.c.l.b16 %v7249
    %v7385 = vunpack.c.h.b16 %v7249
    %v7386 = vunpack.c.l.b16 %v7250
    %v7387 = vunpack.c.h.b16 %v7250
    %v7388 = vunpack.c.l.b16 %v7251
    %v7389 = vunpack.c.h.b16 %v7251
    %v7390 = vunpack.c.l.b16 %v7252
    %v7391 = vunpack.c.h.b16 %v7252
    %v7392 = vunpack.c.l.b16 %v7253
    %v7393 = vunpack.c.h.b16 %v7253
    %v7394 = vunpack.c.l.b16 %v7254
    %v7395 = vunpack.c.h.b16 %v7254
    %v7396 = vunpack.c.l.b16 %v7255
    %v7397 = vunpack.c.h.b16 %v7255
    %v7398 = vunpack.c.l.b16 %v7256
    %v7399 = vunpack.c.h.b16 %v7256
    %v7400 = vunpack.c.l.b16 %v7257
    %v7401 = vunpack.c.h.b16 %v7257
    %v7402 = vunpack.c.l.b16 %v7258
    %v7403 = vunpack.c.h.b16 %v7258
    %v7404 = vunpack.c.l.b16 %v7259
    %v7405 = vunpack.c.h.b16 %v7259
    %v7406 = vunpack.c.l.b16 %v7260
    %v7407 = vunpack.c.h.b16 %v7260
    %v7408 = vunpack.c.l.b16 %v7261
    %v7409 = vunpack.c.h.b16 %v7261
    %v7410 = vunpack.c.l.b16 %v7262
    %v7411 = vunpack.c.h.b16 %v7262
    %v7412 = vunpack.c.l.b16 %v7263
    %v7413 = vunpack.c.h.b16 %v7263
    %v7414 = vunpack.c.l.b16 %v7264
    %v7415 = vunpack.c.h.b16 %v7264
    %v7416 = vunpack.c.l.b16 %v7265
    %v7417 = vunpack.c.h.b16 %v7265
    %v7418 = vunpack.c.l.b16 %v7266
    %v7419 = vunpack.c.h.b16 %v7266
    %v7420 = vunpack.c.l.b16 %v7267
    %v7421 = vunpack.c.h.b16 %v7267
    %v7422 = vunpack.c.l.b16 %v7268
    %v7423 = vunpack.c.h.b16 %v7268
    %v7424 = vunpack.c.l.b16 %v7269
    %v7425 = vunpack.c.h.b16 %v7269
    %v7426 = vunpack.c.l.b16 %v7270
    %v7427 = vunpack.c.h.b16 %v7270
    %v7428 = vunpack.c.l.b16 %v7271
    %v7429 = vunpack.c.h.b16 %v7271
    %v7430 = vunpack.c.l.b16 %v7272
    %v7431 = vunpack.c.h.b16 %v7272
    %v7432 = vunpack.c.l.b16 %v7273
    %v7433 = vunpack.c.h.b16 %v7273
    %v7434 = vunpack.c.l.b16 %v7274
    %v7435 = vunpack.c.h.b16 %v7274
    %v7436 = vunpack.c.l.b16 %v7275
    %v7437 = vunpack.c.h.b16 %v7275
    %v7438 = vunpack.c.l.b16 %v7276
    %v7439 = vunpack.c.h.b16 %v7276
    %v7440 = vunpack.c.l.b16 %v7277
    %v7441 = vunpack.c.h.b16 %v7277
    %v7442 = vunpack.c.l.b16 %v7278
    %v7443 = vunpack.c.h.b16 %v7278
    %v7444 = vunpack.c.l.b16 %v7279
    %v7445 = vunpack.c.h.b16 %v7279
    %v7446 = vunpack.c.l.b16 %v7280
    %v7447 = vunpack.c.h.b16 %v7280
    %v7448 = vunpack.c.l.b16 %v7281
    %v7449 = vunpack.c.h.b16 %v7281
    %v7450 = vunpack.c.l.b16 %v7282
    %v7451 = vunpack.c.h.b16 %v7282
    %v7452 = vunpack.c.l.b16 %v7283
    %v7453 = vunpack.c.h.b16 %v7283
    %v7454 = vunpack.c.l.b16 %v7284
    %v7455 = vunpack.c.h.b16 %v7284
    %v7456 = vunpack.c.l.b16 %v7285
    %v7457 = vunpack.c.h.b16 %v7285
    %v7458 = vunpack.c.l.b16 %v7286
    %v7459 = vunpack.c.h.b16 %v7286
    %v7460 = vunpack.c.l.b16 %v7287
    %v7461 = vunpack.c.h.b16 %v7287
    %v7462 = vunpack.c.l.b16 %v7288
    %v7463 = vunpack.c.h.b16 %v7288
    %v7464 = vunpack.c.l.b16 %v7289
    %v7465 = vunpack.c.h.b16 %v7289
    %v7466 = vunpack.c.l.b16 %v7290
    %v7467 = vunpack.c.h.b16 %v7290
    %v7468 = vunpack.c.l.b16 %v7291
    %v7469 = vunpack.c.h.b16 %v7291
    %v7470 = vunpack.c.l.b16 %v7292
    %v7471 = vunpack.c.h.b16 %v7292
    %v7472 = vunpack.c.l.b16 %v7293
    %v7473 = vunpack.c.h.b16 %v7293
    %v7474 = vunpack.c.l.b16 %v7294
    %v7475 = vunpack.c.h.b16 %v7294
    %v7476 = vunpack.c.l.b16 %v7295
    %v7477 = vunpack.c.h.b16 %v7295
    %v7478 = vunpack.c.l.b16 %v7296
    %v7479 = vunpack.c.h.b16 %v7296
    %v7480 = vunpack.c.l.b16 %v7297
    %v7481 = vunpack.c.h.b16 %v7297
    %v7482 = vunpack.c.l.b16 %v7298
    %v7483 = vunpack.c.h.b16 %v7298
    %v7484 = vunpack.c.l.b16 %v7299
    %v7485 = vunpack.c.h.b16 %v7299
    %v7486 = vunpack.c.l.b16 %v7300
    %v7487 = vunpack.c.h.b16 %v7300
    %v7488 = vunpack.c.l.b16 %v7301
    %v7489 = vunpack.c.h.b16 %v7301
    %v7490 = vunpack.c.l.b16 %v7302
    %v7491 = vunpack.c.h.b16 %v7302
    %v7492 = vunpack.c.l.b16 %v7303
    %v7493 = vunpack.c.h.b16 %v7303
    %v7494 = vunpack.c.l.b16 %v7304
    %v7495 = vunpack.c.h.b16 %v7304
    %v7496 = vunpack.c.l.b16 %v7305
    %v7497 = vunpack.c.h.b16 %v7305
    %v7498 = vpack.c.b16 %v7374, %v7370
    %v7499 = vpack.c.b16 %v7375, %v7371
    %v7500 = vpack.c.b16 %v7376, %v7372
    %v7501 = vpack.c.b16 %v7377, %v7373
    %v7502 = vpack.c.b16 %v7382, %v7378
    %v7503 = vpack.c.b16 %v7383, %v7379
    %v7504 = vpack.c.b16 %v7384, %v7380
    %v7505 = vpack.c.b16 %v7385, %v7381
    %v7506 = vpack.c.b16 %v7390, %v7386
    %v7507 = vpack.c.b16 %v7391, %v7387
    %v7508 = vpack.c.b16 %v7392, %v7388
    %v7509 = vpack.c.b16 %v7393, %v7389
    %v7510 = vpack.c.b16 %v7398, %v7394
    %v7511 = vpack.c.b16 %v7399, %v7395
    %v7512 = vpack.c.b16 %v7400, %v7396
    %v7513 = vpack.c.b16 %v7401, %v7397
    %v7514 = vpack.c.b16 %v7406, %v7402
    %v7515 = vpack.c.b16 %v7407, %v7403
    %v7516 = vpack.c.b16 %v7408, %v7404
    %v7517 = vpack.c.b16 %v7409, %v7405
    %v7518 = vpack.c.b16 %v7414, %v7410
    %v7519 = vpack.c.b16 %v7415, %v7411
    %v7520 = vpack.c.b16 %v7416, %v7412
    %v7521 = vpack.c.b16 %v7417, %v7413
    %v7522 = vpack.c.b16 %v7422, %v7418
    %v7523 = vpack.c.b16 %v7423, %v7419
    %v7524 = vpack.c.b16 %v7424, %v7420
    %v7525 = vpack.c.b16 %v7425, %v7421
    %v7526 = vpack.c.b16 %v7430, %v7426
    %v7527 = vpack.c.b16 %v7431, %v7427
    %v7528 = vpack.c.b16 %v7432, %v7428
    %v7529 = vpack.c.b16 %v7433, %v7429
    %v7530 = vpack.c.b16 %v7438, %v7434
    %v7531 = vpack.c.b16 %v7439, %v7435
    %v7532 = vpack.c.b16 %v7440, %v7436
    %v7533 = vpack.c.b16 %v7441, %v7437
    %v7534 = vpack.c.b16 %v7446, %v7442
    %v7535 = vpack.c.b16 %v7447, %v7443
    %v7536 = vpack.c.b16 %v7448, %v7444
    %v7537 = vpack.c.b16 %v7449, %v7445
    %v7538 = vpack.c.b16 %v7454, %v7450
    %v7539 = vpack.c.b16 %v7455, %v7451
    %v7540 = vpack.c.b16 %v7456, %v7452
    %v7541 = vpack.c.b16 %v7457, %v7453
    %v7542 = vpack.c.b16 %v7462, %v7458
    %v7543 = vpack.c.b16 %v7463, %v7459
    %v7544 = vpack.c.b16 %v7464, %v7460
    %v7545 = vpack.c.b16 %v7465, %v7461
    %v7546 = vpack.c.b16 %v7470, %v7466
    %v7547 = vpack.c.b16 %v7471, %v7467
    %v7548 = vpack.c.b16 %v7472, %v7468
    %v7549 = vpack.c.b16 %v7473, %v7469
    %v7550 = vpack.c.b16 %v7478, %v7474
    %v7551 = vpack.c.b16 %v7479, %v7475
    %v7552 = vpack.c.b16 %v7480, %v7476
    %v7553 = vpack.c.b16 %v7481, %v7477
    %v7554 = vpack.c.b16 %v7486, %v7482
    %v7555 = vpack.c.b16 %v7487, %v7483
    %v7556 = vpack.c.b16 %v7488, %v7484
    %v7557 = vpack.c.b16 %v7489, %v7485
    %v7558 = vpack.c.b16 %v7494, %v7490
    %v7559 = vpack.c.b16 %v7495, %v7491
    %v7560 = vpack.c.b16 %v7496, %v7492
    %v7561 = vpack.c.b16 %v7497, %v7493
    %7626 = vmatpush.bf16.msra.mxu0 %v7526
    %7627 = vmatpush.bf16.msra.mxu0 %v7522
    %7628 = vmatpush.bf16.msra.mxu0 %v7518
    %7629 = vmatpush.bf16.msra.mxu0 %v7514
    %7630 = vmatpush.bf16.msra.mxu0 %v7510
    %7631 = vmatpush.bf16.msra.mxu0 %v7506
    %7632 = vmatpush.bf16.msra.mxu0 %v7502
    %7633 = vmatpush.bf16.msra.mxu0 %v7498
    %7634 = vmatmul.bf16.gmra.mxu0 %v7240
    %v7635 = vpop.f32.mrf.mxu0
    %v7636 = vadd.f32 0.0, %v7635
    %v7637 = vpop.f32.mrf.mxu0
    %7638 = vdwg.mxu0
    %7639 = vmatpush.bf16.msra.mxu0 %v7558
    %7640 = vmatpush.bf16.msra.mxu0 %v7554
    %7641 = vmatpush.bf16.msra.mxu0 %v7550
    %7642 = vmatpush.bf16.msra.mxu0 %v7546
    %7643 = vmatpush.bf16.msra.mxu0 %v7542
    %7644 = vmatpush.bf16.msra.mxu0 %v7538
    %7645 = vmatpush.bf16.msra.mxu0 %v7534
    %7646 = vmatpush.bf16.msra.mxu0 %v7530
    %7647 = vmatmul.bf16.gmra.mxu0 %v7241
    %v7648 = vpop.f32.mrf.mxu0
    %v7649 = vadd.f32 %v7636, %v7648
    %v7650 = vpop.f32.mrf.mxu0
    %7651 = vdwg.mxu0
    %7652 = vmatpush.bf16.msra.mxu0 %v7527
    %7653 = vmatpush.bf16.msra.mxu0 %v7523
    %7654 = vmatpush.bf16.msra.mxu0 %v7519
    %7655 = vmatpush.bf16.msra.mxu0 %v7515
    %7656 = vmatpush.bf16.msra.mxu0 %v7511
    %7657 = vmatpush.bf16.msra.mxu0 %v7507
    %7658 = vmatpush.bf16.msra.mxu0 %v7503
    %7659 = vmatpush.bf16.msra.mxu0 %v7499
    %7660 = vmatmul.bf16.gmra.mxu0 %v7240
    %v7661 = vpop.f32.mrf.mxu0
    %v7662 = vadd.f32 0.0, %v7661
    %v7663 = vpop.f32.mrf.mxu0
    %7664 = vdwg.mxu0
    %7665 = vmatpush.bf16.msra.mxu0 %v7559
    %7666 = vmatpush.bf16.msra.mxu0 %v7555
    %7667 = vmatpush.bf16.msra.mxu0 %v7551
    %7668 = vmatpush.bf16.msra.mxu0 %v7547
    %7669 = vmatpush.bf16.msra.mxu0 %v7543
    %7670 = vmatpush.bf16.msra.mxu0 %v7539
    %7671 = vmatpush.bf16.msra.mxu0 %v7535
    %7672 = vmatpush.bf16.msra.mxu0 %v7531
    %7673 = vmatmul.bf16.gmra.mxu0 %v7241
    %v7674 = vpop.f32.mrf.mxu0
    %v7675 = vadd.f32 %v7662, %v7674
    %v7676 = vpop.f32.mrf.mxu0
    %7677 = vdwg.mxu0
    %7678 = vmatpush.bf16.msra.mxu0 %v7528
    %7679 = vmatpush.bf16.msra.mxu0 %v7524
    %7680 = vmatpush.bf16.msra.mxu0 %v7520
    %7681 = vmatpush.bf16.msra.mxu0 %v7516
    %7682 = vmatpush.bf16.msra.mxu0 %v7512
    %7683 = vmatpush.bf16.msra.mxu0 %v7508
    %7684 = vmatpush.bf16.msra.mxu0 %v7504
    %7685 = vmatpush.bf16.msra.mxu0 %v7500
    %7686 = vmatmul.bf16.gmra.mxu0 %v7240
    %v7687 = vpop.f32.mrf.mxu0
    %v7688 = vadd.f32 0.0, %v7687
    %v7689 = vpop.f32.mrf.mxu0
    %7690 = vdwg.mxu0
    %7691 = vmatpush.bf16.msra.mxu0 %v7560
    %7692 = vmatpush.bf16.msra.mxu0 %v7556
    %7693 = vmatpush.bf16.msra.mxu0 %v7552
    %7694 = vmatpush.bf16.msra.mxu0 %v7548
    %7695 = vmatpush.bf16.msra.mxu0 %v7544
    %7696 = vmatpush.bf16.msra.mxu0 %v7540
    %7697 = vmatpush.bf16.msra.mxu0 %v7536
    %7698 = vmatpush.bf16.msra.mxu0 %v7532
    %7699 = vmatmul.bf16.gmra.mxu0 %v7241
    %v7700 = vpop.f32.mrf.mxu0
    %v7701 = vadd.f32 %v7688, %v7700
    %v7702 = vpop.f32.mrf.mxu0
    %7703 = vdwg.mxu0
    %7704 = vmatpush.bf16.msra.mxu0 %v7529
    %7705 = vmatpush.bf16.msra.mxu0 %v7525
    %7706 = vmatpush.bf16.msra.mxu0 %v7521
    %7707 = vmatpush.bf16.msra.mxu0 %v7517
    %7708 = vmatpush.bf16.msra.mxu0 %v7513
    %7709 = vmatpush.bf16.msra.mxu0 %v7509
    %7710 = vmatpush.bf16.msra.mxu0 %v7505
    %7711 = vmatpush.bf16.msra.mxu0 %v7501
    %7712 = vmatmul.bf16.gmra.mxu0 %v7240
    %v7713 = vpop.f32.mrf.mxu0
    %v7714 = vadd.f32 0.0, %v7713
    %v7715 = vpop.f32.mrf.mxu0
    %7716 = vdwg.mxu0
    %7717 = vmatpush.bf16.msra.mxu0 %v7561
    %7718 = vmatpush.bf16.msra.mxu0 %v7557
    %7719 = vmatpush.bf16.msra.mxu0 %v7553
    %7720 = vmatpush.bf16.msra.mxu0 %v7549
    %7721 = vmatpush.bf16.msra.mxu0 %v7545
    %7722 = vmatpush.bf16.msra.mxu0 %v7541
    %7723 = vmatpush.bf16.msra.mxu0 %v7537
    %7724 = vmatpush.bf16.msra.mxu0 %v7533
    %7725 = vmatmul.bf16.gmra.mxu0 %v7241
    %v7726 = vpop.f32.mrf.mxu0
    %v7727 = vadd.f32 %v7714, %v7726
    %v7728 = vpop.f32.mrf.mxu0
    %7729 = vdwg.mxu0
    %v7730 = vld [vmem:[#allocation3 + $0x18] sm:$0xc]
    %v7731 = vld [vmem:[#allocation3 + $0x20] sm:$0xc]
    %v7732 = vld [vmem:[#allocation3 + $0x28] sm:$0xc]
    %v7734 = vrot.slane %v7649, 6
    %v7736 = vadd.f32 %v7730, %v7734
    %v7737 = vxor.u32 %v7736, 2147483648
    %v7738 = vmul.f32 %v7737, 1.442695
    %v7739 = vpow.pop %v7738
    %v7740 = vadd.f32 %v7739, 1.0
    %v7741 = vrcp.pop %v7740
    %v7742 = vmul.f32 %v7740, %v7741
    %v7743 = vsub.f32 1.0, %v7742
    %v7744 = vmul.f32 %v7741, %v7743
    %v7745 = vadd.f32 %v7741, %v7744
    %vm7746 = vweird.f32 %v7740
    %vm7747 = vweird.f32 %v7741
    %vm7748 = vmor %vm7746, %vm7747
    %v7749 = vsel %vm7748, %v7741, %v7745
    %v7750 = vand.u32 2147483647, %v7740
    %vm7751 = vcmp.eq.f32.partialorder %v7750, 8.507059e+37
    %v7752 = vand.u32 %v7740, 2147483648
    %v7753 = vor.u32 1.1754944e-38, %v7752
    %v7754 = vsel %vm7751, %v7753, %v7749
    %v7755 = vmul.f32 1.0, %v7754
    %v7757 = vrot.slane %v7675, 6
    %v7759 = vadd.f32 %v7731, %v7757
    %v7760 = vxor.u32 %v7759, 2147483648
    %v7761 = vmul.f32 %v7760, 1.442695
    %v7762 = vpow.pop %v7761
    %v7763 = vadd.f32 %v7762, 1.0
    %v7764 = vrcp.pop %v7763
    %v7765 = vmul.f32 %v7763, %v7764
    %v7766 = vsub.f32 1.0, %v7765
    %v7767 = vmul.f32 %v7764, %v7766
    %v7768 = vadd.f32 %v7764, %v7767
    %vm7769 = vweird.f32 %v7763
    %vm7770 = vweird.f32 %v7764
    %vm7771 = vmor %vm7769, %vm7770
    %v7772 = vsel %vm7771, %v7764, %v7768
    %v7773 = vand.u32 2147483647, %v7763
    %vm7774 = vcmp.eq.f32.partialorder %v7773, 8.507059e+37
    %v7775 = vand.u32 %v7763, 2147483648
    %v7776 = vor.u32 1.1754944e-38, %v7775
    %v7777 = vsel %vm7774, %v7776, %v7772
    %v7778 = vmul.f32 1.0, %v7777
    %v7780 = vrot.slane %v7701, 6
    %v7782 = vadd.f32 %v7732, %v7780
    %v7783 = vadd.f32 %v7727, %v3215
    %v7785 = vrot.slane %v7783, 6
    %v7787 = vmul.f32 %v7755, %v7785
    %v7788 = vadd.f32 %v7782, %v7787
    %v7789 = vtanh.pop %v7788
    %v7790 = vsub.f32 1.0, %v7778
    %v7791 = vmul.f32 %v7790, %v7789
    %v7792 = vrot.slane %v7032, 6
    %v7794 = vmul.f32 %v7778, %v7792
    %v7795 = vadd.f32 %v7791, %v7794
    %7796 = vst [vmem:[#allocation5 + $0x3] sm:$0x4] %v7795
    %7797 = vst [vmem:[#allocation5 + $0xc] sm:$0x8] %v7795
    %7799 = vst [vmem:[#allocation1] sm:$0xff] %v7795
    %s7800 = scalar_lea.vmem [#allocation1], 2
    %v7801 = vld [vmem:[%s7800] ss:$9 sm:$0xff]
    %s7802 = scalar_lea.vmem [#allocation1], 3
    %v7803 = vld [vmem:[%s7802] ss:$9 sm:$0xff]
    %v7804 = vperm.slane %v7801, 0
    %v7805 = vperm.slane %v7803, 0
    %v7808 = vrot.slane %v7804, 2
    %v7809 = vrot.slane %v7804, 4
    %v7810 = vrot.slane %v7804, 6
    %v7811 = vrot.slane %v7805, 2
    %v7812 = vrot.slane %v7805, 4
    %v7813 = vrot.slane %v7805, 6
    %v7820 = vmul.f32 %v3178, %v7804
    %v7821 = vmul.f32 %v3199, %v7808
    %v7822 = vmul.f32 %v3200, %v7809
    %v7823 = vmul.f32 %v3201, %v7810
    %v7824 = vmul.f32 %v3180, %v7804
    %v7825 = vmul.f32 %v3202, %v7805
    %v7826 = vmul.f32 %v3203, %v7811
    %v7827 = vmul.f32 %v3204, %v7812
    %v7828 = vmul.f32 %v3183, %v7813
    %v7829 = vmul.f32 %v3205, %v7805
    %7840 = vst [vmem:[#allocation1] ss:$4 sm:$0xff] %v7820
    %s7841 = scalar_lea.vmem [#allocation1], 1
    %7842 = vst [vmem:[%s7841] ss:$4 sm:$0xff] %v7821
    %s7843 = scalar_lea.vmem [#allocation1], 2
    %7844 = vst [vmem:[%s7843] ss:$4 sm:$0xff] %v7822
    %s7845 = scalar_lea.vmem [#allocation1], 3
    %7846 = vst [vmem:[%s7845] ss:$4 sm:$0xff] %v7823
    %s7847 = scalar_lea.vmem [#allocation1], 32
    %7848 = vst [vmem:[%s7847] ss:$4 sm:$0xff] %v7824
    %v7849 = vld.sshfl [vmem:[#allocation1] sm:$0xff pattern:$0x73625140]
    %v7850 = vld.sshfl [vmem:[#allocation1 + $0x20] sm:$0xff pattern:$0x73625140]
    %7851 = vst [vmem:[#allocation1] ss:$4 sm:$0xff] %v7825
    %7852 = vst [vmem:[%s7841] ss:$4 sm:$0xff] %v7826
    %7853 = vst [vmem:[%s7843] ss:$4 sm:$0xff] %v7827
    %7854 = vst [vmem:[%s7845] ss:$4 sm:$0xff] %v7828
    %7855 = vst [vmem:[%s7847] ss:$4 sm:$0xff] %v7829
    %v7856 = vld.sshfl [vmem:[#allocation1] sm:$0xff pattern:$0x73625140]
    %v7857 = vld.sshfl [vmem:[#allocation1 + $0x20] sm:$0xff pattern:$0x73625140]
    %7862 = vadd.xlane.f32.xlu0 %v7849
    %v7863 = vpop.xlane.xlu0 %7862
    %v7864 = vsel %vm3283, %v7850, 0.0
    %7865 = vadd.xlane.f32.xlu0 %v7864
    %v7866 = vpop.xlane.xlu0 %7865
    %7867 = vadd.xlane.f32.xlu0 %v7856
    %v7868 = vpop.xlane.xlu0 %7867
    %v7869 = vsel %vm3283, %v7857, 0.0
    %7870 = vadd.xlane.f32.xlu0 %v7869
    %v7871 = vpop.xlane.xlu0 %7870
    %v7876 = vperm.slane %v7863, %v3297
    %v7877 = vperm.slane %v7866, %v3299
    %v7878 = vsel %vm3301, %v7877, %v7876
    %v7879 = vperm.slane %v7868, %v3297
    %v7880 = vperm.slane %v7871, %v3299
    %v7881 = vsel %vm3301, %v7880, %v7879
    %v7882 = vsel %vm3306, %v7881, %v7878
    %v7884 = vsel %vm3309, %v7882, -inf
    %7885 = vmax.xlane.f32.xlu0 %v7884
    %v7886 = vpop.xlane.xlu0 %7885
    %v7888 = vperm.slane %v7886, 0
    %v7889 = vperm.slane %v7886, 1
    %v7892 = vsub.f32 %v7863, %v7888
    %v7893 = vsub.f32 %v7866, %v7888
    %v7894 = vsub.f32 %v7868, %v7889
    %v7895 = vsub.f32 %v7871, %v7889
    %v7896 = vmul.f32 %v7892, 1.442695
    %v7897 = vpow.pop %v7896
    %v7898 = vmul.f32 %v7893, 1.442695
    %v7899 = vpow.pop %v7898
    %v7900 = vmul.f32 %v7894, 1.442695
    %v7901 = vpow.pop %v7900
    %v7902 = vmul.f32 %v7895, 1.442695
    %v7903 = vpow.pop %v7902
    %7908 = vset.pattern.permute.xlu0 0
    %7909 = vperm.xlu0 %7908, %v7897
    %v7910 = vpop.permute.xlu0 %7909
    %7911 = vset.pattern.permute.xlu0 0
    %7912 = vperm.xlu0 %7911, %v7899
    %v7913 = vpop.permute.xlu0 %7912
    %7914 = vset.pattern.permute.xlu0 0
    %7915 = vperm.xlu0 %7914, %v7901
    %v7916 = vpop.permute.xlu0 %7915
    %7917 = vset.pattern.permute.xlu0 0
    %7918 = vperm.xlu0 %7917, %v7903
    %v7919 = vpop.permute.xlu0 %7918
    %v7920 = vperm.slane %v7910, %v3297
    %v7921 = vperm.slane %v7913, %v3299
    %v7922 = vsel %vm3301, %v7921, %v7920
    %v7923 = vperm.slane %v7916, %v3297
    %v7924 = vperm.slane %v7919, %v3299
    %v7925 = vsel %vm3301, %v7924, %v7923
    %v7926 = vsel %vm3306, %v7925, %v7922
    %v7928 = vsel %vm3309, %v7926, 0.0
    %7929 = vadd.xlane.f32.xlu0 %v7928
    %v7930 = vpop.xlane.xlu0 %7929
    %v7931 = vrcp.pop %v7930
    %v7933 = vperm.slane %v7931, 0
    %v7934 = vperm.slane %v7931, 1
    %v7937 = vmul.f32 %v7897, %v7933
    %v7938 = vmul.f32 %v7899, %v7933
    %v7939 = vmul.f32 %v7901, %v7934
    %v7940 = vmul.f32 %v7903, %v7934
    %7942 = vset.pattern.permute.xlu0 0
    %7943 = vperm.xlu0 %7942, %v7937
    %v7944 = vpop.permute.xlu0 %7943
    %7947 = vset.pattern.permute.xlu0 0
    %7948 = vperm.xlu0 %7947, %v7938
    %v7949 = vpop.permute.xlu0 %7948
    %7952 = vset.pattern.permute.xlu0 0
    %7953 = vperm.xlu0 %7952, %v7939
    %v7954 = vpop.permute.xlu0 %7953
    %7957 = vset.pattern.permute.xlu0 0
    %7958 = vperm.xlu0 %7957, %v7940
    %v7959 = vpop.permute.xlu0 %7958
    %7961 = vst [vmem:[#allocation1] ss:$4 sm:$0xff] %v3099
    %s7962 = scalar_lea.vmem [#allocation1], 1
    %7963 = vst [vmem:[%s7962] ss:$4 sm:$0xff] %v3189
    %s7964 = scalar_lea.vmem [#allocation1], 2
    %7965 = vst [vmem:[%s7964] ss:$4 sm:$0xff] %v3190
    %s7966 = scalar_lea.vmem [#allocation1], 3
    %7967 = vst [vmem:[%s7966] ss:$4 sm:$0xff] %v3191
    %s7968 = scalar_lea.vmem [#allocation1], 32
    %7969 = vst [vmem:[%s7968] ss:$4 sm:$0xff] %v3100
    %v7970 = vld.sshfl [vmem:[#allocation1] sm:$0xff pattern:$0x73625140]
    %v7971 = vld.sshfl [vmem:[#allocation1 + $0x20] sm:$0xff pattern:$0x73625140]
    %7972 = vst [vmem:[#allocation1] ss:$4 sm:$0xff] %v3192
    %7973 = vst [vmem:[%s7962] ss:$4 sm:$0xff] %v3193
    %7974 = vst [vmem:[%s7964] ss:$4 sm:$0xff] %v3194
    %7975 = vst [vmem:[%s7966] ss:$4 sm:$0xff] %v3101
    %7976 = vst [vmem:[%s7968] ss:$4 sm:$0xff] %v3195
    %v7977 = vld.sshfl [vmem:[#allocation1] sm:$0xff pattern:$0x73625140]
    %v7978 = vld.sshfl [vmem:[#allocation1 + $0x20] sm:$0xff pattern:$0x73625140]
    %v7983 = vmul.f32 %v7944, %v7970
    %v7984 = vmul.f32 %v7949, %v7971
    %v7985 = vmul.f32 %v7954, %v7977
    %v7986 = vmul.f32 %v7959, %v7978
    %v7987 = vsel %vm3283, %v7984, 0.0
    %v7988 = vadd.f32 %v7983, %v7987
    %v7989 = vrot.slane %v7988, 4
    %v7990 = vadd.f32 %v7988, %v7989
    %v7991 = vrot.slane %v7990, 2
    %v7992 = vadd.f32 %v7990, %v7991
    %v7993 = vrot.slane %v7992, 1
    %v7994 = vadd.f32 %v7992, %v7993
    %v7995 = vsel %vm3283, %v7986, 0.0
    %v7996 = vadd.f32 %v7985, %v7995
    %v7997 = vrot.slane %v7996, 4
    %v7998 = vadd.f32 %v7996, %v7997
    %v7999 = vrot.slane %v7998, 2
    %v8000 = vadd.f32 %v7998, %v7999
    %v8001 = vrot.slane %v8000, 1
    %v8002 = vadd.f32 %v8000, %v8001
    %v8005 = vsel %vm3306, %v8002, %v7994
    %v8007 = vrot.slane %v7795, 2
    %v8009 = vpack.c.bf16 %v8005, %v8005
    %v8010 = vpack.c.bf16 %v8007, %v8007
    %v8011 = vld [vmem:[%s7] sm:$0xff]
    %v8012 = vld [vmem:[%s7 + $0x8] sm:$0xff]
    %v8013 = vld [vmem:[%s7 + $0x10] sm:$0xff]
    %v8014 = vld [vmem:[%s7 + $0x18] sm:$0xff]
    %v8015 = vld [vmem:[%s7 + $0x20] sm:$0xff]
    %v8016 = vld [vmem:[%s7 + $0x28] sm:$0xff]
    %v8017 = vld [vmem:[%s7 + $0x30] sm:$0xff]
    %v8018 = vld [vmem:[%s7 + $0x38] sm:$0xff]
    %v8019 = vld [vmem:[%s7 + $0x40] sm:$0xff]
    %v8020 = vld [vmem:[%s7 + $0x48] sm:$0xff]
    %v8021 = vld [vmem:[%s7 + $0x50] sm:$0xff]
    %v8022 = vld [vmem:[%s7 + $0x58] sm:$0xff]
    %v8023 = vld [vmem:[%s7 + $0x60] sm:$0xff]
    %v8024 = vld [vmem:[%s7 + $0x68] sm:$0xff]
    %v8025 = vld [vmem:[%s7 + $0x70] sm:$0xff]
    %v8026 = vld [vmem:[%s7 + $0x78] sm:$0xff]
    %v8027 = vld [vmem:[%s7 + $0x80] sm:$0xff]
    %v8028 = vld [vmem:[%s7 + $0x88] sm:$0xff]
    %v8029 = vld [vmem:[%s7 + $0x90] sm:$0xff]
    %v8030 = vld [vmem:[%s7 + $0x98] sm:$0xff]
    %v8031 = vld [vmem:[%s7 + $0xa0] sm:$0xff]
    %v8032 = vld [vmem:[%s7 + $0xa8] sm:$0xff]
    %v8033 = vld [vmem:[%s7 + $0xb0] sm:$0xff]
    %v8034 = vld [vmem:[%s7 + $0xb8] sm:$0xff]
    %v8035 = vld [vmem:[%s7 + $0xc0] sm:$0xff]
    %v8036 = vld [vmem:[%s7 + $0xc8] sm:$0xff]
    %v8037 = vld [vmem:[%s7 + $0xd0] sm:$0xff]
    %v8038 = vld [vmem:[%s7 + $0xd8] sm:$0xff]
    %v8039 = vld [vmem:[%s7 + $0xe0] sm:$0xff]
    %v8040 = vld [vmem:[%s7 + $0xe8] sm:$0xff]
    %v8041 = vld [vmem:[%s7 + $0xf0] sm:$0xff]
    %v8042 = vld [vmem:[%s7 + $0xf8] sm:$0xff]
    %v8043 = vld [vmem:[%s7 + $0x100] sm:$0xff]
    %v8044 = vld [vmem:[%s7 + $0x108] sm:$0xff]
    %v8045 = vld [vmem:[%s7 + $0x110] sm:$0xff]
    %v8046 = vld [vmem:[%s7 + $0x118] sm:$0xff]
    %v8047 = vld [vmem:[%s7 + $0x120] sm:$0xff]
    %v8048 = vld [vmem:[%s7 + $0x128] sm:$0xff]
    %v8049 = vld [vmem:[%s7 + $0x130] sm:$0xff]
    %v8050 = vld [vmem:[%s7 + $0x138] sm:$0xff]
    %v8051 = vld [vmem:[%s7 + $0x140] sm:$0xff]
    %v8052 = vld [vmem:[%s7 + $0x148] sm:$0xff]
    %v8053 = vld [vmem:[%s7 + $0x150] sm:$0xff]
    %v8054 = vld [vmem:[%s7 + $0x158] sm:$0xff]
    %v8055 = vld [vmem:[%s7 + $0x160] sm:$0xff]
    %v8056 = vld [vmem:[%s7 + $0x168] sm:$0xff]
    %v8057 = vld [vmem:[%s7 + $0x170] sm:$0xff]
    %v8058 = vld [vmem:[%s7 + $0x178] sm:$0xff]
    %v8059 = vld [vmem:[%s7 + $0x180] sm:$0xff]
    %v8060 = vld [vmem:[%s7 + $0x188] sm:$0xff]
    %v8061 = vld [vmem:[%s7 + $0x190] sm:$0xff]
    %v8062 = vld [vmem:[%s7 + $0x198] sm:$0xff]
    %v8063 = vld [vmem:[%s7 + $0x1a0] sm:$0xff]
    %v8064 = vld [vmem:[%s7 + $0x1a8] sm:$0xff]
    %v8065 = vld [vmem:[%s7 + $0x1b0] sm:$0xff]
    %v8066 = vld [vmem:[%s7 + $0x1b8] sm:$0xff]
    %v8067 = vld [vmem:[%s7 + $0x1c0] sm:$0xff]
    %v8068 = vld [vmem:[%s7 + $0x1c8] sm:$0xff]
    %v8069 = vld [vmem:[%s7 + $0x1d0] sm:$0xff]
    %v8070 = vld [vmem:[%s7 + $0x1d8] sm:$0xff]
    %v8071 = vld [vmem:[%s7 + $0x1e0] sm:$0xff]
    %v8072 = vld [vmem:[%s7 + $0x1e8] sm:$0xff]
    %v8073 = vld [vmem:[%s7 + $0x1f0] sm:$0xff]
    %v8074 = vld [vmem:[%s7 + $0x1f8] sm:$0xff]
    %v8139 = vunpack.c.l.b16 %v8011
    %v8140 = vunpack.c.h.b16 %v8011
    %v8141 = vunpack.c.l.b16 %v8012
    %v8142 = vunpack.c.h.b16 %v8012
    %v8143 = vunpack.c.l.b16 %v8013
    %v8144 = vunpack.c.h.b16 %v8013
    %v8145 = vunpack.c.l.b16 %v8014
    %v8146 = vunpack.c.h.b16 %v8014
    %v8147 = vunpack.c.l.b16 %v8015
    %v8148 = vunpack.c.h.b16 %v8015
    %v8149 = vunpack.c.l.b16 %v8016
    %v8150 = vunpack.c.h.b16 %v8016
    %v8151 = vunpack.c.l.b16 %v8017
    %v8152 = vunpack.c.h.b16 %v8017
    %v8153 = vunpack.c.l.b16 %v8018
    %v8154 = vunpack.c.h.b16 %v8018
    %v8155 = vunpack.c.l.b16 %v8019
    %v8156 = vunpack.c.h.b16 %v8019
    %v8157 = vunpack.c.l.b16 %v8020
    %v8158 = vunpack.c.h.b16 %v8020
    %v8159 = vunpack.c.l.b16 %v8021
    %v8160 = vunpack.c.h.b16 %v8021
    %v8161 = vunpack.c.l.b16 %v8022
    %v8162 = vunpack.c.h.b16 %v8022
    %v8163 = vunpack.c.l.b16 %v8023
    %v8164 = vunpack.c.h.b16 %v8023
    %v8165 = vunpack.c.l.b16 %v8024
    %v8166 = vunpack.c.h.b16 %v8024
    %v8167 = vunpack.c.l.b16 %v8025
    %v8168 = vunpack.c.h.b16 %v8025
    %v8169 = vunpack.c.l.b16 %v8026
    %v8170 = vunpack.c.h.b16 %v8026
    %v8171 = vunpack.c.l.b16 %v8027
    %v8172 = vunpack.c.h.b16 %v8027
    %v8173 = vunpack.c.l.b16 %v8028
    %v8174 = vunpack.c.h.b16 %v8028
    %v8175 = vunpack.c.l.b16 %v8029
    %v8176 = vunpack.c.h.b16 %v8029
    %v8177 = vunpack.c.l.b16 %v8030
    %v8178 = vunpack.c.h.b16 %v8030
    %v8179 = vunpack.c.l.b16 %v8031
    %v8180 = vunpack.c.h.b16 %v8031
    %v8181 = vunpack.c.l.b16 %v8032
    %v8182 = vunpack.c.h.b16 %v8032
    %v8183 = vunpack.c.l.b16 %v8033
    %v8184 = vunpack.c.h.b16 %v8033
    %v8185 = vunpack.c.l.b16 %v8034
    %v8186 = vunpack.c.h.b16 %v8034
    %v8187 = vunpack.c.l.b16 %v8035
    %v8188 = vunpack.c.h.b16 %v8035
    %v8189 = vunpack.c.l.b16 %v8036
    %v8190 = vunpack.c.h.b16 %v8036
    %v8191 = vunpack.c.l.b16 %v8037
    %v8192 = vunpack.c.h.b16 %v8037
    %v8193 = vunpack.c.l.b16 %v8038
    %v8194 = vunpack.c.h.b16 %v8038
    %v8195 = vunpack.c.l.b16 %v8039
    %v8196 = vunpack.c.h.b16 %v8039
    %v8197 = vunpack.c.l.b16 %v8040
    %v8198 = vunpack.c.h.b16 %v8040
    %v8199 = vunpack.c.l.b16 %v8041
    %v8200 = vunpack.c.h.b16 %v8041
    %v8201 = vunpack.c.l.b16 %v8042
    %v8202 = vunpack.c.h.b16 %v8042
    %v8203 = vunpack.c.l.b16 %v8043
    %v8204 = vunpack.c.h.b16 %v8043
    %v8205 = vunpack.c.l.b16 %v8044
    %v8206 = vunpack.c.h.b16 %v8044
    %v8207 = vunpack.c.l.b16 %v8045
    %v8208 = vunpack.c.h.b16 %v8045
    %v8209 = vunpack.c.l.b16 %v8046
    %v8210 = vunpack.c.h.b16 %v8046
    %v8211 = vunpack.c.l.b16 %v8047
    %v8212 = vunpack.c.h.b16 %v8047
    %v8213 = vunpack.c.l.b16 %v8048
    %v8214 = vunpack.c.h.b16 %v8048
    %v8215 = vunpack.c.l.b16 %v8049
    %v8216 = vunpack.c.h.b16 %v8049
    %v8217 = vunpack.c.l.b16 %v8050
    %v8218 = vunpack.c.h.b16 %v8050
    %v8219 = vunpack.c.l.b16 %v8051
    %v8220 = vunpack.c.h.b16 %v8051
    %v8221 = vunpack.c.l.b16 %v8052
    %v8222 = vunpack.c.h.b16 %v8052
    %v8223 = vunpack.c.l.b16 %v8053
    %v8224 = vunpack.c.h.b16 %v8053
    %v8225 = vunpack.c.l.b16 %v8054
    %v8226 = vunpack.c.h.b16 %v8054
    %v8227 = vunpack.c.l.b16 %v8055
    %v8228 = vunpack.c.h.b16 %v8055
    %v8229 = vunpack.c.l.b16 %v8056
    %v8230 = vunpack.c.h.b16 %v8056
    %v8231 = vunpack.c.l.b16 %v8057
    %v8232 = vunpack.c.h.b16 %v8057
    %v8233 = vunpack.c.l.b16 %v8058
    %v8234 = vunpack.c.h.b16 %v8058
    %v8235 = vunpack.c.l.b16 %v8059
    %v8236 = vunpack.c.h.b16 %v8059
    %v8237 = vunpack.c.l.b16 %v8060
    %v8238 = vunpack.c.h.b16 %v8060
    %v8239 = vunpack.c.l.b16 %v8061
    %v8240 = vunpack.c.h.b16 %v8061
    %v8241 = vunpack.c.l.b16 %v8062
    %v8242 = vunpack.c.h.b16 %v8062
    %v8243 = vunpack.c.l.b16 %v8063
    %v8244 = vunpack.c.h.b16 %v8063
    %v8245 = vunpack.c.l.b16 %v8064
    %v8246 = vunpack.c.h.b16 %v8064
    %v8247 = vunpack.c.l.b16 %v8065
    %v8248 = vunpack.c.h.b16 %v8065
    %v8249 = vunpack.c.l.b16 %v8066
    %v8250 = vunpack.c.h.b16 %v8066
    %v8251 = vunpack.c.l.b16 %v8067
    %v8252 = vunpack.c.h.b16 %v8067
    %v8253 = vunpack.c.l.b16 %v8068
    %v8254 = vunpack.c.h.b16 %v8068
    %v8255 = vunpack.c.l.b16 %v8069
    %v8256 = vunpack.c.h.b16 %v8069
    %v8257 = vunpack.c.l.b16 %v8070
    %v8258 = vunpack.c.h.b16 %v8070
    %v8259 = vunpack.c.l.b16 %v8071
    %v8260 = vunpack.c.h.b16 %v8071
    %v8261 = vunpack.c.l.b16 %v8072
    %v8262 = vunpack.c.h.b16 %v8072
    %v8263 = vunpack.c.l.b16 %v8073
    %v8264 = vunpack.c.h.b16 %v8073
    %v8265 = vunpack.c.l.b16 %v8074
    %v8266 = vunpack.c.h.b16 %v8074
    %v8267 = vpack.c.b16 %v8143, %v8139
    %v8268 = vpack.c.b16 %v8144, %v8140
    %v8269 = vpack.c.b16 %v8145, %v8141
    %v8270 = vpack.c.b16 %v8146, %v8142
    %v8271 = vpack.c.b16 %v8151, %v8147
    %v8272 = vpack.c.b16 %v8152, %v8148
    %v8273 = vpack.c.b16 %v8153, %v8149
    %v8274 = vpack.c.b16 %v8154, %v8150
    %v8275 = vpack.c.b16 %v8159, %v8155
    %v8276 = vpack.c.b16 %v8160, %v8156
    %v8277 = vpack.c.b16 %v8161, %v8157
    %v8278 = vpack.c.b16 %v8162, %v8158
    %v8279 = vpack.c.b16 %v8167, %v8163
    %v8280 = vpack.c.b16 %v8168, %v8164
    %v8281 = vpack.c.b16 %v8169, %v8165
    %v8282 = vpack.c.b16 %v8170, %v8166
    %v8283 = vpack.c.b16 %v8175, %v8171
    %v8284 = vpack.c.b16 %v8176, %v8172
    %v8285 = vpack.c.b16 %v8177, %v8173
    %v8286 = vpack.c.b16 %v8178, %v8174
    %v8287 = vpack.c.b16 %v8183, %v8179
    %v8288 = vpack.c.b16 %v8184, %v8180
    %v8289 = vpack.c.b16 %v8185, %v8181
    %v8290 = vpack.c.b16 %v8186, %v8182
    %v8291 = vpack.c.b16 %v8191, %v8187
    %v8292 = vpack.c.b16 %v8192, %v8188
    %v8293 = vpack.c.b16 %v8193, %v8189
    %v8294 = vpack.c.b16 %v8194, %v8190
    %v8295 = vpack.c.b16 %v8199, %v8195
    %v8296 = vpack.c.b16 %v8200, %v8196
    %v8297 = vpack.c.b16 %v8201, %v8197
    %v8298 = vpack.c.b16 %v8202, %v8198
    %v8299 = vpack.c.b16 %v8207, %v8203
    %v8300 = vpack.c.b16 %v8208, %v8204
    %v8301 = vpack.c.b16 %v8209, %v8205
    %v8302 = vpack.c.b16 %v8210, %v8206
    %v8303 = vpack.c.b16 %v8215, %v8211
    %v8304 = vpack.c.b16 %v8216, %v8212
    %v8305 = vpack.c.b16 %v8217, %v8213
    %v8306 = vpack.c.b16 %v8218, %v8214
    %v8307 = vpack.c.b16 %v8223, %v8219
    %v8308 = vpack.c.b16 %v8224, %v8220
    %v8309 = vpack.c.b16 %v8225, %v8221
    %v8310 = vpack.c.b16 %v8226, %v8222
    %v8311 = vpack.c.b16 %v8231, %v8227
    %v8312 = vpack.c.b16 %v8232, %v8228
    %v8313 = vpack.c.b16 %v8233, %v8229
    %v8314 = vpack.c.b16 %v8234, %v8230
    %v8315 = vpack.c.b16 %v8239, %v8235
    %v8316 = vpack.c.b16 %v8240, %v8236
    %v8317 = vpack.c.b16 %v8241, %v8237
    %v8318 = vpack.c.b16 %v8242, %v8238
    %v8319 = vpack.c.b16 %v8247, %v8243
    %v8320 = vpack.c.b16 %v8248, %v8244
    %v8321 = vpack.c.b16 %v8249, %v8245
    %v8322 = vpack.c.b16 %v8250, %v8246
    %v8323 = vpack.c.b16 %v8255, %v8251
    %v8324 = vpack.c.b16 %v8256, %v8252
    %v8325 = vpack.c.b16 %v8257, %v8253
    %v8326 = vpack.c.b16 %v8258, %v8254
    %v8327 = vpack.c.b16 %v8263, %v8259
    %v8328 = vpack.c.b16 %v8264, %v8260
    %v8329 = vpack.c.b16 %v8265, %v8261
    %v8330 = vpack.c.b16 %v8266, %v8262
    %8395 = vmatpush.bf16.msra.mxu0 %v8295
    %8396 = vmatpush.bf16.msra.mxu0 %v8291
    %8397 = vmatpush.bf16.msra.mxu0 %v8287
    %8398 = vmatpush.bf16.msra.mxu0 %v8283
    %8399 = vmatpush.bf16.msra.mxu0 %v8279
    %8400 = vmatpush.bf16.msra.mxu0 %v8275
    %8401 = vmatpush.bf16.msra.mxu0 %v8271
    %8402 = vmatpush.bf16.msra.mxu0 %v8267
    %8403 = vmatmul.bf16.gmra.mxu0 %v8009
    %v8404 = vpop.f32.mrf.mxu0
    %v8405 = vadd.f32 0.0, %v8404
    %v8406 = vpop.f32.mrf.mxu0
    %8407 = vdwg.mxu0
    %8408 = vmatpush.bf16.msra.mxu0 %v8327
    %8409 = vmatpush.bf16.msra.mxu0 %v8323
    %8410 = vmatpush.bf16.msra.mxu0 %v8319
    %8411 = vmatpush.bf16.msra.mxu0 %v8315
    %8412 = vmatpush.bf16.msra.mxu0 %v8311
    %8413 = vmatpush.bf16.msra.mxu0 %v8307
    %8414 = vmatpush.bf16.msra.mxu0 %v8303
    %8415 = vmatpush.bf16.msra.mxu0 %v8299
    %8416 = vmatmul.bf16.gmra.mxu0 %v8010
    %v8417 = vpop.f32.mrf.mxu0
    %v8418 = vadd.f32 %v8405, %v8417
    %v8419 = vpop.f32.mrf.mxu0
    %8420 = vdwg.mxu0
    %8421 = vmatpush.bf16.msra.mxu0 %v8296
    %8422 = vmatpush.bf16.msra.mxu0 %v8292
    %8423 = vmatpush.bf16.msra.mxu0 %v8288
    %8424 = vmatpush.bf16.msra.mxu0 %v8284
    %8425 = vmatpush.bf16.msra.mxu0 %v8280
    %8426 = vmatpush.bf16.msra.mxu0 %v8276
    %8427 = vmatpush.bf16.msra.mxu0 %v8272
    %8428 = vmatpush.bf16.msra.mxu0 %v8268
    %8429 = vmatmul.bf16.gmra.mxu0 %v8009
    %v8430 = vpop.f32.mrf.mxu0
    %v8431 = vadd.f32 0.0, %v8430
    %v8432 = vpop.f32.mrf.mxu0
    %8433 = vdwg.mxu0
    %8434 = vmatpush.bf16.msra.mxu0 %v8328
    %8435 = vmatpush.bf16.msra.mxu0 %v8324
    %8436 = vmatpush.bf16.msra.mxu0 %v8320
    %8437 = vmatpush.bf16.msra.mxu0 %v8316
    %8438 = vmatpush.bf16.msra.mxu0 %v8312
    %8439 = vmatpush.bf16.msra.mxu0 %v8308
    %8440 = vmatpush.bf16.msra.mxu0 %v8304
    %8441 = vmatpush.bf16.msra.mxu0 %v8300
    %8442 = vmatmul.bf16.gmra.mxu0 %v8010
    %v8443 = vpop.f32.mrf.mxu0
    %v8444 = vadd.f32 %v8431, %v8443
    %v8445 = vpop.f32.mrf.mxu0
    %8446 = vdwg.mxu0
    %8447 = vmatpush.bf16.msra.mxu0 %v8297
    %8448 = vmatpush.bf16.msra.mxu0 %v8293
    %8449 = vmatpush.bf16.msra.mxu0 %v8289
    %8450 = vmatpush.bf16.msra.mxu0 %v8285
    %8451 = vmatpush.bf16.msra.mxu0 %v8281
    %8452 = vmatpush.bf16.msra.mxu0 %v8277
    %8453 = vmatpush.bf16.msra.mxu0 %v8273
    %8454 = vmatpush.bf16.msra.mxu0 %v8269
    %8455 = vmatmul.bf16.gmra.mxu0 %v8009
    %v8456 = vpop.f32.mrf.mxu0
    %v8457 = vadd.f32 0.0, %v8456
    %v8458 = vpop.f32.mrf.mxu0
    %8459 = vdwg.mxu0
    %8460 = vmatpush.bf16.msra.mxu0 %v8329
    %8461 = vmatpush.bf16.msra.mxu0 %v8325
    %8462 = vmatpush.bf16.msra.mxu0 %v8321
    %8463 = vmatpush.bf16.msra.mxu0 %v8317
    %8464 = vmatpush.bf16.msra.mxu0 %v8313
    %8465 = vmatpush.bf16.msra.mxu0 %v8309
    %8466 = vmatpush.bf16.msra.mxu0 %v8305
    %8467 = vmatpush.bf16.msra.mxu0 %v8301
    %8468 = vmatmul.bf16.gmra.mxu0 %v8010
    %v8469 = vpop.f32.mrf.mxu0
    %v8470 = vadd.f32 %v8457, %v8469
    %v8471 = vpop.f32.mrf.mxu0
    %8472 = vdwg.mxu0
    %8473 = vmatpush.bf16.msra.mxu0 %v8298
    %8474 = vmatpush.bf16.msra.mxu0 %v8294
    %8475 = vmatpush.bf16.msra.mxu0 %v8290
    %8476 = vmatpush.bf16.msra.mxu0 %v8286
    %8477 = vmatpush.bf16.msra.mxu0 %v8282
    %8478 = vmatpush.bf16.msra.mxu0 %v8278
    %8479 = vmatpush.bf16.msra.mxu0 %v8274
    %8480 = vmatpush.bf16.msra.mxu0 %v8270
    %8481 = vmatmul.bf16.gmra.mxu0 %v8009
    %v8482 = vpop.f32.mrf.mxu0
    %v8483 = vadd.f32 0.0, %v8482
    %v8484 = vpop.f32.mrf.mxu0
    %8485 = vdwg.mxu0
    %8486 = vmatpush.bf16.msra.mxu0 %v8330
    %8487 = vmatpush.bf16.msra.mxu0 %v8326
    %8488 = vmatpush.bf16.msra.mxu0 %v8322
    %8489 = vmatpush.bf16.msra.mxu0 %v8318
    %8490 = vmatpush.bf16.msra.mxu0 %v8314
    %8491 = vmatpush.bf16.msra.mxu0 %v8310
    %8492 = vmatpush.bf16.msra.mxu0 %v8306
    %8493 = vmatpush.bf16.msra.mxu0 %v8302
    %8494 = vmatmul.bf16.gmra.mxu0 %v8010
    %v8495 = vpop.f32.mrf.mxu0
    %v8496 = vadd.f32 %v8483, %v8495
    %v8497 = vpop.f32.mrf.mxu0
    %8498 = vdwg.mxu0
    %v8499 = vld [vmem:[#allocation3 + $0x18] sm:$0x30]
    %v8500 = vld [vmem:[#allocation3 + $0x20] sm:$0x30]
    %v8501 = vld [vmem:[#allocation3 + $0x28] sm:$0x30]
    %v8503 = vrot.slane %v8418, 4
    %v8505 = vadd.f32 %v8499, %v8503
    %v8506 = vxor.u32 %v8505, 2147483648
    %v8507 = vmul.f32 %v8506, 1.442695
    %v8508 = vpow.pop %v8507
    %v8509 = vadd.f32 %v8508, 1.0
    %v8510 = vrcp.pop %v8509
    %v8511 = vmul.f32 %v8509, %v8510
    %v8512 = vsub.f32 1.0, %v8511
    %v8513 = vmul.f32 %v8510, %v8512
    %v8514 = vadd.f32 %v8510, %v8513
    %vm8515 = vweird.f32 %v8509
    %vm8516 = vweird.f32 %v8510
    %vm8517 = vmor %vm8515, %vm8516
    %v8518 = vsel %vm8517, %v8510, %v8514
    %v8519 = vand.u32 2147483647, %v8509
    %vm8520 = vcmp.eq.f32.partialorder %v8519, 8.507059e+37
    %v8521 = vand.u32 %v8509, 2147483648
    %v8522 = vor.u32 1.1754944e-38, %v8521
    %v8523 = vsel %vm8520, %v8522, %v8518
    %v8524 = vmul.f32 1.0, %v8523
    %v8526 = vrot.slane %v8444, 4
    %v8528 = vadd.f32 %v8500, %v8526
    %v8529 = vxor.u32 %v8528, 2147483648
    %v8530 = vmul.f32 %v8529, 1.442695
    %v8531 = vpow.pop %v8530
    %v8532 = vadd.f32 %v8531, 1.0
    %v8533 = vrcp.pop %v8532
    %v8534 = vmul.f32 %v8532, %v8533
    %v8535 = vsub.f32 1.0, %v8534
    %v8536 = vmul.f32 %v8533, %v8535
    %v8537 = vadd.f32 %v8533, %v8536
    %vm8538 = vweird.f32 %v8532
    %vm8539 = vweird.f32 %v8533
    %vm8540 = vmor %vm8538, %vm8539
    %v8541 = vsel %vm8540, %v8533, %v8537
    %v8542 = vand.u32 2147483647, %v8532
    %vm8543 = vcmp.eq.f32.partialorder %v8542, 8.507059e+37
    %v8544 = vand.u32 %v8532, 2147483648
    %v8545 = vor.u32 1.1754944e-38, %v8544
    %v8546 = vsel %vm8543, %v8545, %v8541
    %v8547 = vmul.f32 1.0, %v8546
    %v8549 = vrot.slane %v8470, 4
    %v8551 = vadd.f32 %v8501, %v8549
    %v8552 = vadd.f32 %v8496, %v3215
    %v8554 = vrot.slane %v8552, 4
    %v8556 = vmul.f32 %v8524, %v8554
    %v8557 = vadd.f32 %v8551, %v8556
    %v8558 = vtanh.pop %v8557
    %v8559 = vsub.f32 1.0, %v8547
    %v8560 = vmul.f32 %v8559, %v8558
    %v8561 = vrot.slane %v7795, 6
    %v8563 = vmul.f32 %v8547, %v8561
    %v8564 = vadd.f32 %v8560, %v8563
    %8565 = vst [vmem:[#allocation5 + $0x2] sm:$0x10] %v8564
    %8566 = vst [vmem:[#allocation5 + $0xb] sm:$0x20] %v8564
    %8568 = vst [vmem:[#allocation1] sm:$0xff] %v8564
    %s8569 = scalar_lea.vmem [#allocation1], 4
    %v8570 = vld [vmem:[%s8569] ss:$9 sm:$0xff]
    %s8571 = scalar_lea.vmem [#allocation1], 5
    %v8572 = vld [vmem:[%s8571] ss:$9 sm:$0xff]
    %v8573 = vperm.slane %v8570, 0
    %v8574 = vperm.slane %v8572, 0
    %v8577 = vrot.slane %v8573, 2
    %v8578 = vrot.slane %v8573, 4
    %v8579 = vrot.slane %v8573, 6
    %v8580 = vrot.slane %v8574, 2
    %v8581 = vrot.slane %v8574, 4
    %v8582 = vrot.slane %v8574, 6
    %v8589 = vmul.f32 %v3178, %v8573
    %v8590 = vmul.f32 %v3199, %v8577
    %v8591 = vmul.f32 %v3200, %v8578
    %v8592 = vmul.f32 %v3201, %v8579
    %v8593 = vmul.f32 %v3180, %v8573
    %v8594 = vmul.f32 %v3202, %v8574
    %v8595 = vmul.f32 %v3203, %v8580
    %v8596 = vmul.f32 %v3204, %v8581
    %v8597 = vmul.f32 %v3183, %v8582
    %v8598 = vmul.f32 %v3205, %v8574
    %8609 = vst [vmem:[#allocation1] ss:$4 sm:$0xff] %v8589
    %s8610 = scalar_lea.vmem [#allocation1], 1
    %8611 = vst [vmem:[%s8610] ss:$4 sm:$0xff] %v8590
    %s8612 = scalar_lea.vmem [#allocation1], 2
    %8613 = vst [vmem:[%s8612] ss:$4 sm:$0xff] %v8591
    %s8614 = scalar_lea.vmem [#allocation1], 3
    %8615 = vst [vmem:[%s8614] ss:$4 sm:$0xff] %v8592
    %s8616 = scalar_lea.vmem [#allocation1], 32
    %8617 = vst [vmem:[%s8616] ss:$4 sm:$0xff] %v8593
    %v8618 = vld.sshfl [vmem:[#allocation1] sm:$0xff pattern:$0x73625140]
    %v8619 = vld.sshfl [vmem:[#allocation1 + $0x20] sm:$0xff pattern:$0x73625140]
    %8620 = vst [vmem:[#allocation1] ss:$4 sm:$0xff] %v8594
    %8621 = vst [vmem:[%s8610] ss:$4 sm:$0xff] %v8595
    %8622 = vst [vmem:[%s8612] ss:$4 sm:$0xff] %v8596
    %8623 = vst [vmem:[%s8614] ss:$4 sm:$0xff] %v8597
    %8624 = vst [vmem:[%s8616] ss:$4 sm:$0xff] %v8598
    %v8625 = vld.sshfl [vmem:[#allocation1] sm:$0xff pattern:$0x73625140]
    %v8626 = vld.sshfl [vmem:[#allocation1 + $0x20] sm:$0xff pattern:$0x73625140]
    %8631 = vadd.xlane.f32.xlu0 %v8618
    %v8632 = vpop.xlane.xlu0 %8631
    %v8633 = vsel %vm3283, %v8619, 0.0
    %8634 = vadd.xlane.f32.xlu0 %v8633
    %v8635 = vpop.xlane.xlu0 %8634
    %8636 = vadd.xlane.f32.xlu0 %v8625
    %v8637 = vpop.xlane.xlu0 %8636
    %v8638 = vsel %vm3283, %v8626, 0.0
    %8639 = vadd.xlane.f32.xlu0 %v8638
    %v8640 = vpop.xlane.xlu0 %8639
    %v8645 = vperm.slane %v8632, %v3297
    %v8646 = vperm.slane %v8635, %v3299
    %v8647 = vsel %vm3301, %v8646, %v8645
    %v8648 = vperm.slane %v8637, %v3297
    %v8649 = vperm.slane %v8640, %v3299
    %v8650 = vsel %vm3301, %v8649, %v8648
    %v8651 = vsel %vm3306, %v8650, %v8647
    %v8653 = vsel %vm3309, %v8651, -inf
    %8654 = vmax.xlane.f32.xlu0 %v8653
    %v8655 = vpop.xlane.xlu0 %8654
    %v8657 = vperm.slane %v8655, 0
    %v8658 = vperm.slane %v8655, 1
    %v8661 = vsub.f32 %v8632, %v8657
    %v8662 = vsub.f32 %v8635, %v8657
    %v8663 = vsub.f32 %v8637, %v8658
    %v8664 = vsub.f32 %v8640, %v8658
    %v8665 = vmul.f32 %v8661, 1.442695
    %v8666 = vpow.pop %v8665
    %v8667 = vmul.f32 %v8662, 1.442695
    %v8668 = vpow.pop %v8667
    %v8669 = vmul.f32 %v8663, 1.442695
    %v8670 = vpow.pop %v8669
    %v8671 = vmul.f32 %v8664, 1.442695
    %v8672 = vpow.pop %v8671
    %8677 = vset.pattern.permute.xlu0 0
    %8678 = vperm.xlu0 %8677, %v8666
    %v8679 = vpop.permute.xlu0 %8678
    %8680 = vset.pattern.permute.xlu0 0
    %8681 = vperm.xlu0 %8680, %v8668
    %v8682 = vpop.permute.xlu0 %8681
    %8683 = vset.pattern.permute.xlu0 0
    %8684 = vperm.xlu0 %8683, %v8670
    %v8685 = vpop.permute.xlu0 %8684
    %8686 = vset.pattern.permute.xlu0 0
    %8687 = vperm.xlu0 %8686, %v8672
    %v8688 = vpop.permute.xlu0 %8687
    %v8689 = vperm.slane %v8679, %v3297
    %v8690 = vperm.slane %v8682, %v3299
    %v8691 = vsel %vm3301, %v8690, %v8689
    %v8692 = vperm.slane %v8685, %v3297
    %v8693 = vperm.slane %v8688, %v3299
    %v8694 = vsel %vm3301, %v8693, %v8692
    %v8695 = vsel %vm3306, %v8694, %v8691
    %v8697 = vsel %vm3309, %v8695, 0.0
    %8698 = vadd.xlane.f32.xlu0 %v8697
    %v8699 = vpop.xlane.xlu0 %8698
    %v8700 = vrcp.pop %v8699
    %v8702 = vperm.slane %v8700, 0
    %v8703 = vperm.slane %v8700, 1
    %v8706 = vmul.f32 %v8666, %v8702
    %v8707 = vmul.f32 %v8668, %v8702
    %v8708 = vmul.f32 %v8670, %v8703
    %v8709 = vmul.f32 %v8672, %v8703
    %8711 = vset.pattern.permute.xlu0 0
    %8712 = vperm.xlu0 %8711, %v8706
    %v8713 = vpop.permute.xlu0 %8712
    %8716 = vset.pattern.permute.xlu0 0
    %8717 = vperm.xlu0 %8716, %v8707
    %v8718 = vpop.permute.xlu0 %8717
    %8721 = vset.pattern.permute.xlu0 0
    %8722 = vperm.xlu0 %8721, %v8708
    %v8723 = vpop.permute.xlu0 %8722
    %8726 = vset.pattern.permute.xlu0 0
    %8727 = vperm.xlu0 %8726, %v8709
    %v8728 = vpop.permute.xlu0 %8727
    %8730 = vst [vmem:[#allocation1] ss:$4 sm:$0xff] %v3099
    %s8731 = scalar_lea.vmem [#allocation1], 1
    %8732 = vst [vmem:[%s8731] ss:$4 sm:$0xff] %v3189
    %s8733 = scalar_lea.vmem [#allocation1], 2
    %8734 = vst [vmem:[%s8733] ss:$4 sm:$0xff] %v3190
    %s8735 = scalar_lea.vmem [#allocation1], 3
    %8736 = vst [vmem:[%s8735] ss:$4 sm:$0xff] %v3191
    %s8737 = scalar_lea.vmem [#allocation1], 32
    %8738 = vst [vmem:[%s8737] ss:$4 sm:$0xff] %v3100
    %v8739 = vld.sshfl [vmem:[#allocation1] sm:$0xff pattern:$0x73625140]
    %v8740 = vld.sshfl [vmem:[#allocation1 + $0x20] sm:$0xff pattern:$0x73625140]
    %8741 = vst [vmem:[#allocation1] ss:$4 sm:$0xff] %v3192
    %8742 = vst [vmem:[%s8731] ss:$4 sm:$0xff] %v3193
    %8743 = vst [vmem:[%s8733] ss:$4 sm:$0xff] %v3194
    %8744 = vst [vmem:[%s8735] ss:$4 sm:$0xff] %v3101
    %8745 = vst [vmem:[%s8737] ss:$4 sm:$0xff] %v3195
    %v8746 = vld.sshfl [vmem:[#allocation1] sm:$0xff pattern:$0x73625140]
    %v8747 = vld.sshfl [vmem:[#allocation1 + $0x20] sm:$0xff pattern:$0x73625140]
    %v8752 = vmul.f32 %v8713, %v8739
    %v8753 = vmul.f32 %v8718, %v8740
    %v8754 = vmul.f32 %v8723, %v8746
    %v8755 = vmul.f32 %v8728, %v8747
    %v8756 = vsel %vm3283, %v8753, 0.0
    %v8757 = vadd.f32 %v8752, %v8756
    %v8758 = vrot.slane %v8757, 4
    %v8759 = vadd.f32 %v8757, %v8758
    %v8760 = vrot.slane %v8759, 2
    %v8761 = vadd.f32 %v8759, %v8760
    %v8762 = vrot.slane %v8761, 1
    %v8763 = vadd.f32 %v8761, %v8762
    %v8764 = vsel %vm3283, %v8755, 0.0
    %v8765 = vadd.f32 %v8754, %v8764
    %v8766 = vrot.slane %v8765, 4
    %v8767 = vadd.f32 %v8765, %v8766
    %v8768 = vrot.slane %v8767, 2
    %v8769 = vadd.f32 %v8767, %v8768
    %v8770 = vrot.slane %v8769, 1
    %v8771 = vadd.f32 %v8769, %v8770
    %v8774 = vsel %vm3306, %v8771, %v8763
    %v8776 = vrot.slane %v8564, 4
    %v8778 = vpack.c.bf16 %v8774, %v8774
    %v8779 = vpack.c.bf16 %v8776, %v8776
    %v8780 = vld [vmem:[%s7] sm:$0xff]
    %v8781 = vld [vmem:[%s7 + $0x8] sm:$0xff]
    %v8782 = vld [vmem:[%s7 + $0x10] sm:$0xff]
    %v8783 = vld [vmem:[%s7 + $0x18] sm:$0xff]
    %v8784 = vld [vmem:[%s7 + $0x20] sm:$0xff]
    %v8785 = vld [vmem:[%s7 + $0x28] sm:$0xff]
    %v8786 = vld [vmem:[%s7 + $0x30] sm:$0xff]
    %v8787 = vld [vmem:[%s7 + $0x38] sm:$0xff]
    %v8788 = vld [vmem:[%s7 + $0x40] sm:$0xff]
    %v8789 = vld [vmem:[%s7 + $0x48] sm:$0xff]
    %v8790 = vld [vmem:[%s7 + $0x50] sm:$0xff]
    %v8791 = vld [vmem:[%s7 + $0x58] sm:$0xff]
    %v8792 = vld [vmem:[%s7 + $0x60] sm:$0xff]
    %v8793 = vld [vmem:[%s7 + $0x68] sm:$0xff]
    %v8794 = vld [vmem:[%s7 + $0x70] sm:$0xff]
    %v8795 = vld [vmem:[%s7 + $0x78] sm:$0xff]
    %v8796 = vld [vmem:[%s7 + $0x80] sm:$0xff]
    %v8797 = vld [vmem:[%s7 + $0x88] sm:$0xff]
    %v8798 = vld [vmem:[%s7 + $0x90] sm:$0xff]
    %v8799 = vld [vmem:[%s7 + $0x98] sm:$0xff]
    %v8800 = vld [vmem:[%s7 + $0xa0] sm:$0xff]
    %v8801 = vld [vmem:[%s7 + $0xa8] sm:$0xff]
    %v8802 = vld [vmem:[%s7 + $0xb0] sm:$0xff]
    %v8803 = vld [vmem:[%s7 + $0xb8] sm:$0xff]
    %v8804 = vld [vmem:[%s7 + $0xc0] sm:$0xff]
    %v8805 = vld [vmem:[%s7 + $0xc8] sm:$0xff]
    %v8806 = vld [vmem:[%s7 + $0xd0] sm:$0xff]
    %v8807 = vld [vmem:[%s7 + $0xd8] sm:$0xff]
    %v8808 = vld [vmem:[%s7 + $0xe0] sm:$0xff]
    %v8809 = vld [vmem:[%s7 + $0xe8] sm:$0xff]
    %v8810 = vld [vmem:[%s7 + $0xf0] sm:$0xff]
    %v8811 = vld [vmem:[%s7 + $0xf8] sm:$0xff]
    %v8812 = vld [vmem:[%s7 + $0x100] sm:$0xff]
    %v8813 = vld [vmem:[%s7 + $0x108] sm:$0xff]
    %v8814 = vld [vmem:[%s7 + $0x110] sm:$0xff]
    %v8815 = vld [vmem:[%s7 + $0x118] sm:$0xff]
    %v8816 = vld [vmem:[%s7 + $0x120] sm:$0xff]
    %v8817 = vld [vmem:[%s7 + $0x128] sm:$0xff]
    %v8818 = vld [vmem:[%s7 + $0x130] sm:$0xff]
    %v8819 = vld [vmem:[%s7 + $0x138] sm:$0xff]
    %v8820 = vld [vmem:[%s7 + $0x140] sm:$0xff]
    %v8821 = vld [vmem:[%s7 + $0x148] sm:$0xff]
    %v8822 = vld [vmem:[%s7 + $0x150] sm:$0xff]
    %v8823 = vld [vmem:[%s7 + $0x158] sm:$0xff]
    %v8824 = vld [vmem:[%s7 + $0x160] sm:$0xff]
    %v8825 = vld [vmem:[%s7 + $0x168] sm:$0xff]
    %v8826 = vld [vmem:[%s7 + $0x170] sm:$0xff]
    %v8827 = vld [vmem:[%s7 + $0x178] sm:$0xff]
    %v8828 = vld [vmem:[%s7 + $0x180] sm:$0xff]
    %v8829 = vld [vmem:[%s7 + $0x188] sm:$0xff]
    %v8830 = vld [vmem:[%s7 + $0x190] sm:$0xff]
    %v8831 = vld [vmem:[%s7 + $0x198] sm:$0xff]
    %v8832 = vld [vmem:[%s7 + $0x1a0] sm:$0xff]
    %v8833 = vld [vmem:[%s7 + $0x1a8] sm:$0xff]
    %v8834 = vld [vmem:[%s7 + $0x1b0] sm:$0xff]
    %v8835 = vld [vmem:[%s7 + $0x1b8] sm:$0xff]
    %v8836 = vld [vmem:[%s7 + $0x1c0] sm:$0xff]
    %v8837 = vld [vmem:[%s7 + $0x1c8] sm:$0xff]
    %v8838 = vld [vmem:[%s7 + $0x1d0] sm:$0xff]
    %v8839 = vld [vmem:[%s7 + $0x1d8] sm:$0xff]
    %v8840 = vld [vmem:[%s7 + $0x1e0] sm:$0xff]
    %v8841 = vld [vmem:[%s7 + $0x1e8] sm:$0xff]
    %v8842 = vld [vmem:[%s7 + $0x1f0] sm:$0xff]
    %v8843 = vld [vmem:[%s7 + $0x1f8] sm:$0xff]
    %v8908 = vunpack.c.l.b16 %v8780
    %v8909 = vunpack.c.h.b16 %v8780
    %v8910 = vunpack.c.l.b16 %v8781
    %v8911 = vunpack.c.h.b16 %v8781
    %v8912 = vunpack.c.l.b16 %v8782
    %v8913 = vunpack.c.h.b16 %v8782
    %v8914 = vunpack.c.l.b16 %v8783
    %v8915 = vunpack.c.h.b16 %v8783
    %v8916 = vunpack.c.l.b16 %v8784
    %v8917 = vunpack.c.h.b16 %v8784
    %v8918 = vunpack.c.l.b16 %v8785
    %v8919 = vunpack.c.h.b16 %v8785
    %v8920 = vunpack.c.l.b16 %v8786
    %v8921 = vunpack.c.h.b16 %v8786
    %v8922 = vunpack.c.l.b16 %v8787
    %v8923 = vunpack.c.h.b16 %v8787
    %v8924 = vunpack.c.l.b16 %v8788
    %v8925 = vunpack.c.h.b16 %v8788
    %v8926 = vunpack.c.l.b16 %v8789
    %v8927 = vunpack.c.h.b16 %v8789
    %v8928 = vunpack.c.l.b16 %v8790
    %v8929 = vunpack.c.h.b16 %v8790
    %v8930 = vunpack.c.l.b16 %v8791
    %v8931 = vunpack.c.h.b16 %v8791
    %v8932 = vunpack.c.l.b16 %v8792
    %v8933 = vunpack.c.h.b16 %v8792
    %v8934 = vunpack.c.l.b16 %v8793
    %v8935 = vunpack.c.h.b16 %v8793
    %v8936 = vunpack.c.l.b16 %v8794
    %v8937 = vunpack.c.h.b16 %v8794
    %v8938 = vunpack.c.l.b16 %v8795
    %v8939 = vunpack.c.h.b16 %v8795
    %v8940 = vunpack.c.l.b16 %v8796
    %v8941 = vunpack.c.h.b16 %v8796
    %v8942 = vunpack.c.l.b16 %v8797
    %v8943 = vunpack.c.h.b16 %v8797
    %v8944 = vunpack.c.l.b16 %v8798
    %v8945 = vunpack.c.h.b16 %v8798
    %v8946 = vunpack.c.l.b16 %v8799
    %v8947 = vunpack.c.h.b16 %v8799
    %v8948 = vunpack.c.l.b16 %v8800
    %v8949 = vunpack.c.h.b16 %v8800
    %v8950 = vunpack.c.l.b16 %v8801
    %v8951 = vunpack.c.h.b16 %v8801
    %v8952 = vunpack.c.l.b16 %v8802
    %v8953 = vunpack.c.h.b16 %v8802
    %v8954 = vunpack.c.l.b16 %v8803
    %v8955 = vunpack.c.h.b16 %v8803
    %v8956 = vunpack.c.l.b16 %v8804
    %v8957 = vunpack.c.h.b16 %v8804
    %v8958 = vunpack.c.l.b16 %v8805
    %v8959 = vunpack.c.h.b16 %v8805
    %v8960 = vunpack.c.l.b16 %v8806
    %v8961 = vunpack.c.h.b16 %v8806
    %v8962 = vunpack.c.l.b16 %v8807
    %v8963 = vunpack.c.h.b16 %v8807
    %v8964 = vunpack.c.l.b16 %v8808
    %v8965 = vunpack.c.h.b16 %v8808
    %v8966 = vunpack.c.l.b16 %v8809
    %v8967 = vunpack.c.h.b16 %v8809
    %v8968 = vunpack.c.l.b16 %v8810
    %v8969 = vunpack.c.h.b16 %v8810
    %v8970 = vunpack.c.l.b16 %v8811
    %v8971 = vunpack.c.h.b16 %v8811
    %v8972 = vunpack.c.l.b16 %v8812
    %v8973 = vunpack.c.h.b16 %v8812
    %v8974 = vunpack.c.l.b16 %v8813
    %v8975 = vunpack.c.h.b16 %v8813
    %v8976 = vunpack.c.l.b16 %v8814
    %v8977 = vunpack.c.h.b16 %v8814
    %v8978 = vunpack.c.l.b16 %v8815
    %v8979 = vunpack.c.h.b16 %v8815
    %v8980 = vunpack.c.l.b16 %v8816
    %v8981 = vunpack.c.h.b16 %v8816
    %v8982 = vunpack.c.l.b16 %v8817
    %v8983 = vunpack.c.h.b16 %v8817
    %v8984 = vunpack.c.l.b16 %v8818
    %v8985 = vunpack.c.h.b16 %v8818
    %v8986 = vunpack.c.l.b16 %v8819
    %v8987 = vunpack.c.h.b16 %v8819
    %v8988 = vunpack.c.l.b16 %v8820
    %v8989 = vunpack.c.h.b16 %v8820
    %v8990 = vunpack.c.l.b16 %v8821
    %v8991 = vunpack.c.h.b16 %v8821
    %v8992 = vunpack.c.l.b16 %v8822
    %v8993 = vunpack.c.h.b16 %v8822
    %v8994 = vunpack.c.l.b16 %v8823
    %v8995 = vunpack.c.h.b16 %v8823
    %v8996 = vunpack.c.l.b16 %v8824
    %v8997 = vunpack.c.h.b16 %v8824
    %v8998 = vunpack.c.l.b16 %v8825
    %v8999 = vunpack.c.h.b16 %v8825
    %v9000 = vunpack.c.l.b16 %v8826
    %v9001 = vunpack.c.h.b16 %v8826
    %v9002 = vunpack.c.l.b16 %v8827
    %v9003 = vunpack.c.h.b16 %v8827
    %v9004 = vunpack.c.l.b16 %v8828
    %v9005 = vunpack.c.h.b16 %v8828
    %v9006 = vunpack.c.l.b16 %v8829
    %v9007 = vunpack.c.h.b16 %v8829
    %v9008 = vunpack.c.l.b16 %v8830
    %v9009 = vunpack.c.h.b16 %v8830
    %v9010 = vunpack.c.l.b16 %v8831
    %v9011 = vunpack.c.h.b16 %v8831
    %v9012 = vunpack.c.l.b16 %v8832
    %v9013 = vunpack.c.h.b16 %v8832
    %v9014 = vunpack.c.l.b16 %v8833
    %v9015 = vunpack.c.h.b16 %v8833
    %v9016 = vunpack.c.l.b16 %v8834
    %v9017 = vunpack.c.h.b16 %v8834
    %v9018 = vunpack.c.l.b16 %v8835
    %v9019 = vunpack.c.h.b16 %v8835
    %v9020 = vunpack.c.l.b16 %v8836
    %v9021 = vunpack.c.h.b16 %v8836
    %v9022 = vunpack.c.l.b16 %v8837
    %v9023 = vunpack.c.h.b16 %v8837
    %v9024 = vunpack.c.l.b16 %v8838
    %v9025 = vunpack.c.h.b16 %v8838
    %v9026 = vunpack.c.l.b16 %v8839
    %v9027 = vunpack.c.h.b16 %v8839
    %v9028 = vunpack.c.l.b16 %v8840
    %v9029 = vunpack.c.h.b16 %v8840
    %v9030 = vunpack.c.l.b16 %v8841
    %v9031 = vunpack.c.h.b16 %v8841
    %v9032 = vunpack.c.l.b16 %v8842
    %v9033 = vunpack.c.h.b16 %v8842
    %v9034 = vunpack.c.l.b16 %v8843
    %v9035 = vunpack.c.h.b16 %v8843
    %v9036 = vpack.c.b16 %v8912, %v8908
    %v9037 = vpack.c.b16 %v8913, %v8909
    %v9038 = vpack.c.b16 %v8914, %v8910
    %v9039 = vpack.c.b16 %v8915, %v8911
    %v9040 = vpack.c.b16 %v8920, %v8916
    %v9041 = vpack.c.b16 %v8921, %v8917
    %v9042 = vpack.c.b16 %v8922, %v8918
    %v9043 = vpack.c.b16 %v8923, %v8919
    %v9044 = vpack.c.b16 %v8928, %v8924
    %v9045 = vpack.c.b16 %v8929, %v8925
    %v9046 = vpack.c.b16 %v8930, %v8926
    %v9047 = vpack.c.b16 %v8931, %v8927
    %v9048 = vpack.c.b16 %v8936, %v8932
    %v9049 = vpack.c.b16 %v8937, %v8933
    %v9050 = vpack.c.b16 %v8938, %v8934
    %v9051 = vpack.c.b16 %v8939, %v8935
    %v9052 = vpack.c.b16 %v8944, %v8940
    %v9053 = vpack.c.b16 %v8945, %v8941
    %v9054 = vpack.c.b16 %v8946, %v8942
    %v9055 = vpack.c.b16 %v8947, %v8943
    %v9056 = vpack.c.b16 %v8952, %v8948
    %v9057 = vpack.c.b16 %v8953, %v8949
    %v9058 = vpack.c.b16 %v8954, %v8950
    %v9059 = vpack.c.b16 %v8955, %v8951
    %v9060 = vpack.c.b16 %v8960, %v8956
    %v9061 = vpack.c.b16 %v8961, %v8957
    %v9062 = vpack.c.b16 %v8962, %v8958
    %v9063 = vpack.c.b16 %v8963, %v8959
    %v9064 = vpack.c.b16 %v8968, %v8964
    %v9065 = vpack.c.b16 %v8969, %v8965
    %v9066 = vpack.c.b16 %v8970, %v8966
    %v9067 = vpack.c.b16 %v8971, %v8967
    %v9068 = vpack.c.b16 %v8976, %v8972
    %v9069 = vpack.c.b16 %v8977, %v8973
    %v9070 = vpack.c.b16 %v8978, %v8974
    %v9071 = vpack.c.b16 %v8979, %v8975
    %v9072 = vpack.c.b16 %v8984, %v8980
    %v9073 = vpack.c.b16 %v8985, %v8981
    %v9074 = vpack.c.b16 %v8986, %v8982
    %v9075 = vpack.c.b16 %v8987, %v8983
    %v9076 = vpack.c.b16 %v8992, %v8988
    %v9077 = vpack.c.b16 %v8993, %v8989
    %v9078 = vpack.c.b16 %v8994, %v8990
    %v9079 = vpack.c.b16 %v8995, %v8991
    %v9080 = vpack.c.b16 %v9000, %v8996
    %v9081 = vpack.c.b16 %v9001, %v8997
    %v9082 = vpack.c.b16 %v9002, %v8998
    %v9083 = vpack.c.b16 %v9003, %v8999
    %v9084 = vpack.c.b16 %v9008, %v9004
    %v9085 = vpack.c.b16 %v9009, %v9005
    %v9086 = vpack.c.b16 %v9010, %v9006
    %v9087 = vpack.c.b16 %v9011, %v9007
    %v9088 = vpack.c.b16 %v9016, %v9012
    %v9089 = vpack.c.b16 %v9017, %v9013
    %v9090 = vpack.c.b16 %v9018, %v9014
    %v9091 = vpack.c.b16 %v9019, %v9015
    %v9092 = vpack.c.b16 %v9024, %v9020
    %v9093 = vpack.c.b16 %v9025, %v9021
    %v9094 = vpack.c.b16 %v9026, %v9022
    %v9095 = vpack.c.b16 %v9027, %v9023
    %v9096 = vpack.c.b16 %v9032, %v9028
    %v9097 = vpack.c.b16 %v9033, %v9029
    %v9098 = vpack.c.b16 %v9034, %v9030
    %v9099 = vpack.c.b16 %v9035, %v9031
    %9164 = vmatpush.bf16.msra.mxu0 %v9064
    %9165 = vmatpush.bf16.msra.mxu0 %v9060
    %9166 = vmatpush.bf16.msra.mxu0 %v9056
    %9167 = vmatpush.bf16.msra.mxu0 %v9052
    %9168 = vmatpush.bf16.msra.mxu0 %v9048
    %9169 = vmatpush.bf16.msra.mxu0 %v9044
    %9170 = vmatpush.bf16.msra.mxu0 %v9040
    %9171 = vmatpush.bf16.msra.mxu0 %v9036
    %9172 = vmatmul.bf16.gmra.mxu0 %v8778
    %v9173 = vpop.f32.mrf.mxu0
    %v9174 = vadd.f32 0.0, %v9173
    %v9175 = vpop.f32.mrf.mxu0
    %9176 = vdwg.mxu0
    %9177 = vmatpush.bf16.msra.mxu0 %v9096
    %9178 = vmatpush.bf16.msra.mxu0 %v9092
    %9179 = vmatpush.bf16.msra.mxu0 %v9088
    %9180 = vmatpush.bf16.msra.mxu0 %v9084
    %9181 = vmatpush.bf16.msra.mxu0 %v9080
    %9182 = vmatpush.bf16.msra.mxu0 %v9076
    %9183 = vmatpush.bf16.msra.mxu0 %v9072
    %9184 = vmatpush.bf16.msra.mxu0 %v9068
    %9185 = vmatmul.bf16.gmra.mxu0 %v8779
    %v9186 = vpop.f32.mrf.mxu0
    %v9187 = vadd.f32 %v9174, %v9186
    %v9188 = vpop.f32.mrf.mxu0
    %9189 = vdwg.mxu0
    %9190 = vmatpush.bf16.msra.mxu0 %v9065
    %9191 = vmatpush.bf16.msra.mxu0 %v9061
    %9192 = vmatpush.bf16.msra.mxu0 %v9057
    %9193 = vmatpush.bf16.msra.mxu0 %v9053
    %9194 = vmatpush.bf16.msra.mxu0 %v9049
    %9195 = vmatpush.bf16.msra.mxu0 %v9045
    %9196 = vmatpush.bf16.msra.mxu0 %v9041
    %9197 = vmatpush.bf16.msra.mxu0 %v9037
    %9198 = vmatmul.bf16.gmra.mxu0 %v8778
    %v9199 = vpop.f32.mrf.mxu0
    %v9200 = vadd.f32 0.0, %v9199
    %v9201 = vpop.f32.mrf.mxu0
    %9202 = vdwg.mxu0
    %9203 = vmatpush.bf16.msra.mxu0 %v9097
    %9204 = vmatpush.bf16.msra.mxu0 %v9093
    %9205 = vmatpush.bf16.msra.mxu0 %v9089
    %9206 = vmatpush.bf16.msra.mxu0 %v9085
    %9207 = vmatpush.bf16.msra.mxu0 %v9081
    %9208 = vmatpush.bf16.msra.mxu0 %v9077
    %9209 = vmatpush.bf16.msra.mxu0 %v9073
    %9210 = vmatpush.bf16.msra.mxu0 %v9069
    %9211 = vmatmul.bf16.gmra.mxu0 %v8779
    %v9212 = vpop.f32.mrf.mxu0
    %v9213 = vadd.f32 %v9200, %v9212
    %v9214 = vpop.f32.mrf.mxu0
    %9215 = vdwg.mxu0
    %9216 = vmatpush.bf16.msra.mxu0 %v9066
    %9217 = vmatpush.bf16.msra.mxu0 %v9062
    %9218 = vmatpush.bf16.msra.mxu0 %v9058
    %9219 = vmatpush.bf16.msra.mxu0 %v9054
    %9220 = vmatpush.bf16.msra.mxu0 %v9050
    %9221 = vmatpush.bf16.msra.mxu0 %v9046
    %9222 = vmatpush.bf16.msra.mxu0 %v9042
    %9223 = vmatpush.bf16.msra.mxu0 %v9038
    %9224 = vmatmul.bf16.gmra.mxu0 %v8778
    %v9225 = vpop.f32.mrf.mxu0
    %v9226 = vadd.f32 0.0, %v9225
    %v9227 = vpop.f32.mrf.mxu0
    %9228 = vdwg.mxu0
    %9229 = vmatpush.bf16.msra.mxu0 %v9098
    %9230 = vmatpush.bf16.msra.mxu0 %v9094
    %9231 = vmatpush.bf16.msra.mxu0 %v9090
    %9232 = vmatpush.bf16.msra.mxu0 %v9086
    %9233 = vmatpush.bf16.msra.mxu0 %v9082
    %9234 = vmatpush.bf16.msra.mxu0 %v9078
    %9235 = vmatpush.bf16.msra.mxu0 %v9074
    %9236 = vmatpush.bf16.msra.mxu0 %v9070
    %9237 = vmatmul.bf16.gmra.mxu0 %v8779
    %v9238 = vpop.f32.mrf.mxu0
    %v9239 = vadd.f32 %v9226, %v9238
    %v9240 = vpop.f32.mrf.mxu0
    %9241 = vdwg.mxu0
    %9242 = vmatpush.bf16.msra.mxu0 %v9067
    %9243 = vmatpush.bf16.msra.mxu0 %v9063
    %9244 = vmatpush.bf16.msra.mxu0 %v9059
    %9245 = vmatpush.bf16.msra.mxu0 %v9055
    %9246 = vmatpush.bf16.msra.mxu0 %v9051
    %9247 = vmatpush.bf16.msra.mxu0 %v9047
    %9248 = vmatpush.bf16.msra.mxu0 %v9043
    %9249 = vmatpush.bf16.msra.mxu0 %v9039
    %9250 = vmatmul.bf16.gmra.mxu0 %v8778
    %v9251 = vpop.f32.mrf.mxu0
    %v9252 = vadd.f32 0.0, %v9251
    %v9253 = vpop.f32.mrf.mxu0
    %9254 = vdwg.mxu0
    %9255 = vmatpush.bf16.msra.mxu0 %v9099
    %9256 = vmatpush.bf16.msra.mxu0 %v9095
    %9257 = vmatpush.bf16.msra.mxu0 %v9091
    %9258 = vmatpush.bf16.msra.mxu0 %v9087
    %9259 = vmatpush.bf16.msra.mxu0 %v9083
    %9260 = vmatpush.bf16.msra.mxu0 %v9079
    %9261 = vmatpush.bf16.msra.mxu0 %v9075
    %9262 = vmatpush.bf16.msra.mxu0 %v9071
    %9263 = vmatmul.bf16.gmra.mxu0 %v8779
    %v9264 = vpop.f32.mrf.mxu0
    %v9265 = vadd.f32 %v9252, %v9264
    %v9266 = vpop.f32.mrf.mxu0
    %9267 = vdwg.mxu0
    %v9268 = vld [vmem:[#allocation3 + $0x18] sm:$0xc0]
    %v9269 = vld [vmem:[#allocation3 + $0x20] sm:$0xc0]
    %v9270 = vld [vmem:[#allocation3 + $0x28] sm:$0xc0]
    %v9272 = vrot.slane %v9187, 2
    %v9274 = vadd.f32 %v9268, %v9272
    %v9275 = vxor.u32 %v9274, 2147483648
    %v9276 = vmul.f32 %v9275, 1.442695
    %v9277 = vpow.pop %v9276
    %v9278 = vadd.f32 %v9277, 1.0
    %v9279 = vrcp.pop %v9278
    %v9280 = vmul.f32 %v9278, %v9279
    %v9281 = vsub.f32 1.0, %v9280
    %v9282 = vmul.f32 %v9279, %v9281
    %v9283 = vadd.f32 %v9279, %v9282
    %vm9284 = vweird.f32 %v9278
    %vm9285 = vweird.f32 %v9279
    %vm9286 = vmor %vm9284, %vm9285
    %v9287 = vsel %vm9286, %v9279, %v9283
    %v9288 = vand.u32 2147483647, %v9278
    %vm9289 = vcmp.eq.f32.partialorder %v9288, 8.507059e+37
    %v9290 = vand.u32 %v9278, 2147483648
    %v9291 = vor.u32 1.1754944e-38, %v9290
    %v9292 = vsel %vm9289, %v9291, %v9287
    %v9293 = vmul.f32 1.0, %v9292
    %v9295 = vrot.slane %v9213, 2
    %v9297 = vadd.f32 %v9269, %v9295
    %v9298 = vxor.u32 %v9297, 2147483648
    %v9299 = vmul.f32 %v9298, 1.442695
    %v9300 = vpow.pop %v9299
    %v9301 = vadd.f32 %v9300, 1.0
    %v9302 = vrcp.pop %v9301
    %v9303 = vmul.f32 %v9301, %v9302
    %v9304 = vsub.f32 1.0, %v9303
    %v9305 = vmul.f32 %v9302, %v9304
    %v9306 = vadd.f32 %v9302, %v9305
    %vm9307 = vweird.f32 %v9301
    %vm9308 = vweird.f32 %v9302
    %vm9309 = vmor %vm9307, %vm9308
    %v9310 = vsel %vm9309, %v9302, %v9306
    %v9311 = vand.u32 2147483647, %v9301
    %vm9312 = vcmp.eq.f32.partialorder %v9311, 8.507059e+37
    %v9313 = vand.u32 %v9301, 2147483648
    %v9314 = vor.u32 1.1754944e-38, %v9313
    %v9315 = vsel %vm9312, %v9314, %v9310
    %v9316 = vmul.f32 1.0, %v9315
    %v9318 = vrot.slane %v9239, 2
    %v9320 = vadd.f32 %v9270, %v9318
    %v9321 = vadd.f32 %v9265, %v3215
    %v9323 = vrot.slane %v9321, 2
    %v9325 = vmul.f32 %v9293, %v9323
    %v9326 = vadd.f32 %v9320, %v9325
    %v9327 = vtanh.pop %v9326
    %v9328 = vsub.f32 1.0, %v9316
    %v9329 = vmul.f32 %v9328, %v9327
    %v9330 = vrot.slane %v8564, 6
    %v9332 = vmul.f32 %v9316, %v9330
    %v9333 = vadd.f32 %v9329, %v9332
    %9334 = vst [vmem:[#allocation5 + $0x1] sm:$0x40] %v9333
    %9335 = vst [vmem:[#allocation5 + $0xa] sm:$0x80] %v9333
    %9337 = vst [vmem:[#allocation1] sm:$0xff] %v9333
    %s9338 = scalar_lea.vmem [#allocation1], 6
    %v9339 = vld [vmem:[%s9338] ss:$9 sm:$0xff]
    %s9340 = scalar_lea.vmem [#allocation1], 7
    %v9341 = vld [vmem:[%s9340] ss:$9 sm:$0xff]
    %v9342 = vperm.slane %v9339, 0
    %v9343 = vperm.slane %v9341, 0
    %v9346 = vrot.slane %v9342, 2
    %v9347 = vrot.slane %v9342, 4
    %v9348 = vrot.slane %v9342, 6
    %v9349 = vrot.slane %v9343, 2
    %v9350 = vrot.slane %v9343, 4
    %v9351 = vrot.slane %v9343, 6
    %v9358 = vmul.f32 %v3178, %v9342
    %v9359 = vmul.f32 %v3199, %v9346
    %v9360 = vmul.f32 %v3200, %v9347
    %v9361 = vmul.f32 %v3201, %v9348
    %v9362 = vmul.f32 %v3180, %v9342
    %v9363 = vmul.f32 %v3202, %v9343
    %v9364 = vmul.f32 %v3203, %v9349
    %v9365 = vmul.f32 %v3204, %v9350
    %v9366 = vmul.f32 %v3183, %v9351
    %v9367 = vmul.f32 %v3205, %v9343
    %9378 = vst [vmem:[#allocation1] ss:$4 sm:$0xff] %v9358
    %s9379 = scalar_lea.vmem [#allocation1], 1
    %9380 = vst [vmem:[%s9379] ss:$4 sm:$0xff] %v9359
    %s9381 = scalar_lea.vmem [#allocation1], 2
    %9382 = vst [vmem:[%s9381] ss:$4 sm:$0xff] %v9360
    %s9383 = scalar_lea.vmem [#allocation1], 3
    %9384 = vst [vmem:[%s9383] ss:$4 sm:$0xff] %v9361
    %s9385 = scalar_lea.vmem [#allocation1], 32
    %9386 = vst [vmem:[%s9385] ss:$4 sm:$0xff] %v9362
    %v9387 = vld.sshfl [vmem:[#allocation1] sm:$0xff pattern:$0x73625140]
    %v9388 = vld.sshfl [vmem:[#allocation1 + $0x20] sm:$0xff pattern:$0x73625140]
    %9389 = vst [vmem:[#allocation1] ss:$4 sm:$0xff] %v9363
    %9390 = vst [vmem:[%s9379] ss:$4 sm:$0xff] %v9364
    %9391 = vst [vmem:[%s9381] ss:$4 sm:$0xff] %v9365
    %9392 = vst [vmem:[%s9383] ss:$4 sm:$0xff] %v9366
    %9393 = vst [vmem:[%s9385] ss:$4 sm:$0xff] %v9367
    %v9394 = vld.sshfl [vmem:[#allocation1] sm:$0xff pattern:$0x73625140]
    %v9395 = vld.sshfl [vmem:[#allocation1 + $0x20] sm:$0xff pattern:$0x73625140]
    %9400 = vadd.xlane.f32.xlu0 %v9387
    %v9401 = vpop.xlane.xlu0 %9400
    %v9402 = vsel %vm3283, %v9388, 0.0
    %9403 = vadd.xlane.f32.xlu0 %v9402
    %v9404 = vpop.xlane.xlu0 %9403
    %9405 = vadd.xlane.f32.xlu0 %v9394
    %v9406 = vpop.xlane.xlu0 %9405
    %v9407 = vsel %vm3283, %v9395, 0.0
    %9408 = vadd.xlane.f32.xlu0 %v9407
    %v9409 = vpop.xlane.xlu0 %9408
    %v9414 = vperm.slane %v9401, %v3297
    %v9415 = vperm.slane %v9404, %v3299
    %v9416 = vsel %vm3301, %v9415, %v9414
    %v9417 = vperm.slane %v9406, %v3297
    %v9418 = vperm.slane %v9409, %v3299
    %v9419 = vsel %vm3301, %v9418, %v9417
    %v9420 = vsel %vm3306, %v9419, %v9416
    %v9422 = vsel %vm3309, %v9420, -inf
    %9423 = vmax.xlane.f32.xlu0 %v9422
    %v9424 = vpop.xlane.xlu0 %9423
    %v9426 = vperm.slane %v9424, 0
    %v9427 = vperm.slane %v9424, 1
    %v9430 = vsub.f32 %v9401, %v9426
    %v9431 = vsub.f32 %v9404, %v9426
    %v9432 = vsub.f32 %v9406, %v9427
    %v9433 = vsub.f32 %v9409, %v9427
    %v9434 = vmul.f32 %v9430, 1.442695
    %v9435 = vpow.pop %v9434
    %v9436 = vmul.f32 %v9431, 1.442695
    %v9437 = vpow.pop %v9436
    %v9438 = vmul.f32 %v9432, 1.442695
    %v9439 = vpow.pop %v9438
    %v9440 = vmul.f32 %v9433, 1.442695
    %v9441 = vpow.pop %v9440
    %9446 = vset.pattern.permute.xlu0 0
    %9447 = vperm.xlu0 %9446, %v9435
    %v9448 = vpop.permute.xlu0 %9447
    %9449 = vset.pattern.permute.xlu0 0
    %9450 = vperm.xlu0 %9449, %v9437
    %v9451 = vpop.permute.xlu0 %9450
    %9452 = vset.pattern.permute.xlu0 0
    %9453 = vperm.xlu0 %9452, %v9439
    %v9454 = vpop.permute.xlu0 %9453
    %9455 = vset.pattern.permute.xlu0 0
    %9456 = vperm.xlu0 %9455, %v9441
    %v9457 = vpop.permute.xlu0 %9456
    %v9458 = vperm.slane %v9448, %v3297
    %v9459 = vperm.slane %v9451, %v3299
    %v9460 = vsel %vm3301, %v9459, %v9458
    %v9461 = vperm.slane %v9454, %v3297
    %v9462 = vperm.slane %v9457, %v3299
    %v9463 = vsel %vm3301, %v9462, %v9461
    %v9464 = vsel %vm3306, %v9463, %v9460
    %v9466 = vsel %vm3309, %v9464, 0.0
    %9467 = vadd.xlane.f32.xlu0 %v9466
    %v9468 = vpop.xlane.xlu0 %9467
    %v9469 = vrcp.pop %v9468
    %v9471 = vperm.slane %v9469, 0
    %v9472 = vperm.slane %v9469, 1
    %v9475 = vmul.f32 %v9435, %v9471
    %v9476 = vmul.f32 %v9437, %v9471
    %v9477 = vmul.f32 %v9439, %v9472
    %v9478 = vmul.f32 %v9441, %v9472
    %9480 = vset.pattern.permute.xlu0 0
    %9481 = vperm.xlu0 %9480, %v9475
    %v9482 = vpop.permute.xlu0 %9481
    %9485 = vset.pattern.permute.xlu0 0
    %9486 = vperm.xlu0 %9485, %v9476
    %v9487 = vpop.permute.xlu0 %9486
    %9490 = vset.pattern.permute.xlu0 0
    %9491 = vperm.xlu0 %9490, %v9477
    %v9492 = vpop.permute.xlu0 %9491
    %9495 = vset.pattern.permute.xlu0 0
    %9496 = vperm.xlu0 %9495, %v9478
    %v9497 = vpop.permute.xlu0 %9496
    %9499 = vst [vmem:[#allocation1] ss:$4 sm:$0xff] %v3099
    %s9500 = scalar_lea.vmem [#allocation1], 1
    %9501 = vst [vmem:[%s9500] ss:$4 sm:$0xff] %v3189
    %s9502 = scalar_lea.vmem [#allocation1], 2
    %9503 = vst [vmem:[%s9502] ss:$4 sm:$0xff] %v3190
    %s9504 = scalar_lea.vmem [#allocation1], 3
    %9505 = vst [vmem:[%s9504] ss:$4 sm:$0xff] %v3191
    %s9506 = scalar_lea.vmem [#allocation1], 32
    %9507 = vst [vmem:[%s9506] ss:$4 sm:$0xff] %v3100
    %v9508 = vld.sshfl [vmem:[#allocation1] sm:$0xff pattern:$0x73625140]
    %v9509 = vld.sshfl [vmem:[#allocation1 + $0x20] sm:$0xff pattern:$0x73625140]
    %9510 = vst [vmem:[#allocation1] ss:$4 sm:$0xff] %v3192
    %9511 = vst [vmem:[%s9500] ss:$4 sm:$0xff] %v3193
    %9512 = vst [vmem:[%s9502] ss:$4 sm:$0xff] %v3194
    %9513 = vst [vmem:[%s9504] ss:$4 sm:$0xff] %v3101
    %9514 = vst [vmem:[%s9506] ss:$4 sm:$0xff] %v3195
    %v9515 = vld.sshfl [vmem:[#allocation1] sm:$0xff pattern:$0x73625140]
    %v9516 = vld.sshfl [vmem:[#allocation1 + $0x20] sm:$0xff pattern:$0x73625140]
    %v9521 = vmul.f32 %v9482, %v9508
    %v9522 = vmul.f32 %v9487, %v9509
    %v9523 = vmul.f32 %v9492, %v9515
    %v9524 = vmul.f32 %v9497, %v9516
    %v9525 = vsel %vm3283, %v9522, 0.0
    %v9526 = vadd.f32 %v9521, %v9525
    %v9527 = vrot.slane %v9526, 4
    %v9528 = vadd.f32 %v9526, %v9527
    %v9529 = vrot.slane %v9528, 2
    %v9530 = vadd.f32 %v9528, %v9529
    %v9531 = vrot.slane %v9530, 1
    %v9532 = vadd.f32 %v9530, %v9531
    %v9533 = vsel %vm3283, %v9524, 0.0
    %v9534 = vadd.f32 %v9523, %v9533
    %v9535 = vrot.slane %v9534, 4
    %v9536 = vadd.f32 %v9534, %v9535
    %v9537 = vrot.slane %v9536, 2
    %v9538 = vadd.f32 %v9536, %v9537
    %v9539 = vrot.slane %v9538, 1
    %v9540 = vadd.f32 %v9538, %v9539
    %v9543 = vsel %vm3306, %v9540, %v9532
    %v9545 = vrot.slane %v9333, 6
    %v9547 = vpack.c.bf16 %v9543, %v9543
    %v9548 = vpack.c.bf16 %v9545, %v9545
    %v9549 = vld [vmem:[%s7] sm:$0xff]
    %v9550 = vld [vmem:[%s7 + $0x8] sm:$0xff]
    %v9551 = vld [vmem:[%s7 + $0x10] sm:$0xff]
    %v9552 = vld [vmem:[%s7 + $0x18] sm:$0xff]
    %v9553 = vld [vmem:[%s7 + $0x20] sm:$0xff]
    %v9554 = vld [vmem:[%s7 + $0x28] sm:$0xff]
    %v9555 = vld [vmem:[%s7 + $0x30] sm:$0xff]
    %v9556 = vld [vmem:[%s7 + $0x38] sm:$0xff]
    %v9557 = vld [vmem:[%s7 + $0x40] sm:$0xff]
    %v9558 = vld [vmem:[%s7 + $0x48] sm:$0xff]
    %v9559 = vld [vmem:[%s7 + $0x50] sm:$0xff]
    %v9560 = vld [vmem:[%s7 + $0x58] sm:$0xff]
    %v9561 = vld [vmem:[%s7 + $0x60] sm:$0xff]
    %v9562 = vld [vmem:[%s7 + $0x68] sm:$0xff]
    %v9563 = vld [vmem:[%s7 + $0x70] sm:$0xff]
    %v9564 = vld [vmem:[%s7 + $0x78] sm:$0xff]
    %v9565 = vld [vmem:[%s7 + $0x80] sm:$0xff]
    %v9566 = vld [vmem:[%s7 + $0x88] sm:$0xff]
    %v9567 = vld [vmem:[%s7 + $0x90] sm:$0xff]
    %v9568 = vld [vmem:[%s7 + $0x98] sm:$0xff]
    %v9569 = vld [vmem:[%s7 + $0xa0] sm:$0xff]
    %v9570 = vld [vmem:[%s7 + $0xa8] sm:$0xff]
    %v9571 = vld [vmem:[%s7 + $0xb0] sm:$0xff]
    %v9572 = vld [vmem:[%s7 + $0xb8] sm:$0xff]
    %v9573 = vld [vmem:[%s7 + $0xc0] sm:$0xff]
    %v9574 = vld [vmem:[%s7 + $0xc8] sm:$0xff]
    %v9575 = vld [vmem:[%s7 + $0xd0] sm:$0xff]
    %v9576 = vld [vmem:[%s7 + $0xd8] sm:$0xff]
    %v9577 = vld [vmem:[%s7 + $0xe0] sm:$0xff]
    %v9578 = vld [vmem:[%s7 + $0xe8] sm:$0xff]
    %v9579 = vld [vmem:[%s7 + $0xf0] sm:$0xff]
    %v9580 = vld [vmem:[%s7 + $0xf8] sm:$0xff]
    %v9581 = vld [vmem:[%s7 + $0x100] sm:$0xff]
    %v9582 = vld [vmem:[%s7 + $0x108] sm:$0xff]
    %v9583 = vld [vmem:[%s7 + $0x110] sm:$0xff]
    %v9584 = vld [vmem:[%s7 + $0x118] sm:$0xff]
    %v9585 = vld [vmem:[%s7 + $0x120] sm:$0xff]
    %v9586 = vld [vmem:[%s7 + $0x128] sm:$0xff]
    %v9587 = vld [vmem:[%s7 + $0x130] sm:$0xff]
    %v9588 = vld [vmem:[%s7 + $0x138] sm:$0xff]
    %v9589 = vld [vmem:[%s7 + $0x140] sm:$0xff]
    %v9590 = vld [vmem:[%s7 + $0x148] sm:$0xff]
    %v9591 = vld [vmem:[%s7 + $0x150] sm:$0xff]
    %v9592 = vld [vmem:[%s7 + $0x158] sm:$0xff]
    %v9593 = vld [vmem:[%s7 + $0x160] sm:$0xff]
    %v9594 = vld [vmem:[%s7 + $0x168] sm:$0xff]
    %v9595 = vld [vmem:[%s7 + $0x170] sm:$0xff]
    %v9596 = vld [vmem:[%s7 + $0x178] sm:$0xff]
    %v9597 = vld [vmem:[%s7 + $0x180] sm:$0xff]
    %v9598 = vld [vmem:[%s7 + $0x188] sm:$0xff]
    %v9599 = vld [vmem:[%s7 + $0x190] sm:$0xff]
    %v9600 = vld [vmem:[%s7 + $0x198] sm:$0xff]
    %v9601 = vld [vmem:[%s7 + $0x1a0] sm:$0xff]
    %v9602 = vld [vmem:[%s7 + $0x1a8] sm:$0xff]
    %v9603 = vld [vmem:[%s7 + $0x1b0] sm:$0xff]
    %v9604 = vld [vmem:[%s7 + $0x1b8] sm:$0xff]
    %v9605 = vld [vmem:[%s7 + $0x1c0] sm:$0xff]
    %v9606 = vld [vmem:[%s7 + $0x1c8] sm:$0xff]
    %v9607 = vld [vmem:[%s7 + $0x1d0] sm:$0xff]
    %v9608 = vld [vmem:[%s7 + $0x1d8] sm:$0xff]
    %v9609 = vld [vmem:[%s7 + $0x1e0] sm:$0xff]
    %v9610 = vld [vmem:[%s7 + $0x1e8] sm:$0xff]
    %v9611 = vld [vmem:[%s7 + $0x1f0] sm:$0xff]
    %v9612 = vld [vmem:[%s7 + $0x1f8] sm:$0xff]
    %v9677 = vunpack.c.l.b16 %v9549
    %v9678 = vunpack.c.h.b16 %v9549
    %v9679 = vunpack.c.l.b16 %v9550
    %v9680 = vunpack.c.h.b16 %v9550
    %v9681 = vunpack.c.l.b16 %v9551
    %v9682 = vunpack.c.h.b16 %v9551
    %v9683 = vunpack.c.l.b16 %v9552
    %v9684 = vunpack.c.h.b16 %v9552
    %v9685 = vunpack.c.l.b16 %v9553
    %v9686 = vunpack.c.h.b16 %v9553
    %v9687 = vunpack.c.l.b16 %v9554
    %v9688 = vunpack.c.h.b16 %v9554
    %v9689 = vunpack.c.l.b16 %v9555
    %v9690 = vunpack.c.h.b16 %v9555
    %v9691 = vunpack.c.l.b16 %v9556
    %v9692 = vunpack.c.h.b16 %v9556
    %v9693 = vunpack.c.l.b16 %v9557
    %v9694 = vunpack.c.h.b16 %v9557
    %v9695 = vunpack.c.l.b16 %v9558
    %v9696 = vunpack.c.h.b16 %v9558
    %v9697 = vunpack.c.l.b16 %v9559
    %v9698 = vunpack.c.h.b16 %v9559
    %v9699 = vunpack.c.l.b16 %v9560
    %v9700 = vunpack.c.h.b16 %v9560
    %v9701 = vunpack.c.l.b16 %v9561
    %v9702 = vunpack.c.h.b16 %v9561
    %v9703 = vunpack.c.l.b16 %v9562
    %v9704 = vunpack.c.h.b16 %v9562
    %v9705 = vunpack.c.l.b16 %v9563
    %v9706 = vunpack.c.h.b16 %v9563
    %v9707 = vunpack.c.l.b16 %v9564
    %v9708 = vunpack.c.h.b16 %v9564
    %v9709 = vunpack.c.l.b16 %v9565
    %v9710 = vunpack.c.h.b16 %v9565
    %v9711 = vunpack.c.l.b16 %v9566
    %v9712 = vunpack.c.h.b16 %v9566
    %v9713 = vunpack.c.l.b16 %v9567
    %v9714 = vunpack.c.h.b16 %v9567
    %v9715 = vunpack.c.l.b16 %v9568
    %v9716 = vunpack.c.h.b16 %v9568
    %v9717 = vunpack.c.l.b16 %v9569
    %v9718 = vunpack.c.h.b16 %v9569
    %v9719 = vunpack.c.l.b16 %v9570
    %v9720 = vunpack.c.h.b16 %v9570
    %v9721 = vunpack.c.l.b16 %v9571
    %v9722 = vunpack.c.h.b16 %v9571
    %v9723 = vunpack.c.l.b16 %v9572
    %v9724 = vunpack.c.h.b16 %v9572
    %v9725 = vunpack.c.l.b16 %v9573
    %v9726 = vunpack.c.h.b16 %v9573
    %v9727 = vunpack.c.l.b16 %v9574
    %v9728 = vunpack.c.h.b16 %v9574
    %v9729 = vunpack.c.l.b16 %v9575
    %v9730 = vunpack.c.h.b16 %v9575
    %v9731 = vunpack.c.l.b16 %v9576
    %v9732 = vunpack.c.h.b16 %v9576
    %v9733 = vunpack.c.l.b16 %v9577
    %v9734 = vunpack.c.h.b16 %v9577
    %v9735 = vunpack.c.l.b16 %v9578
    %v9736 = vunpack.c.h.b16 %v9578
    %v9737 = vunpack.c.l.b16 %v9579
    %v9738 = vunpack.c.h.b16 %v9579
    %v9739 = vunpack.c.l.b16 %v9580
    %v9740 = vunpack.c.h.b16 %v9580
    %v9741 = vunpack.c.l.b16 %v9581
    %v9742 = vunpack.c.h.b16 %v9581
    %v9743 = vunpack.c.l.b16 %v9582
    %v9744 = vunpack.c.h.b16 %v9582
    %v9745 = vunpack.c.l.b16 %v9583
    %v9746 = vunpack.c.h.b16 %v9583
    %v9747 = vunpack.c.l.b16 %v9584
    %v9748 = vunpack.c.h.b16 %v9584
    %v9749 = vunpack.c.l.b16 %v9585
    %v9750 = vunpack.c.h.b16 %v9585
    %v9751 = vunpack.c.l.b16 %v9586
    %v9752 = vunpack.c.h.b16 %v9586
    %v9753 = vunpack.c.l.b16 %v9587
    %v9754 = vunpack.c.h.b16 %v9587
    %v9755 = vunpack.c.l.b16 %v9588
    %v9756 = vunpack.c.h.b16 %v9588
    %v9757 = vunpack.c.l.b16 %v9589
    %v9758 = vunpack.c.h.b16 %v9589
    %v9759 = vunpack.c.l.b16 %v9590
    %v9760 = vunpack.c.h.b16 %v9590
    %v9761 = vunpack.c.l.b16 %v9591
    %v9762 = vunpack.c.h.b16 %v9591
    %v9763 = vunpack.c.l.b16 %v9592
    %v9764 = vunpack.c.h.b16 %v9592
    %v9765 = vunpack.c.l.b16 %v9593
    %v9766 = vunpack.c.h.b16 %v9593
    %v9767 = vunpack.c.l.b16 %v9594
    %v9768 = vunpack.c.h.b16 %v9594
    %v9769 = vunpack.c.l.b16 %v9595
    %v9770 = vunpack.c.h.b16 %v9595
    %v9771 = vunpack.c.l.b16 %v9596
    %v9772 = vunpack.c.h.b16 %v9596
    %v9773 = vunpack.c.l.b16 %v9597
    %v9774 = vunpack.c.h.b16 %v9597
    %v9775 = vunpack.c.l.b16 %v9598
    %v9776 = vunpack.c.h.b16 %v9598
    %v9777 = vunpack.c.l.b16 %v9599
    %v9778 = vunpack.c.h.b16 %v9599
    %v9779 = vunpack.c.l.b16 %v9600
    %v9780 = vunpack.c.h.b16 %v9600
    %v9781 = vunpack.c.l.b16 %v9601
    %v9782 = vunpack.c.h.b16 %v9601
    %v9783 = vunpack.c.l.b16 %v9602
    %v9784 = vunpack.c.h.b16 %v9602
    %v9785 = vunpack.c.l.b16 %v9603
    %v9786 = vunpack.c.h.b16 %v9603
    %v9787 = vunpack.c.l.b16 %v9604
    %v9788 = vunpack.c.h.b16 %v9604
    %v9789 = vunpack.c.l.b16 %v9605
    %v9790 = vunpack.c.h.b16 %v9605
    %v9791 = vunpack.c.l.b16 %v9606
    %v9792 = vunpack.c.h.b16 %v9606
    %v9793 = vunpack.c.l.b16 %v9607
    %v9794 = vunpack.c.h.b16 %v9607
    %v9795 = vunpack.c.l.b16 %v9608
    %v9796 = vunpack.c.h.b16 %v9608
    %v9797 = vunpack.c.l.b16 %v9609
    %v9798 = vunpack.c.h.b16 %v9609
    %v9799 = vunpack.c.l.b16 %v9610
    %v9800 = vunpack.c.h.b16 %v9610
    %v9801 = vunpack.c.l.b16 %v9611
    %v9802 = vunpack.c.h.b16 %v9611
    %v9803 = vunpack.c.l.b16 %v9612
    %v9804 = vunpack.c.h.b16 %v9612
    %v9805 = vpack.c.b16 %v9681, %v9677
    %v9806 = vpack.c.b16 %v9682, %v9678
    %v9807 = vpack.c.b16 %v9683, %v9679
    %v9808 = vpack.c.b16 %v9684, %v9680
    %v9809 = vpack.c.b16 %v9689, %v9685
    %v9810 = vpack.c.b16 %v9690, %v9686
    %v9811 = vpack.c.b16 %v9691, %v9687
    %v9812 = vpack.c.b16 %v9692, %v9688
    %v9813 = vpack.c.b16 %v9697, %v9693
    %v9814 = vpack.c.b16 %v9698, %v9694
    %v9815 = vpack.c.b16 %v9699, %v9695
    %v9816 = vpack.c.b16 %v9700, %v9696
    %v9817 = vpack.c.b16 %v9705, %v9701
    %v9818 = vpack.c.b16 %v9706, %v9702
    %v9819 = vpack.c.b16 %v9707, %v9703
    %v9820 = vpack.c.b16 %v9708, %v9704
    %v9821 = vpack.c.b16 %v9713, %v9709
    %v9822 = vpack.c.b16 %v9714, %v9710
    %v9823 = vpack.c.b16 %v9715, %v9711
    %v9824 = vpack.c.b16 %v9716, %v9712
    %v9825 = vpack.c.b16 %v9721, %v9717
    %v9826 = vpack.c.b16 %v9722, %v9718
    %v9827 = vpack.c.b16 %v9723, %v9719
    %v9828 = vpack.c.b16 %v9724, %v9720
    %v9829 = vpack.c.b16 %v9729, %v9725
    %v9830 = vpack.c.b16 %v9730, %v9726
    %v9831 = vpack.c.b16 %v9731, %v9727
    %v9832 = vpack.c.b16 %v9732, %v9728
    %v9833 = vpack.c.b16 %v9737, %v9733
    %v9834 = vpack.c.b16 %v9738, %v9734
    %v9835 = vpack.c.b16 %v9739, %v9735
    %v9836 = vpack.c.b16 %v9740, %v9736
    %v9837 = vpack.c.b16 %v9745, %v9741
    %v9838 = vpack.c.b16 %v9746, %v9742
    %v9839 = vpack.c.b16 %v9747, %v9743
    %v9840 = vpack.c.b16 %v9748, %v9744
    %v9841 = vpack.c.b16 %v9753, %v9749
    %v9842 = vpack.c.b16 %v9754, %v9750
    %v9843 = vpack.c.b16 %v9755, %v9751
    %v9844 = vpack.c.b16 %v9756, %v9752
    %v9845 = vpack.c.b16 %v9761, %v9757
    %v9846 = vpack.c.b16 %v9762, %v9758
    %v9847 = vpack.c.b16 %v9763, %v9759
    %v9848 = vpack.c.b16 %v9764, %v9760
    %v9849 = vpack.c.b16 %v9769, %v9765
    %v9850 = vpack.c.b16 %v9770, %v9766
    %v9851 = vpack.c.b16 %v9771, %v9767
    %v9852 = vpack.c.b16 %v9772, %v9768
    %v9853 = vpack.c.b16 %v9777, %v9773
    %v9854 = vpack.c.b16 %v9778, %v9774
    %v9855 = vpack.c.b16 %v9779, %v9775
    %v9856 = vpack.c.b16 %v9780, %v9776
    %v9857 = vpack.c.b16 %v9785, %v9781
    %v9858 = vpack.c.b16 %v9786, %v9782
    %v9859 = vpack.c.b16 %v9787, %v9783
    %v9860 = vpack.c.b16 %v9788, %v9784
    %v9861 = vpack.c.b16 %v9793, %v9789
    %v9862 = vpack.c.b16 %v9794, %v9790
    %v9863 = vpack.c.b16 %v9795, %v9791
    %v9864 = vpack.c.b16 %v9796, %v9792
    %v9865 = vpack.c.b16 %v9801, %v9797
    %v9866 = vpack.c.b16 %v9802, %v9798
    %v9867 = vpack.c.b16 %v9803, %v9799
    %v9868 = vpack.c.b16 %v9804, %v9800
    %9933 = vmatpush.bf16.msra.mxu0 %v9833
    %9934 = vmatpush.bf16.msra.mxu0 %v9829
    %9935 = vmatpush.bf16.msra.mxu0 %v9825
    %9936 = vmatpush.bf16.msra.mxu0 %v9821
    %9937 = vmatpush.bf16.msra.mxu0 %v9817
    %9938 = vmatpush.bf16.msra.mxu0 %v9813
    %9939 = vmatpush.bf16.msra.mxu0 %v9809
    %9940 = vmatpush.bf16.msra.mxu0 %v9805
    %9941 = vmatmul.bf16.gmra.mxu0 %v9547
    %v9942 = vpop.f32.mrf.mxu0
    %v9943 = vadd.f32 0.0, %v9942
    %v9944 = vpop.f32.mrf.mxu0
    %9945 = vdwg.mxu0
    %9946 = vmatpush.bf16.msra.mxu0 %v9865
    %9947 = vmatpush.bf16.msra.mxu0 %v9861
    %9948 = vmatpush.bf16.msra.mxu0 %v9857
    %9949 = vmatpush.bf16.msra.mxu0 %v9853
    %9950 = vmatpush.bf16.msra.mxu0 %v9849
    %9951 = vmatpush.bf16.msra.mxu0 %v9845
    %9952 = vmatpush.bf16.msra.mxu0 %v9841
    %9953 = vmatpush.bf16.msra.mxu0 %v9837
    %9954 = vmatmul.bf16.gmra.mxu0 %v9548
    %v9955 = vpop.f32.mrf.mxu0
    %v9956 = vadd.f32 %v9943, %v9955
    %v9957 = vpop.f32.mrf.mxu0
    %9958 = vdwg.mxu0
    %9959 = vmatpush.bf16.msra.mxu0 %v9834
    %9960 = vmatpush.bf16.msra.mxu0 %v9830
    %9961 = vmatpush.bf16.msra.mxu0 %v9826
    %9962 = vmatpush.bf16.msra.mxu0 %v9822
    %9963 = vmatpush.bf16.msra.mxu0 %v9818
    %9964 = vmatpush.bf16.msra.mxu0 %v9814
    %9965 = vmatpush.bf16.msra.mxu0 %v9810
    %9966 = vmatpush.bf16.msra.mxu0 %v9806
    %9967 = vmatmul.bf16.gmra.mxu0 %v9547
    %v9968 = vpop.f32.mrf.mxu0
    %v9969 = vadd.f32 0.0, %v9968
    %v9970 = vpop.f32.mrf.mxu0
    %9971 = vdwg.mxu0
    %9972 = vmatpush.bf16.msra.mxu0 %v9866
    %9973 = vmatpush.bf16.msra.mxu0 %v9862
    %9974 = vmatpush.bf16.msra.mxu0 %v9858
    %9975 = vmatpush.bf16.msra.mxu0 %v9854
    %9976 = vmatpush.bf16.msra.mxu0 %v9850
    %9977 = vmatpush.bf16.msra.mxu0 %v9846
    %9978 = vmatpush.bf16.msra.mxu0 %v9842
    %9979 = vmatpush.bf16.msra.mxu0 %v9838
    %9980 = vmatmul.bf16.gmra.mxu0 %v9548
    %v9981 = vpop.f32.mrf.mxu0
    %v9982 = vadd.f32 %v9969, %v9981
    %v9983 = vpop.f32.mrf.mxu0
    %9984 = vdwg.mxu0
    %9985 = vmatpush.bf16.msra.mxu0 %v9835
    %9986 = vmatpush.bf16.msra.mxu0 %v9831
    %9987 = vmatpush.bf16.msra.mxu0 %v9827
    %9988 = vmatpush.bf16.msra.mxu0 %v9823
    %9989 = vmatpush.bf16.msra.mxu0 %v9819
    %9990 = vmatpush.bf16.msra.mxu0 %v9815
    %9991 = vmatpush.bf16.msra.mxu0 %v9811
    %9992 = vmatpush.bf16.msra.mxu0 %v9807
    %9993 = vmatmul.bf16.gmra.mxu0 %v9547
    %v9994 = vpop.f32.mrf.mxu0
    %v9995 = vadd.f32 0.0, %v9994
    %v9996 = vpop.f32.mrf.mxu0
    %9997 = vdwg.mxu0
    %9998 = vmatpush.bf16.msra.mxu0 %v9867
    %9999 = vmatpush.bf16.msra.mxu0 %v9863
    %10000 = vmatpush.bf16.msra.mxu0 %v9859
    %10001 = vmatpush.bf16.msra.mxu0 %v9855
    %10002 = vmatpush.bf16.msra.mxu0 %v9851
    %10003 = vmatpush.bf16.msra.mxu0 %v9847
    %10004 = vmatpush.bf16.msra.mxu0 %v9843
    %10005 = vmatpush.bf16.msra.mxu0 %v9839
    %10006 = vmatmul.bf16.gmra.mxu0 %v9548
    %v10007 = vpop.f32.mrf.mxu0
    %v10008 = vadd.f32 %v9995, %v10007
    %v10009 = vpop.f32.mrf.mxu0
    %10010 = vdwg.mxu0
    %10011 = vmatpush.bf16.msra.mxu0 %v9836
    %10012 = vmatpush.bf16.msra.mxu0 %v9832
    %10013 = vmatpush.bf16.msra.mxu0 %v9828
    %10014 = vmatpush.bf16.msra.mxu0 %v9824
    %10015 = vmatpush.bf16.msra.mxu0 %v9820
    %10016 = vmatpush.bf16.msra.mxu0 %v9816
    %10017 = vmatpush.bf16.msra.mxu0 %v9812
    %10018 = vmatpush.bf16.msra.mxu0 %v9808
    %10019 = vmatmul.bf16.gmra.mxu0 %v9547
    %v10020 = vpop.f32.mrf.mxu0
    %v10021 = vadd.f32 0.0, %v10020
    %v10022 = vpop.f32.mrf.mxu0
    %10023 = vdwg.mxu0
    %10024 = vmatpush.bf16.msra.mxu0 %v9868
    %10025 = vmatpush.bf16.msra.mxu0 %v9864
    %10026 = vmatpush.bf16.msra.mxu0 %v9860
    %10027 = vmatpush.bf16.msra.mxu0 %v9856
    %10028 = vmatpush.bf16.msra.mxu0 %v9852
    %10029 = vmatpush.bf16.msra.mxu0 %v9848
    %10030 = vmatpush.bf16.msra.mxu0 %v9844
    %10031 = vmatpush.bf16.msra.mxu0 %v9840
    %10032 = vmatmul.bf16.gmra.mxu0 %v9548
    %v10033 = vpop.f32.mrf.mxu0
    %v10034 = vadd.f32 %v10021, %v10033
    %v10035 = vpop.f32.mrf.mxu0
    %10036 = vdwg.mxu0
    %v10037 = vld [vmem:[#allocation3 + $0x30] sm:$0x3]
    %v10038 = vld [vmem:[#allocation3 + $0x38] sm:$0x3]
    %v10039 = vld [vmem:[#allocation3 + $0x40] sm:$0x3]
    %v10040 = vadd.f32 %v10037, %v9956
    %v10041 = vxor.u32 %v10040, 2147483648
    %v10042 = vmul.f32 %v10041, 1.442695
    %v10043 = vpow.pop %v10042
    %v10044 = vadd.f32 %v10043, 1.0
    %v10045 = vrcp.pop %v10044
    %v10046 = vmul.f32 %v10044, %v10045
    %v10047 = vsub.f32 1.0, %v10046
    %v10048 = vmul.f32 %v10045, %v10047
    %v10049 = vadd.f32 %v10045, %v10048
    %vm10050 = vweird.f32 %v10044
    %vm10051 = vweird.f32 %v10045
    %vm10052 = vmor %vm10050, %vm10051
    %v10053 = vsel %vm10052, %v10045, %v10049
    %v10054 = vand.u32 2147483647, %v10044
    %vm10055 = vcmp.eq.f32.partialorder %v10054, 8.507059e+37
    %v10056 = vand.u32 %v10044, 2147483648
    %v10057 = vor.u32 1.1754944e-38, %v10056
    %v10058 = vsel %vm10055, %v10057, %v10053
    %v10059 = vmul.f32 1.0, %v10058
    %v10060 = vadd.f32 %v10038, %v9982
    %v10061 = vxor.u32 %v10060, 2147483648
    %v10062 = vmul.f32 %v10061, 1.442695
    %v10063 = vpow.pop %v10062
    %v10064 = vadd.f32 %v10063, 1.0
    %v10065 = vrcp.pop %v10064
    %v10066 = vmul.f32 %v10064, %v10065
    %v10067 = vsub.f32 1.0, %v10066
    %v10068 = vmul.f32 %v10065, %v10067
    %v10069 = vadd.f32 %v10065, %v10068
    %vm10070 = vweird.f32 %v10064
    %vm10071 = vweird.f32 %v10065
    %vm10072 = vmor %vm10070, %vm10071
    %v10073 = vsel %vm10072, %v10065, %v10069
    %v10074 = vand.u32 2147483647, %v10064
    %vm10075 = vcmp.eq.f32.partialorder %v10074, 8.507059e+37
    %v10076 = vand.u32 %v10064, 2147483648
    %v10077 = vor.u32 1.1754944e-38, %v10076
    %v10078 = vsel %vm10075, %v10077, %v10073
    %v10079 = vmul.f32 1.0, %v10078
    %v10080 = vadd.f32 %v10039, %v10008
    %v10081 = vadd.f32 %v10034, %v3215
    %v10082 = vmul.f32 %v10059, %v10081
    %v10083 = vadd.f32 %v10080, %v10082
    %v10084 = vtanh.pop %v10083
    %v10085 = vsub.f32 1.0, %v10079
    %v10086 = vmul.f32 %v10085, %v10084
    %v10087 = vmul.f32 %v10079, %v9545
    %v10088 = vadd.f32 %v10086, %v10087
    %10089 = vst [vmem:[#allocation5 + $0x8] sm:$0x1] %v10088
    %10090 = vst [vmem:[#allocation5 + $0x11] sm:$0x2] %v10088
    %v10092 = vrot.slane %v10088, 1
    %v10093 = vperm.slane %v10088, 0
    %v10094 = vperm.slane %v10092, 0
    %v10097 = vrot.slane %v10093, 2
    %v10098 = vrot.slane %v10093, 4
    %v10099 = vrot.slane %v10093, 6
    %v10100 = vrot.slane %v10094, 2
    %v10101 = vrot.slane %v10094, 4
    %v10102 = vrot.slane %v10094, 6
    %v10109 = vmul.f32 %v3178, %v10093
    %v10110 = vmul.f32 %v3199, %v10097
    %v10111 = vmul.f32 %v3200, %v10098
    %v10112 = vmul.f32 %v3201, %v10099
    %v10113 = vmul.f32 %v3180, %v10093
    %v10114 = vmul.f32 %v3202, %v10094
    %v10115 = vmul.f32 %v3203, %v10100
    %v10116 = vmul.f32 %v3204, %v10101
    %v10117 = vmul.f32 %v3183, %v10102
    %v10118 = vmul.f32 %v3205, %v10094
    %10129 = vst [vmem:[#allocation1] ss:$4 sm:$0xff] %v10109
    %s10130 = scalar_lea.vmem [#allocation1], 1
    %10131 = vst [vmem:[%s10130] ss:$4 sm:$0xff] %v10110
    %s10132 = scalar_lea.vmem [#allocation1], 2
    %10133 = vst [vmem:[%s10132] ss:$4 sm:$0xff] %v10111
    %s10134 = scalar_lea.vmem [#allocation1], 3
    %10135 = vst [vmem:[%s10134] ss:$4 sm:$0xff] %v10112
    %s10136 = scalar_lea.vmem [#allocation1], 32
    %10137 = vst [vmem:[%s10136] ss:$4 sm:$0xff] %v10113
    %v10138 = vld.sshfl [vmem:[#allocation1] sm:$0xff pattern:$0x73625140]
    %v10139 = vld.sshfl [vmem:[#allocation1 + $0x20] sm:$0xff pattern:$0x73625140]
    %10140 = vst [vmem:[#allocation1] ss:$4 sm:$0xff] %v10114
    %10141 = vst [vmem:[%s10130] ss:$4 sm:$0xff] %v10115
    %10142 = vst [vmem:[%s10132] ss:$4 sm:$0xff] %v10116
    %10143 = vst [vmem:[%s10134] ss:$4 sm:$0xff] %v10117
    %10144 = vst [vmem:[%s10136] ss:$4 sm:$0xff] %v10118
    %v10145 = vld.sshfl [vmem:[#allocation1] sm:$0xff pattern:$0x73625140]
    %v10146 = vld.sshfl [vmem:[#allocation1 + $0x20] sm:$0xff pattern:$0x73625140]
    %10151 = vadd.xlane.f32.xlu0 %v10138
    %v10152 = vpop.xlane.xlu0 %10151
    %v10153 = vsel %vm3283, %v10139, 0.0
    %10154 = vadd.xlane.f32.xlu0 %v10153
    %v10155 = vpop.xlane.xlu0 %10154
    %10156 = vadd.xlane.f32.xlu0 %v10145
    %v10157 = vpop.xlane.xlu0 %10156
    %v10158 = vsel %vm3283, %v10146, 0.0
    %10159 = vadd.xlane.f32.xlu0 %v10158
    %v10160 = vpop.xlane.xlu0 %10159
    %v10165 = vperm.slane %v10152, %v3297
    %v10166 = vperm.slane %v10155, %v3299
    %v10167 = vsel %vm3301, %v10166, %v10165
    %v10168 = vperm.slane %v10157, %v3297
    %v10169 = vperm.slane %v10160, %v3299
    %v10170 = vsel %vm3301, %v10169, %v10168
    %v10171 = vsel %vm3306, %v10170, %v10167
    %v10173 = vsel %vm3309, %v10171, -inf
    %10174 = vmax.xlane.f32.xlu0 %v10173
    %v10175 = vpop.xlane.xlu0 %10174
    %v10177 = vperm.slane %v10175, 0
    %v10178 = vperm.slane %v10175, 1
    %v10181 = vsub.f32 %v10152, %v10177
    %v10182 = vsub.f32 %v10155, %v10177
    %v10183 = vsub.f32 %v10157, %v10178
    %v10184 = vsub.f32 %v10160, %v10178
    %v10185 = vmul.f32 %v10181, 1.442695
    %v10186 = vpow.pop %v10185
    %v10187 = vmul.f32 %v10182, 1.442695
    %v10188 = vpow.pop %v10187
    %v10189 = vmul.f32 %v10183, 1.442695
    %v10190 = vpow.pop %v10189
    %v10191 = vmul.f32 %v10184, 1.442695
    %v10192 = vpow.pop %v10191
    %10197 = vset.pattern.permute.xlu0 0
    %10198 = vperm.xlu0 %10197, %v10186
    %v10199 = vpop.permute.xlu0 %10198
    %10200 = vset.pattern.permute.xlu0 0
    %10201 = vperm.xlu0 %10200, %v10188
    %v10202 = vpop.permute.xlu0 %10201
    %10203 = vset.pattern.permute.xlu0 0
    %10204 = vperm.xlu0 %10203, %v10190
    %v10205 = vpop.permute.xlu0 %10204
    %10206 = vset.pattern.permute.xlu0 0
    %10207 = vperm.xlu0 %10206, %v10192
    %v10208 = vpop.permute.xlu0 %10207
    %v10209 = vperm.slane %v10199, %v3297
    %v10210 = vperm.slane %v10202, %v3299
    %v10211 = vsel %vm3301, %v10210, %v10209
    %v10212 = vperm.slane %v10205, %v3297
    %v10213 = vperm.slane %v10208, %v3299
    %v10214 = vsel %vm3301, %v10213, %v10212
    %v10215 = vsel %vm3306, %v10214, %v10211
    %v10217 = vsel %vm3309, %v10215, 0.0
    %10218 = vadd.xlane.f32.xlu0 %v10217
    %v10219 = vpop.xlane.xlu0 %10218
    %v10220 = vrcp.pop %v10219
    %v10222 = vperm.slane %v10220, 0
    %v10223 = vperm.slane %v10220, 1
    %v10226 = vmul.f32 %v10186, %v10222
    %v10227 = vmul.f32 %v10188, %v10222
    %v10228 = vmul.f32 %v10190, %v10223
    %v10229 = vmul.f32 %v10192, %v10223
    %10231 = vset.pattern.permute.xlu0 0
    %10232 = vperm.xlu0 %10231, %v10226
    %v10233 = vpop.permute.xlu0 %10232
    %10236 = vset.pattern.permute.xlu0 0
    %10237 = vperm.xlu0 %10236, %v10227
    %v10238 = vpop.permute.xlu0 %10237
    %10241 = vset.pattern.permute.xlu0 0
    %10242 = vperm.xlu0 %10241, %v10228
    %v10243 = vpop.permute.xlu0 %10242
    %10246 = vset.pattern.permute.xlu0 0
    %10247 = vperm.xlu0 %10246, %v10229
    %v10248 = vpop.permute.xlu0 %10247
    %10250 = vst [vmem:[#allocation1] ss:$4 sm:$0xff] %v3099
    %s10251 = scalar_lea.vmem [#allocation1], 1
    %10252 = vst [vmem:[%s10251] ss:$4 sm:$0xff] %v3189
    %s10253 = scalar_lea.vmem [#allocation1], 2
    %10254 = vst [vmem:[%s10253] ss:$4 sm:$0xff] %v3190
    %s10255 = scalar_lea.vmem [#allocation1], 3
    %10256 = vst [vmem:[%s10255] ss:$4 sm:$0xff] %v3191
    %s10257 = scalar_lea.vmem [#allocation1], 32
    %10258 = vst [vmem:[%s10257] ss:$4 sm:$0xff] %v3100
    %v10259 = vld.sshfl [vmem:[#allocation1] sm:$0xff pattern:$0x73625140]
    %v10260 = vld.sshfl [vmem:[#allocation1 + $0x20] sm:$0xff pattern:$0x73625140]
    %10261 = vst [vmem:[#allocation1] ss:$4 sm:$0xff] %v3192
    %10262 = vst [vmem:[%s10251] ss:$4 sm:$0xff] %v3193
    %10263 = vst [vmem:[%s10253] ss:$4 sm:$0xff] %v3194
    %10264 = vst [vmem:[%s10255] ss:$4 sm:$0xff] %v3101
    %10265 = vst [vmem:[%s10257] ss:$4 sm:$0xff] %v3195
    %v10266 = vld.sshfl [vmem:[#allocation1] sm:$0xff pattern:$0x73625140]
    %v10267 = vld.sshfl [vmem:[#allocation1 + $0x20] sm:$0xff pattern:$0x73625140]
    %v10272 = vmul.f32 %v10233, %v10259
    %v10273 = vmul.f32 %v10238, %v10260
    %v10274 = vmul.f32 %v10243, %v10266
    %v10275 = vmul.f32 %v10248, %v10267
    %v10276 = vsel %vm3283, %v10273, 0.0
    %v10277 = vadd.f32 %v10272, %v10276
    %v10278 = vrot.slane %v10277, 4
    %v10279 = vadd.f32 %v10277, %v10278
    %v10280 = vrot.slane %v10279, 2
    %v10281 = vadd.f32 %v10279, %v10280
    %v10282 = vrot.slane %v10281, 1
    %v10283 = vadd.f32 %v10281, %v10282
    %v10284 = vsel %vm3283, %v10275, 0.0
    %v10285 = vadd.f32 %v10274, %v10284
    %v10286 = vrot.slane %v10285, 4
    %v10287 = vadd.f32 %v10285, %v10286
    %v10288 = vrot.slane %v10287, 2
    %v10289 = vadd.f32 %v10287, %v10288
    %v10290 = vrot.slane %v10289, 1
    %v10291 = vadd.f32 %v10289, %v10290
    %v10294 = vsel %vm3306, %v10291, %v10283
    %v10296 = vpack.c.bf16 %v10294, %v10294
    %v10297 = vpack.c.bf16 %v10088, %v10088
    %v10298 = vld [vmem:[%s7] sm:$0xff]
    %v10299 = vld [vmem:[%s7 + $0x8] sm:$0xff]
    %v10300 = vld [vmem:[%s7 + $0x10] sm:$0xff]
    %v10301 = vld [vmem:[%s7 + $0x18] sm:$0xff]
    %v10302 = vld [vmem:[%s7 + $0x20] sm:$0xff]
    %v10303 = vld [vmem:[%s7 + $0x28] sm:$0xff]
    %v10304 = vld [vmem:[%s7 + $0x30] sm:$0xff]
    %v10305 = vld [vmem:[%s7 + $0x38] sm:$0xff]
    %v10306 = vld [vmem:[%s7 + $0x40] sm:$0xff]
    %v10307 = vld [vmem:[%s7 + $0x48] sm:$0xff]
    %v10308 = vld [vmem:[%s7 + $0x50] sm:$0xff]
    %v10309 = vld [vmem:[%s7 + $0x58] sm:$0xff]
    %v10310 = vld [vmem:[%s7 + $0x60] sm:$0xff]
    %v10311 = vld [vmem:[%s7 + $0x68] sm:$0xff]
    %v10312 = vld [vmem:[%s7 + $0x70] sm:$0xff]
    %v10313 = vld [vmem:[%s7 + $0x78] sm:$0xff]
    %v10314 = vld [vmem:[%s7 + $0x80] sm:$0xff]
    %v10315 = vld [vmem:[%s7 + $0x88] sm:$0xff]
    %v10316 = vld [vmem:[%s7 + $0x90] sm:$0xff]
    %v10317 = vld [vmem:[%s7 + $0x98] sm:$0xff]
    %v10318 = vld [vmem:[%s7 + $0xa0] sm:$0xff]
    %v10319 = vld [vmem:[%s7 + $0xa8] sm:$0xff]
    %v10320 = vld [vmem:[%s7 + $0xb0] sm:$0xff]
    %v10321 = vld [vmem:[%s7 + $0xb8] sm:$0xff]
    %v10322 = vld [vmem:[%s7 + $0xc0] sm:$0xff]
    %v10323 = vld [vmem:[%s7 + $0xc8] sm:$0xff]
    %v10324 = vld [vmem:[%s7 + $0xd0] sm:$0xff]
    %v10325 = vld [vmem:[%s7 + $0xd8] sm:$0xff]
    %v10326 = vld [vmem:[%s7 + $0xe0] sm:$0xff]
    %v10327 = vld [vmem:[%s7 + $0xe8] sm:$0xff]
    %v10328 = vld [vmem:[%s7 + $0xf0] sm:$0xff]
    %v10329 = vld [vmem:[%s7 + $0xf8] sm:$0xff]
    %v10330 = vld [vmem:[%s7 + $0x100] sm:$0xff]
    %v10331 = vld [vmem:[%s7 + $0x108] sm:$0xff]
    %v10332 = vld [vmem:[%s7 + $0x110] sm:$0xff]
    %v10333 = vld [vmem:[%s7 + $0x118] sm:$0xff]
    %v10334 = vld [vmem:[%s7 + $0x120] sm:$0xff]
    %v10335 = vld [vmem:[%s7 + $0x128] sm:$0xff]
    %v10336 = vld [vmem:[%s7 + $0x130] sm:$0xff]
    %v10337 = vld [vmem:[%s7 + $0x138] sm:$0xff]
    %v10338 = vld [vmem:[%s7 + $0x140] sm:$0xff]
    %v10339 = vld [vmem:[%s7 + $0x148] sm:$0xff]
    %v10340 = vld [vmem:[%s7 + $0x150] sm:$0xff]
    %v10341 = vld [vmem:[%s7 + $0x158] sm:$0xff]
    %v10342 = vld [vmem:[%s7 + $0x160] sm:$0xff]
    %v10343 = vld [vmem:[%s7 + $0x168] sm:$0xff]
    %v10344 = vld [vmem:[%s7 + $0x170] sm:$0xff]
    %v10345 = vld [vmem:[%s7 + $0x178] sm:$0xff]
    %v10346 = vld [vmem:[%s7 + $0x180] sm:$0xff]
    %v10347 = vld [vmem:[%s7 + $0x188] sm:$0xff]
    %v10348 = vld [vmem:[%s7 + $0x190] sm:$0xff]
    %v10349 = vld [vmem:[%s7 + $0x198] sm:$0xff]
    %v10350 = vld [vmem:[%s7 + $0x1a0] sm:$0xff]
    %v10351 = vld [vmem:[%s7 + $0x1a8] sm:$0xff]
    %v10352 = vld [vmem:[%s7 + $0x1b0] sm:$0xff]
    %v10353 = vld [vmem:[%s7 + $0x1b8] sm:$0xff]
    %v10354 = vld [vmem:[%s7 + $0x1c0] sm:$0xff]
    %v10355 = vld [vmem:[%s7 + $0x1c8] sm:$0xff]
    %v10356 = vld [vmem:[%s7 + $0x1d0] sm:$0xff]
    %v10357 = vld [vmem:[%s7 + $0x1d8] sm:$0xff]
    %v10358 = vld [vmem:[%s7 + $0x1e0] sm:$0xff]
    %v10359 = vld [vmem:[%s7 + $0x1e8] sm:$0xff]
    %v10360 = vld [vmem:[%s7 + $0x1f0] sm:$0xff]
    %v10361 = vld [vmem:[%s7 + $0x1f8] sm:$0xff]
    %v10426 = vunpack.c.l.b16 %v10298
    %v10427 = vunpack.c.h.b16 %v10298
    %v10428 = vunpack.c.l.b16 %v10299
    %v10429 = vunpack.c.h.b16 %v10299
    %v10430 = vunpack.c.l.b16 %v10300
    %v10431 = vunpack.c.h.b16 %v10300
    %v10432 = vunpack.c.l.b16 %v10301
    %v10433 = vunpack.c.h.b16 %v10301
    %v10434 = vunpack.c.l.b16 %v10302
    %v10435 = vunpack.c.h.b16 %v10302
    %v10436 = vunpack.c.l.b16 %v10303
    %v10437 = vunpack.c.h.b16 %v10303
    %v10438 = vunpack.c.l.b16 %v10304
    %v10439 = vunpack.c.h.b16 %v10304
    %v10440 = vunpack.c.l.b16 %v10305
    %v10441 = vunpack.c.h.b16 %v10305
    %v10442 = vunpack.c.l.b16 %v10306
    %v10443 = vunpack.c.h.b16 %v10306
    %v10444 = vunpack.c.l.b16 %v10307
    %v10445 = vunpack.c.h.b16 %v10307
    %v10446 = vunpack.c.l.b16 %v10308
    %v10447 = vunpack.c.h.b16 %v10308
    %v10448 = vunpack.c.l.b16 %v10309
    %v10449 = vunpack.c.h.b16 %v10309
    %v10450 = vunpack.c.l.b16 %v10310
    %v10451 = vunpack.c.h.b16 %v10310
    %v10452 = vunpack.c.l.b16 %v10311
    %v10453 = vunpack.c.h.b16 %v10311
    %v10454 = vunpack.c.l.b16 %v10312
    %v10455 = vunpack.c.h.b16 %v10312
    %v10456 = vunpack.c.l.b16 %v10313
    %v10457 = vunpack.c.h.b16 %v10313
    %v10458 = vunpack.c.l.b16 %v10314
    %v10459 = vunpack.c.h.b16 %v10314
    %v10460 = vunpack.c.l.b16 %v10315
    %v10461 = vunpack.c.h.b16 %v10315
    %v10462 = vunpack.c.l.b16 %v10316
    %v10463 = vunpack.c.h.b16 %v10316
    %v10464 = vunpack.c.l.b16 %v10317
    %v10465 = vunpack.c.h.b16 %v10317
    %v10466 = vunpack.c.l.b16 %v10318
    %v10467 = vunpack.c.h.b16 %v10318
    %v10468 = vunpack.c.l.b16 %v10319
    %v10469 = vunpack.c.h.b16 %v10319
    %v10470 = vunpack.c.l.b16 %v10320
    %v10471 = vunpack.c.h.b16 %v10320
    %v10472 = vunpack.c.l.b16 %v10321
    %v10473 = vunpack.c.h.b16 %v10321
    %v10474 = vunpack.c.l.b16 %v10322
    %v10475 = vunpack.c.h.b16 %v10322
    %v10476 = vunpack.c.l.b16 %v10323
    %v10477 = vunpack.c.h.b16 %v10323
    %v10478 = vunpack.c.l.b16 %v10324
    %v10479 = vunpack.c.h.b16 %v10324
    %v10480 = vunpack.c.l.b16 %v10325
    %v10481 = vunpack.c.h.b16 %v10325
    %v10482 = vunpack.c.l.b16 %v10326
    %v10483 = vunpack.c.h.b16 %v10326
    %v10484 = vunpack.c.l.b16 %v10327
    %v10485 = vunpack.c.h.b16 %v10327
    %v10486 = vunpack.c.l.b16 %v10328
    %v10487 = vunpack.c.h.b16 %v10328
    %v10488 = vunpack.c.l.b16 %v10329
    %v10489 = vunpack.c.h.b16 %v10329
    %v10490 = vunpack.c.l.b16 %v10330
    %v10491 = vunpack.c.h.b16 %v10330
    %v10492 = vunpack.c.l.b16 %v10331
    %v10493 = vunpack.c.h.b16 %v10331
    %v10494 = vunpack.c.l.b16 %v10332
    %v10495 = vunpack.c.h.b16 %v10332
    %v10496 = vunpack.c.l.b16 %v10333
    %v10497 = vunpack.c.h.b16 %v10333
    %v10498 = vunpack.c.l.b16 %v10334
    %v10499 = vunpack.c.h.b16 %v10334
    %v10500 = vunpack.c.l.b16 %v10335
    %v10501 = vunpack.c.h.b16 %v10335
    %v10502 = vunpack.c.l.b16 %v10336
    %v10503 = vunpack.c.h.b16 %v10336
    %v10504 = vunpack.c.l.b16 %v10337
    %v10505 = vunpack.c.h.b16 %v10337
    %v10506 = vunpack.c.l.b16 %v10338
    %v10507 = vunpack.c.h.b16 %v10338
    %v10508 = vunpack.c.l.b16 %v10339
    %v10509 = vunpack.c.h.b16 %v10339
    %v10510 = vunpack.c.l.b16 %v10340
    %v10511 = vunpack.c.h.b16 %v10340
    %v10512 = vunpack.c.l.b16 %v10341
    %v10513 = vunpack.c.h.b16 %v10341
    %v10514 = vunpack.c.l.b16 %v10342
    %v10515 = vunpack.c.h.b16 %v10342
    %v10516 = vunpack.c.l.b16 %v10343
    %v10517 = vunpack.c.h.b16 %v10343
    %v10518 = vunpack.c.l.b16 %v10344
    %v10519 = vunpack.c.h.b16 %v10344
    %v10520 = vunpack.c.l.b16 %v10345
    %v10521 = vunpack.c.h.b16 %v10345
    %v10522 = vunpack.c.l.b16 %v10346
    %v10523 = vunpack.c.h.b16 %v10346
    %v10524 = vunpack.c.l.b16 %v10347
    %v10525 = vunpack.c.h.b16 %v10347
    %v10526 = vunpack.c.l.b16 %v10348
    %v10527 = vunpack.c.h.b16 %v10348
    %v10528 = vunpack.c.l.b16 %v10349
    %v10529 = vunpack.c.h.b16 %v10349
    %v10530 = vunpack.c.l.b16 %v10350
    %v10531 = vunpack.c.h.b16 %v10350
    %v10532 = vunpack.c.l.b16 %v10351
    %v10533 = vunpack.c.h.b16 %v10351
    %v10534 = vunpack.c.l.b16 %v10352
    %v10535 = vunpack.c.h.b16 %v10352
    %v10536 = vunpack.c.l.b16 %v10353
    %v10537 = vunpack.c.h.b16 %v10353
    %v10538 = vunpack.c.l.b16 %v10354
    %v10539 = vunpack.c.h.b16 %v10354
    %v10540 = vunpack.c.l.b16 %v10355
    %v10541 = vunpack.c.h.b16 %v10355
    %v10542 = vunpack.c.l.b16 %v10356
    %v10543 = vunpack.c.h.b16 %v10356
    %v10544 = vunpack.c.l.b16 %v10357
    %v10545 = vunpack.c.h.b16 %v10357
    %v10546 = vunpack.c.l.b16 %v10358
    %v10547 = vunpack.c.h.b16 %v10358
    %v10548 = vunpack.c.l.b16 %v10359
    %v10549 = vunpack.c.h.b16 %v10359
    %v10550 = vunpack.c.l.b16 %v10360
    %v10551 = vunpack.c.h.b16 %v10360
    %v10552 = vunpack.c.l.b16 %v10361
    %v10553 = vunpack.c.h.b16 %v10361
    %v10554 = vpack.c.b16 %v10430, %v10426
    %v10555 = vpack.c.b16 %v10431, %v10427
    %v10556 = vpack.c.b16 %v10432, %v10428
    %v10557 = vpack.c.b16 %v10433, %v10429
    %v10558 = vpack.c.b16 %v10438, %v10434
    %v10559 = vpack.c.b16 %v10439, %v10435
    %v10560 = vpack.c.b16 %v10440, %v10436
    %v10561 = vpack.c.b16 %v10441, %v10437
    %v10562 = vpack.c.b16 %v10446, %v10442
    %v10563 = vpack.c.b16 %v10447, %v10443
    %v10564 = vpack.c.b16 %v10448, %v10444
    %v10565 = vpack.c.b16 %v10449, %v10445
    %v10566 = vpack.c.b16 %v10454, %v10450
    %v10567 = vpack.c.b16 %v10455, %v10451
    %v10568 = vpack.c.b16 %v10456, %v10452
    %v10569 = vpack.c.b16 %v10457, %v10453
    %v10570 = vpack.c.b16 %v10462, %v10458
    %v10571 = vpack.c.b16 %v10463, %v10459
    %v10572 = vpack.c.b16 %v10464, %v10460
    %v10573 = vpack.c.b16 %v10465, %v10461
    %v10574 = vpack.c.b16 %v10470, %v10466
    %v10575 = vpack.c.b16 %v10471, %v10467
    %v10576 = vpack.c.b16 %v10472, %v10468
    %v10577 = vpack.c.b16 %v10473, %v10469
    %v10578 = vpack.c.b16 %v10478, %v10474
    %v10579 = vpack.c.b16 %v10479, %v10475
    %v10580 = vpack.c.b16 %v10480, %v10476
    %v10581 = vpack.c.b16 %v10481, %v10477
    %v10582 = vpack.c.b16 %v10486, %v10482
    %v10583 = vpack.c.b16 %v10487, %v10483
    %v10584 = vpack.c.b16 %v10488, %v10484
    %v10585 = vpack.c.b16 %v10489, %v10485
    %v10586 = vpack.c.b16 %v10494, %v10490
    %v10587 = vpack.c.b16 %v10495, %v10491
    %v10588 = vpack.c.b16 %v10496, %v10492
    %v10589 = vpack.c.b16 %v10497, %v10493
    %v10590 = vpack.c.b16 %v10502, %v10498
    %v10591 = vpack.c.b16 %v10503, %v10499
    %v10592 = vpack.c.b16 %v10504, %v10500
    %v10593 = vpack.c.b16 %v10505, %v10501
    %v10594 = vpack.c.b16 %v10510, %v10506
    %v10595 = vpack.c.b16 %v10511, %v10507
    %v10596 = vpack.c.b16 %v10512, %v10508
    %v10597 = vpack.c.b16 %v10513, %v10509
    %v10598 = vpack.c.b16 %v10518, %v10514
    %v10599 = vpack.c.b16 %v10519, %v10515
    %v10600 = vpack.c.b16 %v10520, %v10516
    %v10601 = vpack.c.b16 %v10521, %v10517
    %v10602 = vpack.c.b16 %v10526, %v10522
    %v10603 = vpack.c.b16 %v10527, %v10523
    %v10604 = vpack.c.b16 %v10528, %v10524
    %v10605 = vpack.c.b16 %v10529, %v10525
    %v10606 = vpack.c.b16 %v10534, %v10530
    %v10607 = vpack.c.b16 %v10535, %v10531
    %v10608 = vpack.c.b16 %v10536, %v10532
    %v10609 = vpack.c.b16 %v10537, %v10533
    %v10610 = vpack.c.b16 %v10542, %v10538
    %v10611 = vpack.c.b16 %v10543, %v10539
    %v10612 = vpack.c.b16 %v10544, %v10540
    %v10613 = vpack.c.b16 %v10545, %v10541
    %v10614 = vpack.c.b16 %v10550, %v10546
    %v10615 = vpack.c.b16 %v10551, %v10547
    %v10616 = vpack.c.b16 %v10552, %v10548
    %v10617 = vpack.c.b16 %v10553, %v10549
    %10682 = vmatpush.bf16.msra.mxu0 %v10582
    %10683 = vmatpush.bf16.msra.mxu0 %v10578
    %10684 = vmatpush.bf16.msra.mxu0 %v10574
    %10685 = vmatpush.bf16.msra.mxu0 %v10570
    %10686 = vmatpush.bf16.msra.mxu0 %v10566
    %10687 = vmatpush.bf16.msra.mxu0 %v10562
    %10688 = vmatpush.bf16.msra.mxu0 %v10558
    %10689 = vmatpush.bf16.msra.mxu0 %v10554
    %10690 = vmatmul.bf16.gmra.mxu0 %v10296
    %v10691 = vpop.f32.mrf.mxu0
    %v10692 = vadd.f32 0.0, %v10691
    %v10693 = vpop.f32.mrf.mxu0
    %10694 = vdwg.mxu0
    %10695 = vmatpush.bf16.msra.mxu0 %v10614
    %10696 = vmatpush.bf16.msra.mxu0 %v10610
    %10697 = vmatpush.bf16.msra.mxu0 %v10606
    %10698 = vmatpush.bf16.msra.mxu0 %v10602
    %10699 = vmatpush.bf16.msra.mxu0 %v10598
    %10700 = vmatpush.bf16.msra.mxu0 %v10594
    %10701 = vmatpush.bf16.msra.mxu0 %v10590
    %10702 = vmatpush.bf16.msra.mxu0 %v10586
    %10703 = vmatmul.bf16.gmra.mxu0 %v10297
    %v10704 = vpop.f32.mrf.mxu0
    %v10705 = vadd.f32 %v10692, %v10704
    %v10706 = vpop.f32.mrf.mxu0
    %10707 = vdwg.mxu0
    %10708 = vmatpush.bf16.msra.mxu0 %v10583
    %10709 = vmatpush.bf16.msra.mxu0 %v10579
    %10710 = vmatpush.bf16.msra.mxu0 %v10575
    %10711 = vmatpush.bf16.msra.mxu0 %v10571
    %10712 = vmatpush.bf16.msra.mxu0 %v10567
    %10713 = vmatpush.bf16.msra.mxu0 %v10563
    %10714 = vmatpush.bf16.msra.mxu0 %v10559
    %10715 = vmatpush.bf16.msra.mxu0 %v10555
    %10716 = vmatmul.bf16.gmra.mxu0 %v10296
    %v10717 = vpop.f32.mrf.mxu0
    %v10718 = vadd.f32 0.0, %v10717
    %v10719 = vpop.f32.mrf.mxu0
    %10720 = vdwg.mxu0
    %10721 = vmatpush.bf16.msra.mxu0 %v10615
    %10722 = vmatpush.bf16.msra.mxu0 %v10611
    %10723 = vmatpush.bf16.msra.mxu0 %v10607
    %10724 = vmatpush.bf16.msra.mxu0 %v10603
    %10725 = vmatpush.bf16.msra.mxu0 %v10599
    %10726 = vmatpush.bf16.msra.mxu0 %v10595
    %10727 = vmatpush.bf16.msra.mxu0 %v10591
    %10728 = vmatpush.bf16.msra.mxu0 %v10587
    %10729 = vmatmul.bf16.gmra.mxu0 %v10297
    %v10730 = vpop.f32.mrf.mxu0
    %v10731 = vadd.f32 %v10718, %v10730
    %v10732 = vpop.f32.mrf.mxu0
    %10733 = vdwg.mxu0
    %10734 = vmatpush.bf16.msra.mxu0 %v10584
    %10735 = vmatpush.bf16.msra.mxu0 %v10580
    %10736 = vmatpush.bf16.msra.mxu0 %v10576
    %10737 = vmatpush.bf16.msra.mxu0 %v10572
    %10738 = vmatpush.bf16.msra.mxu0 %v10568
    %10739 = vmatpush.bf16.msra.mxu0 %v10564
    %10740 = vmatpush.bf16.msra.mxu0 %v10560
    %10741 = vmatpush.bf16.msra.mxu0 %v10556
    %10742 = vmatmul.bf16.gmra.mxu0 %v10296
    %v10743 = vpop.f32.mrf.mxu0
    %v10744 = vadd.f32 0.0, %v10743
    %v10745 = vpop.f32.mrf.mxu0
    %10746 = vdwg.mxu0
    %10747 = vmatpush.bf16.msra.mxu0 %v10616
    %10748 = vmatpush.bf16.msra.mxu0 %v10612
    %10749 = vmatpush.bf16.msra.mxu0 %v10608
    %10750 = vmatpush.bf16.msra.mxu0 %v10604
    %10751 = vmatpush.bf16.msra.mxu0 %v10600
    %10752 = vmatpush.bf16.msra.mxu0 %v10596
    %10753 = vmatpush.bf16.msra.mxu0 %v10592
    %10754 = vmatpush.bf16.msra.mxu0 %v10588
    %10755 = vmatmul.bf16.gmra.mxu0 %v10297
    %v10756 = vpop.f32.mrf.mxu0
    %v10757 = vadd.f32 %v10744, %v10756
    %v10758 = vpop.f32.mrf.mxu0
    %10759 = vdwg.mxu0
    %10760 = vmatpush.bf16.msra.mxu0 %v10585
    %10761 = vmatpush.bf16.msra.mxu0 %v10581
    %10762 = vmatpush.bf16.msra.mxu0 %v10577
    %10763 = vmatpush.bf16.msra.mxu0 %v10573
    %10764 = vmatpush.bf16.msra.mxu0 %v10569
    %10765 = vmatpush.bf16.msra.mxu0 %v10565
    %10766 = vmatpush.bf16.msra.mxu0 %v10561
    %10767 = vmatpush.bf16.msra.mxu0 %v10557
    %10768 = vmatmul.bf16.gmra.mxu0 %v10296
    %v10769 = vpop.f32.mrf.mxu0
    %v10770 = vadd.f32 0.0, %v10769
    %v10771 = vpop.f32.mrf.mxu0
    %10772 = vdwg.mxu0
    %10773 = vmatpush.bf16.msra.mxu0 %v10617
    %10774 = vmatpush.bf16.msra.mxu0 %v10613
    %10775 = vmatpush.bf16.msra.mxu0 %v10609
    %10776 = vmatpush.bf16.msra.mxu0 %v10605
    %10777 = vmatpush.bf16.msra.mxu0 %v10601
    %10778 = vmatpush.bf16.msra.mxu0 %v10597
    %10779 = vmatpush.bf16.msra.mxu0 %v10593
    %10780 = vmatpush.bf16.msra.mxu0 %v10589
    %10781 = vmatmul.bf16.gmra.mxu0 %v10297
    %v10782 = vpop.f32.mrf.mxu0
    %v10783 = vadd.f32 %v10770, %v10782
    %v10784 = vpop.f32.mrf.mxu0
    %10785 = vdwg.mxu0
    %v10786 = vld [vmem:[#allocation3 + $0x30] sm:$0xc]
    %v10787 = vld [vmem:[#allocation3 + $0x38] sm:$0xc]
    %v10788 = vld [vmem:[#allocation3 + $0x40] sm:$0xc]
    %v10790 = vrot.slane %v10705, 6
    %v10792 = vadd.f32 %v10786, %v10790
    %v10793 = vxor.u32 %v10792, 2147483648
    %v10794 = vmul.f32 %v10793, 1.442695
    %v10795 = vpow.pop %v10794
    %v10796 = vadd.f32 %v10795, 1.0
    %v10797 = vrcp.pop %v10796
    %v10798 = vmul.f32 %v10796, %v10797
    %v10799 = vsub.f32 1.0, %v10798
    %v10800 = vmul.f32 %v10797, %v10799
    %v10801 = vadd.f32 %v10797, %v10800
    %vm10802 = vweird.f32 %v10796
    %vm10803 = vweird.f32 %v10797
    %vm10804 = vmor %vm10802, %vm10803
    %v10805 = vsel %vm10804, %v10797, %v10801
    %v10806 = vand.u32 2147483647, %v10796
    %vm10807 = vcmp.eq.f32.partialorder %v10806, 8.507059e+37
    %v10808 = vand.u32 %v10796, 2147483648
    %v10809 = vor.u32 1.1754944e-38, %v10808
    %v10810 = vsel %vm10807, %v10809, %v10805
    %v10811 = vmul.f32 1.0, %v10810
    %v10813 = vrot.slane %v10731, 6
    %v10815 = vadd.f32 %v10787, %v10813
    %v10816 = vxor.u32 %v10815, 2147483648
    %v10817 = vmul.f32 %v10816, 1.442695
    %v10818 = vpow.pop %v10817
    %v10819 = vadd.f32 %v10818, 1.0
    %v10820 = vrcp.pop %v10819
    %v10821 = vmul.f32 %v10819, %v10820
    %v10822 = vsub.f32 1.0, %v10821
    %v10823 = vmul.f32 %v10820, %v10822
    %v10824 = vadd.f32 %v10820, %v10823
    %vm10825 = vweird.f32 %v10819
    %vm10826 = vweird.f32 %v10820
    %vm10827 = vmor %vm10825, %vm10826
    %v10828 = vsel %vm10827, %v10820, %v10824
    %v10829 = vand.u32 2147483647, %v10819
    %vm10830 = vcmp.eq.f32.partialorder %v10829, 8.507059e+37
    %v10831 = vand.u32 %v10819, 2147483648
    %v10832 = vor.u32 1.1754944e-38, %v10831
    %v10833 = vsel %vm10830, %v10832, %v10828
    %v10834 = vmul.f32 1.0, %v10833
    %v10836 = vrot.slane %v10757, 6
    %v10838 = vadd.f32 %v10788, %v10836
    %v10839 = vadd.f32 %v10783, %v3215
    %v10841 = vrot.slane %v10839, 6
    %v10843 = vmul.f32 %v10811, %v10841
    %v10844 = vadd.f32 %v10838, %v10843
    %v10845 = vtanh.pop %v10844
    %v10846 = vsub.f32 1.0, %v10834
    %v10847 = vmul.f32 %v10846, %v10845
    %v10848 = vrot.slane %v10088, 6
    %v10850 = vmul.f32 %v10834, %v10848
    %v10851 = vadd.f32 %v10847, %v10850
    %10852 = vst [vmem:[#allocation5 + $0x7] sm:$0x4] %v10851
    %10853 = vst [vmem:[#allocation5 + $0x10] sm:$0x8] %v10851
    %v10854 = vld [vmem:[#allocation5] sm:$0xff]
    %v10855 = vld [vmem:[#allocation5 + $0x8] sm:$0xff]
    %v10856 = vld [vmem:[#allocation5 + $0x10] sm:$0xff]
    %v10857 = vpack.c.bf16 %v10855, %v10854
    %v10858 = vpack.c.bf16 %v10856, %v10856
    %v10859 = vld [vmem:[#allocation14] sm:$0xf]
    %v10860 = vld [vmem:[#allocation14 + $0x4] sm:$0xf]
    %v10861 = vld [vmem:[#allocation14 + $0x8] sm:$0xf]
    %v10862 = vld [vmem:[#allocation14 + $0xc] sm:$0xf]
    %v10863 = vld [vmem:[#allocation14 + $0x10] sm:$0xf]
    %v10864 = vld [vmem:[#allocation14 + $0x14] sm:$0xf]
    %v10865 = vld [vmem:[#allocation14 + $0x18] sm:$0xf]
    %v10866 = vld [vmem:[#allocation14 + $0x1c] sm:$0xf]
    %v10867 = vld [vmem:[#allocation14 + $0x20] sm:$0xf]
    %v10868 = vld [vmem:[#allocation14 + $0x24] sm:$0xf]
    %v10869 = vld [vmem:[#allocation14 + $0x28] sm:$0xf]
    %v10870 = vld [vmem:[#allocation14 + $0x2c] sm:$0xf]
    %v10871 = vld [vmem:[#allocation14 + $0x30] sm:$0xf]
    %v10872 = vld [vmem:[#allocation14 + $0x34] sm:$0xf]
    %v10873 = vld [vmem:[#allocation14 + $0x38] sm:$0xf]
    %v10874 = vld [vmem:[#allocation14 + $0x3c] sm:$0xf]
    %v10875 = vld [vmem:[%s12] sm:$0x1]
    %v10877 = vperm.slane %v10875, 0
    %v10895 = vunpack.c.l.b16 %v10859
    %v10896 = vunpack.c.l.b16 %v10860
    %v10897 = vunpack.c.l.b16 %v10861
    %v10898 = vunpack.c.l.b16 %v10862
    %v10899 = vunpack.c.l.b16 %v10863
    %v10900 = vunpack.c.l.b16 %v10864
    %v10901 = vunpack.c.l.b16 %v10865
    %v10902 = vunpack.c.l.b16 %v10866
    %v10903 = vunpack.c.l.b16 %v10867
    %v10904 = vunpack.c.l.b16 %v10868
    %v10905 = vunpack.c.l.b16 %v10869
    %v10906 = vunpack.c.l.b16 %v10870
    %v10907 = vunpack.c.l.b16 %v10871
    %v10908 = vunpack.c.l.b16 %v10872
    %v10909 = vunpack.c.l.b16 %v10873
    %v10910 = vunpack.c.l.b16 %v10874
    %v10911 = vpack.c.b16 %v10896, %v10895
    %v10912 = vpack.c.b16 %v10898, %v10897
    %v10913 = vpack.c.b16 %v10900, %v10899
    %v10914 = vpack.c.b16 %v10902, %v10901
    %v10915 = vpack.c.b16 %v10904, %v10903
    %v10916 = vpack.c.b16 %v10906, %v10905
    %v10917 = vpack.c.b16 %v10908, %v10907
    %v10918 = vpack.c.b16 %v10910, %v10909
    %10927 = vmatpush.bf16.msra.mxu0 %v10918
    %10928 = vmatpush.bf16.msra.mxu0 %v10917
    %10929 = vmatpush.bf16.msra.mxu0 %v10916
    %10930 = vmatpush.bf16.msra.mxu0 %v10915
    %10931 = vmatpush.bf16.msra.mxu0 %v10914
    %10932 = vmatpush.bf16.msra.mxu0 %v10913
    %10933 = vmatpush.bf16.msra.mxu0 %v10912
    %10934 = vmatpush.bf16.msra.mxu0 %v10911
    %10935 = vmatmul.bf16.gmra.mxu0 %v10857
    %v10936 = vpop.f32.mrf.mxu0
    %v10937 = vadd.f32 %v10877, %v10936
    %v10938 = vpop.f32.mrf.mxu0
    %v10939 = vadd.f32 %v10877, %v10938
    %10940 = vmatmul.bf16.gmra.mxu0 %v10858
    %v10941 = vpop.f32.mrf.mxu0
    %v10942 = vadd.f32 %v10877, %v10941
    %v10943 = vpop.f32.mrf.mxu0
    %10944 = vdwg.mxu0
    %10945 = vst [vmem:[#allocation15] sm:$0xff] %v10937
    %10946 = vst [vmem:[#allocation15 + $0x8] sm:$0xff] %v10939
    %10947 = vst [vmem:[#allocation15 + $0x10] sm:$0xff] %v10942
    // Predicated region
    $region74: #{seq2seq_forward.1} parent=1 // pred_check
      _
    $region75: #{seq2seq_forward.1} parent=1 // pred_check_branch
      %10949 = sbr.rel (0) target = $region77
    $region76: #{seq2seq_forward.1} parent=1 // pred_region
      %10951 = vsyncadd [#allocation8], 0
      %s10952 = sshll.u32 [#allocation15], 4
      %s10953 = int_to_ptr.vmem [resolvable:$true] %s10952
      %s10954 = sshll.u32 %s13, 4
      %s10955 = int_to_ptr.hbm [resolvable:$true] %s10954
      %10960 = dma.vmem_to_hbm [thread:$0]  %s10953, 384, %s10955, [#allocation8], 128, 128, 8
    $region77: #{seq2seq_forward.1} parent=1 // pred_fallthru
      _
    // Predicated region
    $region78: #{seq2seq_forward.1} parent=1 // pred_check
      _
    $region79: #{seq2seq_forward.1} parent=1 // pred_check_branch
      %10962 = sbr.rel (0) target = $region81
    $region80: #{seq2seq_forward.1} parent=1 // pred_region
      %10964 = dma.done [#allocation8], 384
    $region81: #{seq2seq_forward.1} parent=1 // pred_fallthru
      _
    %10965 = vsyncpa [#allocation7], 1
    %10966 = vsyncpa [#allocation10], 1
    %10967 = vsyncpa [#allocation13], 1
    %10968 = vsyncpa [#allocation8], 1

</llo_original>
